<compile_context>
chip_gen: v7x
topology: tpu7x:2x2x1
jax: 0.10.0
libtpu: 0.0.40
codegen_flags: <defaults>
</compile_context>

<pallas_src>
import functools
import math

import jax
import jax.numpy as jnp
from jax.experimental import pallas as pl
from jax.experimental.pallas import tpu as pltpu


VMEM_LIMIT = 32 * 1024 * 1024   # conservative scoped-VMEM budget (fits v5e/v6e/v7x)
LRELU_SLOPE = 0.2
PAD = 128                       # flat-spatial halo width (lanes); must be >= W + 1


def _round8(n):
    return ((n + 7) // 8) * 8


# -----------------------------------------------------------------------------
# Pallas kernel 1: fused stack of 3x3 "same" convolutions at a fixed spatial size
# -----------------------------------------------------------------------------
def _conv_stack_kernel(*args, n_in, layer_cfg, H, W, P, slope):
    """args = mask_ref, x_refs[n_in], w_refs[L], b_refs[L], out_ref, pad_ref.

    Layout: activations are (C, M) with M = H*W in the lane axis.  pad_ref is a
    (C_max, P + M + P) f32 VMEM scratch whose first/last P columns stay zero so
    the 9 3x3 taps become static lane-shifted slices of the scratch.
    """
    M = H * W
    L = len(layer_cfg)
    mask_ref = args[0]
    x_refs = args[1:1 + n_in]
    w_refs = args[1 + n_in:1 + n_in + L]
    b_refs = args[1 + n_in + L:1 + n_in + 2 * L]
    out_ref = args[1 + n_in + 2 * L]
    pad_ref = args[1 + n_in + 2 * L + 1]

    # Zero once: the halo columns must read as zero for every layer.
    pad_ref[...] = jnp.zeros_like(pad_ref)

    # Column-edge masks (precomputed on host): kill taps that would wrap across
    # image rows when shifting by +/-1 in the flat layout.
    mask_l = mask_ref[0:1, :]          # zero where j == 0
    mask_r = mask_ref[1:2, :]          # zero where j == W - 1

    # Write the (channel-concatenated) inputs into the padded scratch.
    row = 0
    for xr in x_refs:
        c = xr.shape[1]
        pad_ref[row:row + c, P:P + M] = xr[0].astype(jnp.float32)
        row += c

    h = None
    for li, (cin, cout, act) in enumerate(layer_cfg):
        if li > 0:
            pad_ref[0:cin, P:P + M] = h          # intermediate never leaves VMEM
        xpad = pad_ref[0:cin, :]                 # (cin, P + M + P) f32

        # Build the 9 shifted taps; order (dy, dx, cin) matches the weight layout.
        slabs = []
        for dy in (-1, 0, 1):
            for dx in (-1, 0, 1):
                s = dy * W + dx
                slab = xpad[:, P + s:P + s + M]
                if dx == -1:
                    slab = slab * mask_l
                elif dx == 1:
                    slab = slab * mask_r
                slabs.append(slab)
        patches = jnp.concatenate(slabs, axis=0).astype(jnp.bfloat16)   # (9*cin, M)

        acc = jnp.dot(w_refs[li][...], patches,
                      preferred_element_type=jnp.float32)               # (cout, M)
        acc = acc + b_refs[li][...]                                     # (cout, 1)
        if act == "relu":
            acc = jnp.maximum(acc, 0.0)
        elif act == "lrelu":
            acc = jnp.maximum(acc, slope * acc)
        h = acc

    out_ref[0] = h.astype(out_ref.dtype)


def conv_stack(inputs, layers, H, W, out_dtype=jnp.bfloat16, slope=LRELU_SLOPE):
    """Fused stack of 3x3 'same' convs.

    inputs: list of (N, C_i, H*W) arrays (channel-concatenated in the kernel).
    layers: list of (wmat (Cout, 9*Cin) bf16, bias (Cout, 1) f32, act) tuples.
    """
    N = inputs[0].shape[0]
    M = H * W
    P = PAD
    assert W + 1 <= P
    cfg = tuple((w.shape[1] // 9, w.shape[0], act) for (w, _, act) in layers)
    assert sum(x.shape[1] for x in inputs) == cfg[0][0]
    for (ci, _, _), (_, co_prev, _) in zip(cfg[1:], cfg[:-1]):
        assert ci == co_prev
    assert all(ci % 8 == 0 and co % 8 == 0 for (ci, co, _) in cfg)
    c_max = max(ci for (ci, _, _) in cfg)
    cout_last = cfg[-1][1]

    col = jnp.arange(M, dtype=jnp.int32) % W
    mask = jnp.stack([(col != 0), (col != W - 1)]).astype(jnp.float32)   # (2, M)

    args = [mask] + list(inputs) \
        + [w for (w, _, _) in layers] + [b for (_, b, _) in layers]
    in_specs = [pl.BlockSpec((2, M), lambda n: (0, 0))]
    in_specs += [pl.BlockSpec((1, x.shape[1], M), lambda n: (n, 0, 0)) for x in inputs]
    in_specs += [pl.BlockSpec(w.shape, lambda n: (0, 0)) for (w, _, _) in layers]
    in_specs += [pl.BlockSpec(b.shape, lambda n: (0, 0)) for (_, b, _) in layers]
    out_specs = pl.BlockSpec((1, cout_last, M), lambda n: (n, 0, 0))

    flops = 2 * N * M * sum(9 * ci * co for (ci, co, _) in cfg)
    out_bytes = N * cout_last * M * jnp.dtype(out_dtype).itemsize
    bytes_accessed = int(sum(a.size * a.dtype.itemsize for a in args) + out_bytes)

    kern = functools.partial(_conv_stack_kernel, n_in=len(inputs), layer_cfg=cfg,
                             H=H, W=W, P=P, slope=slope)
    return pl.pallas_call(
        kern,
        out_shape=jax.ShapeDtypeStruct((N, cout_last, M), out_dtype),
        grid_spec=pltpu.PrefetchScalarGridSpec(
            num_scalar_prefetch=0,
            grid=(N,),
            in_specs=in_specs,
            out_specs=out_specs,
            scratch_shapes=[pltpu.VMEM((c_max, 2 * P + M), jnp.float32)]),
        compiler_params=pltpu.CompilerParams(
            dimension_semantics=("parallel",),
            vmem_limit_bytes=VMEM_LIMIT),
        cost_estimate=pl.CostEstimate(flops=int(flops), transcendentals=0,
                                      bytes_accessed=bytes_accessed),
    )(*args)


# -----------------------------------------------------------------------------
# Pallas kernel 2: per-pixel channel matmul (used for the 2x2 transposed conv)
# -----------------------------------------------------------------------------
def _channel_matmul_kernel(x_ref, w_ref, b_ref, o_ref):
    acc = jnp.dot(w_ref[...], x_ref[0], preferred_element_type=jnp.float32)
    acc = acc + b_ref[...]
    o_ref[0] = acc.astype(o_ref.dtype)


def channel_matmul(x, w, b, out_dtype=jnp.bfloat16):
    """x: (N, Cin, M) bf16, w: (Cout, Cin) bf16, b: (Cout, 1) f32 -> (N, Cout, M)."""
    N, Cin, M = x.shape
    Cout = w.shape[0]
    flops = 2 * N * M * Cin * Cout
    bytes_accessed = int(x.size * x.dtype.itemsize + w.size * 2 + b.size * 4
                         + N * Cout * M * jnp.dtype(out_dtype).itemsize)
    return pl.pallas_call(
        _channel_matmul_kernel,
        out_shape=jax.ShapeDtypeStruct((N, Cout, M), out_dtype),
        grid_spec=pltpu.PrefetchScalarGridSpec(
            num_scalar_prefetch=0,
            grid=(N,),
            in_specs=[pl.BlockSpec((1, Cin, M), lambda n: (n, 0, 0)),
                      pl.BlockSpec((Cout, Cin), lambda n: (0, 0)),
                      pl.BlockSpec((Cout, 1), lambda n: (0, 0))],
            out_specs=pl.BlockSpec((1, Cout, M), lambda n: (n, 0, 0))),
        compiler_params=pltpu.CompilerParams(
            dimension_semantics=("parallel",),
            vmem_limit_bytes=VMEM_LIMIT),
        cost_estimate=pl.CostEstimate(flops=int(flops), transcendentals=0,
                                      bytes_accessed=bytes_accessed),
    )(x, w, b)


# -----------------------------------------------------------------------------
# XLA glue (cheap reshapes / reductions around the Pallas matmul kernels)
# -----------------------------------------------------------------------------
def avg_pool2x2_flat(x, H, W):
    N, C, _ = x.shape
    y = x.reshape(N, C, H // 2, 2, W // 2, 2).mean(axis=(3, 5))
    return y.reshape(N, C, (H // 2) * (W // 2))


def conv_transpose_up(x, wtm, btm, H, W):
    """ConvTranspose2d(kernel=2, stride=2): Pallas channel matmul + de-interleave."""
    N, _, M = x.shape
    cout = wtm.shape[0] // 4
    y = channel_matmul(x, wtm, btm, out_dtype=jnp.bfloat16)      # (N, 4*Cout, M)
    # TODO(synk): fold this (di, dj) de-interleave into the kernel output stores.
    y = y.reshape(N, 2, 2, cout, H, W)
    y = jnp.transpose(y, (0, 3, 4, 1, 5, 2)).reshape(N, cout, 4 * M)
    return y


# -----------------------------------------------------------------------------
# Deterministic parameter init (Kaiming-normal, fan_in, relu gain; zero bias)
# -----------------------------------------------------------------------------
def _kaiming_conv(key, cin, cout, kh=3, kw=3):
    fan_in = cin * kh * kw
    std = math.sqrt(2.0 / fan_in)
    w = jax.random.normal(key, (kh, kw, cin, cout), jnp.float32) * std
    b = jnp.zeros((cout,), jnp.float32)
    return w, b


def _conv_block_init(key, cin, cout):
    k1, k2 = jax.random.split(key)
    return (_kaiming_conv(k1, cin, cout), _kaiming_conv(k2, cout, cout))


def unet_init(key, in_channels, wf=8, depth=3):
    n_keys = depth + 2 * (depth - 1) + 1
    keys = list(jax.random.split(key, n_keys))
    down, prev = [], in_channels
    for i in range(depth):
        down.append(_conv_block_init(keys.pop(0), prev, wf * (2 ** i)))
        prev = wf * (2 ** i)
    up = []
    for i in reversed(range(depth - 1)):
        cout = wf * (2 ** i)
        kt = keys.pop(0)
        # ConvTranspose2d weight (Cin, Cout, 2, 2); PyTorch fan_in = Cout*kh*kw
        wt = jax.random.normal(kt, (prev, cout, 2, 2), jnp.float32) * math.sqrt(2.0 / (cout * 4))
        bt = jnp.zeros((cout,), jnp.float32)
        blk = _conv_block_init(keys.pop(0), 2 * cout, cout)   # concat(up, skip)
        up.append(((wt, bt), blk))
        prev = cout
    last = _kaiming_conv(keys.pop(0), prev, 2 * in_channels)
    return dict(down=down, up=up, last=last)


def dncnn_init(key, in_channels, feat=16, depth=5):
    keys = jax.random.split(key, depth)
    params = [_kaiming_conv(keys[0], in_channels, feat)]
    bn_scale = 1.0 / math.sqrt(1.0 + 1e-5)   # eval-mode BN (gamma=1, beta=0) folded
    for i in range(1, depth - 1):
        w, b = _kaiming_conv(keys[i], feat, feat)
        params.append((w * bn_scale, b * bn_scale))
    params.append(_kaiming_conv(keys[-1], feat, 2 * in_channels))
    return params


# -------------------- convert to kernel-ready (lane-dense) format -------------
def _prep_conv(w_hwio, b, act, cin_pad=None, cout_pad=None):
    kh, kw, cin, cout = w_hwio.shape
    if cin_pad is not None and cin_pad > cin:
        w_hwio = jnp.pad(w_hwio, ((0, 0), (0, 0), (0, cin_pad - cin), (0, 0)))
        cin = cin_pad
    wmat = jnp.transpose(w_hwio.reshape(kh * kw * cin, cout))     # (Cout, 9*Cin)
    bcol = b.reshape(cout, 1)
    if cout_pad is not None and cout_pad > cout:
        wmat = jnp.pad(wmat, ((0, cout_pad - cout), (0, 0)))
        bcol = jnp.pad(bcol, ((0, cout_pad - cout), (0, 0)))
    return (wmat.astype(jnp.bfloat16), bcol.astype(jnp.float32), act)


def prepare_unet(params, in_channels):
    c_in_pad = _round8(in_channels)
    down = []
    for i, ((w1, b1), (w2, b2)) in enumerate(params["down"]):
        cin_pad = c_in_pad if i == 0 else None
        down.append([_prep_conv(w1, b1, "lrelu", cin_pad=cin_pad),
                     _prep_conv(w2, b2, "lrelu")])
    up = []
    for (wt, bt), ((w1, b1), (w2, b2)) in params["up"]:
        cout = wt.shape[1]
        # row order (di*2+dj)*Cout + c  <->  PyTorch weight[ci, c, di, dj]
        wtm = jnp.transpose(wt, (2, 3, 1, 0)).reshape(4 * cout, wt.shape[0]).astype(jnp.bfloat16)
        btm = jnp.tile(bt, 4).reshape(4 * cout, 1).astype(jnp.float32)
        up.append(dict(t=(wtm, btm),
                       block=[_prep_conv(w1, b1, "lrelu"), _prep_conv(w2, b2, "lrelu")]))
    wl, bl = params["last"]
    last = _prep_conv(wl, bl, "none", cout_pad=_round8(wl.shape[-1]))
    return dict(down=down, up=up, last=last)


def prepare_dncnn(params, in_channels):
    c_in_pad = _round8(in_channels)
    out = [_prep_conv(params[0][0], params[0][1], "relu", cin_pad=c_in_pad)]
    for (w, b) in params[1:-1]:
        out.append(_prep_conv(w, b, "relu"))
    wl, bl = params[-1]
    out.append(_prep_conv(wl, bl, "none", cout_pad=_round8(wl.shape[-1])))
    return out


# ------------------------------- forward passes -------------------------------
def unet_forward(prep, x, H, W):
    skips = []
    h, ch, cw = x, H, W
    n_down = len(prep["down"])
    for i, blk in enumerate(prep["down"]):
        h = conv_stack([h], blk, ch, cw)                       # fused 2-conv block
        if i != n_down - 1:
            skips.append((h, ch, cw))
            h = avg_pool2x2_flat(h, ch, cw)
            ch, cw = ch // 2, cw // 2
    for i, up in enumerate(prep["up"]):
        wtm, btm = up["t"]
        h = conv_transpose_up(h, wtm, btm, ch, cw)
        ch, cw = ch * 2, cw * 2
        skip, _, _ = skips[-(i + 1)]
        is_last = (i == len(prep["up"]) - 1)
        layers = up["block"] + ([prep["last"]] if is_last else [])
        # skip-concat happens inside the fused kernel (two activation inputs)
        h = conv_stack([h, skip], layers, ch, cw,
                       out_dtype=jnp.float32 if is_last else jnp.bfloat16)
    return h                                                    # (N, Cout_pad, H*W) f32


def dncnn_forward(prep, x, H, W):
    # whole 5-layer DnCNN in a single pallas_call
    return conv_stack([x], prep, H, W, out_dtype=jnp.float32)


def vdn_forward(dprep, sprep, x_nchw):
    N, C, H, W = x_nchw.shape
    c8 = _round8(C)
    x = x_nchw.reshape(N, C, H * W)                             # NCHW is already channel-major
    x = jnp.pad(x, ((0, 0), (0, c8 - C), (0, 0))).astype(jnp.bfloat16)
    Z = unet_forward(dprep, x, H, W)[:, :2 * C]                 # DNet
    sigma = dncnn_forward(sprep, x, H, W)[:, :2 * C]            # SNet
    return Z.reshape(N, 2 * C, H, W), sigma.reshape(N, 2 * C, H, W)


if __name__ == "__main__":
    key = jax.random.PRNGKey(0)
    kx, kd, ks = jax.random.split(key, 3)

    N, C, H, W = 2, 4, 16, 16                                   # small synthetic shapes
    x = jax.random.normal(kx, (N, C, H, W), jnp.float32)

    dnet_params = unet_init(kd, C, wf=8, depth=3)               # DNet
    snet_params = dncnn_init(ks, C, feat=16, depth=5)           # SNet (depth_snet=5)
    dprep = prepare_unet(dnet_params, C)
    sprep = prepare_dncnn(snet_params, C)

    fwd = jax.jit(functools.partial(vdn_forward, dprep, sprep))
    Z, sigma = fwd(x)
    jax.block_until_ready((Z, sigma))

    assert Z.shape == (N, 2 * C, H, W), Z.shape
    assert sigma.shape == (N, 2 * C, H, W), sigma.shape
    assert Z.dtype == jnp.float32 and sigma.dtype == jnp.float32
    assert bool(jnp.isfinite(Z).all()) and bool(jnp.isfinite(sigma).all())
    print("KERNEL_OK")
</pallas_src>

<mosaic_0001>
module attributes {stable_mosaic.version = 11 : i64} {
  func.func @_conv_stack_kernel(%arg0: i32, %arg1: memref<2x256xf32, #tpu.memory_space<vmem>>, %arg2: memref<1x8x256xbf16, #tpu.memory_space<vmem>>, %arg3: memref<8x72xbf16, #tpu.memory_space<vmem>>, %arg4: memref<8x72xbf16, #tpu.memory_space<vmem>>, %arg5: memref<8x1xf32, #tpu.memory_space<vmem>>, %arg6: memref<8x1xf32, #tpu.memory_space<vmem>>, %arg7: memref<1x8x256xbf16, #tpu.memory_space<vmem>>, %arg8: memref<8x512xf32, #tpu.memory_space<vmem>>) attributes {dimension_semantics = [#tpu.dimension_semantics<parallel>], iteration_bounds = array<i64: 2>, scalar_prefetch = 0 : i64, scratch_operands = 1 : i64, tpu.core_type = #tpu.core_type<tc>, window_params = [{pipeline_mode = #tpu.pipeline_mode<synchronous>, transform_indices = @transform_0, window_bounds = array<i64: 2, 256>}, {transform_indices = @transform_1, window_bounds = array<i64: 1, 8, 256>}, {pipeline_mode = #tpu.pipeline_mode<synchronous>, transform_indices = @transform_2, window_bounds = array<i64: 8, 72>}, {pipeline_mode = #tpu.pipeline_mode<synchronous>, transform_indices = @transform_3, window_bounds = array<i64: 8, 72>}, {pipeline_mode = #tpu.pipeline_mode<synchronous>, transform_indices = @transform_4, window_bounds = array<i64: 8, 1>}, {pipeline_mode = #tpu.pipeline_mode<synchronous>, transform_indices = @transform_5, window_bounds = array<i64: 8, 1>}, {transform_indices = @transform_6, window_bounds = array<i64: 1, 8, 256>}]} {
    %cst = arith.constant 0.000000e+00 : f32
    %0 = vector.broadcast %cst : f32 to vector<8x512xf32>
    %c0 = arith.constant 0 : index
    %c0_0 = arith.constant 0 : index
    %1 = vector.load %arg8[%c0, %c0_0] : memref<8x512xf32, #tpu.memory_space<vmem>>, vector<8x512xf32>
    tpu.vector_store %arg8[%c0, %c0_0], %0 {strides = array<i32>} : memref<8x512xf32, #tpu.memory_space<vmem>>, vector<8x512xf32>,
    %c0_1 = arith.constant 0 : index
    %c0_2 = arith.constant 0 : index
    %2 = vector.load %arg1[%c0_1, %c0_2] : memref<2x256xf32, #tpu.memory_space<vmem>>, vector<1x256xf32>
    %c1 = arith.constant 1 : index
    %c0_3 = arith.constant 0 : index
    %3 = vector.load %arg1[%c1, %c0_3] : memref<2x256xf32, #tpu.memory_space<vmem>>, vector<1x256xf32>
    %c0_4 = arith.constant 0 : index
    %c0_5 = arith.constant 0 : index
    %c0_6 = arith.constant 0 : index
    %4 = vector.load %arg2[%c0_4, %c0_5, %c0_6] : memref<1x8x256xbf16, #tpu.memory_space<vmem>>, vector<1x8x256xbf16>
    %5 = vector.shape_cast %4 : vector<1x8x256xbf16> to vector<8x256xbf16>
    %6 = arith.extf %5 : vector<8x256xbf16> to vector<8x256xf32>
    %c0_7 = arith.constant 0 : index
    %c128 = arith.constant 128 : index
    %7 = vector.load %arg8[%c0_7, %c128] : memref<8x512xf32, #tpu.memory_space<vmem>>, vector<8x256xf32>
    tpu.vector_store %arg8[%c0_7, %c128], %6 {strides = array<i32>} : memref<8x512xf32, #tpu.memory_space<vmem>>, vector<8x256xf32>,
    %c0_8 = arith.constant 0 : index
    %c0_9 = arith.constant 0 : index
    %8 = vector.load %arg8[%c0_8, %c0_9] : memref<8x512xf32, #tpu.memory_space<vmem>>, vector<8x512xf32>
    %9 = vector.extract_strided_slice %8 {offsets = [0, 111], sizes = [8, 256], strides = [1, 1]} : vector<8x512xf32> to vector<8x256xf32>
    %10 = vector.broadcast %2 : vector<1x256xf32> to vector<8x256xf32>
    %11 = arith.mulf %9, %10 : vector<8x256xf32>
    %12 = vector.extract_strided_slice %8 {offsets = [0, 112], sizes = [8, 256], strides = [1, 1]} : vector<8x512xf32> to vector<8x256xf32>
    %13 = vector.extract_strided_slice %8 {offsets = [0, 113], sizes = [8, 256], strides = [1, 1]} : vector<8x512xf32> to vector<8x256xf32>
    %14 = vector.broadcast %3 : vector<1x256xf32> to vector<8x256xf32>
    %15 = arith.mulf %13, %14 : vector<8x256xf32>
    %16 = vector.extract_strided_slice %8 {offsets = [0, 127], sizes = [8, 256], strides = [1, 1]} : vector<8x512xf32> to vector<8x256xf32>
    %17 = vector.broadcast %2 : vector<1x256xf32> to vector<8x256xf32>
    %18 = arith.mulf %16, %17 : vector<8x256xf32>
    %19 = vector.extract_strided_slice %8 {offsets = [0, 128], sizes = [8, 256], strides = [1, 1]} : vector<8x512xf32> to vector<8x256xf32>
    %20 = vector.extract_strided_slice %8 {offsets = [0, 129], sizes = [8, 256], strides = [1, 1]} : vector<8x512xf32> to vector<8x256xf32>
    %21 = vector.broadcast %3 : vector<1x256xf32> to vector<8x256xf32>
    %22 = arith.mulf %20, %21 : vector<8x256xf32>
    %23 = vector.extract_strided_slice %8 {offsets = [0, 143], sizes = [8, 256], strides = [1, 1]} : vector<8x512xf32> to vector<8x256xf32>
    %24 = vector.broadcast %2 : vector<1x256xf32> to vector<8x256xf32>
    %25 = arith.mulf %23, %24 : vector<8x256xf32>
    %26 = vector.extract_strided_slice %8 {offsets = [0, 144], sizes = [8, 256], strides = [1, 1]} : vector<8x512xf32> to vector<8x256xf32>
    %27 = vector.extract_strided_slice %8 {offsets = [0, 145], sizes = [8, 256], strides = [1, 1]} : vector<8x512xf32> to vector<8x256xf32>
    %28 = vector.broadcast %3 : vector<1x256xf32> to vector<8x256xf32>
    %29 = arith.mulf %27, %28 : vector<8x256xf32>
    %30 = tpu.concatenate %11, %12, %15, %18, %19, %22, %25, %26, %29 in 0 : vector<8x256xf32>, vector<8x256xf32>, vector<8x256xf32>, vector<8x256xf32>, vector<8x256xf32>, vector<8x256xf32>, vector<8x256xf32>, vector<8x256xf32>, vector<8x256xf32> -> vector<72x256xf32>
    %31 = arith.truncf %30 : vector<72x256xf32> to vector<72x256xbf16>
    %c0_10 = arith.constant 0 : index
    %c0_11 = arith.constant 0 : index
    %32 = vector.load %arg3[%c0_10, %c0_11] : memref<8x72xbf16, #tpu.memory_space<vmem>>, vector<8x72xbf16>
    %cst_12 = arith.constant dense<0.000000e+00> : vector<8x256xf32>
    %33 = tpu.matmul %32, %31, %cst_12 {dimension_numbers = #tpu.dot_dimension_numbers<[1], [0], [0], [1], [0, 0, 1, 1], [], []>} : vector<8x72xbf16>, vector<72x256xbf16>, vector<8x256xf32> -> vector<8x256xf32>
    %c0_13 = arith.constant 0 : index
    %c0_14 = arith.constant 0 : index
    %34 = vector.load %arg5[%c0_13, %c0_14] : memref<8x1xf32, #tpu.memory_space<vmem>>, vector<8x1xf32>
    %35 = vector.broadcast %34 : vector<8x1xf32> to vector<8x256xf32>
    %36 = arith.addf %33, %35 : vector<8x256xf32>
    %cst_15 = arith.constant 2.000000e-01 : f32
    %37 = vector.broadcast %cst_15 : f32 to vector<8x256xf32>
    %38 = arith.mulf %37, %36 : vector<8x256xf32>
    %39 = arith.maximumf %36, %38 : vector<8x256xf32>
    %c0_16 = arith.constant 0 : index
    %c128_17 = arith.constant 128 : index
    %40 = vector.load %arg8[%c0_16, %c128_17] : memref<8x512xf32, #tpu.memory_space<vmem>>, vector<8x256xf32>
    tpu.vector_store %arg8[%c0_16, %c128_17], %39 {strides = array<i32>} : memref<8x512xf32, #tpu.memory_space<vmem>>, vector<8x256xf32>,
    %c0_18 = arith.constant 0 : index
    %c0_19 = arith.constant 0 : index
    %41 = vector.load %arg8[%c0_18, %c0_19] : memref<8x512xf32, #tpu.memory_space<vmem>>, vector<8x512xf32>
    %42 = vector.extract_strided_slice %41 {offsets = [0, 111], sizes = [8, 256], strides = [1, 1]} : vector<8x512xf32> to vector<8x256xf32>
    %43 = vector.broadcast %2 : vector<1x256xf32> to vector<8x256xf32>
    %44 = arith.mulf %42, %43 : vector<8x256xf32>
    %45 = vector.extract_strided_slice %41 {offsets = [0, 112], sizes = [8, 256], strides = [1, 1]} : vector<8x512xf32> to vector<8x256xf32>
    %46 = vector.extract_strided_slice %41 {offsets = [0, 113], sizes = [8, 256], strides = [1, 1]} : vector<8x512xf32> to vector<8x256xf32>
    %47 = vector.broadcast %3 : vector<1x256xf32> to vector<8x256xf32>
    %48 = arith.mulf %46, %47 : vector<8x256xf32>
    %49 = vector.extract_strided_slice %41 {offsets = [0, 127], sizes = [8, 256], strides = [1, 1]} : vector<8x512xf32> to vector<8x256xf32>
    %50 = vector.broadcast %2 : vector<1x256xf32> to vector<8x256xf32>
    %51 = arith.mulf %49, %50 : vector<8x256xf32>
    %52 = vector.extract_strided_slice %41 {offsets = [0, 128], sizes = [8, 256], strides = [1, 1]} : vector<8x512xf32> to vector<8x256xf32>
    %53 = vector.extract_strided_slice %41 {offsets = [0, 129], sizes = [8, 256], strides = [1, 1]} : vector<8x512xf32> to vector<8x256xf32>
    %54 = vector.broadcast %3 : vector<1x256xf32> to vector<8x256xf32>
    %55 = arith.mulf %53, %54 : vector<8x256xf32>
    %56 = vector.extract_strided_slice %41 {offsets = [0, 143], sizes = [8, 256], strides = [1, 1]} : vector<8x512xf32> to vector<8x256xf32>
    %57 = vector.broadcast %2 : vector<1x256xf32> to vector<8x256xf32>
    %58 = arith.mulf %56, %57 : vector<8x256xf32>
    %59 = vector.extract_strided_slice %41 {offsets = [0, 144], sizes = [8, 256], strides = [1, 1]} : vector<8x512xf32> to vector<8x256xf32>
    %60 = vector.extract_strided_slice %41 {offsets = [0, 145], sizes = [8, 256], strides = [1, 1]} : vector<8x512xf32> to vector<8x256xf32>
    %61 = vector.broadcast %3 : vector<1x256xf32> to vector<8x256xf32>
    %62 = arith.mulf %60, %61 : vector<8x256xf32>
    %63 = tpu.concatenate %44, %45, %48, %51, %52, %55, %58, %59, %62 in 0 : vector<8x256xf32>, vector<8x256xf32>, vector<8x256xf32>, vector<8x256xf32>, vector<8x256xf32>, vector<8x256xf32>, vector<8x256xf32>, vector<8x256xf32>, vector<8x256xf32> -> vector<72x256xf32>
    %64 = arith.truncf %63 : vector<72x256xf32> to vector<72x256xbf16>
    %c0_20 = arith.constant 0 : index
    %c0_21 = arith.constant 0 : index
    %65 = vector.load %arg4[%c0_20, %c0_21] : memref<8x72xbf16, #tpu.memory_space<vmem>>, vector<8x72xbf16>
    %cst_22 = arith.constant dense<0.000000e+00> : vector<8x256xf32>
    %66 = tpu.matmul %65, %64, %cst_22 {dimension_numbers = #tpu.dot_dimension_numbers<[1], [0], [0], [1], [0, 0, 1, 1], [], []>} : vector<8x72xbf16>, vector<72x256xbf16>, vector<8x256xf32> -> vector<8x256xf32>
    %c0_23 = arith.constant 0 : index
    %c0_24 = arith.constant 0 : index
    %67 = vector.load %arg6[%c0_23, %c0_24] : memref<8x1xf32, #tpu.memory_space<vmem>>, vector<8x1xf32>
    %68 = vector.broadcast %67 : vector<8x1xf32> to vector<8x256xf32>
    %69 = arith.addf %66, %68 : vector<8x256xf32>
    %cst_25 = arith.constant 2.000000e-01 : f32
    %70 = vector.broadcast %cst_25 : f32 to vector<8x256xf32>
    %71 = arith.mulf %70, %69 : vector<8x256xf32>
    %72 = arith.maximumf %69, %71 : vector<8x256xf32>
    %73 = arith.truncf %72 : vector<8x256xf32> to vector<8x256xbf16>
    %c0_26 = arith.constant 0 : index
    %c0_27 = arith.constant 0 : index
    %c0_28 = arith.constant 0 : index
    %74 = vector.load %arg7[%c0_26, %c0_27, %c0_28] : memref<1x8x256xbf16, #tpu.memory_space<vmem>>, vector<1x8x256xbf16>
    %75 = vector.shape_cast %74 : vector<1x8x256xbf16> to vector<8x256xbf16>
    %76 = vector.shape_cast %73 : vector<8x256xbf16> to vector<1x8x256xbf16>
    tpu.vector_store %arg7[%c0_26, %c0_27, %c0_28], %76 {strides = array<i32>} : memref<1x8x256xbf16, #tpu.memory_space<vmem>>, vector<1x8x256xbf16>,
    return
  }
  func.func @transform_0(%arg0: i32) -> (i32, i32) {
    %c0_i32 = arith.constant 0 : i32
    %c0_i32_0 = arith.constant 0 : i32
    %c0_i32_1 = arith.constant 0 : i32
    return %c0_i32, %c0_i32_0 : i32, i32
  }
  func.func @transform_1(%arg0: i32) -> (i32, i32, i32) {
    %c0_i32 = arith.constant 0 : i32
    %c0_i32_0 = arith.constant 0 : i32
    %c0_i32_1 = arith.constant 0 : i32
    return %arg0, %c0_i32, %c0_i32_0 : i32, i32, i32
  }
  func.func @transform_2(%arg0: i32) -> (i32, i32) {
    %c0_i32 = arith.constant 0 : i32
    %c0_i32_0 = arith.constant 0 : i32
    %c0_i32_1 = arith.constant 0 : i32
    return %c0_i32, %c0_i32_0 : i32, i32
  }
  func.func @transform_3(%arg0: i32) -> (i32, i32) {
    %c0_i32 = arith.constant 0 : i32
    %c0_i32_0 = arith.constant 0 : i32
    %c0_i32_1 = arith.constant 0 : i32
    return %c0_i32, %c0_i32_0 : i32, i32
  }
  func.func @transform_4(%arg0: i32) -> (i32, i32) {
    %c0_i32 = arith.constant 0 : i32
    %c0_i32_0 = arith.constant 0 : i32
    %c0_i32_1 = arith.constant 0 : i32
    return %c0_i32, %c0_i32_0 : i32, i32
  }
  func.func @transform_5(%arg0: i32) -> (i32, i32) {
    %c0_i32 = arith.constant 0 : i32
    %c0_i32_0 = arith.constant 0 : i32
    %c0_i32_1 = arith.constant 0 : i32
    return %c0_i32, %c0_i32_0 : i32, i32
  }
  func.func @transform_6(%arg0: i32) -> (i32, i32, i32) {
    %c0_i32 = arith.constant 0 : i32
    %c0_i32_0 = arith.constant 0 : i32
    %c0_i32_1 = arith.constant 0 : i32
    return %arg0, %c0_i32, %c0_i32_0 : i32, i32, i32
  }
}

module attributes {stable_mosaic.version = 11 : i64} {
  func.func @_conv_stack_kernel(%arg0: i32, %arg1: memref<2x64xf32, #tpu.memory_space<vmem>>, %arg2: memref<1x8x64xbf16, #tpu.memory_space<vmem>>, %arg3: memref<16x72xbf16, #tpu.memory_space<vmem>>, %arg4: memref<16x144xbf16, #tpu.memory_space<vmem>>, %arg5: memref<16x1xf32, #tpu.memory_space<vmem>>, %arg6: memref<16x1xf32, #tpu.memory_space<vmem>>, %arg7: memref<1x16x64xbf16, #tpu.memory_space<vmem>>, %arg8: memref<16x320xf32, #tpu.memory_space<vmem>>) attributes {dimension_semantics = [#tpu.dimension_semantics<parallel>], iteration_bounds = array<i64: 2>, scalar_prefetch = 0 : i64, scratch_operands = 1 : i64, tpu.core_type = #tpu.core_type<tc>, window_params = [{pipeline_mode = #tpu.pipeline_mode<synchronous>, transform_indices = @transform_0, window_bounds = array<i64: 2, 64>}, {transform_indices = @transform_1, window_bounds = array<i64: 1, 8, 64>}, {pipeline_mode = #tpu.pipeline_mode<synchronous>, transform_indices = @transform_2, window_bounds = array<i64: 16, 72>}, {pipeline_mode = #tpu.pipeline_mode<synchronous>, transform_indices = @transform_3, window_bounds = array<i64: 16, 144>}, {pipeline_mode = #tpu.pipeline_mode<synchronous>, transform_indices = @transform_4, window_bounds = array<i64: 16, 1>}, {pipeline_mode = #tpu.pipeline_mode<synchronous>, transform_indices = @transform_5, window_bounds = array<i64: 16, 1>}, {transform_indices = @transform_6, window_bounds = array<i64: 1, 16, 64>}]} {
    %cst = arith.constant 0.000000e+00 : f32
    %0 = vector.broadcast %cst : f32 to vector<16x320xf32>
    %c0 = arith.constant 0 : index
    %c0_0 = arith.constant 0 : index
    %1 = vector.load %arg8[%c0, %c0_0] : memref<16x320xf32, #tpu.memory_space<vmem>>, vector<16x320xf32>
    tpu.vector_store %arg8[%c0, %c0_0], %0 {strides = array<i32>} : memref<16x320xf32, #tpu.memory_space<vmem>>, vector<16x320xf32>,
    %c0_1 = arith.constant 0 : index
    %c0_2 = arith.constant 0 : index
    %2 = vector.load %arg1[%c0_1, %c0_2] : memref<2x64xf32, #tpu.memory_space<vmem>>, vector<1x64xf32>
    %c1 = arith.constant 1 : index
    %c0_3 = arith.constant 0 : index
    %3 = vector.load %arg1[%c1, %c0_3] : memref<2x64xf32, #tpu.memory_space<vmem>>, vector<1x64xf32>
    %c0_4 = arith.constant 0 : index
    %c0_5 = arith.constant 0 : index
    %c0_6 = arith.constant 0 : index
    %4 = vector.load %arg2[%c0_4, %c0_5, %c0_6] : memref<1x8x64xbf16, #tpu.memory_space<vmem>>, vector<1x8x64xbf16>
    %5 = vector.shape_cast %4 : vector<1x8x64xbf16> to vector<8x64xbf16>
    %6 = arith.extf %5 : vector<8x64xbf16> to vector<8x64xf32>
    %c0_7 = arith.constant 0 : index
    %c128 = arith.constant 128 : index
    %7 = vector.load %arg8[%c0_7, %c128] : memref<16x320xf32, #tpu.memory_space<vmem>>, vector<8x64xf32>
    tpu.vector_store %arg8[%c0_7, %c128], %6 {strides = array<i32>} : memref<16x320xf32, #tpu.memory_space<vmem>>, vector<8x64xf32>,
    %c0_8 = arith.constant 0 : index
    %c0_9 = arith.constant 0 : index
    %8 = vector.load %arg8[%c0_8, %c0_9] : memref<16x320xf32, #tpu.memory_space<vmem>>, vector<8x320xf32>
    %9 = vector.extract_strided_slice %8 {offsets = [0, 119], sizes = [8, 64], strides = [1, 1]} : vector<8x320xf32> to vector<8x64xf32>
    %10 = vector.broadcast %2 : vector<1x64xf32> to vector<8x64xf32>
    %11 = arith.mulf %9, %10 : vector<8x64xf32>
    %12 = vector.extract_strided_slice %8 {offsets = [0, 120], sizes = [8, 64], strides = [1, 1]} : vector<8x320xf32> to vector<8x64xf32>
    %13 = vector.extract_strided_slice %8 {offsets = [0, 121], sizes = [8, 64], strides = [1, 1]} : vector<8x320xf32> to vector<8x64xf32>
    %14 = vector.broadcast %3 : vector<1x64xf32> to vector<8x64xf32>
    %15 = arith.mulf %13, %14 : vector<8x64xf32>
    %16 = vector.extract_strided_slice %8 {offsets = [0, 127], sizes = [8, 64], strides = [1, 1]} : vector<8x320xf32> to vector<8x64xf32>
    %17 = vector.broadcast %2 : vector<1x64xf32> to vector<8x64xf32>
    %18 = arith.mulf %16, %17 : vector<8x64xf32>
    %19 = vector.extract_strided_slice %8 {offsets = [0, 128], sizes = [8, 64], strides = [1, 1]} : vector<8x320xf32> to vector<8x64xf32>
    %20 = vector.extract_strided_slice %8 {offsets = [0, 129], sizes = [8, 64], strides = [1, 1]} : vector<8x320xf32> to vector<8x64xf32>
    %21 = vector.broadcast %3 : vector<1x64xf32> to vector<8x64xf32>
    %22 = arith.mulf %20, %21 : vector<8x64xf32>
    %23 = vector.extract_strided_slice %8 {offsets = [0, 135], sizes = [8, 64], strides = [1, 1]} : vector<8x320xf32> to vector<8x64xf32>
    %24 = vector.broadcast %2 : vector<1x64xf32> to vector<8x64xf32>
    %25 = arith.mulf %23, %24 : vector<8x64xf32>
    %26 = vector.extract_strided_slice %8 {offsets = [0, 136], sizes = [8, 64], strides = [1, 1]} : vector<8x320xf32> to vector<8x64xf32>
    %27 = vector.extract_strided_slice %8 {offsets = [0, 137], sizes = [8, 64], strides = [1, 1]} : vector<8x320xf32> to vector<8x64xf32>
    %28 = vector.broadcast %3 : vector<1x64xf32> to vector<8x64xf32>
    %29 = arith.mulf %27, %28 : vector<8x64xf32>
    %30 = tpu.concatenate %11, %12, %15, %18, %19, %22, %25, %26, %29 in 0 : vector<8x64xf32>, vector<8x64xf32>, vector<8x64xf32>, vector<8x64xf32>, vector<8x64xf32>, vector<8x64xf32>, vector<8x64xf32>, vector<8x64xf32>, vector<8x64xf32> -> vector<72x64xf32>
    %31 = arith.truncf %30 : vector<72x64xf32> to vector<72x64xbf16>
    %c0_10 = arith.constant 0 : index
    %c0_11 = arith.constant 0 : index
    %32 = vector.load %arg3[%c0_10, %c0_11] : memref<16x72xbf16, #tpu.memory_space<vmem>>, vector<16x72xbf16>
    %cst_12 = arith.constant dense<0.000000e+00> : vector<16x64xf32>
    %33 = tpu.matmul %32, %31, %cst_12 {dimension_numbers = #tpu.dot_dimension_numbers<[1], [0], [0], [1], [0, 0, 1, 1], [], []>} : vector<16x72xbf16>, vector<72x64xbf16>, vector<16x64xf32> -> vector<16x64xf32>
    %c0_13 = arith.constant 0 : index
    %c0_14 = arith.constant 0 : index
    %34 = vector.load %arg5[%c0_13, %c0_14] : memref<16x1xf32, #tpu.memory_space<vmem>>, vector<16x1xf32>
    %35 = vector.broadcast %34 : vector<16x1xf32> to vector<16x64xf32>
    %36 = arith.addf %33, %35 : vector<16x64xf32>
    %cst_15 = arith.constant 2.000000e-01 : f32
    %37 = vector.broadcast %cst_15 : f32 to vector<16x64xf32>
    %38 = arith.mulf %37, %36 : vector<16x64xf32>
    %39 = arith.maximumf %36, %38 : vector<16x64xf32>
    %c0_16 = arith.constant 0 : index
    %c128_17 = arith.constant 128 : index
    %40 = vector.load %arg8[%c0_16, %c128_17] : memref<16x320xf32, #tpu.memory_space<vmem>>, vector<16x64xf32>
    tpu.vector_store %arg8[%c0_16, %c128_17], %39 {strides = array<i32>} : memref<16x320xf32, #tpu.memory_space<vmem>>, vector<16x64xf32>,
    %c0_18 = arith.constant 0 : index
    %c0_19 = arith.constant 0 : index
    %41 = vector.load %arg8[%c0_18, %c0_19] : memref<16x320xf32, #tpu.memory_space<vmem>>, vector<16x320xf32>
    %42 = vector.extract_strided_slice %41 {offsets = [0, 119], sizes = [16, 64], strides = [1, 1]} : vector<16x320xf32> to vector<16x64xf32>
    %43 = vector.broadcast %2 : vector<1x64xf32> to vector<16x64xf32>
    %44 = arith.mulf %42, %43 : vector<16x64xf32>
    %45 = vector.extract_strided_slice %41 {offsets = [0, 120], sizes = [16, 64], strides = [1, 1]} : vector<16x320xf32> to vector<16x64xf32>
    %46 = vector.extract_strided_slice %41 {offsets = [0, 121], sizes = [16, 64], strides = [1, 1]} : vector<16x320xf32> to vector<16x64xf32>
    %47 = vector.broadcast %3 : vector<1x64xf32> to vector<16x64xf32>
    %48 = arith.mulf %46, %47 : vector<16x64xf32>
    %49 = vector.extract_strided_slice %41 {offsets = [0, 127], sizes = [16, 64], strides = [1, 1]} : vector<16x320xf32> to vector<16x64xf32>
    %50 = vector.broadcast %2 : vector<1x64xf32> to vector<16x64xf32>
    %51 = arith.mulf %49, %50 : vector<16x64xf32>
    %52 = vector.extract_strided_slice %41 {offsets = [0, 128], sizes = [16, 64], strides = [1, 1]} : vector<16x320xf32> to vector<16x64xf32>
    %53 = vector.extract_strided_slice %41 {offsets = [0, 129], sizes = [16, 64], strides = [1, 1]} : vector<16x320xf32> to vector<16x64xf32>
    %54 = vector.broadcast %3 : vector<1x64xf32> to vector<16x64xf32>
    %55 = arith.mulf %53, %54 : vector<16x64xf32>
    %56 = vector.extract_strided_slice %41 {offsets = [0, 135], sizes = [16, 64], strides = [1, 1]} : vector<16x320xf32> to vector<16x64xf32>
    %57 = vector.broadcast %2 : vector<1x64xf32> to vector<16x64xf32>
    %58 = arith.mulf %56, %57 : vector<16x64xf32>
    %59 = vector.extract_strided_slice %41 {offsets = [0, 136], sizes = [16, 64], strides = [1, 1]} : vector<16x320xf32> to vector<16x64xf32>
    %60 = vector.extract_strided_slice %41 {offsets = [0, 137], sizes = [16, 64], strides = [1, 1]} : vector<16x320xf32> to vector<16x64xf32>
    %61 = vector.broadcast %3 : vector<1x64xf32> to vector<16x64xf32>
    %62 = arith.mulf %60, %61 : vector<16x64xf32>
    %63 = tpu.concatenate %44, %45, %48, %51, %52, %55, %58, %59, %62 in 0 : vector<16x64xf32>, vector<16x64xf32>, vector<16x64xf32>, vector<16x64xf32>, vector<16x64xf32>, vector<16x64xf32>, vector<16x64xf32>, vector<16x64xf32>, vector<16x64xf32> -> vector<144x64xf32>
    %64 = arith.truncf %63 : vector<144x64xf32> to vector<144x64xbf16>
    %c0_20 = arith.constant 0 : index
    %c0_21 = arith.constant 0 : index
    %65 = vector.load %arg4[%c0_20, %c0_21] : memref<16x144xbf16, #tpu.memory_space<vmem>>, vector<16x144xbf16>
    %cst_22 = arith.constant dense<0.000000e+00> : vector<16x64xf32>
    %66 = tpu.matmul %65, %64, %cst_22 {dimension_numbers = #tpu.dot_dimension_numbers<[1], [0], [0], [1], [0, 0, 1, 1], [], []>} : vector<16x144xbf16>, vector<144x64xbf16>, vector<16x64xf32> -> vector<16x64xf32>
    %c0_23 = arith.constant 0 : index
    %c0_24 = arith.constant 0 : index
    %67 = vector.load %arg6[%c0_23, %c0_24] : memref<16x1xf32, #tpu.memory_space<vmem>>, vector<16x1xf32>
    %68 = vector.broadcast %67 : vector<16x1xf32> to vector<16x64xf32>
    %69 = arith.addf %66, %68 : vector<16x64xf32>
    %cst_25 = arith.constant 2.000000e-01 : f32
    %70 = vector.broadcast %cst_25 : f32 to vector<16x64xf32>
    %71 = arith.mulf %70, %69 : vector<16x64xf32>
    %72 = arith.maximumf %69, %71 : vector<16x64xf32>
    %73 = arith.truncf %72 : vector<16x64xf32> to vector<16x64xbf16>
    %c0_26 = arith.constant 0 : index
    %c0_27 = arith.constant 0 : index
    %c0_28 = arith.constant 0 : index
    %74 = vector.load %arg7[%c0_26, %c0_27, %c0_28] : memref<1x16x64xbf16, #tpu.memory_space<vmem>>, vector<1x16x64xbf16>
    %75 = vector.shape_cast %74 : vector<1x16x64xbf16> to vector<16x64xbf16>
    %76 = vector.shape_cast %73 : vector<16x64xbf16> to vector<1x16x64xbf16>
    tpu.vector_store %arg7[%c0_26, %c0_27, %c0_28], %76 {strides = array<i32>} : memref<1x16x64xbf16, #tpu.memory_space<vmem>>, vector<1x16x64xbf16>,
    return
  }
  func.func @transform_0(%arg0: i32) -> (i32, i32) {
    %c0_i32 = arith.constant 0 : i32
    %c0_i32_0 = arith.constant 0 : i32
    %c0_i32_1 = arith.constant 0 : i32
    return %c0_i32, %c0_i32_0 : i32, i32
  }
  func.func @transform_1(%arg0: i32) -> (i32, i32, i32) {
    %c0_i32 = arith.constant 0 : i32
    %c0_i32_0 = arith.constant 0 : i32
    %c0_i32_1 = arith.constant 0 : i32
    return %arg0, %c0_i32, %c0_i32_0 : i32, i32, i32
  }
  func.func @transform_2(%arg0: i32) -> (i32, i32) {
    %c0_i32 = arith.constant 0 : i32
    %c0_i32_0 = arith.constant 0 : i32
    %c0_i32_1 = arith.constant 0 : i32
    return %c0_i32, %c0_i32_0 : i32, i32
  }
  func.func @transform_3(%arg0: i32) -> (i32, i32) {
    %c0_i32 = arith.constant 0 : i32
    %c0_i32_0 = arith.constant 0 : i32
    %c0_i32_1 = arith.constant 0 : i32
    return %c0_i32, %c0_i32_0 : i32, i32
  }
  func.func @transform_4(%arg0: i32) -> (i32, i32) {
    %c0_i32 = arith.constant 0 : i32
    %c0_i32_0 = arith.constant 0 : i32
    %c0_i32_1 = arith.constant 0 : i32
    return %c0_i32, %c0_i32_0 : i32, i32
  }
  func.func @transform_5(%arg0: i32) -> (i32, i32) {
    %c0_i32 = arith.constant 0 : i32
    %c0_i32_0 = arith.constant 0 : i32
    %c0_i32_1 = arith.constant 0 : i32
    return %c0_i32, %c0_i32_0 : i32, i32
  }
  func.func @transform_6(%arg0: i32) -> (i32, i32, i32) {
    %c0_i32 = arith.constant 0 : i32
    %c0_i32_0 = arith.constant 0 : i32
    %c0_i32_1 = arith.constant 0 : i32
    return %arg0, %c0_i32, %c0_i32_0 : i32, i32, i32
  }
}

module attributes {stable_mosaic.version = 11 : i64} {
  func.func @_conv_stack_kernel(%arg0: i32, %arg1: memref<2x16xf32, #tpu.memory_space<vmem>>, %arg2: memref<1x16x16xbf16, #tpu.memory_space<vmem>>, %arg3: memref<32x144xbf16, #tpu.memory_space<vmem>>, %arg4: memref<32x288xbf16, #tpu.memory_space<vmem>>, %arg5: memref<32x1xf32, #tpu.memory_space<vmem>>, %arg6: memref<32x1xf32, #tpu.memory_space<vmem>>, %arg7: memref<1x32x16xbf16, #tpu.memory_space<vmem>>, %arg8: memref<32x272xf32, #tpu.memory_space<vmem>>) attributes {dimension_semantics = [#tpu.dimension_semantics<parallel>], iteration_bounds = array<i64: 2>, scalar_prefetch = 0 : i64, scratch_operands = 1 : i64, tpu.core_type = #tpu.core_type<tc>, window_params = [{pipeline_mode = #tpu.pipeline_mode<synchronous>, transform_indices = @transform_0, window_bounds = array<i64: 2, 16>}, {transform_indices = @transform_1, window_bounds = array<i64: 1, 16, 16>}, {pipeline_mode = #tpu.pipeline_mode<synchronous>, transform_indices = @transform_2, window_bounds = array<i64: 32, 144>}, {pipeline_mode = #tpu.pipeline_mode<synchronous>, transform_indices = @transform_3, window_bounds = array<i64: 32, 288>}, {pipeline_mode = #tpu.pipeline_mode<synchronous>, transform_indices = @transform_4, window_bounds = array<i64: 32, 1>}, {pipeline_mode = #tpu.pipeline_mode<synchronous>, transform_indices = @transform_5, window_bounds = array<i64: 32, 1>}, {transform_indices = @transform_6, window_bounds = array<i64: 1, 32, 16>}]} {
    %cst = arith.constant 0.000000e+00 : f32
    %0 = vector.broadcast %cst : f32 to vector<32x272xf32>
    %c0 = arith.constant 0 : index
    %c0_0 = arith.constant 0 : index
    %1 = vector.load %arg8[%c0, %c0_0] : memref<32x272xf32, #tpu.memory_space<vmem>>, vector<32x272xf32>
    tpu.vector_store %arg8[%c0, %c0_0], %0 {strides = array<i32>} : memref<32x272xf32, #tpu.memory_space<vmem>>, vector<32x272xf32>,
    %c0_1 = arith.constant 0 : index
    %c0_2 = arith.constant 0 : index
    %2 = vector.load %arg1[%c0_1, %c0_2] : memref<2x16xf32, #tpu.memory_space<vmem>>, vector<1x16xf32>
    %c1 = arith.constant 1 : index
    %c0_3 = arith.constant 0 : index
    %3 = vector.load %arg1[%c1, %c0_3] : memref<2x16xf32, #tpu.memory_space<vmem>>, vector<1x16xf32>
    %c0_4 = arith.constant 0 : index
    %c0_5 = arith.constant 0 : index
    %c0_6 = arith.constant 0 : index
    %4 = vector.load %arg2[%c0_4, %c0_5, %c0_6] : memref<1x16x16xbf16, #tpu.memory_space<vmem>>, vector<1x16x16xbf16>
    %5 = vector.shape_cast %4 : vector<1x16x16xbf16> to vector<16x16xbf16>
    %6 = arith.extf %5 : vector<16x16xbf16> to vector<16x16xf32>
    %c0_7 = arith.constant 0 : index
    %c128 = arith.constant 128 : index
    %7 = vector.load %arg8[%c0_7, %c128] : memref<32x272xf32, #tpu.memory_space<vmem>>, vector<16x16xf32>
    tpu.vector_store %arg8[%c0_7, %c128], %6 {strides = array<i32>} : memref<32x272xf32, #tpu.memory_space<vmem>>, vector<16x16xf32>,
    %c0_8 = arith.constant 0 : index
    %c0_9 = arith.constant 0 : index
    %8 = vector.load %arg8[%c0_8, %c0_9] : memref<32x272xf32, #tpu.memory_space<vmem>>, vector<16x272xf32>
    %9 = vector.extract_strided_slice %8 {offsets = [0, 123], sizes = [16, 16], strides = [1, 1]} : vector<16x272xf32> to vector<16x16xf32>
    %10 = vector.broadcast %2 : vector<1x16xf32> to vector<16x16xf32>
    %11 = arith.mulf %9, %10 : vector<16x16xf32>
    %12 = vector.extract_strided_slice %8 {offsets = [0, 124], sizes = [16, 16], strides = [1, 1]} : vector<16x272xf32> to vector<16x16xf32>
    %13 = vector.extract_strided_slice %8 {offsets = [0, 125], sizes = [16, 16], strides = [1, 1]} : vector<16x272xf32> to vector<16x16xf32>
    %14 = vector.broadcast %3 : vector<1x16xf32> to vector<16x16xf32>
    %15 = arith.mulf %13, %14 : vector<16x16xf32>
    %16 = vector.extract_strided_slice %8 {offsets = [0, 127], sizes = [16, 16], strides = [1, 1]} : vector<16x272xf32> to vector<16x16xf32>
    %17 = vector.broadcast %2 : vector<1x16xf32> to vector<16x16xf32>
    %18 = arith.mulf %16, %17 : vector<16x16xf32>
    %19 = vector.extract_strided_slice %8 {offsets = [0, 128], sizes = [16, 16], strides = [1, 1]} : vector<16x272xf32> to vector<16x16xf32>
    %20 = vector.extract_strided_slice %8 {offsets = [0, 129], sizes = [16, 16], strides = [1, 1]} : vector<16x272xf32> to vector<16x16xf32>
    %21 = vector.broadcast %3 : vector<1x16xf32> to vector<16x16xf32>
    %22 = arith.mulf %20, %21 : vector<16x16xf32>
    %23 = vector.extract_strided_slice %8 {offsets = [0, 131], sizes = [16, 16], strides = [1, 1]} : vector<16x272xf32> to vector<16x16xf32>
    %24 = vector.broadcast %2 : vector<1x16xf32> to vector<16x16xf32>
    %25 = arith.mulf %23, %24 : vector<16x16xf32>
    %26 = vector.extract_strided_slice %8 {offsets = [0, 132], sizes = [16, 16], strides = [1, 1]} : vector<16x272xf32> to vector<16x16xf32>
    %27 = vector.extract_strided_slice %8 {offsets = [0, 133], sizes = [16, 16], strides = [1, 1]} : vector<16x272xf32> to vector<16x16xf32>
    %28 = vector.broadcast %3 : vector<1x16xf32> to vector<16x16xf32>
    %29 = arith.mulf %27, %28 : vector<16x16xf32>
    %30 = tpu.concatenate %11, %12, %15, %18, %19, %22, %25, %26, %29 in 0 : vector<16x16xf32>, vector<16x16xf32>, vector<16x16xf32>, vector<16x16xf32>, vector<16x16xf32>, vector<16x16xf32>, vector<16x16xf32>, vector<16x16xf32>, vector<16x16xf32> -> vector<144x16xf32>
    %31 = arith.truncf %30 : vector<144x16xf32> to vector<144x16xbf16>
    %c0_10 = arith.constant 0 : index
    %c0_11 = arith.constant 0 : index
    %32 = vector.load %arg3[%c0_10, %c0_11] : memref<32x144xbf16, #tpu.memory_space<vmem>>, vector<32x144xbf16>
    %cst_12 = arith.constant dense<0.000000e+00> : vector<32x16xf32>
    %33 = tpu.matmul %32, %31, %cst_12 {dimension_numbers = #tpu.dot_dimension_numbers<[1], [0], [0], [1], [0, 0, 1, 1], [], []>} : vector<32x144xbf16>, vector<144x16xbf16>, vector<32x16xf32> -> vector<32x16xf32>
    %c0_13 = arith.constant 0 : index
    %c0_14 = arith.constant 0 : index
    %34 = vector.load %arg5[%c0_13, %c0_14] : memref<32x1xf32, #tpu.memory_space<vmem>>, vector<32x1xf32>
    %35 = vector.broadcast %34 : vector<32x1xf32> to vector<32x16xf32>
    %36 = arith.addf %33, %35 : vector<32x16xf32>
    %cst_15 = arith.constant 2.000000e-01 : f32
    %37 = vector.broadcast %cst_15 : f32 to vector<32x16xf32>
    %38 = arith.mulf %37, %36 : vector<32x16xf32>
    %39 = arith.maximumf %36, %38 : vector<32x16xf32>
    %c0_16 = arith.constant 0 : index
    %c128_17 = arith.constant 128 : index
    %40 = vector.load %arg8[%c0_16, %c128_17] : memref<32x272xf32, #tpu.memory_space<vmem>>, vector<32x16xf32>
    tpu.vector_store %arg8[%c0_16, %c128_17], %39 {strides = array<i32>} : memref<32x272xf32, #tpu.memory_space<vmem>>, vector<32x16xf32>,
    %c0_18 = arith.constant 0 : index
    %c0_19 = arith.constant 0 : index
    %41 = vector.load %arg8[%c0_18, %c0_19] : memref<32x272xf32, #tpu.memory_space<vmem>>, vector<32x272xf32>
    %42 = vector.extract_strided_slice %41 {offsets = [0, 123], sizes = [32, 16], strides = [1, 1]} : vector<32x272xf32> to vector<32x16xf32>
    %43 = vector.broadcast %2 : vector<1x16xf32> to vector<32x16xf32>
    %44 = arith.mulf %42, %43 : vector<32x16xf32>
    %45 = vector.extract_strided_slice %41 {offsets = [0, 124], sizes = [32, 16], strides = [1, 1]} : vector<32x272xf32> to vector<32x16xf32>
    %46 = vector.extract_strided_slice %41 {offsets = [0, 125], sizes = [32, 16], strides = [1, 1]} : vector<32x272xf32> to vector<32x16xf32>
    %47 = vector.broadcast %3 : vector<1x16xf32> to vector<32x16xf32>
    %48 = arith.mulf %46, %47 : vector<32x16xf32>
    %49 = vector.extract_strided_slice %41 {offsets = [0, 127], sizes = [32, 16], strides = [1, 1]} : vector<32x272xf32> to vector<32x16xf32>
    %50 = vector.broadcast %2 : vector<1x16xf32> to vector<32x16xf32>
    %51 = arith.mulf %49, %50 : vector<32x16xf32>
    %52 = vector.extract_strided_slice %41 {offsets = [0, 128], sizes = [32, 16], strides = [1, 1]} : vector<32x272xf32> to vector<32x16xf32>
    %53 = vector.extract_strided_slice %41 {offsets = [0, 129], sizes = [32, 16], strides = [1, 1]} : vector<32x272xf32> to vector<32x16xf32>
    %54 = vector.broadcast %3 : vector<1x16xf32> to vector<32x16xf32>
    %55 = arith.mulf %53, %54 : vector<32x16xf32>
    %56 = vector.extract_strided_slice %41 {offsets = [0, 131], sizes = [32, 16], strides = [1, 1]} : vector<32x272xf32> to vector<32x16xf32>
    %57 = vector.broadcast %2 : vector<1x16xf32> to vector<32x16xf32>
    %58 = arith.mulf %56, %57 : vector<32x16xf32>
    %59 = vector.extract_strided_slice %41 {offsets = [0, 132], sizes = [32, 16], strides = [1, 1]} : vector<32x272xf32> to vector<32x16xf32>
    %60 = vector.extract_strided_slice %41 {offsets = [0, 133], sizes = [32, 16], strides = [1, 1]} : vector<32x272xf32> to vector<32x16xf32>
    %61 = vector.broadcast %3 : vector<1x16xf32> to vector<32x16xf32>
    %62 = arith.mulf %60, %61 : vector<32x16xf32>
    %63 = tpu.concatenate %44, %45, %48, %51, %52, %55, %58, %59, %62 in 0 : vector<32x16xf32>, vector<32x16xf32>, vector<32x16xf32>, vector<32x16xf32>, vector<32x16xf32>, vector<32x16xf32>, vector<32x16xf32>, vector<32x16xf32>, vector<32x16xf32> -> vector<288x16xf32>
    %64 = arith.truncf %63 : vector<288x16xf32> to vector<288x16xbf16>
    %c0_20 = arith.constant 0 : index
    %c0_21 = arith.constant 0 : index
    %65 = vector.load %arg4[%c0_20, %c0_21] : memref<32x288xbf16, #tpu.memory_space<vmem>>, vector<32x288xbf16>
    %cst_22 = arith.constant dense<0.000000e+00> : vector<32x16xf32>
    %66 = tpu.matmul %65, %64, %cst_22 {dimension_numbers = #tpu.dot_dimension_numbers<[1], [0], [0], [1], [0, 0, 1, 1], [], []>} : vector<32x288xbf16>, vector<288x16xbf16>, vector<32x16xf32> -> vector<32x16xf32>
    %c0_23 = arith.constant 0 : index
    %c0_24 = arith.constant 0 : index
    %67 = vector.load %arg6[%c0_23, %c0_24] : memref<32x1xf32, #tpu.memory_space<vmem>>, vector<32x1xf32>
    %68 = vector.broadcast %67 : vector<32x1xf32> to vector<32x16xf32>
    %69 = arith.addf %66, %68 : vector<32x16xf32>
    %cst_25 = arith.constant 2.000000e-01 : f32
    %70 = vector.broadcast %cst_25 : f32 to vector<32x16xf32>
    %71 = arith.mulf %70, %69 : vector<32x16xf32>
    %72 = arith.maximumf %69, %71 : vector<32x16xf32>
    %73 = arith.truncf %72 : vector<32x16xf32> to vector<32x16xbf16>
    %c0_26 = arith.constant 0 : index
    %c0_27 = arith.constant 0 : index
    %c0_28 = arith.constant 0 : index
    %74 = vector.load %arg7[%c0_26, %c0_27, %c0_28] : memref<1x32x16xbf16, #tpu.memory_space<vmem>>, vector<1x32x16xbf16>
    %75 = vector.shape_cast %74 : vector<1x32x16xbf16> to vector<32x16xbf16>
    %76 = vector.shape_cast %73 : vector<32x16xbf16> to vector<1x32x16xbf16>
    tpu.vector_store %arg7[%c0_26, %c0_27, %c0_28], %76 {strides = array<i32>} : memref<1x32x16xbf16, #tpu.memory_space<vmem>>, vector<1x32x16xbf16>,
    return
  }
  func.func @transform_0(%arg0: i32) -> (i32, i32) {
    %c0_i32 = arith.constant 0 : i32
    %c0_i32_0 = arith.constant 0 : i32
    %c0_i32_1 = arith.constant 0 : i32
    return %c0_i32, %c0_i32_0 : i32, i32
  }
  func.func @transform_1(%arg0: i32) -> (i32, i32, i32) {
    %c0_i32 = arith.constant 0 : i32
    %c0_i32_0 = arith.constant 0 : i32
    %c0_i32_1 = arith.constant 0 : i32
    return %arg0, %c0_i32, %c0_i32_0 : i32, i32, i32
  }
  func.func @transform_2(%arg0: i32) -> (i32, i32) {
    %c0_i32 = arith.constant 0 : i32
    %c0_i32_0 = arith.constant 0 : i32
    %c0_i32_1 = arith.constant 0 : i32
    return %c0_i32, %c0_i32_0 : i32, i32
  }
  func.func @transform_3(%arg0: i32) -> (i32, i32) {
    %c0_i32 = arith.constant 0 : i32
    %c0_i32_0 = arith.constant 0 : i32
    %c0_i32_1 = arith.constant 0 : i32
    return %c0_i32, %c0_i32_0 : i32, i32
  }
  func.func @transform_4(%arg0: i32) -> (i32, i32) {
    %c0_i32 = arith.constant 0 : i32
    %c0_i32_0 = arith.constant 0 : i32
    %c0_i32_1 = arith.constant 0 : i32
    return %c0_i32, %c0_i32_0 : i32, i32
  }
  func.func @transform_5(%arg0: i32) -> (i32, i32) {
    %c0_i32 = arith.constant 0 : i32
    %c0_i32_0 = arith.constant 0 : i32
    %c0_i32_1 = arith.constant 0 : i32
    return %c0_i32, %c0_i32_0 : i32, i32
  }
  func.func @transform_6(%arg0: i32) -> (i32, i32, i32) {
    %c0_i32 = arith.constant 0 : i32
    %c0_i32_0 = arith.constant 0 : i32
    %c0_i32_1 = arith.constant 0 : i32
    return %arg0, %c0_i32, %c0_i32_0 : i32, i32, i32
  }
}

module attributes {stable_mosaic.version = 11 : i64} {
  func.func @_channel_matmul_kernel(%arg0: i32, %arg1: memref<1x32x16xbf16, #tpu.memory_space<vmem>>, %arg2: memref<64x32xbf16, #tpu.memory_space<vmem>>, %arg3: memref<64x1xf32, #tpu.memory_space<vmem>>, %arg4: memref<1x64x16xbf16, #tpu.memory_space<vmem>>) attributes {dimension_semantics = [#tpu.dimension_semantics<parallel>], iteration_bounds = array<i64: 2>, scalar_prefetch = 0 : i64, scratch_operands = 0 : i64, tpu.core_type = #tpu.core_type<tc>, window_params = [{transform_indices = @transform_0, window_bounds = array<i64: 1, 32, 16>}, {pipeline_mode = #tpu.pipeline_mode<synchronous>, transform_indices = @transform_1, window_bounds = array<i64: 64, 32>}, {pipeline_mode = #tpu.pipeline_mode<synchronous>, transform_indices = @transform_2, window_bounds = array<i64: 64, 1>}, {transform_indices = @transform_3, window_bounds = array<i64: 1, 64, 16>}]} {
    %c0 = arith.constant 0 : index
    %c0_0 = arith.constant 0 : index
    %0 = vector.load %arg2[%c0, %c0_0] : memref<64x32xbf16, #tpu.memory_space<vmem>>, vector<64x32xbf16>
    %c0_1 = arith.constant 0 : index
    %c0_2 = arith.constant 0 : index
    %c0_3 = arith.constant 0 : index
    %1 = vector.load %arg1[%c0_1, %c0_2, %c0_3] : memref<1x32x16xbf16, #tpu.memory_space<vmem>>, vector<1x32x16xbf16>
    %2 = vector.shape_cast %1 : vector<1x32x16xbf16> to vector<32x16xbf16>
    %cst = arith.constant dense<0.000000e+00> : vector<64x16xf32>
    %3 = tpu.matmul %0, %2, %cst {dimension_numbers = #tpu.dot_dimension_numbers<[1], [0], [0], [1], [0, 0, 1, 1], [], []>} : vector<64x32xbf16>, vector<32x16xbf16>, vector<64x16xf32> -> vector<64x16xf32>
    %c0_4 = arith.constant 0 : index
    %c0_5 = arith.constant 0 : index
    %4 = vector.load %arg3[%c0_4, %c0_5] : memref<64x1xf32, #tpu.memory_space<vmem>>, vector<64x1xf32>
    %5 = vector.broadcast %4 : vector<64x1xf32> to vector<64x16xf32>
    %6 = arith.addf %3, %5 : vector<64x16xf32>
    %7 = arith.truncf %6 : vector<64x16xf32> to vector<64x16xbf16>
    %c0_6 = arith.constant 0 : index
    %c0_7 = arith.constant 0 : index
    %c0_8 = arith.constant 0 : index
    %8 = vector.load %arg4[%c0_6, %c0_7, %c0_8] : memref<1x64x16xbf16, #tpu.memory_space<vmem>>, vector<1x64x16xbf16>
    %9 = vector.shape_cast %8 : vector<1x64x16xbf16> to vector<64x16xbf16>
    %10 = vector.shape_cast %7 : vector<64x16xbf16> to vector<1x64x16xbf16>
    tpu.vector_store %arg4[%c0_6, %c0_7, %c0_8], %10 {strides = array<i32>} : memref<1x64x16xbf16, #tpu.memory_space<vmem>>, vector<1x64x16xbf16>,
    return
  }
  func.func @transform_0(%arg0: i32) -> (i32, i32, i32) {
    %c0_i32 = arith.constant 0 : i32
    %c0_i32_0 = arith.constant 0 : i32
    %c0_i32_1 = arith.constant 0 : i32
    return %arg0, %c0_i32, %c0_i32_0 : i32, i32, i32
  }
  func.func @transform_1(%arg0: i32) -> (i32, i32) {
    %c0_i32 = arith.constant 0 : i32
    %c0_i32_0 = arith.constant 0 : i32
    %c0_i32_1 = arith.constant 0 : i32
    return %c0_i32, %c0_i32_0 : i32, i32
  }
  func.func @transform_2(%arg0: i32) -> (i32, i32) {
    %c0_i32 = arith.constant 0 : i32
    %c0_i32_0 = arith.constant 0 : i32
    %c0_i32_1 = arith.constant 0 : i32
    return %c0_i32, %c0_i32_0 : i32, i32
  }
  func.func @transform_3(%arg0: i32) -> (i32, i32, i32) {
    %c0_i32 = arith.constant 0 : i32
    %c0_i32_0 = arith.constant 0 : i32
    %c0_i32_1 = arith.constant 0 : i32
    return %arg0, %c0_i32, %c0_i32_0 : i32, i32, i32
  }
}

module attributes {stable_mosaic.version = 11 : i64} {
  func.func @_conv_stack_kernel(%arg0: i32, %arg1: memref<2x64xf32, #tpu.memory_space<vmem>>, %arg2: memref<1x16x64xbf16, #tpu.memory_space<vmem>>, %arg3: memref<1x16x64xbf16, #tpu.memory_space<vmem>>, %arg4: memref<16x288xbf16, #tpu.memory_space<vmem>>, %arg5: memref<16x144xbf16, #tpu.memory_space<vmem>>, %arg6: memref<16x1xf32, #tpu.memory_space<vmem>>, %arg7: memref<16x1xf32, #tpu.memory_space<vmem>>, %arg8: memref<1x16x64xbf16, #tpu.memory_space<vmem>>, %arg9: memref<32x320xf32, #tpu.memory_space<vmem>>) attributes {dimension_semantics = [#tpu.dimension_semantics<parallel>], iteration_bounds = array<i64: 2>, scalar_prefetch = 0 : i64, scratch_operands = 1 : i64, tpu.core_type = #tpu.core_type<tc>, window_params = [{pipeline_mode = #tpu.pipeline_mode<synchronous>, transform_indices = @transform_0, window_bounds = array<i64: 2, 64>}, {transform_indices = @transform_1, window_bounds = array<i64: 1, 16, 64>}, {transform_indices = @transform_2, window_bounds = array<i64: 1, 16, 64>}, {pipeline_mode = #tpu.pipeline_mode<synchronous>, transform_indices = @transform_3, window_bounds = array<i64: 16, 288>}, {pipeline_mode = #tpu.pipeline_mode<synchronous>, transform_indices = @transform_4, window_bounds = array<i64: 16, 144>}, {pipeline_mode = #tpu.pipeline_mode<synchronous>, transform_indices = @transform_5, window_bounds = array<i64: 16, 1>}, {pipeline_mode = #tpu.pipeline_mode<synchronous>, transform_indices = @transform_6, window_bounds = array<i64: 16, 1>}, {transform_indices = @transform_7, window_bounds = array<i64: 1, 16, 64>}]} {
    %cst = arith.constant 0.000000e+00 : f32
    %0 = vector.broadcast %cst : f32 to vector<32x320xf32>
    %c0 = arith.constant 0 : index
    %c0_0 = arith.constant 0 : index
    %1 = vector.load %arg9[%c0, %c0_0] : memref<32x320xf32, #tpu.memory_space<vmem>>, vector<32x320xf32>
    tpu.vector_store %arg9[%c0, %c0_0], %0 {strides = array<i32>} : memref<32x320xf32, #tpu.memory_space<vmem>>, vector<32x320xf32>,
    %c0_1 = arith.constant 0 : index
    %c0_2 = arith.constant 0 : index
    %2 = vector.load %arg1[%c0_1, %c0_2] : memref<2x64xf32, #tpu.memory_space<vmem>>, vector<1x64xf32>
    %c1 = arith.constant 1 : index
    %c0_3 = arith.constant 0 : index
    %3 = vector.load %arg1[%c1, %c0_3] : memref<2x64xf32, #tpu.memory_space<vmem>>, vector<1x64xf32>
    %c0_4 = arith.constant 0 : index
    %c0_5 = arith.constant 0 : index
    %c0_6 = arith.constant 0 : index
    %4 = vector.load %arg2[%c0_4, %c0_5, %c0_6] : memref<1x16x64xbf16, #tpu.memory_space<vmem>>, vector<1x16x64xbf16>
    %5 = vector.shape_cast %4 : vector<1x16x64xbf16> to vector<16x64xbf16>
    %6 = arith.extf %5 : vector<16x64xbf16> to vector<16x64xf32>
    %c0_7 = arith.constant 0 : index
    %c128 = arith.constant 128 : index
    %7 = vector.load %arg9[%c0_7, %c128] : memref<32x320xf32, #tpu.memory_space<vmem>>, vector<16x64xf32>
    tpu.vector_store %arg9[%c0_7, %c128], %6 {strides = array<i32>} : memref<32x320xf32, #tpu.memory_space<vmem>>, vector<16x64xf32>,
    %c0_8 = arith.constant 0 : index
    %c0_9 = arith.constant 0 : index
    %c0_10 = arith.constant 0 : index
    %8 = vector.load %arg3[%c0_8, %c0_9, %c0_10] : memref<1x16x64xbf16, #tpu.memory_space<vmem>>, vector<1x16x64xbf16>
    %9 = vector.shape_cast %8 : vector<1x16x64xbf16> to vector<16x64xbf16>
    %10 = arith.extf %9 : vector<16x64xbf16> to vector<16x64xf32>
    %c16 = arith.constant 16 : index
    %c128_11 = arith.constant 128 : index
    %11 = vector.load %arg9[%c16, %c128_11] : memref<32x320xf32, #tpu.memory_space<vmem>>, vector<16x64xf32>
    tpu.vector_store %arg9[%c16, %c128_11], %10 {strides = array<i32>} : memref<32x320xf32, #tpu.memory_space<vmem>>, vector<16x64xf32>,
    %c0_12 = arith.constant 0 : index
    %c0_13 = arith.constant 0 : index
    %12 = vector.load %arg9[%c0_12, %c0_13] : memref<32x320xf32, #tpu.memory_space<vmem>>, vector<32x320xf32>
    %13 = vector.extract_strided_slice %12 {offsets = [0, 119], sizes = [32, 64], strides = [1, 1]} : vector<32x320xf32> to vector<32x64xf32>
    %14 = vector.broadcast %2 : vector<1x64xf32> to vector<32x64xf32>
    %15 = arith.mulf %13, %14 : vector<32x64xf32>
    %16 = vector.extract_strided_slice %12 {offsets = [0, 120], sizes = [32, 64], strides = [1, 1]} : vector<32x320xf32> to vector<32x64xf32>
    %17 = vector.extract_strided_slice %12 {offsets = [0, 121], sizes = [32, 64], strides = [1, 1]} : vector<32x320xf32> to vector<32x64xf32>
    %18 = vector.broadcast %3 : vector<1x64xf32> to vector<32x64xf32>
    %19 = arith.mulf %17, %18 : vector<32x64xf32>
    %20 = vector.extract_strided_slice %12 {offsets = [0, 127], sizes = [32, 64], strides = [1, 1]} : vector<32x320xf32> to vector<32x64xf32>
    %21 = vector.broadcast %2 : vector<1x64xf32> to vector<32x64xf32>
    %22 = arith.mulf %20, %21 : vector<32x64xf32>
    %23 = vector.extract_strided_slice %12 {offsets = [0, 128], sizes = [32, 64], strides = [1, 1]} : vector<32x320xf32> to vector<32x64xf32>
    %24 = vector.extract_strided_slice %12 {offsets = [0, 129], sizes = [32, 64], strides = [1, 1]} : vector<32x320xf32> to vector<32x64xf32>
    %25 = vector.broadcast %3 : vector<1x64xf32> to vector<32x64xf32>
    %26 = arith.mulf %24, %25 : vector<32x64xf32>
    %27 = vector.extract_strided_slice %12 {offsets = [0, 135], sizes = [32, 64], strides = [1, 1]} : vector<32x320xf32> to vector<32x64xf32>
    %28 = vector.broadcast %2 : vector<1x64xf32> to vector<32x64xf32>
    %29 = arith.mulf %27, %28 : vector<32x64xf32>
    %30 = vector.extract_strided_slice %12 {offsets = [0, 136], sizes = [32, 64], strides = [1, 1]} : vector<32x320xf32> to vector<32x64xf32>
    %31 = vector.extract_strided_slice %12 {offsets = [0, 137], sizes = [32, 64], strides = [1, 1]} : vector<32x320xf32> to vector<32x64xf32>
    %32 = vector.broadcast %3 : vector<1x64xf32> to vector<32x64xf32>
    %33 = arith.mulf %31, %32 : vector<32x64xf32>
    %34 = tpu.concatenate %15, %16, %19, %22, %23, %26, %29, %30, %33 in 0 : vector<32x64xf32>, vector<32x64xf32>, vector<32x64xf32>, vector<32x64xf32>, vector<32x64xf32>, vector<32x64xf32>, vector<32x64xf32>, vector<32x64xf32>, vector<32x64xf32> -> vector<288x64xf32>
    %35 = arith.truncf %34 : vector<288x64xf32> to vector<288x64xbf16>
    %c0_14 = arith.constant 0 : index
    %c0_15 = arith.constant 0 : index
    %36 = vector.load %arg4[%c0_14, %c0_15] : memref<16x288xbf16, #tpu.memory_space<vmem>>, vector<16x288xbf16>
    %cst_16 = arith.constant dense<0.000000e+00> : vector<16x64xf32>
    %37 = tpu.matmul %36, %35, %cst_16 {dimension_numbers = #tpu.dot_dimension_numbers<[1], [0], [0], [1], [0, 0, 1, 1], [], []>} : vector<16x288xbf16>, vector<288x64xbf16>, vector<16x64xf32> -> vector<16x64xf32>
    %c0_17 = arith.constant 0 : index
    %c0_18 = arith.constant 0 : index
    %38 = vector.load %arg6[%c0_17, %c0_18] : memref<16x1xf32, #tpu.memory_space<vmem>>, vector<16x1xf32>
    %39 = vector.broadcast %38 : vector<16x1xf32> to vector<16x64xf32>
    %40 = arith.addf %37, %39 : vector<16x64xf32>
    %cst_19 = arith.constant 2.000000e-01 : f32
    %41 = vector.broadcast %cst_19 : f32 to vector<16x64xf32>
    %42 = arith.mulf %41, %40 : vector<16x64xf32>
    %43 = arith.maximumf %40, %42 : vector<16x64xf32>
    %c0_20 = arith.constant 0 : index
    %c128_21 = arith.constant 128 : index
    %44 = vector.load %arg9[%c0_20, %c128_21] : memref<32x320xf32, #tpu.memory_space<vmem>>, vector<16x64xf32>
    tpu.vector_store %arg9[%c0_20, %c128_21], %43 {strides = array<i32>} : memref<32x320xf32, #tpu.memory_space<vmem>>, vector<16x64xf32>,
    %c0_22 = arith.constant 0 : index
    %c0_23 = arith.constant 0 : index
    %45 = vector.load %arg9[%c0_22, %c0_23] : memref<32x320xf32, #tpu.memory_space<vmem>>, vector<16x320xf32>
    %46 = vector.extract_strided_slice %45 {offsets = [0, 119], sizes = [16, 64], strides = [1, 1]} : vector<16x320xf32> to vector<16x64xf32>
    %47 = vector.broadcast %2 : vector<1x64xf32> to vector<16x64xf32>
    %48 = arith.mulf %46, %47 : vector<16x64xf32>
    %49 = vector.extract_strided_slice %45 {offsets = [0, 120], sizes = [16, 64], strides = [1, 1]} : vector<16x320xf32> to vector<16x64xf32>
    %50 = vector.extract_strided_slice %45 {offsets = [0, 121], sizes = [16, 64], strides = [1, 1]} : vector<16x320xf32> to vector<16x64xf32>
    %51 = vector.broadcast %3 : vector<1x64xf32> to vector<16x64xf32>
    %52 = arith.mulf %50, %51 : vector<16x64xf32>
    %53 = vector.extract_strided_slice %45 {offsets = [0, 127], sizes = [16, 64], strides = [1, 1]} : vector<16x320xf32> to vector<16x64xf32>
    %54 = vector.broadcast %2 : vector<1x64xf32> to vector<16x64xf32>
    %55 = arith.mulf %53, %54 : vector<16x64xf32>
    %56 = vector.extract_strided_slice %45 {offsets = [0, 128], sizes = [16, 64], strides = [1, 1]} : vector<16x320xf32> to vector<16x64xf32>
    %57 = vector.extract_strided_slice %45 {offsets = [0, 129], sizes = [16, 64], strides = [1, 1]} : vector<16x320xf32> to vector<16x64xf32>
    %58 = vector.broadcast %3 : vector<1x64xf32> to vector<16x64xf32>
    %59 = arith.mulf %57, %58 : vector<16x64xf32>
    %60 = vector.extract_strided_slice %45 {offsets = [0, 135], sizes = [16, 64], strides = [1, 1]} : vector<16x320xf32> to vector<16x64xf32>
    %61 = vector.broadcast %2 : vector<1x64xf32> to vector<16x64xf32>
    %62 = arith.mulf %60, %61 : vector<16x64xf32>
    %63 = vector.extract_strided_slice %45 {offsets = [0, 136], sizes = [16, 64], strides = [1, 1]} : vector<16x320xf32> to vector<16x64xf32>
    %64 = vector.extract_strided_slice %45 {offsets = [0, 137], sizes = [16, 64], strides = [1, 1]} : vector<16x320xf32> to vector<16x64xf32>
    %65 = vector.broadcast %3 : vector<1x64xf32> to vector<16x64xf32>
    %66 = arith.mulf %64, %65 : vector<16x64xf32>
    %67 = tpu.concatenate %48, %49, %52, %55, %56, %59, %62, %63, %66 in 0 : vector<16x64xf32>, vector<16x64xf32>, vector<16x64xf32>, vector<16x64xf32>, vector<16x64xf32>, vector<16x64xf32>, vector<16x64xf32>, vector<16x64xf32>, vector<16x64xf32> -> vector<144x64xf32>
    %68 = arith.truncf %67 : vector<144x64xf32> to vector<144x64xbf16>
    %c0_24 = arith.constant 0 : index
    %c0_25 = arith.constant 0 : index
    %69 = vector.load %arg5[%c0_24, %c0_25] : memref<16x144xbf16, #tpu.memory_space<vmem>>, vector<16x144xbf16>
    %cst_26 = arith.constant dense<0.000000e+00> : vector<16x64xf32>
    %70 = tpu.matmul %69, %68, %cst_26 {dimension_numbers = #tpu.dot_dimension_numbers<[1], [0], [0], [1], [0, 0, 1, 1], [], []>} : vector<16x144xbf16>, vector<144x64xbf16>, vector<16x64xf32> -> vector<16x64xf32>
    %c0_27 = arith.constant 0 : index
    %c0_28 = arith.constant 0 : index
    %71 = vector.load %arg7[%c0_27, %c0_28] : memref<16x1xf32, #tpu.memory_space<vmem>>, vector<16x1xf32>
    %72 = vector.broadcast %71 : vector<16x1xf32> to vector<16x64xf32>
    %73 = arith.addf %70, %72 : vector<16x64xf32>
    %cst_29 = arith.constant 2.000000e-01 : f32
    %74 = vector.broadcast %cst_29 : f32 to vector<16x64xf32>
    %75 = arith.mulf %74, %73 : vector<16x64xf32>
    %76 = arith.maximumf %73, %75 : vector<16x64xf32>
    %77 = arith.truncf %76 : vector<16x64xf32> to vector<16x64xbf16>
    %c0_30 = arith.constant 0 : index
    %c0_31 = arith.constant 0 : index
    %c0_32 = arith.constant 0 : index
    %78 = vector.load %arg8[%c0_30, %c0_31, %c0_32] : memref<1x16x64xbf16, #tpu.memory_space<vmem>>, vector<1x16x64xbf16>
    %79 = vector.shape_cast %78 : vector<1x16x64xbf16> to vector<16x64xbf16>
    %80 = vector.shape_cast %77 : vector<16x64xbf16> to vector<1x16x64xbf16>
    tpu.vector_store %arg8[%c0_30, %c0_31, %c0_32], %80 {strides = array<i32>} : memref<1x16x64xbf16, #tpu.memory_space<vmem>>, vector<1x16x64xbf16>,
    return
  }
  func.func @transform_0(%arg0: i32) -> (i32, i32) {
    %c0_i32 = arith.constant 0 : i32
    %c0_i32_0 = arith.constant 0 : i32
    %c0_i32_1 = arith.constant 0 : i32
    return %c0_i32, %c0_i32_0 : i32, i32
  }
  func.func @transform_1(%arg0: i32) -> (i32, i32, i32) {
    %c0_i32 = arith.constant 0 : i32
    %c0_i32_0 = arith.constant 0 : i32
    %c0_i32_1 = arith.constant 0 : i32
    return %arg0, %c0_i32, %c0_i32_0 : i32, i32, i32
  }
  func.func @transform_2(%arg0: i32) -> (i32, i32, i32) {
    %c0_i32 = arith.constant 0 : i32
    %c0_i32_0 = arith.constant 0 : i32
    %c0_i32_1 = arith.constant 0 : i32
    return %arg0, %c0_i32, %c0_i32_0 : i32, i32, i32
  }
  func.func @transform_3(%arg0: i32) -> (i32, i32) {
    %c0_i32 = arith.constant 0 : i32
    %c0_i32_0 = arith.constant 0 : i32
    %c0_i32_1 = arith.constant 0 : i32
    return %c0_i32, %c0_i32_0 : i32, i32
  }
  func.func @transform_4(%arg0: i32) -> (i32, i32) {
    %c0_i32 = arith.constant 0 : i32
    %c0_i32_0 = arith.constant 0 : i32
    %c0_i32_1 = arith.constant 0 : i32
    return %c0_i32, %c0_i32_0 : i32, i32
  }
  func.func @transform_5(%arg0: i32) -> (i32, i32) {
    %c0_i32 = arith.constant 0 : i32
    %c0_i32_0 = arith.constant 0 : i32
    %c0_i32_1 = arith.constant 0 : i32
    return %c0_i32, %c0_i32_0 : i32, i32
  }
  func.func @transform_6(%arg0: i32) -> (i32, i32) {
    %c0_i32 = arith.constant 0 : i32
    %c0_i32_0 = arith.constant 0 : i32
    %c0_i32_1 = arith.constant 0 : i32
    return %c0_i32, %c0_i32_0 : i32, i32
  }
  func.func @transform_7(%arg0: i32) -> (i32, i32, i32) {
    %c0_i32 = arith.constant 0 : i32
    %c0_i32_0 = arith.constant 0 : i32
    %c0_i32_1 = arith.constant 0 : i32
    return %arg0, %c0_i32, %c0_i32_0 : i32, i32, i32
  }
}

module attributes {stable_mosaic.version = 11 : i64} {
  func.func @_channel_matmul_kernel(%arg0: i32, %arg1: memref<1x16x64xbf16, #tpu.memory_space<vmem>>, %arg2: memref<32x16xbf16, #tpu.memory_space<vmem>>, %arg3: memref<32x1xf32, #tpu.memory_space<vmem>>, %arg4: memref<1x32x64xbf16, #tpu.memory_space<vmem>>) attributes {dimension_semantics = [#tpu.dimension_semantics<parallel>], iteration_bounds = array<i64: 2>, scalar_prefetch = 0 : i64, scratch_operands = 0 : i64, tpu.core_type = #tpu.core_type<tc>, window_params = [{transform_indices = @transform_0, window_bounds = array<i64: 1, 16, 64>}, {pipeline_mode = #tpu.pipeline_mode<synchronous>, transform_indices = @transform_1, window_bounds = array<i64: 32, 16>}, {pipeline_mode = #tpu.pipeline_mode<synchronous>, transform_indices = @transform_2, window_bounds = array<i64: 32, 1>}, {transform_indices = @transform_3, window_bounds = array<i64: 1, 32, 64>}]} {
    %c0 = arith.constant 0 : index
    %c0_0 = arith.constant 0 : index
    %0 = vector.load %arg2[%c0, %c0_0] : memref<32x16xbf16, #tpu.memory_space<vmem>>, vector<32x16xbf16>
    %c0_1 = arith.constant 0 : index
    %c0_2 = arith.constant 0 : index
    %c0_3 = arith.constant 0 : index
    %1 = vector.load %arg1[%c0_1, %c0_2, %c0_3] : memref<1x16x64xbf16, #tpu.memory_space<vmem>>, vector<1x16x64xbf16>
    %2 = vector.shape_cast %1 : vector<1x16x64xbf16> to vector<16x64xbf16>
    %cst = arith.constant dense<0.000000e+00> : vector<32x64xf32>
    %3 = tpu.matmul %0, %2, %cst {dimension_numbers = #tpu.dot_dimension_numbers<[1], [0], [0], [1], [0, 0, 1, 1], [], []>} : vector<32x16xbf16>, vector<16x64xbf16>, vector<32x64xf32> -> vector<32x64xf32>
    %c0_4 = arith.constant 0 : index
    %c0_5 = arith.constant 0 : index
    %4 = vector.load %arg3[%c0_4, %c0_5] : memref<32x1xf32, #tpu.memory_space<vmem>>, vector<32x1xf32>
    %5 = vector.broadcast %4 : vector<32x1xf32> to vector<32x64xf32>
    %6 = arith.addf %3, %5 : vector<32x64xf32>
    %7 = arith.truncf %6 : vector<32x64xf32> to vector<32x64xbf16>
    %c0_6 = arith.constant 0 : index
    %c0_7 = arith.constant 0 : index
    %c0_8 = arith.constant 0 : index
    %8 = vector.load %arg4[%c0_6, %c0_7, %c0_8] : memref<1x32x64xbf16, #tpu.memory_space<vmem>>, vector<1x32x64xbf16>
    %9 = vector.shape_cast %8 : vector<1x32x64xbf16> to vector<32x64xbf16>
    %10 = vector.shape_cast %7 : vector<32x64xbf16> to vector<1x32x64xbf16>
    tpu.vector_store %arg4[%c0_6, %c0_7, %c0_8], %10 {strides = array<i32>} : memref<1x32x64xbf16, #tpu.memory_space<vmem>>, vector<1x32x64xbf16>,
    return
  }
  func.func @transform_0(%arg0: i32) -> (i32, i32, i32) {
    %c0_i32 = arith.constant 0 : i32
    %c0_i32_0 = arith.constant 0 : i32
    %c0_i32_1 = arith.constant 0 : i32
    return %arg0, %c0_i32, %c0_i32_0 : i32, i32, i32
  }
  func.func @transform_1(%arg0: i32) -> (i32, i32) {
    %c0_i32 = arith.constant 0 : i32
    %c0_i32_0 = arith.constant 0 : i32
    %c0_i32_1 = arith.constant 0 : i32
    return %c0_i32, %c0_i32_0 : i32, i32
  }
  func.func @transform_2(%arg0: i32) -> (i32, i32) {
    %c0_i32 = arith.constant 0 : i32
    %c0_i32_0 = arith.constant 0 : i32
    %c0_i32_1 = arith.constant 0 : i32
    return %c0_i32, %c0_i32_0 : i32, i32
  }
  func.func @transform_3(%arg0: i32) -> (i32, i32, i32) {
    %c0_i32 = arith.constant 0 : i32
    %c0_i32_0 = arith.constant 0 : i32
    %c0_i32_1 = arith.constant 0 : i32
    return %arg0, %c0_i32, %c0_i32_0 : i32, i32, i32
  }
}

module attributes {stable_mosaic.version = 11 : i64} {
  func.func @_conv_stack_kernel(%arg0: i32, %arg1: memref<2x256xf32, #tpu.memory_space<vmem>>, %arg2: memref<1x8x256xbf16, #tpu.memory_space<vmem>>, %arg3: memref<1x8x256xbf16, #tpu.memory_space<vmem>>, %arg4: memref<8x144xbf16, #tpu.memory_space<vmem>>, %arg5: memref<8x72xbf16, #tpu.memory_space<vmem>>, %arg6: memref<8x72xbf16, #tpu.memory_space<vmem>>, %arg7: memref<8x1xf32, #tpu.memory_space<vmem>>, %arg8: memref<8x1xf32, #tpu.memory_space<vmem>>, %arg9: memref<8x1xf32, #tpu.memory_space<vmem>>, %arg10: memref<1x8x256xf32, #tpu.memory_space<vmem>>, %arg11: memref<16x512xf32, #tpu.memory_space<vmem>>) attributes {dimension_semantics = [#tpu.dimension_semantics<parallel>], iteration_bounds = array<i64: 2>, scalar_prefetch = 0 : i64, scratch_operands = 1 : i64, tpu.core_type = #tpu.core_type<tc>, window_params = [{pipeline_mode = #tpu.pipeline_mode<synchronous>, transform_indices = @transform_0, window_bounds = array<i64: 2, 256>}, {transform_indices = @transform_1, window_bounds = array<i64: 1, 8, 256>}, {transform_indices = @transform_2, window_bounds = array<i64: 1, 8, 256>}, {pipeline_mode = #tpu.pipeline_mode<synchronous>, transform_indices = @transform_3, window_bounds = array<i64: 8, 144>}, {pipeline_mode = #tpu.pipeline_mode<synchronous>, transform_indices = @transform_4, window_bounds = array<i64: 8, 72>}, {pipeline_mode = #tpu.pipeline_mode<synchronous>, transform_indices = @transform_5, window_bounds = array<i64: 8, 72>}, {pipeline_mode = #tpu.pipeline_mode<synchronous>, transform_indices = @transform_6, window_bounds = array<i64: 8, 1>}, {pipeline_mode = #tpu.pipeline_mode<synchronous>, transform_indices = @transform_7, window_bounds = array<i64: 8, 1>}, {pipeline_mode = #tpu.pipeline_mode<synchronous>, transform_indices = @transform_8, window_bounds = array<i64: 8, 1>}, {transform_indices = @transform_9, window_bounds = array<i64: 1, 8, 256>}]} {
    %cst = arith.constant 0.000000e+00 : f32
    %0 = vector.broadcast %cst : f32 to vector<16x512xf32>
    %c0 = arith.constant 0 : index
    %c0_0 = arith.constant 0 : index
    %1 = vector.load %arg11[%c0, %c0_0] : memref<16x512xf32, #tpu.memory_space<vmem>>, vector<16x512xf32>
    tpu.vector_store %arg11[%c0, %c0_0], %0 {strides = array<i32>} : memref<16x512xf32, #tpu.memory_space<vmem>>, vector<16x512xf32>,
    %c0_1 = arith.constant 0 : index
    %c0_2 = arith.constant 0 : index
    %2 = vector.load %arg1[%c0_1, %c0_2] : memref<2x256xf32, #tpu.memory_space<vmem>>, vector<1x256xf32>
    %c1 = arith.constant 1 : index
    %c0_3 = arith.constant 0 : index
    %3 = vector.load %arg1[%c1, %c0_3] : memref<2x256xf32, #tpu.memory_space<vmem>>, vector<1x256xf32>
    %c0_4 = arith.constant 0 : index
    %c0_5 = arith.constant 0 : index
    %c0_6 = arith.constant 0 : index
    %4 = vector.load %arg2[%c0_4, %c0_5, %c0_6] : memref<1x8x256xbf16, #tpu.memory_space<vmem>>, vector<1x8x256xbf16>
    %5 = vector.shape_cast %4 : vector<1x8x256xbf16> to vector<8x256xbf16>
    %6 = arith.extf %5 : vector<8x256xbf16> to vector<8x256xf32>
    %c0_7 = arith.constant 0 : index
    %c128 = arith.constant 128 : index
    %7 = vector.load %arg11[%c0_7, %c128] : memref<16x512xf32, #tpu.memory_space<vmem>>, vector<8x256xf32>
    tpu.vector_store %arg11[%c0_7, %c128], %6 {strides = array<i32>} : memref<16x512xf32, #tpu.memory_space<vmem>>, vector<8x256xf32>,
    %c0_8 = arith.constant 0 : index
    %c0_9 = arith.constant 0 : index
    %c0_10 = arith.constant 0 : index
    %8 = vector.load %arg3[%c0_8, %c0_9, %c0_10] : memref<1x8x256xbf16, #tpu.memory_space<vmem>>, vector<1x8x256xbf16>
    %9 = vector.shape_cast %8 : vector<1x8x256xbf16> to vector<8x256xbf16>
    %10 = arith.extf %9 : vector<8x256xbf16> to vector<8x256xf32>
    %c8 = arith.constant 8 : index
    %c128_11 = arith.constant 128 : index
    %11 = vector.load %arg11[%c8, %c128_11] : memref<16x512xf32, #tpu.memory_space<vmem>>, vector<8x256xf32>
    tpu.vector_store %arg11[%c8, %c128_11], %10 {strides = array<i32>} : memref<16x512xf32, #tpu.memory_space<vmem>>, vector<8x256xf32>,
    %c0_12 = arith.constant 0 : index
    %c0_13 = arith.constant 0 : index
    %12 = vector.load %arg11[%c0_12, %c0_13] : memref<16x512xf32, #tpu.memory_space<vmem>>, vector<16x512xf32>
    %13 = vector.extract_strided_slice %12 {offsets = [0, 111], sizes = [16, 256], strides = [1, 1]} : vector<16x512xf32> to vector<16x256xf32>
    %14 = vector.broadcast %2 : vector<1x256xf32> to vector<16x256xf32>
    %15 = arith.mulf %13, %14 : vector<16x256xf32>
    %16 = vector.extract_strided_slice %12 {offsets = [0, 112], sizes = [16, 256], strides = [1, 1]} : vector<16x512xf32> to vector<16x256xf32>
    %17 = vector.extract_strided_slice %12 {offsets = [0, 113], sizes = [16, 256], strides = [1, 1]} : vector<16x512xf32> to vector<16x256xf32>
    %18 = vector.broadcast %3 : vector<1x256xf32> to vector<16x256xf32>
    %19 = arith.mulf %17, %18 : vector<16x256xf32>
    %20 = vector.extract_strided_slice %12 {offsets = [0, 127], sizes = [16, 256], strides = [1, 1]} : vector<16x512xf32> to vector<16x256xf32>
    %21 = vector.broadcast %2 : vector<1x256xf32> to vector<16x256xf32>
    %22 = arith.mulf %20, %21 : vector<16x256xf32>
    %23 = vector.extract_strided_slice %12 {offsets = [0, 128], sizes = [16, 256], strides = [1, 1]} : vector<16x512xf32> to vector<16x256xf32>
    %24 = vector.extract_strided_slice %12 {offsets = [0, 129], sizes = [16, 256], strides = [1, 1]} : vector<16x512xf32> to vector<16x256xf32>
    %25 = vector.broadcast %3 : vector<1x256xf32> to vector<16x256xf32>
    %26 = arith.mulf %24, %25 : vector<16x256xf32>
    %27 = vector.extract_strided_slice %12 {offsets = [0, 143], sizes = [16, 256], strides = [1, 1]} : vector<16x512xf32> to vector<16x256xf32>
    %28 = vector.broadcast %2 : vector<1x256xf32> to vector<16x256xf32>
    %29 = arith.mulf %27, %28 : vector<16x256xf32>
    %30 = vector.extract_strided_slice %12 {offsets = [0, 144], sizes = [16, 256], strides = [1, 1]} : vector<16x512xf32> to vector<16x256xf32>
    %31 = vector.extract_strided_slice %12 {offsets = [0, 145], sizes = [16, 256], strides = [1, 1]} : vector<16x512xf32> to vector<16x256xf32>
    %32 = vector.broadcast %3 : vector<1x256xf32> to vector<16x256xf32>
    %33 = arith.mulf %31, %32 : vector<16x256xf32>
    %34 = tpu.concatenate %15, %16, %19, %22, %23, %26, %29, %30, %33 in 0 : vector<16x256xf32>, vector<16x256xf32>, vector<16x256xf32>, vector<16x256xf32>, vector<16x256xf32>, vector<16x256xf32>, vector<16x256xf32>, vector<16x256xf32>, vector<16x256xf32> -> vector<144x256xf32>
    %35 = arith.truncf %34 : vector<144x256xf32> to vector<144x256xbf16>
    %c0_14 = arith.constant 0 : index
    %c0_15 = arith.constant 0 : index
    %36 = vector.load %arg4[%c0_14, %c0_15] : memref<8x144xbf16, #tpu.memory_space<vmem>>, vector<8x144xbf16>
    %cst_16 = arith.constant dense<0.000000e+00> : vector<8x256xf32>
    %37 = tpu.matmul %36, %35, %cst_16 {dimension_numbers = #tpu.dot_dimension_numbers<[1], [0], [0], [1], [0, 0, 1, 1], [], []>} : vector<8x144xbf16>, vector<144x256xbf16>, vector<8x256xf32> -> vector<8x256xf32>
    %c0_17 = arith.constant 0 : index
    %c0_18 = arith.constant 0 : index
    %38 = vector.load %arg7[%c0_17, %c0_18] : memref<8x1xf32, #tpu.memory_space<vmem>>, vector<8x1xf32>
    %39 = vector.broadcast %38 : vector<8x1xf32> to vector<8x256xf32>
    %40 = arith.addf %37, %39 : vector<8x256xf32>
    %cst_19 = arith.constant 2.000000e-01 : f32
    %41 = vector.broadcast %cst_19 : f32 to vector<8x256xf32>
    %42 = arith.mulf %41, %40 : vector<8x256xf32>
    %43 = arith.maximumf %40, %42 : vector<8x256xf32>
    %c0_20 = arith.constant 0 : index
    %c128_21 = arith.constant 128 : index
    %44 = vector.load %arg11[%c0_20, %c128_21] : memref<16x512xf32, #tpu.memory_space<vmem>>, vector<8x256xf32>
    tpu.vector_store %arg11[%c0_20, %c128_21], %43 {strides = array<i32>} : memref<16x512xf32, #tpu.memory_space<vmem>>, vector<8x256xf32>,
    %c0_22 = arith.constant 0 : index
    %c0_23 = arith.constant 0 : index
    %45 = vector.load %arg11[%c0_22, %c0_23] : memref<16x512xf32, #tpu.memory_space<vmem>>, vector<8x512xf32>
    %46 = vector.extract_strided_slice %45 {offsets = [0, 111], sizes = [8, 256], strides = [1, 1]} : vector<8x512xf32> to vector<8x256xf32>
    %47 = vector.broadcast %2 : vector<1x256xf32> to vector<8x256xf32>
    %48 = arith.mulf %46, %47 : vector<8x256xf32>
    %49 = vector.extract_strided_slice %45 {offsets = [0, 112], sizes = [8, 256], strides = [1, 1]} : vector<8x512xf32> to vector<8x256xf32>
    %50 = vector.extract_strided_slice %45 {offsets = [0, 113], sizes = [8, 256], strides = [1, 1]} : vector<8x512xf32> to vector<8x256xf32>
    %51 = vector.broadcast %3 : vector<1x256xf32> to vector<8x256xf32>
    %52 = arith.mulf %50, %51 : vector<8x256xf32>
    %53 = vector.extract_strided_slice %45 {offsets = [0, 127], sizes = [8, 256], strides = [1, 1]} : vector<8x512xf32> to vector<8x256xf32>
    %54 = vector.broadcast %2 : vector<1x256xf32> to vector<8x256xf32>
    %55 = arith.mulf %53, %54 : vector<8x256xf32>
    %56 = vector.extract_strided_slice %45 {offsets = [0, 128], sizes = [8, 256], strides = [1, 1]} : vector<8x512xf32> to vector<8x256xf32>
    %57 = vector.extract_strided_slice %45 {offsets = [0, 129], sizes = [8, 256], strides = [1, 1]} : vector<8x512xf32> to vector<8x256xf32>
    %58 = vector.broadcast %3 : vector<1x256xf32> to vector<8x256xf32>
    %59 = arith.mulf %57, %58 : vector<8x256xf32>
    %60 = vector.extract_strided_slice %45 {offsets = [0, 143], sizes = [8, 256], strides = [1, 1]} : vector<8x512xf32> to vector<8x256xf32>
    %61 = vector.broadcast %2 : vector<1x256xf32> to vector<8x256xf32>
    %62 = arith.mulf %60, %61 : vector<8x256xf32>
    %63 = vector.extract_strided_slice %45 {offsets = [0, 144], sizes = [8, 256], strides = [1, 1]} : vector<8x512xf32> to vector<8x256xf32>
    %64 = vector.extract_strided_slice %45 {offsets = [0, 145], sizes = [8, 256], strides = [1, 1]} : vector<8x512xf32> to vector<8x256xf32>
    %65 = vector.broadcast %3 : vector<1x256xf32> to vector<8x256xf32>
    %66 = arith.mulf %64, %65 : vector<8x256xf32>
    %67 = tpu.concatenate %48, %49, %52, %55, %56, %59, %62, %63, %66 in 0 : vector<8x256xf32>, vector<8x256xf32>, vector<8x256xf32>, vector<8x256xf32>, vector<8x256xf32>, vector<8x256xf32>, vector<8x256xf32>, vector<8x256xf32>, vector<8x256xf32> -> vector<72x256xf32>
    %68 = arith.truncf %67 : vector<72x256xf32> to vector<72x256xbf16>
    %c0_24 = arith.constant 0 : index
    %c0_25 = arith.constant 0 : index
    %69 = vector.load %arg5[%c0_24, %c0_25] : memref<8x72xbf16, #tpu.memory_space<vmem>>, vector<8x72xbf16>
    %cst_26 = arith.constant dense<0.000000e+00> : vector<8x256xf32>
    %70 = tpu.matmul %69, %68, %cst_26 {dimension_numbers = #tpu.dot_dimension_numbers<[1], [0], [0], [1], [0, 0, 1, 1], [], []>} : vector<8x72xbf16>, vector<72x256xbf16>, vector<8x256xf32> -> vector<8x256xf32>
    %c0_27 = arith.constant 0 : index
    %c0_28 = arith.constant 0 : index
    %71 = vector.load %arg8[%c0_27, %c0_28] : memref<8x1xf32, #tpu.memory_space<vmem>>, vector<8x1xf32>
    %72 = vector.broadcast %71 : vector<8x1xf32> to vector<8x256xf32>
    %73 = arith.addf %70, %72 : vector<8x256xf32>
    %cst_29 = arith.constant 2.000000e-01 : f32
    %74 = vector.broadcast %cst_29 : f32 to vector<8x256xf32>
    %75 = arith.mulf %74, %73 : vector<8x256xf32>
    %76 = arith.maximumf %73, %75 : vector<8x256xf32>
    %c0_30 = arith.constant 0 : index
    %c128_31 = arith.constant 128 : index
    %77 = vector.load %arg11[%c0_30, %c128_31] : memref<16x512xf32, #tpu.memory_space<vmem>>, vector<8x256xf32>
    tpu.vector_store %arg11[%c0_30, %c128_31], %76 {strides = array<i32>} : memref<16x512xf32, #tpu.memory_space<vmem>>, vector<8x256xf32>,
    %c0_32 = arith.constant 0 : index
    %c0_33 = arith.constant 0 : index
    %78 = vector.load %arg11[%c0_32, %c0_33] : memref<16x512xf32, #tpu.memory_space<vmem>>, vector<8x512xf32>
    %79 = vector.extract_strided_slice %78 {offsets = [0, 111], sizes = [8, 256], strides = [1, 1]} : vector<8x512xf32> to vector<8x256xf32>
    %80 = vector.broadcast %2 : vector<1x256xf32> to vector<8x256xf32>
    %81 = arith.mulf %79, %80 : vector<8x256xf32>
    %82 = vector.extract_strided_slice %78 {offsets = [0, 112], sizes = [8, 256], strides = [1, 1]} : vector<8x512xf32> to vector<8x256xf32>
    %83 = vector.extract_strided_slice %78 {offsets = [0, 113], sizes = [8, 256], strides = [1, 1]} : vector<8x512xf32> to vector<8x256xf32>
    %84 = vector.broadcast %3 : vector<1x256xf32> to vector<8x256xf32>
    %85 = arith.mulf %83, %84 : vector<8x256xf32>
    %86 = vector.extract_strided_slice %78 {offsets = [0, 127], sizes = [8, 256], strides = [1, 1]} : vector<8x512xf32> to vector<8x256xf32>
    %87 = vector.broadcast %2 : vector<1x256xf32> to vector<8x256xf32>
    %88 = arith.mulf %86, %87 : vector<8x256xf32>
    %89 = vector.extract_strided_slice %78 {offsets = [0, 128], sizes = [8, 256], strides = [1, 1]} : vector<8x512xf32> to vector<8x256xf32>
    %90 = vector.extract_strided_slice %78 {offsets = [0, 129], sizes = [8, 256], strides = [1, 1]} : vector<8x512xf32> to vector<8x256xf32>
    %91 = vector.broadcast %3 : vector<1x256xf32> to vector<8x256xf32>
    %92 = arith.mulf %90, %91 : vector<8x256xf32>
    %93 = vector.extract_strided_slice %78 {offsets = [0, 143], sizes = [8, 256], strides = [1, 1]} : vector<8x512xf32> to vector<8x256xf32>
    %94 = vector.broadcast %2 : vector<1x256xf32> to vector<8x256xf32>
    %95 = arith.mulf %93, %94 : vector<8x256xf32>
    %96 = vector.extract_strided_slice %78 {offsets = [0, 144], sizes = [8, 256], strides = [1, 1]} : vector<8x512xf32> to vector<8x256xf32>
    %97 = vector.extract_strided_slice %78 {offsets = [0, 145], sizes = [8, 256], strides = [1, 1]} : vector<8x512xf32> to vector<8x256xf32>
    %98 = vector.broadcast %3 : vector<1x256xf32> to vector<8x256xf32>
    %99 = arith.mulf %97, %98 : vector<8x256xf32>
    %100 = tpu.concatenate %81, %82, %85, %88, %89, %92, %95, %96, %99 in 0 : vector<8x256xf32>, vector<8x256xf32>, vector<8x256xf32>, vector<8x256xf32>, vector<8x256xf32>, vector<8x256xf32>, vector<8x256xf32>, vector<8x256xf32>, vector<8x256xf32> -> vector<72x256xf32>
    %101 = arith.truncf %100 : vector<72x256xf32> to vector<72x256xbf16>
    %c0_34 = arith.constant 0 : index
    %c0_35 = arith.constant 0 : index
    %102 = vector.load %arg6[%c0_34, %c0_35] : memref<8x72xbf16, #tpu.memory_space<vmem>>, vector<8x72xbf16>
    %cst_36 = arith.constant dense<0.000000e+00> : vector<8x256xf32>
    %103 = tpu.matmul %102, %101, %cst_36 {dimension_numbers = #tpu.dot_dimension_numbers<[1], [0], [0], [1], [0, 0, 1, 1], [], []>} : vector<8x72xbf16>, vector<72x256xbf16>, vector<8x256xf32> -> vector<8x256xf32>
    %c0_37 = arith.constant 0 : index
    %c0_38 = arith.constant 0 : index
    %104 = vector.load %arg9[%c0_37, %c0_38] : memref<8x1xf32, #tpu.memory_space<vmem>>, vector<8x1xf32>
    %105 = vector.broadcast %104 : vector<8x1xf32> to vector<8x256xf32>
    %106 = arith.addf %103, %105 : vector<8x256xf32>
    %c0_39 = arith.constant 0 : index
    %c0_40 = arith.constant 0 : index
    %c0_41 = arith.constant 0 : index
    %107 = vector.load %arg10[%c0_39, %c0_40, %c0_41] : memref<1x8x256xf32, #tpu.memory_space<vmem>>, vector<1x8x256xf32>
    %108 = vector.shape_cast %107 : vector<1x8x256xf32> to vector<8x256xf32>
    %109 = vector.shape_cast %106 : vector<8x256xf32> to vector<1x8x256xf32>
    tpu.vector_store %arg10[%c0_39, %c0_40, %c0_41], %109 {strides = array<i32>} : memref<1x8x256xf32, #tpu.memory_space<vmem>>, vector<1x8x256xf32>,
    return
  }
  func.func @transform_0(%arg0: i32) -> (i32, i32) {
    %c0_i32 = arith.constant 0 : i32
    %c0_i32_0 = arith.constant 0 : i32
    %c0_i32_1 = arith.constant 0 : i32
    return %c0_i32, %c0_i32_0 : i32, i32
  }
  func.func @transform_1(%arg0: i32) -> (i32, i32, i32) {
    %c0_i32 = arith.constant 0 : i32
    %c0_i32_0 = arith.constant 0 : i32
    %c0_i32_1 = arith.constant 0 : i32
    return %arg0, %c0_i32, %c0_i32_0 : i32, i32, i32
  }
  func.func @transform_2(%arg0: i32) -> (i32, i32, i32) {
    %c0_i32 = arith.constant 0 : i32
    %c0_i32_0 = arith.constant 0 : i32
    %c0_i32_1 = arith.constant 0 : i32
    return %arg0, %c0_i32, %c0_i32_0 : i32, i32, i32
  }
  func.func @transform_3(%arg0: i32) -> (i32, i32) {
    %c0_i32 = arith.constant 0 : i32
    %c0_i32_0 = arith.constant 0 : i32
    %c0_i32_1 = arith.constant 0 : i32
    return %c0_i32, %c0_i32_0 : i32, i32
  }
  func.func @transform_4(%arg0: i32) -> (i32, i32) {
    %c0_i32 = arith.constant 0 : i32
    %c0_i32_0 = arith.constant 0 : i32
    %c0_i32_1 = arith.constant 0 : i32
    return %c0_i32, %c0_i32_0 : i32, i32
  }
  func.func @transform_5(%arg0: i32) -> (i32, i32) {
    %c0_i32 = arith.constant 0 : i32
    %c0_i32_0 = arith.constant 0 : i32
    %c0_i32_1 = arith.constant 0 : i32
    return %c0_i32, %c0_i32_0 : i32, i32
  }
  func.func @transform_6(%arg0: i32) -> (i32, i32) {
    %c0_i32 = arith.constant 0 : i32
    %c0_i32_0 = arith.constant 0 : i32
    %c0_i32_1 = arith.constant 0 : i32
    return %c0_i32, %c0_i32_0 : i32, i32
  }
  func.func @transform_7(%arg0: i32) -> (i32, i32) {
    %c0_i32 = arith.constant 0 : i32
    %c0_i32_0 = arith.constant 0 : i32
    %c0_i32_1 = arith.constant 0 : i32
    return %c0_i32, %c0_i32_0 : i32, i32
  }
  func.func @transform_8(%arg0: i32) -> (i32, i32) {
    %c0_i32 = arith.constant 0 : i32
    %c0_i32_0 = arith.constant 0 : i32
    %c0_i32_1 = arith.constant 0 : i32
    return %c0_i32, %c0_i32_0 : i32, i32
  }
  func.func @transform_9(%arg0: i32) -> (i32, i32, i32) {
    %c0_i32 = arith.constant 0 : i32
    %c0_i32_0 = arith.constant 0 : i32
    %c0_i32_1 = arith.constant 0 : i32
    return %arg0, %c0_i32, %c0_i32_0 : i32, i32, i32
  }
}

module attributes {stable_mosaic.version = 11 : i64} {
  func.func @_conv_stack_kernel(%arg0: i32, %arg1: memref<2x256xf32, #tpu.memory_space<vmem>>, %arg2: memref<1x8x256xbf16, #tpu.memory_space<vmem>>, %arg3: memref<16x72xbf16, #tpu.memory_space<vmem>>, %arg4: memref<16x144xbf16, #tpu.memory_space<vmem>>, %arg5: memref<16x144xbf16, #tpu.memory_space<vmem>>, %arg6: memref<16x144xbf16, #tpu.memory_space<vmem>>, %arg7: memref<8x144xbf16, #tpu.memory_space<vmem>>, %arg8: memref<16x1xf32, #tpu.memory_space<vmem>>, %arg9: memref<16x1xf32, #tpu.memory_space<vmem>>, %arg10: memref<16x1xf32, #tpu.memory_space<vmem>>, %arg11: memref<16x1xf32, #tpu.memory_space<vmem>>, %arg12: memref<8x1xf32, #tpu.memory_space<vmem>>, %arg13: memref<1x8x256xf32, #tpu.memory_space<vmem>>, %arg14: memref<16x512xf32, #tpu.memory_space<vmem>>) attributes {dimension_semantics = [#tpu.dimension_semantics<parallel>], iteration_bounds = array<i64: 2>, scalar_prefetch = 0 : i64, scratch_operands = 1 : i64, tpu.core_type = #tpu.core_type<tc>, window_params = [{pipeline_mode = #tpu.pipeline_mode<synchronous>, transform_indices = @transform_0, window_bounds = array<i64: 2, 256>}, {transform_indices = @transform_1, window_bounds = array<i64: 1, 8, 256>}, {pipeline_mode = #tpu.pipeline_mode<synchronous>, transform_indices = @transform_2, window_bounds = array<i64: 16, 72>}, {pipeline_mode = #tpu.pipeline_mode<synchronous>, transform_indices = @transform_3, window_bounds = array<i64: 16, 144>}, {pipeline_mode = #tpu.pipeline_mode<synchronous>, transform_indices = @transform_4, window_bounds = array<i64: 16, 144>}, {pipeline_mode = #tpu.pipeline_mode<synchronous>, transform_indices = @transform_5, window_bounds = array<i64: 16, 144>}, {pipeline_mode = #tpu.pipeline_mode<synchronous>, transform_indices = @transform_6, window_bounds = array<i64: 8, 144>}, {pipeline_mode = #tpu.pipeline_mode<synchronous>, transform_indices = @transform_7, window_bounds = array<i64: 16, 1>}, {pipeline_mode = #tpu.pipeline_mode<synchronous>, transform_indices = @transform_8, window_bounds = array<i64: 16, 1>}, {pipeline_mode = #tpu.pipeline_mode<synchronous>, transform_indices = @transform_9, window_bounds = array<i64: 16, 1>}, {pipeline_mode = #tpu.pipeline_mode<synchronous>, transform_indices = @transform_10, window_bounds = array<i64: 16, 1>}, {pipeline_mode = #tpu.pipeline_mode<synchronous>, transform_indices = @transform_11, window_bounds = array<i64: 8, 1>}, {transform_indices = @transform_12, window_bounds = array<i64: 1, 8, 256>}]} {
    %cst = arith.constant 0.000000e+00 : f32
    %0 = vector.broadcast %cst : f32 to vector<16x512xf32>
    %c0 = arith.constant 0 : index
    %c0_0 = arith.constant 0 : index
    %1 = vector.load %arg14[%c0, %c0_0] : memref<16x512xf32, #tpu.memory_space<vmem>>, vector<16x512xf32>
    tpu.vector_store %arg14[%c0, %c0_0], %0 {strides = array<i32>} : memref<16x512xf32, #tpu.memory_space<vmem>>, vector<16x512xf32>,
    %c0_1 = arith.constant 0 : index
    %c0_2 = arith.constant 0 : index
    %2 = vector.load %arg1[%c0_1, %c0_2] : memref<2x256xf32, #tpu.memory_space<vmem>>, vector<1x256xf32>
    %c1 = arith.constant 1 : index
    %c0_3 = arith.constant 0 : index
    %3 = vector.load %arg1[%c1, %c0_3] : memref<2x256xf32, #tpu.memory_space<vmem>>, vector<1x256xf32>
    %c0_4 = arith.constant 0 : index
    %c0_5 = arith.constant 0 : index
    %c0_6 = arith.constant 0 : index
    %4 = vector.load %arg2[%c0_4, %c0_5, %c0_6] : memref<1x8x256xbf16, #tpu.memory_space<vmem>>, vector<1x8x256xbf16>
    %5 = vector.shape_cast %4 : vector<1x8x256xbf16> to vector<8x256xbf16>
    %6 = arith.extf %5 : vector<8x256xbf16> to vector<8x256xf32>
    %c0_7 = arith.constant 0 : index
    %c128 = arith.constant 128 : index
    %7 = vector.load %arg14[%c0_7, %c128] : memref<16x512xf32, #tpu.memory_space<vmem>>, vector<8x256xf32>
    tpu.vector_store %arg14[%c0_7, %c128], %6 {strides = array<i32>} : memref<16x512xf32, #tpu.memory_space<vmem>>, vector<8x256xf32>,
    %c0_8 = arith.constant 0 : index
    %c0_9 = arith.constant 0 : index
    %8 = vector.load %arg14[%c0_8, %c0_9] : memref<16x512xf32, #tpu.memory_space<vmem>>, vector<8x512xf32>
    %9 = vector.extract_strided_slice %8 {offsets = [0, 111], sizes = [8, 256], strides = [1, 1]} : vector<8x512xf32> to vector<8x256xf32>
    %10 = vector.broadcast %2 : vector<1x256xf32> to vector<8x256xf32>
    %11 = arith.mulf %9, %10 : vector<8x256xf32>
    %12 = vector.extract_strided_slice %8 {offsets = [0, 112], sizes = [8, 256], strides = [1, 1]} : vector<8x512xf32> to vector<8x256xf32>
    %13 = vector.extract_strided_slice %8 {offsets = [0, 113], sizes = [8, 256], strides = [1, 1]} : vector<8x512xf32> to vector<8x256xf32>
    %14 = vector.broadcast %3 : vector<1x256xf32> to vector<8x256xf32>
    %15 = arith.mulf %13, %14 : vector<8x256xf32>
    %16 = vector.extract_strided_slice %8 {offsets = [0, 127], sizes = [8, 256], strides = [1, 1]} : vector<8x512xf32> to vector<8x256xf32>
    %17 = vector.broadcast %2 : vector<1x256xf32> to vector<8x256xf32>
    %18 = arith.mulf %16, %17 : vector<8x256xf32>
    %19 = vector.extract_strided_slice %8 {offsets = [0, 128], sizes = [8, 256], strides = [1, 1]} : vector<8x512xf32> to vector<8x256xf32>
    %20 = vector.extract_strided_slice %8 {offsets = [0, 129], sizes = [8, 256], strides = [1, 1]} : vector<8x512xf32> to vector<8x256xf32>
    %21 = vector.broadcast %3 : vector<1x256xf32> to vector<8x256xf32>
    %22 = arith.mulf %20, %21 : vector<8x256xf32>
    %23 = vector.extract_strided_slice %8 {offsets = [0, 143], sizes = [8, 256], strides = [1, 1]} : vector<8x512xf32> to vector<8x256xf32>
    %24 = vector.broadcast %2 : vector<1x256xf32> to vector<8x256xf32>
    %25 = arith.mulf %23, %24 : vector<8x256xf32>
    %26 = vector.extract_strided_slice %8 {offsets = [0, 144], sizes = [8, 256], strides = [1, 1]} : vector<8x512xf32> to vector<8x256xf32>
    %27 = vector.extract_strided_slice %8 {offsets = [0, 145], sizes = [8, 256], strides = [1, 1]} : vector<8x512xf32> to vector<8x256xf32>
    %28 = vector.broadcast %3 : vector<1x256xf32> to vector<8x256xf32>
    %29 = arith.mulf %27, %28 : vector<8x256xf32>
    %30 = tpu.concatenate %11, %12, %15, %18, %19, %22, %25, %26, %29 in 0 : vector<8x256xf32>, vector<8x256xf32>, vector<8x256xf32>, vector<8x256xf32>, vector<8x256xf32>, vector<8x256xf32>, vector<8x256xf32>, vector<8x256xf32>, vector<8x256xf32> -> vector<72x256xf32>
    %31 = arith.truncf %30 : vector<72x256xf32> to vector<72x256xbf16>
    %c0_10 = arith.constant 0 : index
    %c0_11 = arith.constant 0 : index
    %32 = vector.load %arg3[%c0_10, %c0_11] : memref<16x72xbf16, #tpu.memory_space<vmem>>, vector<16x72xbf16>
    %cst_12 = arith.constant dense<0.000000e+00> : vector<16x256xf32>
    %33 = tpu.matmul %32, %31, %cst_12 {dimension_numbers = #tpu.dot_dimension_numbers<[1], [0], [0], [1], [0, 0, 1, 1], [], []>} : vector<16x72xbf16>, vector<72x256xbf16>, vector<16x256xf32> -> vector<16x256xf32>
    %c0_13 = arith.constant 0 : index
    %c0_14 = arith.constant 0 : index
    %34 = vector.load %arg8[%c0_13, %c0_14] : memref<16x1xf32, #tpu.memory_space<vmem>>, vector<16x1xf32>
    %35 = vector.broadcast %34 : vector<16x1xf32> to vector<16x256xf32>
    %36 = arith.addf %33, %35 : vector<16x256xf32>
    %cst_15 = arith.constant 0.000000e+00 : f32
    %37 = vector.broadcast %cst_15 : f32 to vector<16x256xf32>
    %38 = arith.maximumf %36, %37 : vector<16x256xf32>
    %c0_16 = arith.constant 0 : index
    %c128_17 = arith.constant 128 : index
    %39 = vector.load %arg14[%c0_16, %c128_17] : memref<16x512xf32, #tpu.memory_space<vmem>>, vector<16x256xf32>
    tpu.vector_store %arg14[%c0_16, %c128_17], %38 {strides = array<i32>} : memref<16x512xf32, #tpu.memory_space<vmem>>, vector<16x256xf32>,
    %c0_18 = arith.constant 0 : index
    %c0_19 = arith.constant 0 : index
    %40 = vector.load %arg14[%c0_18, %c0_19] : memref<16x512xf32, #tpu.memory_space<vmem>>, vector<16x512xf32>
    %41 = vector.extract_strided_slice %40 {offsets = [0, 111], sizes = [16, 256], strides = [1, 1]} : vector<16x512xf32> to vector<16x256xf32>
    %42 = vector.broadcast %2 : vector<1x256xf32> to vector<16x256xf32>
    %43 = arith.mulf %41, %42 : vector<16x256xf32>
    %44 = vector.extract_strided_slice %40 {offsets = [0, 112], sizes = [16, 256], strides = [1, 1]} : vector<16x512xf32> to vector<16x256xf32>
    %45 = vector.extract_strided_slice %40 {offsets = [0, 113], sizes = [16, 256], strides = [1, 1]} : vector<16x512xf32> to vector<16x256xf32>
    %46 = vector.broadcast %3 : vector<1x256xf32> to vector<16x256xf32>
    %47 = arith.mulf %45, %46 : vector<16x256xf32>
    %48 = vector.extract_strided_slice %40 {offsets = [0, 127], sizes = [16, 256], strides = [1, 1]} : vector<16x512xf32> to vector<16x256xf32>
    %49 = vector.broadcast %2 : vector<1x256xf32> to vector<16x256xf32>
    %50 = arith.mulf %48, %49 : vector<16x256xf32>
    %51 = vector.extract_strided_slice %40 {offsets = [0, 128], sizes = [16, 256], strides = [1, 1]} : vector<16x512xf32> to vector<16x256xf32>
    %52 = vector.extract_strided_slice %40 {offsets = [0, 129], sizes = [16, 256], strides = [1, 1]} : vector<16x512xf32> to vector<16x256xf32>
    %53 = vector.broadcast %3 : vector<1x256xf32> to vector<16x256xf32>
    %54 = arith.mulf %52, %53 : vector<16x256xf32>
    %55 = vector.extract_strided_slice %40 {offsets = [0, 143], sizes = [16, 256], strides = [1, 1]} : vector<16x512xf32> to vector<16x256xf32>
    %56 = vector.broadcast %2 : vector<1x256xf32> to vector<16x256xf32>
    %57 = arith.mulf %55, %56 : vector<16x256xf32>
    %58 = vector.extract_strided_slice %40 {offsets = [0, 144], sizes = [16, 256], strides = [1, 1]} : vector<16x512xf32> to vector<16x256xf32>
    %59 = vector.extract_strided_slice %40 {offsets = [0, 145], sizes = [16, 256], strides = [1, 1]} : vector<16x512xf32> to vector<16x256xf32>
    %60 = vector.broadcast %3 : vector<1x256xf32> to vector<16x256xf32>
    %61 = arith.mulf %59, %60 : vector<16x256xf32>
    %62 = tpu.concatenate %43, %44, %47, %50, %51, %54, %57, %58, %61 in 0 : vector<16x256xf32>, vector<16x256xf32>, vector<16x256xf32>, vector<16x256xf32>, vector<16x256xf32>, vector<16x256xf32>, vector<16x256xf32>, vector<16x256xf32>, vector<16x256xf32> -> vector<144x256xf32>
    %63 = arith.truncf %62 : vector<144x256xf32> to vector<144x256xbf16>
    %c0_20 = arith.constant 0 : index
    %c0_21 = arith.constant 0 : index
    %64 = vector.load %arg4[%c0_20, %c0_21] : memref<16x144xbf16, #tpu.memory_space<vmem>>, vector<16x144xbf16>
    %cst_22 = arith.constant dense<0.000000e+00> : vector<16x256xf32>
    %65 = tpu.matmul %64, %63, %cst_22 {dimension_numbers = #tpu.dot_dimension_numbers<[1], [0], [0], [1], [0, 0, 1, 1], [], []>} : vector<16x144xbf16>, vector<144x256xbf16>, vector<16x256xf32> -> vector<16x256xf32>
    %c0_23 = arith.constant 0 : index
    %c0_24 = arith.constant 0 : index
    %66 = vector.load %arg9[%c0_23, %c0_24] : memref<16x1xf32, #tpu.memory_space<vmem>>, vector<16x1xf32>
    %67 = vector.broadcast %66 : vector<16x1xf32> to vector<16x256xf32>
    %68 = arith.addf %65, %67 : vector<16x256xf32>
    %cst_25 = arith.constant 0.000000e+00 : f32
    %69 = vector.broadcast %cst_25 : f32 to vector<16x256xf32>
    %70 = arith.maximumf %68, %69 : vector<16x256xf32>
    %c0_26 = arith.constant 0 : index
    %c128_27 = arith.constant 128 : index
    %71 = vector.load %arg14[%c0_26, %c128_27] : memref<16x512xf32, #tpu.memory_space<vmem>>, vector<16x256xf32>
    tpu.vector_store %arg14[%c0_26, %c128_27], %70 {strides = array<i32>} : memref<16x512xf32, #tpu.memory_space<vmem>>, vector<16x256xf32>,
    %c0_28 = arith.constant 0 : index
    %c0_29 = arith.constant 0 : index
    %72 = vector.load %arg14[%c0_28, %c0_29] : memref<16x512xf32, #tpu.memory_space<vmem>>, vector<16x512xf32>
    %73 = vector.extract_strided_slice %72 {offsets = [0, 111], sizes = [16, 256], strides = [1, 1]} : vector<16x512xf32> to vector<16x256xf32>
    %74 = vector.broadcast %2 : vector<1x256xf32> to vector<16x256xf32>
    %75 = arith.mulf %73, %74 : vector<16x256xf32>
    %76 = vector.extract_strided_slice %72 {offsets = [0, 112], sizes = [16, 256], strides = [1, 1]} : vector<16x512xf32> to vector<16x256xf32>
    %77 = vector.extract_strided_slice %72 {offsets = [0, 113], sizes = [16, 256], strides = [1, 1]} : vector<16x512xf32> to vector<16x256xf32>
    %78 = vector.broadcast %3 : vector<1x256xf32> to vector<16x256xf32>
    %79 = arith.mulf %77, %78 : vector<16x256xf32>
    %80 = vector.extract_strided_slice %72 {offsets = [0, 127], sizes = [16, 256], strides = [1, 1]} : vector<16x512xf32> to vector<16x256xf32>
    %81 = vector.broadcast %2 : vector<1x256xf32> to vector<16x256xf32>
    %82 = arith.mulf %80, %81 : vector<16x256xf32>
    %83 = vector.extract_strided_slice %72 {offsets = [0, 128], sizes = [16, 256], strides = [1, 1]} : vector<16x512xf32> to vector<16x256xf32>
    %84 = vector.extract_strided_slice %72 {offsets = [0, 129], sizes = [16, 256], strides = [1, 1]} : vector<16x512xf32> to vector<16x256xf32>
    %85 = vector.broadcast %3 : vector<1x256xf32> to vector<16x256xf32>
    %86 = arith.mulf %84, %85 : vector<16x256xf32>
    %87 = vector.extract_strided_slice %72 {offsets = [0, 143], sizes = [16, 256], strides = [1, 1]} : vector<16x512xf32> to vector<16x256xf32>
    %88 = vector.broadcast %2 : vector<1x256xf32> to vector<16x256xf32>
    %89 = arith.mulf %87, %88 : vector<16x256xf32>
    %90 = vector.extract_strided_slice %72 {offsets = [0, 144], sizes = [16, 256], strides = [1, 1]} : vector<16x512xf32> to vector<16x256xf32>
    %91 = vector.extract_strided_slice %72 {offsets = [0, 145], sizes = [16, 256], strides = [1, 1]} : vector<16x512xf32> to vector<16x256xf32>
    %92 = vector.broadcast %3 : vector<1x256xf32> to vector<16x256xf32>
    %93 = arith.mulf %91, %92 : vector<16x256xf32>
    %94 = tpu.concatenate %75, %76, %79, %82, %83, %86, %89, %90, %93 in 0 : vector<16x256xf32>, vector<16x256xf32>, vector<16x256xf32>, vector<16x256xf32>, vector<16x256xf32>, vector<16x256xf32>, vector<16x256xf32>, vector<16x256xf32>, vector<16x256xf32> -> vector<144x256xf32>
    %95 = arith.truncf %94 : vector<144x256xf32> to vector<144x256xbf16>
    %c0_30 = arith.constant 0 : index
    %c0_31 = arith.constant 0 : index
    %96 = vector.load %arg5[%c0_30, %c0_31] : memref<16x144xbf16, #tpu.memory_space<vmem>>, vector<16x144xbf16>
    %cst_32 = arith.constant dense<0.000000e+00> : vector<16x256xf32>
    %97 = tpu.matmul %96, %95, %cst_32 {dimension_numbers = #tpu.dot_dimension_numbers<[1], [0], [0], [1], [0, 0, 1, 1], [], []>} : vector<16x144xbf16>, vector<144x256xbf16>, vector<16x256xf32> -> vector<16x256xf32>
    %c0_33 = arith.constant 0 : index
    %c0_34 = arith.constant 0 : index
    %98 = vector.load %arg10[%c0_33, %c0_34] : memref<16x1xf32, #tpu.memory_space<vmem>>, vector<16x1xf32>
    %99 = vector.broadcast %98 : vector<16x1xf32> to vector<16x256xf32>
    %100 = arith.addf %97, %99 : vector<16x256xf32>
    %cst_35 = arith.constant 0.000000e+00 : f32
    %101 = vector.broadcast %cst_35 : f32 to vector<16x256xf32>
    %102 = arith.maximumf %100, %101 : vector<16x256xf32>
    %c0_36 = arith.constant 0 : index
    %c128_37 = arith.constant 128 : index
    %103 = vector.load %arg14[%c0_36, %c128_37] : memref<16x512xf32, #tpu.memory_space<vmem>>, vector<16x256xf32>
    tpu.vector_store %arg14[%c0_36, %c128_37], %102 {strides = array<i32>} : memref<16x512xf32, #tpu.memory_space<vmem>>, vector<16x256xf32>,
    %c0_38 = arith.constant 0 : index
    %c0_39 = arith.constant 0 : index
    %104 = vector.load %arg14[%c0_38, %c0_39] : memref<16x512xf32, #tpu.memory_space<vmem>>, vector<16x512xf32>
    %105 = vector.extract_strided_slice %104 {offsets = [0, 111], sizes = [16, 256], strides = [1, 1]} : vector<16x512xf32> to vector<16x256xf32>
    %106 = vector.broadcast %2 : vector<1x256xf32> to vector<16x256xf32>
    %107 = arith.mulf %105, %106 : vector<16x256xf32>
    %108 = vector.extract_strided_slice %104 {offsets = [0, 112], sizes = [16, 256], strides = [1, 1]} : vector<16x512xf32> to vector<16x256xf32>
    %109 = vector.extract_strided_slice %104 {offsets = [0, 113], sizes = [16, 256], strides = [1, 1]} : vector<16x512xf32> to vector<16x256xf32>
    %110 = vector.broadcast %3 : vector<1x256xf32> to vector<16x256xf32>
    %111 = arith.mulf %109, %110 : vector<16x256xf32>
    %112 = vector.extract_strided_slice %104 {offsets = [0, 127], sizes = [16, 256], strides = [1, 1]} : vector<16x512xf32> to vector<16x256xf32>
    %113 = vector.broadcast %2 : vector<1x256xf32> to vector<16x256xf32>
    %114 = arith.mulf %112, %113 : vector<16x256xf32>
    %115 = vector.extract_strided_slice %104 {offsets = [0, 128], sizes = [16, 256], strides = [1, 1]} : vector<16x512xf32> to vector<16x256xf32>
    %116 = vector.extract_strided_slice %104 {offsets = [0, 129], sizes = [16, 256], strides = [1, 1]} : vector<16x512xf32> to vector<16x256xf32>
    %117 = vector.broadcast %3 : vector<1x256xf32> to vector<16x256xf32>
    %118 = arith.mulf %116, %117 : vector<16x256xf32>
    %119 = vector.extract_strided_slice %104 {offsets = [0, 143], sizes = [16, 256], strides = [1, 1]} : vector<16x512xf32> to vector<16x256xf32>
    %120 = vector.broadcast %2 : vector<1x256xf32> to vector<16x256xf32>
    %121 = arith.mulf %119, %120 : vector<16x256xf32>
    %122 = vector.extract_strided_slice %104 {offsets = [0, 144], sizes = [16, 256], strides = [1, 1]} : vector<16x512xf32> to vector<16x256xf32>
    %123 = vector.extract_strided_slice %104 {offsets = [0, 145], sizes = [16, 256], strides = [1, 1]} : vector<16x512xf32> to vector<16x256xf32>
    %124 = vector.broadcast %3 : vector<1x256xf32> to vector<16x256xf32>
    %125 = arith.mulf %123, %124 : vector<16x256xf32>
    %126 = tpu.concatenate %107, %108, %111, %114, %115, %118, %121, %122, %125 in 0 : vector<16x256xf32>, vector<16x256xf32>, vector<16x256xf32>, vector<16x256xf32>, vector<16x256xf32>, vector<16x256xf32>, vector<16x256xf32>, vector<16x256xf32>, vector<16x256xf32> -> vector<144x256xf32>
    %127 = arith.truncf %126 : vector<144x256xf32> to vector<144x256xbf16>
    %c0_40 = arith.constant 0 : index
    %c0_41 = arith.constant 0 : index
    %128 = vector.load %arg6[%c0_40, %c0_41] : memref<16x144xbf16, #tpu.memory_space<vmem>>, vector<16x144xbf16>
    %cst_42 = arith.constant dense<0.000000e+00> : vector<16x256xf32>
    %129 = tpu.matmul %128, %127, %cst_42 {dimension_numbers = #tpu.dot_dimension_numbers<[1], [0], [0], [1], [0, 0, 1, 1], [], []>} : vector<16x144xbf16>, vector<144x256xbf16>, vector<16x256xf32> -> vector<16x256xf32>
    %c0_43 = arith.constant 0 : index
    %c0_44 = arith.constant 0 : index
    %130 = vector.load %arg11[%c0_43, %c0_44] : memref<16x1xf32, #tpu.memory_space<vmem>>, vector<16x1xf32>
    %131 = vector.broadcast %130 : vector<16x1xf32> to vector<16x256xf32>
    %132 = arith.addf %129, %131 : vector<16x256xf32>
    %cst_45 = arith.constant 0.000000e+00 : f32
    %133 = vector.broadcast %cst_45 : f32 to vector<16x256xf32>
    %134 = arith.maximumf %132, %133 : vector<16x256xf32>
    %c0_46 = arith.constant 0 : index
    %c128_47 = arith.constant 128 : index
    %135 = vector.load %arg14[%c0_46, %c128_47] : memref<16x512xf32, #tpu.memory_space<vmem>>, vector<16x256xf32>
    tpu.vector_store %arg14[%c0_46, %c128_47], %134 {strides = array<i32>} : memref<16x512xf32, #tpu.memory_space<vmem>>, vector<16x256xf32>,
    %c0_48 = arith.constant 0 : index
    %c0_49 = arith.constant 0 : index
    %136 = vector.load %arg14[%c0_48, %c0_49] : memref<16x512xf32, #tpu.memory_space<vmem>>, vector<16x512xf32>
    %137 = vector.extract_strided_slice %136 {offsets = [0, 111], sizes = [16, 256], strides = [1, 1]} : vector<16x512xf32> to vector<16x256xf32>
    %138 = vector.broadcast %2 : vector<1x256xf32> to vector<16x256xf32>
    %139 = arith.mulf %137, %138 : vector<16x256xf32>
    %140 = vector.extract_strided_slice %136 {offsets = [0, 112], sizes = [16, 256], strides = [1, 1]} : vector<16x512xf32> to vector<16x256xf32>
    %141 = vector.extract_strided_slice %136 {offsets = [0, 113], sizes = [16, 256], strides = [1, 1]} : vector<16x512xf32> to vector<16x256xf32>
    %142 = vector.broadcast %3 : vector<1x256xf32> to vector<16x256xf32>
    %143 = arith.mulf %141, %142 : vector<16x256xf32>
    %144 = vector.extract_strided_slice %136 {offsets = [0, 127], sizes = [16, 256], strides = [1, 1]} : vector<16x512xf32> to vector<16x256xf32>
    %145 = vector.broadcast %2 : vector<1x256xf32> to vector<16x256xf32>
    %146 = arith.mulf %144, %145 : vector<16x256xf32>
    %147 = vector.extract_strided_slice %136 {offsets = [0, 128], sizes = [16, 256], strides = [1, 1]} : vector<16x512xf32> to vector<16x256xf32>
    %148 = vector.extract_strided_slice %136 {offsets = [0, 129], sizes = [16, 256], strides = [1, 1]} : vector<16x512xf32> to vector<16x256xf32>
    %149 = vector.broadcast %3 : vector<1x256xf32> to vector<16x256xf32>
    %150 = arith.mulf %148, %149 : vector<16x256xf32>
    %151 = vector.extract_strided_slice %136 {offsets = [0, 143], sizes = [16, 256], strides = [1, 1]} : vector<16x512xf32> to vector<16x256xf32>
    %152 = vector.broadcast %2 : vector<1x256xf32> to vector<16x256xf32>
    %153 = arith.mulf %151, %152 : vector<16x256xf32>
    %154 = vector.extract_strided_slice %136 {offsets = [0, 144], sizes = [16, 256], strides = [1, 1]} : vector<16x512xf32> to vector<16x256xf32>
    %155 = vector.extract_strided_slice %136 {offsets = [0, 145], sizes = [16, 256], strides = [1, 1]} : vector<16x512xf32> to vector<16x256xf32>
    %156 = vector.broadcast %3 : vector<1x256xf32> to vector<16x256xf32>
    %157 = arith.mulf %155, %156 : vector<16x256xf32>
    %158 = tpu.concatenate %139, %140, %143, %146, %147, %150, %153, %154, %157 in 0 : vector<16x256xf32>, vector<16x256xf32>, vector<16x256xf32>, vector<16x256xf32>, vector<16x256xf32>, vector<16x256xf32>, vector<16x256xf32>, vector<16x256xf32>, vector<16x256xf32> -> vector<144x256xf32>
    %159 = arith.truncf %158 : vector<144x256xf32> to vector<144x256xbf16>
    %c0_50 = arith.constant 0 : index
    %c0_51 = arith.constant 0 : index
    %160 = vector.load %arg7[%c0_50, %c0_51] : memref<8x144xbf16, #tpu.memory_space<vmem>>, vector<8x144xbf16>
    %cst_52 = arith.constant dense<0.000000e+00> : vector<8x256xf32>
    %161 = tpu.matmul %160, %159, %cst_52 {dimension_numbers = #tpu.dot_dimension_numbers<[1], [0], [0], [1], [0, 0, 1, 1], [], []>} : vector<8x144xbf16>, vector<144x256xbf16>, vector<8x256xf32> -> vector<8x256xf32>
    %c0_53 = arith.constant 0 : index
    %c0_54 = arith.constant 0 : index
    %162 = vector.load %arg12[%c0_53, %c0_54] : memref<8x1xf32, #tpu.memory_space<vmem>>, vector<8x1xf32>
    %163 = vector.broadcast %162 : vector<8x1xf32> to vector<8x256xf32>
    %164 = arith.addf %161, %163 : vector<8x256xf32>
    %c0_55 = arith.constant 0 : index
    %c0_56 = arith.constant 0 : index
    %c0_57 = arith.constant 0 : index
    %165 = vector.load %arg13[%c0_55, %c0_56, %c0_57] : memref<1x8x256xf32, #tpu.memory_space<vmem>>, vector<1x8x256xf32>
    %166 = vector.shape_cast %165 : vector<1x8x256xf32> to vector<8x256xf32>
    %167 = vector.shape_cast %164 : vector<8x256xf32> to vector<1x8x256xf32>
    tpu.vector_store %arg13[%c0_55, %c0_56, %c0_57], %167 {strides = array<i32>} : memref<1x8x256xf32, #tpu.memory_space<vmem>>, vector<1x8x256xf32>,
    return
  }
  func.func @transform_0(%arg0: i32) -> (i32, i32) {
    %c0_i32 = arith.constant 0 : i32
    %c0_i32_0 = arith.constant 0 : i32
    %c0_i32_1 = arith.constant 0 : i32
    return %c0_i32, %c0_i32_0 : i32, i32
  }
  func.func @transform_1(%arg0: i32) -> (i32, i32, i32) {
    %c0_i32 = arith.constant 0 : i32
    %c0_i32_0 = arith.constant 0 : i32
    %c0_i32_1 = arith.constant 0 : i32
    return %arg0, %c0_i32, %c0_i32_0 : i32, i32, i32
  }
  func.func @transform_2(%arg0: i32) -> (i32, i32) {
    %c0_i32 = arith.constant 0 : i32
    %c0_i32_0 = arith.constant 0 : i32
    %c0_i32_1 = arith.constant 0 : i32
    return %c0_i32, %c0_i32_0 : i32, i32
  }
  func.func @transform_3(%arg0: i32) -> (i32, i32) {
    %c0_i32 = arith.constant 0 : i32
    %c0_i32_0 = arith.constant 0 : i32
    %c0_i32_1 = arith.constant 0 : i32
    return %c0_i32, %c0_i32_0 : i32, i32
  }
  func.func @transform_4(%arg0: i32) -> (i32, i32) {
    %c0_i32 = arith.constant 0 : i32
    %c0_i32_0 = arith.constant 0 : i32
    %c0_i32_1 = arith.constant 0 : i32
    return %c0_i32, %c0_i32_0 : i32, i32
  }
  func.func @transform_5(%arg0: i32) -> (i32, i32) {
    %c0_i32 = arith.constant 0 : i32
    %c0_i32_0 = arith.constant 0 : i32
    %c0_i32_1 = arith.constant 0 : i32
    return %c0_i32, %c0_i32_0 : i32, i32
  }
  func.func @transform_6(%arg0: i32) -> (i32, i32) {
    %c0_i32 = arith.constant 0 : i32
    %c0_i32_0 = arith.constant 0 : i32
    %c0_i32_1 = arith.constant 0 : i32
    return %c0_i32, %c0_i32_0 : i32, i32
  }
  func.func @transform_7(%arg0: i32) -> (i32, i32) {
    %c0_i32 = arith.constant 0 : i32
    %c0_i32_0 = arith.constant 0 : i32
    %c0_i32_1 = arith.constant 0 : i32
    return %c0_i32, %c0_i32_0 : i32, i32
  }
  func.func @transform_8(%arg0: i32) -> (i32, i32) {
    %c0_i32 = arith.constant 0 : i32
    %c0_i32_0 = arith.constant 0 : i32
    %c0_i32_1 = arith.constant 0 : i32
    return %c0_i32, %c0_i32_0 : i32, i32
  }
  func.func @transform_9(%arg0: i32) -> (i32, i32) {
    %c0_i32 = arith.constant 0 : i32
    %c0_i32_0 = arith.constant 0 : i32
    %c0_i32_1 = arith.constant 0 : i32
    return %c0_i32, %c0_i32_0 : i32, i32
  }
  func.func @transform_10(%arg0: i32) -> (i32, i32) {
    %c0_i32 = arith.constant 0 : i32
    %c0_i32_0 = arith.constant 0 : i32
    %c0_i32_1 = arith.constant 0 : i32
    return %c0_i32, %c0_i32_0 : i32, i32
  }
  func.func @transform_11(%arg0: i32) -> (i32, i32) {
    %c0_i32 = arith.constant 0 : i32
    %c0_i32_0 = arith.constant 0 : i32
    %c0_i32_1 = arith.constant 0 : i32
    return %c0_i32, %c0_i32_0 : i32, i32
  }
  func.func @transform_12(%arg0: i32) -> (i32, i32, i32) {
    %c0_i32 = arith.constant 0 : i32
    %c0_i32_0 = arith.constant 0 : i32
    %c0_i32_1 = arith.constant 0 : i32
    return %arg0, %c0_i32, %c0_i32_0 : i32, i32, i32
  }
}

</mosaic_0001>

<llo_original>
// kernel: vdn_forward.9
$region0: #{vdn_forward.9}
  #allocation0 [shape = 'u32[]', space=smem, size = 0x4, offset = 0x4, fixed_abs, tag = 'smem constant byte address 0x4 - core index']
  #allocation1 [shape = 'u32[144,128]{1,0:T(1,128)}', space=vmem, size = 0x12000, scoped, tag = 'internal scratch']
  #allocation2 [shape = 'f32[16,320]{1,0:T(8,128)}', space=vmem, size = 0x6000, scoped, tag = 'scratch operand']
  %s0 = inlined_call_operand.vmem [shape: f32[2,64], index: 0, kind: input, shape index: {}]
  %s1 = inlined_call_operand.vmem [shape: bf16[2,8,64], index: 1, kind: input, shape index: {}]
  %s2 = inlined_call_operand.vmem [shape: bf16[16,72], index: 2, kind: input, shape index: {}]
  %s3 = inlined_call_operand.vmem [shape: bf16[16,144], index: 3, kind: input, shape index: {}]
  %s4 = inlined_call_operand.vmem [shape: f32[16,1], index: 4, kind: input, shape index: {}, may-alias: {4,5}]
  %s5 = inlined_call_operand.vmem [shape: f32[16,1], index: 5, kind: input, shape index: {}, may-alias: {4,5}]
  %s6 = inlined_call_operand.vmem [shape: bf16[2,16,64], index: 6, kind: output, shape index: {}]
  %s7 = sld [smem:[#allocation0]]
  $region57: #{vdn_forward.9} parent=0
    _
  %s9 = ssub.s32 1, %s7
  %s10 = scalar_select 0, %s9, %s7
  loop: start=0, step=1, limit=4
  $region2: #{vdn_forward.9} parent=0 // loop_pre_header
    _
  $region3: #{vdn_forward.9} parent=0 // loop_header
    %s12 = sphi 0, %s16
    %p13 = scmp.ge.s32.totalorder %s12, 4
    %s20 = sphi 0, %s20
    %s22 = sphi 0, %s20
    %s23 = sphi 0, %s22
    %s37 = sphi 0, %s23
    %s43 = sphi 0, %s45
    %s46 = sphi 0, %s43
    %s47 = sphi 0, %s46
    %s63 = sphi 0, %s47
    %s67 = sphi 0, %s67
    %s69 = sphi 0, %s67
    %s70 = sphi 0, %s69
    %s84 = sphi 0, %s70
    %s88 = sphi 0, %s88
    %s90 = sphi 0, %s88
    %s91 = sphi 0, %s90
    %s105 = sphi 0, %s91
    %s109 = sphi 0, %s109
    %s111 = sphi 0, %s109
    %s112 = sphi 0, %s111
    %s126 = sphi 0, %s112
    %s130 = sphi 0, %s130
    %s132 = sphi 0, %s130
    %s133 = sphi 0, %s132
    %s147 = sphi 0, %s133
    %s153 = sphi 0, %s155
    %s156 = sphi 0, %s153
    %s157 = sphi 0, %s156
    %s173 = sphi 0, %s157
  $region4: #{vdn_forward.9} parent=0 // loop_header_branch
    %15 = sbr.rel (%p13) target = $region8
  $region5: #{vdn_forward.9} parent=0 // loop_body
    %s17 = ssub.s32 %s12, 1
    %s18 = ssub.s32 %s12, 2
    %s19 = sadd.s32 %s12, 1
    %s21 = sadd.s32 %s20, 1
    %p24 = scmp.eq.s32.totalorder %s12, 1
    %p25 = scmp.ne.s32.totalorder %s20, %s22
    %p26 = scmp.eq.s32.totalorder %s12, 0
    %p27 = por %p25, %p26
    %p28 = scmp.ne.s32.totalorder %s20, %s22
    %p29 = scmp.eq.s32.totalorder %s17, 1
    %p30 = por %p28, %p29
    %p31 = scmp.ne.s32.totalorder %s22, %s23
    %p32 = scmp.eq.s32.totalorder %s17, 0
    %p33 = por %p31, %p32
    %p34 = scmp.ne.s32.totalorder %s22, %s23
    %p35 = scmp.eq.s32.totalorder %s18, 1
    %p36 = por %p34, %p35
    %p38 = scmp.ne.s32.totalorder %s23, %s37
    %p39 = scmp.eq.s32.totalorder %s18, 0
    %p40 = por %p38, %p39
    %s41 = ssub.s32 %s12, %s19
    %p42 = scmp.eq.s32.totalorder %s41, 0
    %s44 = sadd.s32 %s43, 1
    %s45 = scalar_select %p42, %s43, %s44
    %p48 = pneg %p42
    %p49 = scmp.eq.s32.totalorder %s12, 1
    %p50 = por %p48, %p49
    %p51 = scmp.ne.s32.totalorder %s43, %s46
    %p52 = scmp.eq.s32.totalorder %s12, 0
    %p53 = por %p51, %p52
    %p54 = scmp.ne.s32.totalorder %s43, %s46
    %p55 = scmp.eq.s32.totalorder %s17, 1
    %p56 = por %p54, %p55
    %p57 = scmp.ne.s32.totalorder %s46, %s47
    %p58 = scmp.eq.s32.totalorder %s17, 0
    %p59 = por %p57, %p58
    %p60 = scmp.ne.s32.totalorder %s46, %s47
    %p61 = scmp.eq.s32.totalorder %s18, 1
    %p62 = por %p60, %p61
    %p64 = scmp.ne.s32.totalorder %s47, %s63
    %p65 = scmp.eq.s32.totalorder %s18, 0
    %p66 = por %p64, %p65
    %s68 = sadd.s32 %s67, 1
    %p71 = scmp.eq.s32.totalorder %s12, 1
    %p72 = scmp.ne.s32.totalorder %s67, %s69
    %p73 = scmp.eq.s32.totalorder %s12, 0
    %p74 = por %p72, %p73
    %p75 = scmp.ne.s32.totalorder %s67, %s69
    %p76 = scmp.eq.s32.totalorder %s17, 1
    %p77 = por %p75, %p76
    %p78 = scmp.ne.s32.totalorder %s69, %s70
    %p79 = scmp.eq.s32.totalorder %s17, 0
    %p80 = por %p78, %p79
    %p81 = scmp.ne.s32.totalorder %s69, %s70
    %p82 = scmp.eq.s32.totalorder %s18, 1
    %p83 = por %p81, %p82
    %p85 = scmp.ne.s32.totalorder %s70, %s84
    %p86 = scmp.eq.s32.totalorder %s18, 0
    %p87 = por %p85, %p86
    %s89 = sadd.s32 %s88, 1
    %p92 = scmp.eq.s32.totalorder %s12, 1
    %p93 = scmp.ne.s32.totalorder %s88, %s90
    %p94 = scmp.eq.s32.totalorder %s12, 0
    %p95 = por %p93, %p94
    %p96 = scmp.ne.s32.totalorder %s88, %s90
    %p97 = scmp.eq.s32.totalorder %s17, 1
    %p98 = por %p96, %p97
    %p99 = scmp.ne.s32.totalorder %s90, %s91
    %p100 = scmp.eq.s32.totalorder %s17, 0
    %p101 = por %p99, %p100
    %p102 = scmp.ne.s32.totalorder %s90, %s91
    %p103 = scmp.eq.s32.totalorder %s18, 1
    %p104 = por %p102, %p103
    %p106 = scmp.ne.s32.totalorder %s91, %s105
    %p107 = scmp.eq.s32.totalorder %s18, 0
    %p108 = por %p106, %p107
    %s110 = sadd.s32 %s109, 1
    %p113 = scmp.eq.s32.totalorder %s12, 1
    %p114 = scmp.ne.s32.totalorder %s109, %s111
    %p115 = scmp.eq.s32.totalorder %s12, 0
    %p116 = por %p114, %p115
    %p117 = scmp.ne.s32.totalorder %s109, %s111
    %p118 = scmp.eq.s32.totalorder %s17, 1
    %p119 = por %p117, %p118
    %p120 = scmp.ne.s32.totalorder %s111, %s112
    %p121 = scmp.eq.s32.totalorder %s17, 0
    %p122 = por %p120, %p121
    %p123 = scmp.ne.s32.totalorder %s111, %s112
    %p124 = scmp.eq.s32.totalorder %s18, 1
    %p125 = por %p123, %p124
    %p127 = scmp.ne.s32.totalorder %s112, %s126
    %p128 = scmp.eq.s32.totalorder %s18, 0
    %p129 = por %p127, %p128
    %s131 = sadd.s32 %s130, 1
    %p134 = scmp.eq.s32.totalorder %s12, 1
    %p135 = scmp.ne.s32.totalorder %s130, %s132
    %p136 = scmp.eq.s32.totalorder %s12, 0
    %p137 = por %p135, %p136
    %p138 = scmp.ne.s32.totalorder %s130, %s132
    %p139 = scmp.eq.s32.totalorder %s17, 1
    %p140 = por %p138, %p139
    %p141 = scmp.ne.s32.totalorder %s132, %s133
    %p142 = scmp.eq.s32.totalorder %s17, 0
    %p143 = por %p141, %p142
    %p144 = scmp.ne.s32.totalorder %s132, %s133
    %p145 = scmp.eq.s32.totalorder %s18, 1
    %p146 = por %p144, %p145
    %p148 = scmp.ne.s32.totalorder %s133, %s147
    %p149 = scmp.eq.s32.totalorder %s18, 0
    %p150 = por %p148, %p149
    %s151 = ssub.s32 %s12, %s19
    %p152 = scmp.eq.s32.totalorder %s151, 0
    %s154 = sadd.s32 %s153, 1
    %s155 = scalar_select %p152, %s153, %s154
    %p158 = pneg %p152
    %p159 = scmp.eq.s32.totalorder %s12, 1
    %p160 = por %p158, %p159
    %p161 = scmp.ne.s32.totalorder %s153, %s156
    %p162 = scmp.eq.s32.totalorder %s12, 0
    %p163 = por %p161, %p162
    %p164 = scmp.ne.s32.totalorder %s153, %s156
    %p165 = scmp.eq.s32.totalorder %s17, 1
    %p166 = por %p164, %p165
    %p167 = scmp.ne.s32.totalorder %s156, %s157
    %p168 = scmp.eq.s32.totalorder %s17, 0
    %p169 = por %p167, %p168
    %p170 = scmp.ne.s32.totalorder %s156, %s157
    %p171 = scmp.eq.s32.totalorder %s18, 1
    %p172 = por %p170, %p171
    %p174 = scmp.ne.s32.totalorder %s157, %s173
    %p175 = scmp.eq.s32.totalorder %s18, 0
    %p176 = por %p174, %p175
    %p177 = scmp.le.s32.totalorder 1, %s12
    %p178 = scmp.lt.s32.totalorder %s12, 3
    %p179 = pnand %p177, %p178
    %p180 = pneg %p179
    // Predicated region
    $region9: #{vdn_forward.9} parent=5 // pred_check
      _
    $region10: #{vdn_forward.9} parent=5 // pred_check_branch
      %182 = sbr.rel (%p179) target = $region12
    $region11: #{vdn_forward.9} parent=5 // pred_region
      %s183 = ssub.s32 %s12, 1
      // Predicated region
      $region13: #{vdn_forward.9} parent=11 // pred_check
        %p184 = pneg %p33
      $region14: #{vdn_forward.9} parent=11 // pred_check_branch
        %186 = sbr.rel (%p184) target = $region16
      $region15: #{vdn_forward.9} parent=11 // pred_region
        _
      $region16: #{vdn_forward.9} parent=11 // pred_fallthru
        _
      // Predicated region
      $region17: #{vdn_forward.9} parent=11 // pred_check
        %p187 = pneg %p80
      $region18: #{vdn_forward.9} parent=11 // pred_check_branch
        %189 = sbr.rel (%p187) target = $region20
      $region19: #{vdn_forward.9} parent=11 // pred_region
        _
      $region20: #{vdn_forward.9} parent=11 // pred_fallthru
        _
      // Predicated region
      $region21: #{vdn_forward.9} parent=11 // pred_check
        %p190 = pneg %p101
      $region22: #{vdn_forward.9} parent=11 // pred_check_branch
        %192 = sbr.rel (%p190) target = $region24
      $region23: #{vdn_forward.9} parent=11 // pred_region
        _
      $region24: #{vdn_forward.9} parent=11 // pred_fallthru
        _
      // Predicated region
      $region25: #{vdn_forward.9} parent=11 // pred_check
        %p193 = pneg %p122
      $region26: #{vdn_forward.9} parent=11 // pred_check_branch
        %195 = sbr.rel (%p193) target = $region28
      $region27: #{vdn_forward.9} parent=11 // pred_region
        _
      $region28: #{vdn_forward.9} parent=11 // pred_fallthru
        _
      // Predicated region
      $region29: #{vdn_forward.9} parent=11 // pred_check
        %p196 = pneg %p143
      $region30: #{vdn_forward.9} parent=11 // pred_check_branch
        %198 = sbr.rel (%p196) target = $region32
      $region31: #{vdn_forward.9} parent=11 // pred_region
        _
      $region32: #{vdn_forward.9} parent=11 // pred_fallthru
        _
    $region12: #{vdn_forward.9} parent=5 // pred_fallthru
      _
    %p199 = scmp.lt.s32.totalorder %s12, 2
    // Predicated region
    $region33: #{vdn_forward.9} parent=5 // pred_check
      %p200 = pneg %p199
    $region34: #{vdn_forward.9} parent=5 // pred_check_branch
      %202 = sbr.rel (%p200) target = $region36
    $region35: #{vdn_forward.9} parent=5 // pred_region
      // Predicated region
      $region37: #{vdn_forward.9} parent=35 // pred_check
        %p203 = pneg %p53
      $region38: #{vdn_forward.9} parent=35 // pred_check_branch
        %205 = sbr.rel (%p203) target = $region40
      $region39: #{vdn_forward.9} parent=35 // pred_region
        %p206 = scmp.lt.s32.totalorder %s12, 1
        %s207 = scalar_select %p206, %s12, 1
        %s208 = smul.addr %s207, 4
        %s209 = scalar_lea.vmem %s1, %s208
      $region40: #{vdn_forward.9} parent=35 // pred_fallthru
        _
    $region36: #{vdn_forward.9} parent=5 // pred_fallthru
      _
    %p210 = scmp.le.s32.totalorder 1, %s12
    %p211 = scmp.lt.s32.totalorder %s12, 3
    %p212 = pnand %p210, %p211
    %p213 = pneg %p212
    // Predicated region
    $region41: #{vdn_forward.9} parent=5 // pred_check
      _
    $region42: #{vdn_forward.9} parent=5 // pred_check_branch
      %215 = sbr.rel (%p212) target = $region44
    $region43: #{vdn_forward.9} parent=5 // pred_region
      %s216 = ssub.s32 %s12, 1
      %p217 = pneg %p33
      %p218 = pneg %p30
      %p219 = scmp.lt.s32.totalorder %s17, 1
      %s220 = scalar_select %p219, %s17, 1
      %s221 = smul.addr %s220, 4
      %s222 = scalar_lea.vmem %s1, %s221
      %p223 = pneg %p59
      %p224 = pneg %p56
      %p225 = pneg %p80
      %p226 = pneg %p77
      %p227 = pneg %p101
      %p228 = pneg %p98
      %p229 = pneg %p122
      %p230 = pneg %p119
      %p231 = pneg %p143
      %p232 = pneg %p140
      %p233 = pneg %p169
      %p234 = pneg %p166
      %p235 = scmp.lt.s32.totalorder %s17, 1
      %s236 = scalar_select %p235, %s17, 1
      %s237 = smul.addr %s236, 2
      %s238 = smul.addr %s237, 4
      %s239 = scalar_lea.vmem %s6, %s238
      %p240 = scmp.lt.s32.totalorder %s17, 1
      %s241 = scalar_select %p240, %s17, 1
      %s242 = smul.addr %s241, 4
      %s243 = scalar_lea.vmem %s1, %s242
      %p244 = scmp.lt.s32.totalorder %s17, 1
      %s245 = scalar_select %p244, %s17, 1
      %s246 = smul.addr %s245, 2
      %s247 = smul.addr %s246, 4
      %s248 = scalar_lea.vmem %s6, %s247
      %250 = vst [vmem:[#allocation2] sm:$0xff] 0.0
      %251 = vst [vmem:[#allocation2 + $0x8] sm:$0xff] 0.0
      %vm252 = vcmask 523264
      %253 = vst.msk [vmem:[#allocation2 + $0x10] sm:$0xff] %vm252, 0.0
      %254 = vst [vmem:[#allocation2 + $0x18] sm:$0xff] 0.0
      %255 = vst [vmem:[#allocation2 + $0x20] sm:$0xff] 0.0
      %256 = vst.msk [vmem:[#allocation2 + $0x28] sm:$0xff] %vm252, 0.0
      %v257 = vld [vmem:[%s0] sm:$0x1]
      %v258 = vld [vmem:[%s0 + $0x1] sm:$0x1]
      %v259 = vld [vmem:[%s243] sm:$0xf]
      %v260 = vunpack.c.l.bf16 %v259
      %261 = vst.msk [vmem:[#allocation2 + $0x8] sm:$0xff] %vm252, %v260
      %v262 = vld [vmem:[#allocation2] sm:$0xff]
      %v263 = vld [vmem:[#allocation2 + $0x8] sm:$0xff]
      %v264 = vlaneseq
      %v265 = vshrl.u32 %v264, 7
      %v266 = vsub.s32 0, %v265
      %v267 = vrot.slane %v257, %v266
      %269 = vrot.lane.b32.xlu0 %v267, 119
      %v270 = vpop.permute.xlu0 %269
      %v272 = vmul.f32 %v262, %v270
      %v273 = vmul.f32 %v263, %v270
      %v274 = vlaneseq
      %v275 = vshrl.u32 %v274, 7
      %v276 = vsub.s32 0, %v275
      %v277 = vrot.slane %v258, %v276
      %279 = vrot.lane.b32.xlu0 %v277, 121
      %v280 = vpop.permute.xlu0 %279
      %v282 = vmul.f32 %v262, %v280
      %v283 = vmul.f32 %v263, %v280
      %284 = vrot.lane.b32.xlu0 %v267, 127
      %v285 = vpop.permute.xlu0 %284
      %v287 = vmul.f32 %v262, %v285
      %v288 = vmul.f32 %v263, %v285
      %289 = vrot.lane.b32.xlu0 %v277, 1
      %v290 = vpop.permute.xlu0 %289
      %v292 = vmul.f32 %v263, %v290
      %293 = vrot.lane.b32.xlu0 %v267, 7
      %v294 = vpop.permute.xlu0 %293
      %v296 = vmul.f32 %v263, %v294
      %297 = vrot.lane.b32.xlu0 %v277, 9
      %v298 = vpop.permute.xlu0 %297
      %v300 = vmul.f32 %v263, %v298
      %303 = vrot.lane.b32.xlu0 %v262, 127
      %v304 = vpop.permute.xlu0 %303
      %305 = vrot.lane.b32.xlu0 %v263, 127
      %v306 = vpop.permute.xlu0 %305
      %vm307 = vcmask 1039360
      %v308 = vsel %vm307, %v304, %v306
      %313 = vrot.lane.b32.xlu0 %v282, 126
      %v314 = vpop.permute.xlu0 %313
      %315 = vrot.lane.b32.xlu0 %v283, 126
      %v316 = vpop.permute.xlu0 %315
      %vm317 = vcmask 1031168
      %v318 = vsel %vm317, %v314, %v316
      %323 = vrot.lane.b32.xlu0 %v287, 120
      %v324 = vpop.permute.xlu0 %323
      %325 = vrot.lane.b32.xlu0 %v288, 120
      %v326 = vpop.permute.xlu0 %325
      %vm327 = vcmask 982016
      %v328 = vsel %vm327, %v324, %v326
      %331 = vrot.lane.b32.xlu0 %v263, 119
      %v332 = vpop.permute.xlu0 %331
      %335 = vrot.lane.b32.xlu0 %v292, 118
      %v336 = vpop.permute.xlu0 %335
      %339 = vrot.lane.b32.xlu0 %v296, 112
      %v340 = vpop.permute.xlu0 %339
      %342 = vrot.lane.b32.xlu0 %v263, 111
      %v343 = vpop.permute.xlu0 %342
      %346 = vrot.lane.b32.xlu0 %v300, 110
      %v347 = vpop.permute.xlu0 %346
      %v349 = vpack.c.bf16 %v308, %v272
      %v350 = vpack.c.bf16 %v306, %v273
      %v351 = vpack.c.bf16 %v328, %v318
      %v352 = vpack.c.bf16 %v326, %v316
      %v353 = vpack.c.bf16 %v336, %v332
      %v354 = vpack.c.bf16 %v343, %v340
      %v355 = vpack.c.bf16 %v347, %v347
      %v356 = vld [vmem:[%s2] sm:$0xf]
      %v357 = vld [vmem:[%s2 + $0x4] sm:$0xf]
      %v358 = vld [vmem:[%s4] sm:$0xff]
      %v359 = vld [vmem:[%s4 + $0x8] sm:$0xff]
      %361 = vset.pattern.permute.xlu0 0
      %362 = vperm.xlu0 %361, %v358
      %v363 = vpop.permute.xlu0 %362
      %366 = vset.pattern.permute.xlu0 0
      %367 = vperm.xlu0 %366, %v359
      %v368 = vpop.permute.xlu0 %367
      %v372 = vunpack.c.l.b16 %v356
      %v373 = vunpack.c.l.b16 %v357
      %v374 = vpack.c.b16 %v373, %v372
      %382 = vrot.lane.b32.xlu0 %v349, 9
      %v383 = vpop.permute.xlu0 %382
      %384 = vrot.lane.b32.xlu0 %v350, 9
      %v385 = vpop.permute.xlu0 %384
      %386 = vrot.lane.b32.xlu0 %v351, 9
      %v387 = vpop.permute.xlu0 %386
      %388 = vrot.lane.b32.xlu0 %v352, 9
      %v389 = vpop.permute.xlu0 %388
      %390 = vrot.lane.b32.xlu0 %v353, 9
      %v391 = vpop.permute.xlu0 %390
      %392 = vrot.lane.b32.xlu0 %v354, 9
      %v393 = vpop.permute.xlu0 %392
      %394 = vrot.lane.b32.xlu0 %v355, 9
      %v395 = vpop.permute.xlu0 %394
      %vm396 = vcmask 72704
      %v397 = vsel %vm396, %v383, %v385
      %v398 = vsel %vm396, %v387, %v389
      %vm403 = vcmask 588800
      %v405 = vsel %vm403, %v374, 0
      %vm407 = vcmask 1043456
      %v409 = vsel %vm407, %v395, 0
      %411 = vmatprep.subr.bf16.mxu0 0
      %412 = vmatpush1.bf16.msra.mxu0 %v397
      %413 = vmatprep.subr.bf16.mxu0 0
      %414 = vmatpush1.bf16.msra.mxu0 %v398
      %415 = vmatprep.subr.bf16.mxu0 0
      %416 = vmatpush1.bf16.msra.mxu0 %v391
      %417 = vmatprep.subr.bf16.mxu0 0
      %418 = vmatpush1.bf16.msra.mxu0 %v393
      %419 = vmatprep.subr.bf16.mxu0 0
      %420 = vmatpush1.bf16.msra.mxu0 %v409
      %421 = vmatprep.subr.bf16.mxu0 0
      %422 = vmatpush1.bf16.msra.mxu0 0
      %423 = vmatprep.subr.bf16.mxu0 0
      %424 = vmatpush1.bf16.msra.mxu0 0
      %425 = vmatprep.subr.bf16.mxu0 0
      %426 = vmatpush1.bf16.msra.mxu0 0
      %427 = vmatprep.subr.bf16.mxu0 0
      %428 = vmatpush1.bf16.msra.mxu0 0
      %429 = vmatprep.subr.bf16.mxu0 0
      %430 = vmatpush1.bf16.msra.mxu0 0
      %431 = vmatprep.subr.bf16.mxu0 0
      %432 = vmatpush1.bf16.msra.mxu0 0
      %433 = vmatprep.subr.bf16.mxu0 0
      %434 = vmatpush1.bf16.msra.mxu0 0
      %435 = vmatprep.subr.bf16.mxu0 0
      %436 = vmatpush1.bf16.msra.mxu0 0
      %437 = vmatprep.subr.bf16.mxu0 0
      %438 = vmatpush1.bf16.msra.mxu0 0
      %439 = vmatprep.subr.bf16.mxu0 0
      %440 = vmatpush1.bf16.msra.mxu0 0
      %441 = vmatprep.subr.bf16.mxu0 0
      %442 = vmatpush1.bf16.msra.mxu0 0
      %443 = vmatprep.mubr.bf16.mxu0 0
      %444 = vmatmul.mubr.bf16.gmra.mrb[0].mxu0 %v405
      %v445 = vpop.f32.mrb[0].mxu0
      %v446 = vadd.f32 %v363, %v445
      %v447 = vpop.f32.mrb[0].mxu0
      %v448 = vpop.f32.mrb[0].mxu0
      %v449 = vadd.f32 %v368, %v448
      %v450 = vpop.f32.mrb[0].mxu0
      %451 = vdwg.mxu0
      %v452 = vmul.f32 %v446, 0.2
      %v453 = vmul.f32 %v449, 0.2
      %v454 = vmax.f32 %v446, %v452
      %v455 = vmax.f32 %v449, %v453
      %456 = vst.msk [vmem:[#allocation2 + $0x8] sm:$0xff] %vm252, %v454
      %457 = vst.msk [vmem:[#allocation2 + $0x20] sm:$0xff] %vm252, %v455
      %v458 = vld [vmem:[#allocation2] sm:$0xff]
      %v459 = vld [vmem:[#allocation2 + $0x8] sm:$0xff]
      %v460 = vld [vmem:[#allocation2 + $0x18] sm:$0xff]
      %v461 = vld [vmem:[#allocation2 + $0x20] sm:$0xff]
      %v462 = vmul.f32 %v458, %v270
      %v463 = vmul.f32 %v459, %v270
      %v464 = vmul.f32 %v460, %v270
      %v465 = vmul.f32 %v461, %v270
      %v466 = vmul.f32 %v458, %v280
      %v467 = vmul.f32 %v459, %v280
      %v468 = vmul.f32 %v460, %v280
      %v469 = vmul.f32 %v461, %v280
      %v470 = vmul.f32 %v458, %v285
      %v471 = vmul.f32 %v459, %v285
      %v472 = vmul.f32 %v460, %v285
      %v473 = vmul.f32 %v461, %v285
      %v474 = vmul.f32 %v459, %v290
      %v475 = vmul.f32 %v461, %v290
      %v476 = vmul.f32 %v459, %v294
      %v477 = vmul.f32 %v461, %v294
      %v478 = vmul.f32 %v459, %v298
      %v479 = vmul.f32 %v461, %v298
      %484 = vrot.lane.b32.xlu0 %v458, 127
      %v485 = vpop.permute.xlu0 %484
      %486 = vrot.lane.b32.xlu0 %v459, 127
      %v487 = vpop.permute.xlu0 %486
      %488 = vrot.lane.b32.xlu0 %v460, 127
      %v489 = vpop.permute.xlu0 %488
      %490 = vrot.lane.b32.xlu0 %v461, 127
      %v491 = vpop.permute.xlu0 %490
      %v492 = vsel %vm307, %v485, %v487
      %v493 = vsel %vm307, %v489, %v491
      %502 = vrot.lane.b32.xlu0 %v466, 126
      %v503 = vpop.permute.xlu0 %502
      %504 = vrot.lane.b32.xlu0 %v467, 126
      %v505 = vpop.permute.xlu0 %504
      %506 = vrot.lane.b32.xlu0 %v468, 126
      %v507 = vpop.permute.xlu0 %506
      %508 = vrot.lane.b32.xlu0 %v469, 126
      %v509 = vpop.permute.xlu0 %508
      %v510 = vsel %vm317, %v503, %v505
      %v511 = vsel %vm317, %v507, %v509
      %520 = vrot.lane.b32.xlu0 %v470, 120
      %v521 = vpop.permute.xlu0 %520
      %522 = vrot.lane.b32.xlu0 %v471, 120
      %v523 = vpop.permute.xlu0 %522
      %524 = vrot.lane.b32.xlu0 %v472, 120
      %v525 = vpop.permute.xlu0 %524
      %526 = vrot.lane.b32.xlu0 %v473, 120
      %v527 = vpop.permute.xlu0 %526
      %v528 = vsel %vm327, %v521, %v523
      %v529 = vsel %vm327, %v525, %v527
      %534 = vrot.lane.b32.xlu0 %v459, 119
      %v535 = vpop.permute.xlu0 %534
      %536 = vrot.lane.b32.xlu0 %v461, 119
      %v537 = vpop.permute.xlu0 %536
      %542 = vrot.lane.b32.xlu0 %v474, 118
      %v543 = vpop.permute.xlu0 %542
      %544 = vrot.lane.b32.xlu0 %v475, 118
      %v545 = vpop.permute.xlu0 %544
      %550 = vrot.lane.b32.xlu0 %v476, 112
      %v551 = vpop.permute.xlu0 %550
      %552 = vrot.lane.b32.xlu0 %v477, 112
      %v553 = vpop.permute.xlu0 %552
      %556 = vrot.lane.b32.xlu0 %v459, 111
      %v557 = vpop.permute.xlu0 %556
      %558 = vrot.lane.b32.xlu0 %v461, 111
      %v559 = vpop.permute.xlu0 %558
      %564 = vrot.lane.b32.xlu0 %v478, 110
      %v565 = vpop.permute.xlu0 %564
      %566 = vrot.lane.b32.xlu0 %v479, 110
      %v567 = vpop.permute.xlu0 %566
      %v570 = vpack.c.bf16 %v464, %v462
      %v571 = vpack.c.bf16 %v465, %v463
      %v572 = vpack.c.bf16 %v493, %v492
      %v573 = vpack.c.bf16 %v491, %v487
      %v574 = vpack.c.bf16 %v511, %v510
      %v575 = vpack.c.bf16 %v509, %v505
      %v576 = vpack.c.bf16 %v529, %v528
      %v577 = vpack.c.bf16 %v527, %v523
      %v578 = vpack.c.bf16 %v537, %v535
      %v579 = vpack.c.bf16 %v545, %v543
      %v580 = vpack.c.bf16 %v553, %v551
      %v581 = vpack.c.bf16 %v559, %v557
      %v582 = vpack.c.bf16 %v567, %v565
      %v583 = vld [vmem:[%s3] sm:$0xff]
      %v584 = vld [vmem:[%s3 + $0x8] sm:$0xff]
      %v585 = vld [vmem:[%s5] sm:$0xff]
      %v586 = vld [vmem:[%s5 + $0x8] sm:$0xff]
      %588 = vset.pattern.permute.xlu0 0
      %589 = vperm.xlu0 %588, %v585
      %v590 = vpop.permute.xlu0 %589
      %593 = vset.pattern.permute.xlu0 0
      %594 = vperm.xlu0 %593, %v586
      %v595 = vpop.permute.xlu0 %594
      %v599 = vunpack.c.l.b16 %v583
      %v600 = vunpack.c.h.b16 %v583
      %v601 = vunpack.c.l.b16 %v584
      %v602 = vunpack.c.h.b16 %v584
      %v603 = vpack.c.b16 %v601, %v599
      %v604 = vpack.c.b16 %v602, %v600
      %619 = vrot.lane.b32.xlu0 %v570, 9
      %v620 = vpop.permute.xlu0 %619
      %621 = vrot.lane.b32.xlu0 %v571, 9
      %v622 = vpop.permute.xlu0 %621
      %623 = vrot.lane.b32.xlu0 %v572, 9
      %v624 = vpop.permute.xlu0 %623
      %625 = vrot.lane.b32.xlu0 %v573, 9
      %v626 = vpop.permute.xlu0 %625
      %627 = vrot.lane.b32.xlu0 %v574, 9
      %v628 = vpop.permute.xlu0 %627
      %629 = vrot.lane.b32.xlu0 %v575, 9
      %v630 = vpop.permute.xlu0 %629
      %631 = vrot.lane.b32.xlu0 %v576, 9
      %v632 = vpop.permute.xlu0 %631
      %633 = vrot.lane.b32.xlu0 %v577, 9
      %v634 = vpop.permute.xlu0 %633
      %635 = vrot.lane.b32.xlu0 %v578, 9
      %v636 = vpop.permute.xlu0 %635
      %637 = vrot.lane.b32.xlu0 %v579, 9
      %v638 = vpop.permute.xlu0 %637
      %639 = vrot.lane.b32.xlu0 %v580, 9
      %v640 = vpop.permute.xlu0 %639
      %641 = vrot.lane.b32.xlu0 %v581, 9
      %v642 = vpop.permute.xlu0 %641
      %643 = vrot.lane.b32.xlu0 %v582, 9
      %v644 = vpop.permute.xlu0 %643
      %v645 = vsel %vm396, %v620, %v622
      %v646 = vsel %vm396, %v624, %v626
      %v647 = vsel %vm396, %v628, %v630
      %v648 = vsel %vm396, %v632, %v634
      %vm658 = vcmask 130048
      %v660 = vsel %vm658, %v604, 0
      %662 = vmatprep.subr.bf16.mxu0 0
      %663 = vmatpush1.bf16.msra.mxu0 %v645
      %664 = vmatprep.subr.bf16.mxu0 0
      %665 = vmatpush1.bf16.msra.mxu0 %v646
      %666 = vmatprep.subr.bf16.mxu0 0
      %667 = vmatpush1.bf16.msra.mxu0 %v647
      %668 = vmatprep.subr.bf16.mxu0 0
      %669 = vmatpush1.bf16.msra.mxu0 %v648
      %670 = vmatprep.subr.bf16.mxu0 0
      %671 = vmatpush1.bf16.msra.mxu0 %v636
      %672 = vmatprep.subr.bf16.mxu0 0
      %673 = vmatpush1.bf16.msra.mxu0 %v638
      %674 = vmatprep.subr.bf16.mxu0 0
      %675 = vmatpush1.bf16.msra.mxu0 %v640
      %676 = vmatprep.subr.bf16.mxu0 0
      %677 = vmatpush1.bf16.msra.mxu0 %v642
      %678 = vmatprep.subr.bf16.mxu0 0
      %679 = vmatpush1.bf16.msra.mxu0 %v644
      %680 = vmatprep.subr.bf16.mxu0 0
      %681 = vmatpush1.bf16.msra.mxu0 0
      %682 = vmatprep.subr.bf16.mxu0 0
      %683 = vmatpush1.bf16.msra.mxu0 0
      %684 = vmatprep.subr.bf16.mxu0 0
      %685 = vmatpush1.bf16.msra.mxu0 0
      %686 = vmatprep.subr.bf16.mxu0 0
      %687 = vmatpush1.bf16.msra.mxu0 0
      %688 = vmatprep.subr.bf16.mxu0 0
      %689 = vmatpush1.bf16.msra.mxu0 0
      %690 = vmatprep.subr.bf16.mxu0 0
      %691 = vmatpush1.bf16.msra.mxu0 0
      %692 = vmatprep.subr.bf16.mxu0 0
      %693 = vmatpush1.bf16.msra.mxu0 0
      %694 = vmatprep.mubr.bf16.mxu0 %v660
      %695 = vmatmul.mubr.bf16.gmra.mrb[0].mxu0 %v603
      %v696 = vpop.f32.mrb[0].mxu0
      %v697 = vadd.f32 %v590, %v696
      %v698 = vpop.f32.mrb[0].mxu0
      %v699 = vpop.f32.mrb[0].mxu0
      %v700 = vadd.f32 %v595, %v699
      %v701 = vpop.f32.mrb[0].mxu0
      %702 = vdwg.mxu0
      %v703 = vmul.f32 %v697, 0.2
      %v704 = vmul.f32 %v700, 0.2
      %v705 = vmax.f32 %v697, %v703
      %v706 = vmax.f32 %v700, %v704
      %v707 = vpack.c.bf16 %v706, %v705
      %v709 = vunpack.c.l.b16 %v707
      %v710 = vunpack.c.h.b16 %v707
      %v711 = vpack.c.b16 %v709, %v709
      %v712 = vpack.c.b16 %v710, %v710
      %vm715 = vcmask 519168
      %716 = vst.msk [vmem:[%s248] sm:$0xf] %vm715, %v711
      %717 = vst.msk [vmem:[%s248 + $0x4] sm:$0xf] %vm715, %v712
      %p718 = scmp.lt.s32.totalorder %s17, 1
      %s719 = scalar_select %p718, %s17, 1
      %s720 = smul.addr %s719, 2
      %s721 = smul.addr %s720, 4
      %s722 = scalar_lea.vmem %s6, %s721
      // Predicated region
      $region45: #{vdn_forward.9} parent=43 // pred_check
        %p723 = pneg %p166
      $region46: #{vdn_forward.9} parent=43 // pred_check_branch
        %725 = sbr.rel (%p723) target = $region48
      $region47: #{vdn_forward.9} parent=43 // pred_region
        _
      $region48: #{vdn_forward.9} parent=43 // pred_fallthru
        _
    $region44: #{vdn_forward.9} parent=5 // pred_fallthru
      _
    %p726 = scmp.le.s32.totalorder 2, %s12
    // Predicated region
    $region49: #{vdn_forward.9} parent=5 // pred_check
      %p727 = pneg %p726
    $region50: #{vdn_forward.9} parent=5 // pred_check_branch
      %729 = sbr.rel (%p727) target = $region52
    $region51: #{vdn_forward.9} parent=5 // pred_region
      %s730 = ssub.s32 %s12, 2
      // Predicated region
      $region53: #{vdn_forward.9} parent=51 // pred_check
        %p731 = pneg %p172
      $region54: #{vdn_forward.9} parent=51 // pred_check_branch
        %733 = sbr.rel (%p731) target = $region56
      $region55: #{vdn_forward.9} parent=51 // pred_region
        %p734 = scmp.lt.s32.totalorder %s18, 1
        %s735 = scalar_select %p734, %s18, 1
        %s736 = smul.addr %s735, 2
        %s737 = smul.addr %s736, 4
        %s738 = scalar_lea.vmem %s6, %s737
      $region56: #{vdn_forward.9} parent=51 // pred_fallthru
        _
    $region52: #{vdn_forward.9} parent=5 // pred_fallthru
      _
  $region6: #{vdn_forward.9} parent=0 // loop_footer
    %s16 = sadd.s32 1, %s12
  $region7: #{vdn_forward.9} parent=0 // loop_footer_branch
    %11 = sbr.rel target = $region3
  $region8: #{vdn_forward.9} parent=0 // loop_exit
    _

// kernel: vdn_forward.8
$region0: #{vdn_forward.8}
  #allocation0 [shape = 'u32[]', space=smem, size = 0x4, offset = 0x4, fixed_abs, tag = 'smem constant byte address 0x4 - core index']
  #allocation1 [shape = 'u32[144,128]{1,0:T(1,128)}', space=vmem, size = 0x12000, scoped, tag = 'internal scratch']
  #allocation2 [shape = 'f32[8,512]{1,0:T(8,128)}', space=vmem, size = 0x4000, scoped, tag = 'scratch operand']
  %s0 = inlined_call_operand.vmem [shape: f32[2,256], index: 0, kind: input, shape index: {}]
  %s1 = inlined_call_operand.vmem [shape: bf16[2,8,256], index: 1, kind: input, shape index: {}]
  %s2 = inlined_call_operand.vmem [shape: bf16[8,72], index: 2, kind: input, shape index: {}]
  %s3 = inlined_call_operand.vmem [shape: bf16[8,72], index: 3, kind: input, shape index: {}]
  %s4 = inlined_call_operand.vmem [shape: f32[8,1], index: 4, kind: input, shape index: {}, may-alias: {4,5}]
  %s5 = inlined_call_operand.vmem [shape: f32[8,1], index: 5, kind: input, shape index: {}, may-alias: {4,5}]
  %s6 = inlined_call_operand.vmem [shape: bf16[2,8,256], index: 6, kind: output, shape index: {}]
  %s7 = sld [smem:[#allocation0]]
  $region57: #{vdn_forward.8} parent=0
    _
  %s9 = ssub.s32 1, %s7
  %s10 = scalar_select 0, %s9, %s7
  loop: start=0, step=1, limit=4
  $region2: #{vdn_forward.8} parent=0 // loop_pre_header
    _
  $region3: #{vdn_forward.8} parent=0 // loop_header
    %s12 = sphi 0, %s16
    %p13 = scmp.ge.s32.totalorder %s12, 4
    %s20 = sphi 0, %s20
    %s22 = sphi 0, %s20
    %s23 = sphi 0, %s22
    %s37 = sphi 0, %s23
    %s43 = sphi 0, %s45
    %s46 = sphi 0, %s43
    %s47 = sphi 0, %s46
    %s63 = sphi 0, %s47
    %s67 = sphi 0, %s67
    %s69 = sphi 0, %s67
    %s70 = sphi 0, %s69
    %s84 = sphi 0, %s70
    %s88 = sphi 0, %s88
    %s90 = sphi 0, %s88
    %s91 = sphi 0, %s90
    %s105 = sphi 0, %s91
    %s109 = sphi 0, %s109
    %s111 = sphi 0, %s109
    %s112 = sphi 0, %s111
    %s126 = sphi 0, %s112
    %s130 = sphi 0, %s130
    %s132 = sphi 0, %s130
    %s133 = sphi 0, %s132
    %s147 = sphi 0, %s133
    %s153 = sphi 0, %s155
    %s156 = sphi 0, %s153
    %s157 = sphi 0, %s156
    %s173 = sphi 0, %s157
  $region4: #{vdn_forward.8} parent=0 // loop_header_branch
    %15 = sbr.rel (%p13) target = $region8
  $region5: #{vdn_forward.8} parent=0 // loop_body
    %s17 = ssub.s32 %s12, 1
    %s18 = ssub.s32 %s12, 2
    %s19 = sadd.s32 %s12, 1
    %s21 = sadd.s32 %s20, 1
    %p24 = scmp.eq.s32.totalorder %s12, 1
    %p25 = scmp.ne.s32.totalorder %s20, %s22
    %p26 = scmp.eq.s32.totalorder %s12, 0
    %p27 = por %p25, %p26
    %p28 = scmp.ne.s32.totalorder %s20, %s22
    %p29 = scmp.eq.s32.totalorder %s17, 1
    %p30 = por %p28, %p29
    %p31 = scmp.ne.s32.totalorder %s22, %s23
    %p32 = scmp.eq.s32.totalorder %s17, 0
    %p33 = por %p31, %p32
    %p34 = scmp.ne.s32.totalorder %s22, %s23
    %p35 = scmp.eq.s32.totalorder %s18, 1
    %p36 = por %p34, %p35
    %p38 = scmp.ne.s32.totalorder %s23, %s37
    %p39 = scmp.eq.s32.totalorder %s18, 0
    %p40 = por %p38, %p39
    %s41 = ssub.s32 %s12, %s19
    %p42 = scmp.eq.s32.totalorder %s41, 0
    %s44 = sadd.s32 %s43, 1
    %s45 = scalar_select %p42, %s43, %s44
    %p48 = pneg %p42
    %p49 = scmp.eq.s32.totalorder %s12, 1
    %p50 = por %p48, %p49
    %p51 = scmp.ne.s32.totalorder %s43, %s46
    %p52 = scmp.eq.s32.totalorder %s12, 0
    %p53 = por %p51, %p52
    %p54 = scmp.ne.s32.totalorder %s43, %s46
    %p55 = scmp.eq.s32.totalorder %s17, 1
    %p56 = por %p54, %p55
    %p57 = scmp.ne.s32.totalorder %s46, %s47
    %p58 = scmp.eq.s32.totalorder %s17, 0
    %p59 = por %p57, %p58
    %p60 = scmp.ne.s32.totalorder %s46, %s47
    %p61 = scmp.eq.s32.totalorder %s18, 1
    %p62 = por %p60, %p61
    %p64 = scmp.ne.s32.totalorder %s47, %s63
    %p65 = scmp.eq.s32.totalorder %s18, 0
    %p66 = por %p64, %p65
    %s68 = sadd.s32 %s67, 1
    %p71 = scmp.eq.s32.totalorder %s12, 1
    %p72 = scmp.ne.s32.totalorder %s67, %s69
    %p73 = scmp.eq.s32.totalorder %s12, 0
    %p74 = por %p72, %p73
    %p75 = scmp.ne.s32.totalorder %s67, %s69
    %p76 = scmp.eq.s32.totalorder %s17, 1
    %p77 = por %p75, %p76
    %p78 = scmp.ne.s32.totalorder %s69, %s70
    %p79 = scmp.eq.s32.totalorder %s17, 0
    %p80 = por %p78, %p79
    %p81 = scmp.ne.s32.totalorder %s69, %s70
    %p82 = scmp.eq.s32.totalorder %s18, 1
    %p83 = por %p81, %p82
    %p85 = scmp.ne.s32.totalorder %s70, %s84
    %p86 = scmp.eq.s32.totalorder %s18, 0
    %p87 = por %p85, %p86
    %s89 = sadd.s32 %s88, 1
    %p92 = scmp.eq.s32.totalorder %s12, 1
    %p93 = scmp.ne.s32.totalorder %s88, %s90
    %p94 = scmp.eq.s32.totalorder %s12, 0
    %p95 = por %p93, %p94
    %p96 = scmp.ne.s32.totalorder %s88, %s90
    %p97 = scmp.eq.s32.totalorder %s17, 1
    %p98 = por %p96, %p97
    %p99 = scmp.ne.s32.totalorder %s90, %s91
    %p100 = scmp.eq.s32.totalorder %s17, 0
    %p101 = por %p99, %p100
    %p102 = scmp.ne.s32.totalorder %s90, %s91
    %p103 = scmp.eq.s32.totalorder %s18, 1
    %p104 = por %p102, %p103
    %p106 = scmp.ne.s32.totalorder %s91, %s105
    %p107 = scmp.eq.s32.totalorder %s18, 0
    %p108 = por %p106, %p107
    %s110 = sadd.s32 %s109, 1
    %p113 = scmp.eq.s32.totalorder %s12, 1
    %p114 = scmp.ne.s32.totalorder %s109, %s111
    %p115 = scmp.eq.s32.totalorder %s12, 0
    %p116 = por %p114, %p115
    %p117 = scmp.ne.s32.totalorder %s109, %s111
    %p118 = scmp.eq.s32.totalorder %s17, 1
    %p119 = por %p117, %p118
    %p120 = scmp.ne.s32.totalorder %s111, %s112
    %p121 = scmp.eq.s32.totalorder %s17, 0
    %p122 = por %p120, %p121
    %p123 = scmp.ne.s32.totalorder %s111, %s112
    %p124 = scmp.eq.s32.totalorder %s18, 1
    %p125 = por %p123, %p124
    %p127 = scmp.ne.s32.totalorder %s112, %s126
    %p128 = scmp.eq.s32.totalorder %s18, 0
    %p129 = por %p127, %p128
    %s131 = sadd.s32 %s130, 1
    %p134 = scmp.eq.s32.totalorder %s12, 1
    %p135 = scmp.ne.s32.totalorder %s130, %s132
    %p136 = scmp.eq.s32.totalorder %s12, 0
    %p137 = por %p135, %p136
    %p138 = scmp.ne.s32.totalorder %s130, %s132
    %p139 = scmp.eq.s32.totalorder %s17, 1
    %p140 = por %p138, %p139
    %p141 = scmp.ne.s32.totalorder %s132, %s133
    %p142 = scmp.eq.s32.totalorder %s17, 0
    %p143 = por %p141, %p142
    %p144 = scmp.ne.s32.totalorder %s132, %s133
    %p145 = scmp.eq.s32.totalorder %s18, 1
    %p146 = por %p144, %p145
    %p148 = scmp.ne.s32.totalorder %s133, %s147
    %p149 = scmp.eq.s32.totalorder %s18, 0
    %p150 = por %p148, %p149
    %s151 = ssub.s32 %s12, %s19
    %p152 = scmp.eq.s32.totalorder %s151, 0
    %s154 = sadd.s32 %s153, 1
    %s155 = scalar_select %p152, %s153, %s154
    %p158 = pneg %p152
    %p159 = scmp.eq.s32.totalorder %s12, 1
    %p160 = por %p158, %p159
    %p161 = scmp.ne.s32.totalorder %s153, %s156
    %p162 = scmp.eq.s32.totalorder %s12, 0
    %p163 = por %p161, %p162
    %p164 = scmp.ne.s32.totalorder %s153, %s156
    %p165 = scmp.eq.s32.totalorder %s17, 1
    %p166 = por %p164, %p165
    %p167 = scmp.ne.s32.totalorder %s156, %s157
    %p168 = scmp.eq.s32.totalorder %s17, 0
    %p169 = por %p167, %p168
    %p170 = scmp.ne.s32.totalorder %s156, %s157
    %p171 = scmp.eq.s32.totalorder %s18, 1
    %p172 = por %p170, %p171
    %p174 = scmp.ne.s32.totalorder %s157, %s173
    %p175 = scmp.eq.s32.totalorder %s18, 0
    %p176 = por %p174, %p175
    %p177 = scmp.le.s32.totalorder 1, %s12
    %p178 = scmp.lt.s32.totalorder %s12, 3
    %p179 = pnand %p177, %p178
    %p180 = pneg %p179
    // Predicated region
    $region9: #{vdn_forward.8} parent=5 // pred_check
      _
    $region10: #{vdn_forward.8} parent=5 // pred_check_branch
      %182 = sbr.rel (%p179) target = $region12
    $region11: #{vdn_forward.8} parent=5 // pred_region
      %s183 = ssub.s32 %s12, 1
      // Predicated region
      $region13: #{vdn_forward.8} parent=11 // pred_check
        %p184 = pneg %p33
      $region14: #{vdn_forward.8} parent=11 // pred_check_branch
        %186 = sbr.rel (%p184) target = $region16
      $region15: #{vdn_forward.8} parent=11 // pred_region
        _
      $region16: #{vdn_forward.8} parent=11 // pred_fallthru
        _
      // Predicated region
      $region17: #{vdn_forward.8} parent=11 // pred_check
        %p187 = pneg %p80
      $region18: #{vdn_forward.8} parent=11 // pred_check_branch
        %189 = sbr.rel (%p187) target = $region20
      $region19: #{vdn_forward.8} parent=11 // pred_region
        _
      $region20: #{vdn_forward.8} parent=11 // pred_fallthru
        _
      // Predicated region
      $region21: #{vdn_forward.8} parent=11 // pred_check
        %p190 = pneg %p101
      $region22: #{vdn_forward.8} parent=11 // pred_check_branch
        %192 = sbr.rel (%p190) target = $region24
      $region23: #{vdn_forward.8} parent=11 // pred_region
        _
      $region24: #{vdn_forward.8} parent=11 // pred_fallthru
        _
      // Predicated region
      $region25: #{vdn_forward.8} parent=11 // pred_check
        %p193 = pneg %p122
      $region26: #{vdn_forward.8} parent=11 // pred_check_branch
        %195 = sbr.rel (%p193) target = $region28
      $region27: #{vdn_forward.8} parent=11 // pred_region
        _
      $region28: #{vdn_forward.8} parent=11 // pred_fallthru
        _
      // Predicated region
      $region29: #{vdn_forward.8} parent=11 // pred_check
        %p196 = pneg %p143
      $region30: #{vdn_forward.8} parent=11 // pred_check_branch
        %198 = sbr.rel (%p196) target = $region32
      $region31: #{vdn_forward.8} parent=11 // pred_region
        _
      $region32: #{vdn_forward.8} parent=11 // pred_fallthru
        _
    $region12: #{vdn_forward.8} parent=5 // pred_fallthru
      _
    %p199 = scmp.lt.s32.totalorder %s12, 2
    // Predicated region
    $region33: #{vdn_forward.8} parent=5 // pred_check
      %p200 = pneg %p199
    $region34: #{vdn_forward.8} parent=5 // pred_check_branch
      %202 = sbr.rel (%p200) target = $region36
    $region35: #{vdn_forward.8} parent=5 // pred_region
      // Predicated region
      $region37: #{vdn_forward.8} parent=35 // pred_check
        %p203 = pneg %p53
      $region38: #{vdn_forward.8} parent=35 // pred_check_branch
        %205 = sbr.rel (%p203) target = $region40
      $region39: #{vdn_forward.8} parent=35 // pred_region
        %p206 = scmp.lt.s32.totalorder %s12, 1
        %s207 = scalar_select %p206, %s12, 1
        %s208 = smul.addr %s207, 2
        %s209 = smul.addr %s208, 4
        %s210 = scalar_lea.vmem %s1, %s209
      $region40: #{vdn_forward.8} parent=35 // pred_fallthru
        _
    $region36: #{vdn_forward.8} parent=5 // pred_fallthru
      _
    %p211 = scmp.le.s32.totalorder 1, %s12
    %p212 = scmp.lt.s32.totalorder %s12, 3
    %p213 = pnand %p211, %p212
    %p214 = pneg %p213
    // Predicated region
    $region41: #{vdn_forward.8} parent=5 // pred_check
      _
    $region42: #{vdn_forward.8} parent=5 // pred_check_branch
      %216 = sbr.rel (%p213) target = $region44
    $region43: #{vdn_forward.8} parent=5 // pred_region
      %s217 = ssub.s32 %s12, 1
      %p218 = pneg %p33
      %p219 = pneg %p30
      %p220 = scmp.lt.s32.totalorder %s17, 1
      %s221 = scalar_select %p220, %s17, 1
      %s222 = smul.addr %s221, 2
      %s223 = smul.addr %s222, 4
      %s224 = scalar_lea.vmem %s1, %s223
      %p225 = pneg %p59
      %p226 = pneg %p56
      %p227 = pneg %p80
      %p228 = pneg %p77
      %p229 = pneg %p101
      %p230 = pneg %p98
      %p231 = pneg %p122
      %p232 = pneg %p119
      %p233 = pneg %p143
      %p234 = pneg %p140
      %p235 = pneg %p169
      %p236 = pneg %p166
      %p237 = scmp.lt.s32.totalorder %s17, 1
      %s238 = scalar_select %p237, %s17, 1
      %s239 = smul.addr %s238, 2
      %s240 = smul.addr %s239, 4
      %s241 = scalar_lea.vmem %s6, %s240
      %p242 = scmp.lt.s32.totalorder %s17, 1
      %s243 = scalar_select %p242, %s17, 1
      %s244 = smul.addr %s243, 2
      %s245 = smul.addr %s244, 4
      %s246 = scalar_lea.vmem %s1, %s245
      %p247 = scmp.lt.s32.totalorder %s17, 1
      %s248 = scalar_select %p247, %s17, 1
      %s249 = smul.addr %s248, 2
      %s250 = smul.addr %s249, 4
      %s251 = scalar_lea.vmem %s6, %s250
      %253 = vst [vmem:[#allocation2] sm:$0xff] 0.0
      %254 = vst [vmem:[#allocation2 + $0x8] sm:$0xff] 0.0
      %255 = vst [vmem:[#allocation2 + $0x10] sm:$0xff] 0.0
      %256 = vst [vmem:[#allocation2 + $0x18] sm:$0xff] 0.0
      %v257 = vld [vmem:[%s0] ss:$2 sm:$0x3]
      %s258 = scalar_lea.vmem %s0, 1
      %v259 = vld [vmem:[%s258] ss:$2 sm:$0x3]
      %v260 = vld [vmem:[%s246] sm:$0xff]
      %v261 = vunpack.c.l.bf16 %v260
      %v262 = vunpack.c.h.bf16 %v260
      %263 = vst [vmem:[#allocation2 + $0x8] sm:$0xff] %v261
      %264 = vst [vmem:[#allocation2 + $0x10] sm:$0xff] %v262
      %v265 = vld [vmem:[#allocation2] sm:$0xff]
      %v266 = vld [vmem:[#allocation2 + $0x8] sm:$0xff]
      %v267 = vld [vmem:[#allocation2 + $0x10] sm:$0xff]
      %v268 = vld [vmem:[#allocation2 + $0x18] sm:$0xff]
      %v270 = vlaneseq
      %v271 = vshrl.u32 %v270, 7
      %v272 = vsub.s32 0, %v271
      %v273 = vrot.slane %v257, %v272
      %v274 = vlaneseq
      %v275 = vshrl.u32 %v274, 7
      %v276 = vsub.s32 1, %v275
      %v277 = vrot.slane %v257, %v276
      %278 = vrot.lane.b32.xlu0 %v273, 111
      %v279 = vpop.permute.xlu0 %278
      %280 = vrot.lane.b32.xlu0 %v277, 111
      %v281 = vpop.permute.xlu0 %280
      %vm282 = vcmask 908288
      %v283 = vsel %vm282, %v279, %v281
      %v287 = vmul.f32 %v265, %v279
      %v288 = vmul.f32 %v266, %v283
      %v289 = vmul.f32 %v267, %v281
      %v291 = vlaneseq
      %v292 = vshrl.u32 %v291, 7
      %v293 = vsub.s32 0, %v292
      %v294 = vrot.slane %v259, %v293
      %v295 = vlaneseq
      %v296 = vshrl.u32 %v295, 7
      %v297 = vsub.s32 1, %v296
      %v298 = vrot.slane %v259, %v297
      %299 = vrot.lane.b32.xlu0 %v294, 113
      %v300 = vpop.permute.xlu0 %299
      %301 = vrot.lane.b32.xlu0 %v298, 113
      %v302 = vpop.permute.xlu0 %301
      %vm303 = vcmask 924672
      %v304 = vsel %vm303, %v300, %v302
      %v308 = vmul.f32 %v265, %v300
      %v309 = vmul.f32 %v266, %v304
      %v310 = vmul.f32 %v267, %v302
      %311 = vrot.lane.b32.xlu0 %v273, 127
      %v312 = vpop.permute.xlu0 %311
      %313 = vrot.lane.b32.xlu0 %v277, 127
      %v314 = vpop.permute.xlu0 %313
      %vm315 = vcmask 1039360
      %v316 = vsel %vm315, %v312, %v314
      %v320 = vmul.f32 %v265, %v312
      %v321 = vmul.f32 %v266, %v316
      %v322 = vmul.f32 %v267, %v314
      %323 = vrot.lane.b32.xlu0 %v294, 1
      %v324 = vpop.permute.xlu0 %323
      %325 = vrot.lane.b32.xlu0 %v298, 1
      %v326 = vpop.permute.xlu0 %325
      %vm327 = vcmask 7168
      %v328 = vsel %vm327, %v324, %v326
      %v332 = vmul.f32 %v266, %v324
      %v333 = vmul.f32 %v267, %v328
      %v334 = vmul.f32 %v268, %v326
      %335 = vrot.lane.b32.xlu0 %v273, 15
      %v336 = vpop.permute.xlu0 %335
      %337 = vrot.lane.b32.xlu0 %v277, 15
      %v338 = vpop.permute.xlu0 %337
      %vm339 = vcmask 121856
      %v340 = vsel %vm339, %v336, %v338
      %v344 = vmul.f32 %v266, %v336
      %v345 = vmul.f32 %v267, %v340
      %v346 = vmul.f32 %v268, %v338
      %347 = vrot.lane.b32.xlu0 %v294, 17
      %v348 = vpop.permute.xlu0 %347
      %349 = vrot.lane.b32.xlu0 %v298, 17
      %v350 = vpop.permute.xlu0 %349
      %vm351 = vcmask 138240
      %v352 = vsel %vm351, %v348, %v350
      %v356 = vmul.f32 %v266, %v348
      %v357 = vmul.f32 %v267, %v352
      %v358 = vmul.f32 %v268, %v350
      %362 = vrot.lane.b32.xlu0 %v265, 127
      %v363 = vpop.permute.xlu0 %362
      %364 = vrot.lane.b32.xlu0 %v266, 127
      %v365 = vpop.permute.xlu0 %364
      %366 = vrot.lane.b32.xlu0 %v267, 127
      %v367 = vpop.permute.xlu0 %366
      %v368 = vsel %vm315, %v363, %v365
      %v369 = vsel %vm315, %v365, %v367
      %376 = vrot.lane.b32.xlu0 %v308, 126
      %v377 = vpop.permute.xlu0 %376
      %378 = vrot.lane.b32.xlu0 %v309, 126
      %v379 = vpop.permute.xlu0 %378
      %380 = vrot.lane.b32.xlu0 %v310, 126
      %v381 = vpop.permute.xlu0 %380
      %vm382 = vcmask 1031168
      %v383 = vsel %vm382, %v377, %v379
      %v384 = vsel %vm382, %v379, %v381
      %391 = vrot.lane.b32.xlu0 %v320, 112
      %v392 = vpop.permute.xlu0 %391
      %393 = vrot.lane.b32.xlu0 %v321, 112
      %v394 = vpop.permute.xlu0 %393
      %395 = vrot.lane.b32.xlu0 %v322, 112
      %v396 = vpop.permute.xlu0 %395
      %vm397 = vcmask 916480
      %v398 = vsel %vm397, %v392, %v394
      %v399 = vsel %vm397, %v394, %v396
      %403 = vrot.lane.b32.xlu0 %v266, 111
      %v404 = vpop.permute.xlu0 %403
      %405 = vrot.lane.b32.xlu0 %v267, 111
      %v406 = vpop.permute.xlu0 %405
      %v407 = vsel %vm282, %v404, %v406
      %414 = vrot.lane.b32.xlu0 %v332, 110
      %v415 = vpop.permute.xlu0 %414
      %416 = vrot.lane.b32.xlu0 %v333, 110
      %v417 = vpop.permute.xlu0 %416
      %418 = vrot.lane.b32.xlu0 %v334, 110
      %v419 = vpop.permute.xlu0 %418
      %vm420 = vcmask 900096
      %v421 = vsel %vm420, %v415, %v417
      %v422 = vsel %vm420, %v417, %v419
      %429 = vrot.lane.b32.xlu0 %v344, 96
      %v430 = vpop.permute.xlu0 %429
      %431 = vrot.lane.b32.xlu0 %v345, 96
      %v432 = vpop.permute.xlu0 %431
      %433 = vrot.lane.b32.xlu0 %v346, 96
      %v434 = vpop.permute.xlu0 %433
      %vm435 = vcmask 785408
      %v436 = vsel %vm435, %v430, %v432
      %v437 = vsel %vm435, %v432, %v434
      %442 = vrot.lane.b32.xlu0 %v266, 95
      %v443 = vpop.permute.xlu0 %442
      %444 = vrot.lane.b32.xlu0 %v267, 95
      %v445 = vpop.permute.xlu0 %444
      %446 = vrot.lane.b32.xlu0 %v268, 95
      %v447 = vpop.permute.xlu0 %446
      %vm448 = vcmask 777216
      %v449 = vsel %vm448, %v443, %v445
      %v450 = vsel %vm448, %v445, %v447
      %457 = vrot.lane.b32.xlu0 %v356, 94
      %v458 = vpop.permute.xlu0 %457
      %459 = vrot.lane.b32.xlu0 %v357, 94
      %v460 = vpop.permute.xlu0 %459
      %461 = vrot.lane.b32.xlu0 %v358, 94
      %v462 = vpop.permute.xlu0 %461
      %vm463 = vcmask 769024
      %v464 = vsel %vm463, %v458, %v460
      %v465 = vsel %vm463, %v460, %v462
      %v469 = vpack.c.bf16 %v368, %v287
      %v470 = vpack.c.bf16 %v369, %v288
      %v471 = vpack.c.bf16 %v367, %v289
      %v472 = vpack.c.bf16 %v398, %v383
      %v473 = vpack.c.bf16 %v399, %v384
      %v474 = vpack.c.bf16 %v396, %v381
      %v475 = vpack.c.bf16 %v415, %v404
      %v476 = vpack.c.bf16 %v421, %v407
      %v477 = vpack.c.bf16 %v422, %v406
      %v478 = vpack.c.bf16 %v443, %v430
      %v479 = vpack.c.bf16 %v449, %v436
      %v480 = vpack.c.bf16 %v450, %v437
      %v481 = vpack.c.bf16 %v458, %v458
      %v482 = vpack.c.bf16 %v464, %v464
      %v483 = vpack.c.bf16 %v465, %v465
      %v484 = vld [vmem:[%s2] sm:$0xf]
      %v485 = vld [vmem:[%s4] sm:$0xff]
      %487 = vset.pattern.permute.xlu0 0
      %488 = vperm.xlu0 %487, %v485
      %v489 = vpop.permute.xlu0 %488
      %506 = vrot.lane.b32.xlu0 %v469, 17
      %v507 = vpop.permute.xlu0 %506
      %508 = vrot.lane.b32.xlu0 %v470, 17
      %v509 = vpop.permute.xlu0 %508
      %510 = vrot.lane.b32.xlu0 %v471, 17
      %v511 = vpop.permute.xlu0 %510
      %512 = vrot.lane.b32.xlu0 %v472, 17
      %v513 = vpop.permute.xlu0 %512
      %514 = vrot.lane.b32.xlu0 %v473, 17
      %v515 = vpop.permute.xlu0 %514
      %516 = vrot.lane.b32.xlu0 %v474, 17
      %v517 = vpop.permute.xlu0 %516
      %518 = vrot.lane.b32.xlu0 %v475, 17
      %v519 = vpop.permute.xlu0 %518
      %520 = vrot.lane.b32.xlu0 %v476, 17
      %v521 = vpop.permute.xlu0 %520
      %522 = vrot.lane.b32.xlu0 %v477, 17
      %v523 = vpop.permute.xlu0 %522
      %524 = vrot.lane.b32.xlu0 %v478, 17
      %v525 = vpop.permute.xlu0 %524
      %526 = vrot.lane.b32.xlu0 %v479, 17
      %v527 = vpop.permute.xlu0 %526
      %528 = vrot.lane.b32.xlu0 %v480, 17
      %v529 = vpop.permute.xlu0 %528
      %530 = vrot.lane.b32.xlu0 %v481, 17
      %v531 = vpop.permute.xlu0 %530
      %532 = vrot.lane.b32.xlu0 %v482, 17
      %v533 = vpop.permute.xlu0 %532
      %534 = vrot.lane.b32.xlu0 %v483, 17
      %v535 = vpop.permute.xlu0 %534
      %vm536 = vcmask 138240
      %v537 = vsel %vm536, %v507, %v509
      %v538 = vsel %vm536, %v509, %v511
      %v539 = vsel %vm536, %v513, %v515
      %v540 = vsel %vm536, %v515, %v517
      %v541 = vsel %vm536, %v519, %v521
      %v542 = vsel %vm536, %v521, %v523
      %v543 = vsel %vm536, %v525, %v527
      %v544 = vsel %vm536, %v527, %v529
      %v545 = vsel %vm536, %v531, %v533
      %v546 = vsel %vm536, %v533, %v535
      %vm555 = vcmask 588800
      %v557 = vsel %vm555, %v484, 0
      %vm559 = vcmask 1043456
      %v561 = vsel %vm559, %v545, 0
      %v564 = vsel %vm559, %v546, 0
      %566 = vmatprep.subr.bf16.mxu0 %v538
      %567 = vmatpush1.bf16.msra.mxu0 %v537
      %568 = vmatprep.subr.bf16.mxu0 %v540
      %569 = vmatpush1.bf16.msra.mxu0 %v539
      %570 = vmatprep.subr.bf16.mxu0 %v542
      %571 = vmatpush1.bf16.msra.mxu0 %v541
      %572 = vmatprep.subr.bf16.mxu0 %v544
      %573 = vmatpush1.bf16.msra.mxu0 %v543
      %574 = vmatprep.subr.bf16.mxu0 %v564
      %575 = vmatpush1.bf16.msra.mxu0 %v561
      %576 = vmatprep.subr.bf16.mxu0 0
      %577 = vmatpush1.bf16.msra.mxu0 0
      %578 = vmatprep.subr.bf16.mxu0 0
      %579 = vmatpush1.bf16.msra.mxu0 0
      %580 = vmatprep.subr.bf16.mxu0 0
      %581 = vmatpush1.bf16.msra.mxu0 0
      %582 = vmatprep.subr.bf16.mxu0 0
      %583 = vmatpush1.bf16.msra.mxu0 0
      %584 = vmatprep.subr.bf16.mxu0 0
      %585 = vmatpush1.bf16.msra.mxu0 0
      %586 = vmatprep.subr.bf16.mxu0 0
      %587 = vmatpush1.bf16.msra.mxu0 0
      %588 = vmatprep.subr.bf16.mxu0 0
      %589 = vmatpush1.bf16.msra.mxu0 0
      %590 = vmatprep.subr.bf16.mxu0 0
      %591 = vmatpush1.bf16.msra.mxu0 0
      %592 = vmatprep.subr.bf16.mxu0 0
      %593 = vmatpush1.bf16.msra.mxu0 0
      %594 = vmatprep.subr.bf16.mxu0 0
      %595 = vmatpush1.bf16.msra.mxu0 0
      %596 = vmatprep.subr.bf16.mxu0 0
      %597 = vmatpush1.bf16.msra.mxu0 0
      %598 = vmatprep.mubr.bf16.mxu0 0
      %599 = vmatmul.mubr.bf16.gmra.mrb[0].mxu0 %v557
      %v600 = vpop.f32.mrb[0].mxu0
      %v601 = vadd.f32 %v489, %v600
      %v602 = vpop.f32.mrb[0].mxu0
      %v603 = vadd.f32 %v489, %v602
      %v604 = vpop.f32.mrb[0].mxu0
      %v605 = vpop.f32.mrb[0].mxu0
      %606 = vdwg.mxu0
      %v607 = vmul.f32 %v601, 0.2
      %v608 = vmul.f32 %v603, 0.2
      %v609 = vmax.f32 %v601, %v607
      %v610 = vmax.f32 %v603, %v608
      %611 = vst [vmem:[#allocation2 + $0x8] sm:$0xff] %v609
      %612 = vst [vmem:[#allocation2 + $0x10] sm:$0xff] %v610
      %v613 = vld [vmem:[#allocation2] sm:$0xff]
      %v614 = vld [vmem:[#allocation2 + $0x8] sm:$0xff]
      %v615 = vld [vmem:[#allocation2 + $0x10] sm:$0xff]
      %v616 = vld [vmem:[#allocation2 + $0x18] sm:$0xff]
      %v617 = vmul.f32 %v613, %v279
      %v618 = vmul.f32 %v614, %v283
      %v619 = vmul.f32 %v615, %v281
      %v620 = vmul.f32 %v613, %v300
      %v621 = vmul.f32 %v614, %v304
      %v622 = vmul.f32 %v615, %v302
      %v623 = vmul.f32 %v613, %v312
      %v624 = vmul.f32 %v614, %v316
      %v625 = vmul.f32 %v615, %v314
      %v626 = vmul.f32 %v614, %v324
      %v627 = vmul.f32 %v615, %v328
      %v628 = vmul.f32 %v616, %v326
      %v629 = vmul.f32 %v614, %v336
      %v630 = vmul.f32 %v615, %v340
      %v631 = vmul.f32 %v616, %v338
      %v632 = vmul.f32 %v614, %v348
      %v633 = vmul.f32 %v615, %v352
      %v634 = vmul.f32 %v616, %v350
      %638 = vrot.lane.b32.xlu0 %v613, 127
      %v639 = vpop.permute.xlu0 %638
      %640 = vrot.lane.b32.xlu0 %v614, 127
      %v641 = vpop.permute.xlu0 %640
      %642 = vrot.lane.b32.xlu0 %v615, 127
      %v643 = vpop.permute.xlu0 %642
      %v644 = vsel %vm315, %v639, %v641
      %v645 = vsel %vm315, %v641, %v643
      %652 = vrot.lane.b32.xlu0 %v620, 126
      %v653 = vpop.permute.xlu0 %652
      %654 = vrot.lane.b32.xlu0 %v621, 126
      %v655 = vpop.permute.xlu0 %654
      %656 = vrot.lane.b32.xlu0 %v622, 126
      %v657 = vpop.permute.xlu0 %656
      %v658 = vsel %vm382, %v653, %v655
      %v659 = vsel %vm382, %v655, %v657
      %666 = vrot.lane.b32.xlu0 %v623, 112
      %v667 = vpop.permute.xlu0 %666
      %668 = vrot.lane.b32.xlu0 %v624, 112
      %v669 = vpop.permute.xlu0 %668
      %670 = vrot.lane.b32.xlu0 %v625, 112
      %v671 = vpop.permute.xlu0 %670
      %v672 = vsel %vm397, %v667, %v669
      %v673 = vsel %vm397, %v669, %v671
      %677 = vrot.lane.b32.xlu0 %v614, 111
      %v678 = vpop.permute.xlu0 %677
      %679 = vrot.lane.b32.xlu0 %v615, 111
      %v680 = vpop.permute.xlu0 %679
      %v681 = vsel %vm282, %v678, %v680
      %688 = vrot.lane.b32.xlu0 %v626, 110
      %v689 = vpop.permute.xlu0 %688
      %690 = vrot.lane.b32.xlu0 %v627, 110
      %v691 = vpop.permute.xlu0 %690
      %692 = vrot.lane.b32.xlu0 %v628, 110
      %v693 = vpop.permute.xlu0 %692
      %v694 = vsel %vm420, %v689, %v691
      %v695 = vsel %vm420, %v691, %v693
      %702 = vrot.lane.b32.xlu0 %v629, 96
      %v703 = vpop.permute.xlu0 %702
      %704 = vrot.lane.b32.xlu0 %v630, 96
      %v705 = vpop.permute.xlu0 %704
      %706 = vrot.lane.b32.xlu0 %v631, 96
      %v707 = vpop.permute.xlu0 %706
      %v708 = vsel %vm435, %v703, %v705
      %v709 = vsel %vm435, %v705, %v707
      %714 = vrot.lane.b32.xlu0 %v614, 95
      %v715 = vpop.permute.xlu0 %714
      %716 = vrot.lane.b32.xlu0 %v615, 95
      %v717 = vpop.permute.xlu0 %716
      %718 = vrot.lane.b32.xlu0 %v616, 95
      %v719 = vpop.permute.xlu0 %718
      %v720 = vsel %vm448, %v715, %v717
      %v721 = vsel %vm448, %v717, %v719
      %728 = vrot.lane.b32.xlu0 %v632, 94
      %v729 = vpop.permute.xlu0 %728
      %730 = vrot.lane.b32.xlu0 %v633, 94
      %v731 = vpop.permute.xlu0 %730
      %732 = vrot.lane.b32.xlu0 %v634, 94
      %v733 = vpop.permute.xlu0 %732
      %v734 = vsel %vm463, %v729, %v731
      %v735 = vsel %vm463, %v731, %v733
      %v739 = vpack.c.bf16 %v644, %v617
      %v740 = vpack.c.bf16 %v645, %v618
      %v741 = vpack.c.bf16 %v643, %v619
      %v742 = vpack.c.bf16 %v672, %v658
      %v743 = vpack.c.bf16 %v673, %v659
      %v744 = vpack.c.bf16 %v671, %v657
      %v745 = vpack.c.bf16 %v689, %v678
      %v746 = vpack.c.bf16 %v694, %v681
      %v747 = vpack.c.bf16 %v695, %v680
      %v748 = vpack.c.bf16 %v715, %v703
      %v749 = vpack.c.bf16 %v720, %v708
      %v750 = vpack.c.bf16 %v721, %v709
      %v751 = vpack.c.bf16 %v729, %v729
      %v752 = vpack.c.bf16 %v734, %v734
      %v753 = vpack.c.bf16 %v735, %v735
      %v754 = vld [vmem:[%s3] sm:$0xf]
      %v755 = vld [vmem:[%s5] sm:$0xff]
      %757 = vset.pattern.permute.xlu0 0
      %758 = vperm.xlu0 %757, %v755
      %v759 = vpop.permute.xlu0 %758
      %776 = vrot.lane.b32.xlu0 %v739, 17
      %v777 = vpop.permute.xlu0 %776
      %778 = vrot.lane.b32.xlu0 %v740, 17
      %v779 = vpop.permute.xlu0 %778
      %780 = vrot.lane.b32.xlu0 %v741, 17
      %v781 = vpop.permute.xlu0 %780
      %782 = vrot.lane.b32.xlu0 %v742, 17
      %v783 = vpop.permute.xlu0 %782
      %784 = vrot.lane.b32.xlu0 %v743, 17
      %v785 = vpop.permute.xlu0 %784
      %786 = vrot.lane.b32.xlu0 %v744, 17
      %v787 = vpop.permute.xlu0 %786
      %788 = vrot.lane.b32.xlu0 %v745, 17
      %v789 = vpop.permute.xlu0 %788
      %790 = vrot.lane.b32.xlu0 %v746, 17
      %v791 = vpop.permute.xlu0 %790
      %792 = vrot.lane.b32.xlu0 %v747, 17
      %v793 = vpop.permute.xlu0 %792
      %794 = vrot.lane.b32.xlu0 %v748, 17
      %v795 = vpop.permute.xlu0 %794
      %796 = vrot.lane.b32.xlu0 %v749, 17
      %v797 = vpop.permute.xlu0 %796
      %798 = vrot.lane.b32.xlu0 %v750, 17
      %v799 = vpop.permute.xlu0 %798
      %800 = vrot.lane.b32.xlu0 %v751, 17
      %v801 = vpop.permute.xlu0 %800
      %802 = vrot.lane.b32.xlu0 %v752, 17
      %v803 = vpop.permute.xlu0 %802
      %804 = vrot.lane.b32.xlu0 %v753, 17
      %v805 = vpop.permute.xlu0 %804
      %v806 = vsel %vm536, %v777, %v779
      %v807 = vsel %vm536, %v779, %v781
      %v808 = vsel %vm536, %v783, %v785
      %v809 = vsel %vm536, %v785, %v787
      %v810 = vsel %vm536, %v789, %v791
      %v811 = vsel %vm536, %v791, %v793
      %v812 = vsel %vm536, %v795, %v797
      %v813 = vsel %vm536, %v797, %v799
      %v814 = vsel %vm536, %v801, %v803
      %v815 = vsel %vm536, %v803, %v805
      %v825 = vsel %vm555, %v754, 0
      %v828 = vsel %vm559, %v814, 0
      %v831 = vsel %vm559, %v815, 0
      %833 = vmatprep.subr.bf16.mxu0 %v807
      %834 = vmatpush1.bf16.msra.mxu0 %v806
      %835 = vmatprep.subr.bf16.mxu0 %v809
      %836 = vmatpush1.bf16.msra.mxu0 %v808
      %837 = vmatprep.subr.bf16.mxu0 %v811
      %838 = vmatpush1.bf16.msra.mxu0 %v810
      %839 = vmatprep.subr.bf16.mxu0 %v813
      %840 = vmatpush1.bf16.msra.mxu0 %v812
      %841 = vmatprep.subr.bf16.mxu0 %v831
      %842 = vmatpush1.bf16.msra.mxu0 %v828
      %843 = vmatprep.subr.bf16.mxu0 0
      %844 = vmatpush1.bf16.msra.mxu0 0
      %845 = vmatprep.subr.bf16.mxu0 0
      %846 = vmatpush1.bf16.msra.mxu0 0
      %847 = vmatprep.subr.bf16.mxu0 0
      %848 = vmatpush1.bf16.msra.mxu0 0
      %849 = vmatprep.subr.bf16.mxu0 0
      %850 = vmatpush1.bf16.msra.mxu0 0
      %851 = vmatprep.subr.bf16.mxu0 0
      %852 = vmatpush1.bf16.msra.mxu0 0
      %853 = vmatprep.subr.bf16.mxu0 0
      %854 = vmatpush1.bf16.msra.mxu0 0
      %855 = vmatprep.subr.bf16.mxu0 0
      %856 = vmatpush1.bf16.msra.mxu0 0
      %857 = vmatprep.subr.bf16.mxu0 0
      %858 = vmatpush1.bf16.msra.mxu0 0
      %859 = vmatprep.subr.bf16.mxu0 0
      %860 = vmatpush1.bf16.msra.mxu0 0
      %861 = vmatprep.subr.bf16.mxu0 0
      %862 = vmatpush1.bf16.msra.mxu0 0
      %863 = vmatprep.subr.bf16.mxu0 0
      %864 = vmatpush1.bf16.msra.mxu0 0
      %865 = vmatprep.mubr.bf16.mxu0 0
      %866 = vmatmul.mubr.bf16.gmra.mrb[0].mxu0 %v825
      %v867 = vpop.f32.mrb[0].mxu0
      %v868 = vadd.f32 %v759, %v867
      %v869 = vpop.f32.mrb[0].mxu0
      %v870 = vadd.f32 %v759, %v869
      %v871 = vpop.f32.mrb[0].mxu0
      %v872 = vpop.f32.mrb[0].mxu0
      %873 = vdwg.mxu0
      %v874 = vmul.f32 %v868, 0.2
      %v875 = vmul.f32 %v870, 0.2
      %v876 = vmax.f32 %v868, %v874
      %v877 = vmax.f32 %v870, %v875
      %v878 = vpack.c.bf16 %v876, %v876
      %v879 = vpack.c.bf16 %v877, %v877
      %v882 = vunpack.c.l.b16 %v878
      %v883 = vunpack.c.l.b16 %v879
      %v884 = vpack.c.b16 %v883, %v882
      %886 = vst [vmem:[%s251] sm:$0xff] %v884
      %p887 = scmp.lt.s32.totalorder %s17, 1
      %s888 = scalar_select %p887, %s17, 1
      %s889 = smul.addr %s888, 2
      %s890 = smul.addr %s889, 4
      %s891 = scalar_lea.vmem %s6, %s890
      // Predicated region
      $region45: #{vdn_forward.8} parent=43 // pred_check
        %p892 = pneg %p166
      $region46: #{vdn_forward.8} parent=43 // pred_check_branch
        %894 = sbr.rel (%p892) target = $region48
      $region47: #{vdn_forward.8} parent=43 // pred_region
        _
      $region48: #{vdn_forward.8} parent=43 // pred_fallthru
        _
    $region44: #{vdn_forward.8} parent=5 // pred_fallthru
      _
    %p895 = scmp.le.s32.totalorder 2, %s12
    // Predicated region
    $region49: #{vdn_forward.8} parent=5 // pred_check
      %p896 = pneg %p895
    $region50: #{vdn_forward.8} parent=5 // pred_check_branch
      %898 = sbr.rel (%p896) target = $region52
    $region51: #{vdn_forward.8} parent=5 // pred_region
      %s899 = ssub.s32 %s12, 2
      // Predicated region
      $region53: #{vdn_forward.8} parent=51 // pred_check
        %p900 = pneg %p172
      $region54: #{vdn_forward.8} parent=51 // pred_check_branch
        %902 = sbr.rel (%p900) target = $region56
      $region55: #{vdn_forward.8} parent=51 // pred_region
        %p903 = scmp.lt.s32.totalorder %s18, 1
        %s904 = scalar_select %p903, %s18, 1
        %s905 = smul.addr %s904, 2
        %s906 = smul.addr %s905, 4
        %s907 = scalar_lea.vmem %s6, %s906
      $region56: #{vdn_forward.8} parent=51 // pred_fallthru
        _
    $region52: #{vdn_forward.8} parent=5 // pred_fallthru
      _
  $region6: #{vdn_forward.8} parent=0 // loop_footer
    %s16 = sadd.s32 1, %s12
  $region7: #{vdn_forward.8} parent=0 // loop_footer_branch
    %11 = sbr.rel target = $region3
  $region8: #{vdn_forward.8} parent=0 // loop_exit
    _

// kernel: vdn_forward.11
$region0: #{vdn_forward.11}
  #allocation0 [shape = 'u32[]', space=smem, size = 0x4, offset = 0x4, fixed_abs, tag = 'smem constant byte address 0x4 - core index']
  #allocation1 [shape = 'u32[144,128]{1,0:T(1,128)}', space=vmem, size = 0x12000, scoped, tag = 'internal scratch']
  %s0 = inlined_call_operand.vmem [shape: bf16[2,32,16], index: 0, kind: input, shape index: {}]
  %s1 = inlined_call_operand.vmem [shape: bf16[64,32], index: 1, kind: input, shape index: {}]
  %s2 = inlined_call_operand.vmem [shape: f32[64,1], index: 2, kind: input, shape index: {}]
  %s3 = inlined_call_operand.vmem [shape: bf16[2,64,16], index: 3, kind: output, shape index: {}]
  %s4 = sld [smem:[#allocation0]]
  $region45: #{vdn_forward.11} parent=0
    _
  %s6 = ssub.s32 1, %s4
  %s7 = scalar_select 0, %s6, %s4
  loop: start=0, step=1, limit=4
  $region2: #{vdn_forward.11} parent=0 // loop_pre_header
    _
  $region3: #{vdn_forward.11} parent=0 // loop_header
    %s9 = sphi 0, %s13
    %p10 = scmp.ge.s32.totalorder %s9, 4
    %s19 = sphi 0, %s21
    %s22 = sphi 0, %s19
    %s23 = sphi 0, %s22
    %s39 = sphi 0, %s23
    %s43 = sphi 0, %s43
    %s45 = sphi 0, %s43
    %s46 = sphi 0, %s45
    %s60 = sphi 0, %s46
    %s64 = sphi 0, %s64
    %s66 = sphi 0, %s64
    %s67 = sphi 0, %s66
    %s81 = sphi 0, %s67
    %s87 = sphi 0, %s89
    %s90 = sphi 0, %s87
    %s91 = sphi 0, %s90
    %s107 = sphi 0, %s91
  $region4: #{vdn_forward.11} parent=0 // loop_header_branch
    %12 = sbr.rel (%p10) target = $region8
  $region5: #{vdn_forward.11} parent=0 // loop_body
    %s14 = ssub.s32 %s9, 1
    %s15 = ssub.s32 %s9, 2
    %s16 = sadd.s32 %s9, 1
    %s17 = ssub.s32 %s9, %s16
    %p18 = scmp.eq.s32.totalorder %s17, 0
    %s20 = sadd.s32 %s19, 1
    %s21 = scalar_select %p18, %s19, %s20
    %p24 = pneg %p18
    %p25 = scmp.eq.s32.totalorder %s9, 1
    %p26 = por %p24, %p25
    %p27 = scmp.ne.s32.totalorder %s19, %s22
    %p28 = scmp.eq.s32.totalorder %s9, 0
    %p29 = por %p27, %p28
    %p30 = scmp.ne.s32.totalorder %s19, %s22
    %p31 = scmp.eq.s32.totalorder %s14, 1
    %p32 = por %p30, %p31
    %p33 = scmp.ne.s32.totalorder %s22, %s23
    %p34 = scmp.eq.s32.totalorder %s14, 0
    %p35 = por %p33, %p34
    %p36 = scmp.ne.s32.totalorder %s22, %s23
    %p37 = scmp.eq.s32.totalorder %s15, 1
    %p38 = por %p36, %p37
    %p40 = scmp.ne.s32.totalorder %s23, %s39
    %p41 = scmp.eq.s32.totalorder %s15, 0
    %p42 = por %p40, %p41
    %s44 = sadd.s32 %s43, 1
    %p47 = scmp.eq.s32.totalorder %s9, 1
    %p48 = scmp.ne.s32.totalorder %s43, %s45
    %p49 = scmp.eq.s32.totalorder %s9, 0
    %p50 = por %p48, %p49
    %p51 = scmp.ne.s32.totalorder %s43, %s45
    %p52 = scmp.eq.s32.totalorder %s14, 1
    %p53 = por %p51, %p52
    %p54 = scmp.ne.s32.totalorder %s45, %s46
    %p55 = scmp.eq.s32.totalorder %s14, 0
    %p56 = por %p54, %p55
    %p57 = scmp.ne.s32.totalorder %s45, %s46
    %p58 = scmp.eq.s32.totalorder %s15, 1
    %p59 = por %p57, %p58
    %p61 = scmp.ne.s32.totalorder %s46, %s60
    %p62 = scmp.eq.s32.totalorder %s15, 0
    %p63 = por %p61, %p62
    %s65 = sadd.s32 %s64, 1
    %p68 = scmp.eq.s32.totalorder %s9, 1
    %p69 = scmp.ne.s32.totalorder %s64, %s66
    %p70 = scmp.eq.s32.totalorder %s9, 0
    %p71 = por %p69, %p70
    %p72 = scmp.ne.s32.totalorder %s64, %s66
    %p73 = scmp.eq.s32.totalorder %s14, 1
    %p74 = por %p72, %p73
    %p75 = scmp.ne.s32.totalorder %s66, %s67
    %p76 = scmp.eq.s32.totalorder %s14, 0
    %p77 = por %p75, %p76
    %p78 = scmp.ne.s32.totalorder %s66, %s67
    %p79 = scmp.eq.s32.totalorder %s15, 1
    %p80 = por %p78, %p79
    %p82 = scmp.ne.s32.totalorder %s67, %s81
    %p83 = scmp.eq.s32.totalorder %s15, 0
    %p84 = por %p82, %p83
    %s85 = ssub.s32 %s9, %s16
    %p86 = scmp.eq.s32.totalorder %s85, 0
    %s88 = sadd.s32 %s87, 1
    %s89 = scalar_select %p86, %s87, %s88
    %p92 = pneg %p86
    %p93 = scmp.eq.s32.totalorder %s9, 1
    %p94 = por %p92, %p93
    %p95 = scmp.ne.s32.totalorder %s87, %s90
    %p96 = scmp.eq.s32.totalorder %s9, 0
    %p97 = por %p95, %p96
    %p98 = scmp.ne.s32.totalorder %s87, %s90
    %p99 = scmp.eq.s32.totalorder %s14, 1
    %p100 = por %p98, %p99
    %p101 = scmp.ne.s32.totalorder %s90, %s91
    %p102 = scmp.eq.s32.totalorder %s14, 0
    %p103 = por %p101, %p102
    %p104 = scmp.ne.s32.totalorder %s90, %s91
    %p105 = scmp.eq.s32.totalorder %s15, 1
    %p106 = por %p104, %p105
    %p108 = scmp.ne.s32.totalorder %s91, %s107
    %p109 = scmp.eq.s32.totalorder %s15, 0
    %p110 = por %p108, %p109
    %p111 = scmp.le.s32.totalorder 1, %s9
    %p112 = scmp.lt.s32.totalorder %s9, 3
    %p113 = pnand %p111, %p112
    %p114 = pneg %p113
    // Predicated region
    $region9: #{vdn_forward.11} parent=5 // pred_check
      _
    $region10: #{vdn_forward.11} parent=5 // pred_check_branch
      %116 = sbr.rel (%p113) target = $region12
    $region11: #{vdn_forward.11} parent=5 // pred_region
      %s117 = ssub.s32 %s9, 1
      // Predicated region
      $region13: #{vdn_forward.11} parent=11 // pred_check
        %p118 = pneg %p56
      $region14: #{vdn_forward.11} parent=11 // pred_check_branch
        %120 = sbr.rel (%p118) target = $region16
      $region15: #{vdn_forward.11} parent=11 // pred_region
        _
      $region16: #{vdn_forward.11} parent=11 // pred_fallthru
        _
      // Predicated region
      $region17: #{vdn_forward.11} parent=11 // pred_check
        %p121 = pneg %p77
      $region18: #{vdn_forward.11} parent=11 // pred_check_branch
        %123 = sbr.rel (%p121) target = $region20
      $region19: #{vdn_forward.11} parent=11 // pred_region
        _
      $region20: #{vdn_forward.11} parent=11 // pred_fallthru
        _
    $region12: #{vdn_forward.11} parent=5 // pred_fallthru
      _
    %p124 = scmp.lt.s32.totalorder %s9, 2
    // Predicated region
    $region21: #{vdn_forward.11} parent=5 // pred_check
      %p125 = pneg %p124
    $region22: #{vdn_forward.11} parent=5 // pred_check_branch
      %127 = sbr.rel (%p125) target = $region24
    $region23: #{vdn_forward.11} parent=5 // pred_region
      // Predicated region
      $region25: #{vdn_forward.11} parent=23 // pred_check
        %p128 = pneg %p29
      $region26: #{vdn_forward.11} parent=23 // pred_check_branch
        %130 = sbr.rel (%p128) target = $region28
      $region27: #{vdn_forward.11} parent=23 // pred_region
        %p131 = scmp.lt.s32.totalorder %s9, 1
        %s132 = scalar_select %p131, %s9, 1
        %s133 = smul.addr %s132, 4
        %s134 = smul.addr %s133, 4
        %s135 = scalar_lea.vmem %s0, %s134
      $region28: #{vdn_forward.11} parent=23 // pred_fallthru
        _
    $region24: #{vdn_forward.11} parent=5 // pred_fallthru
      _
    %p136 = scmp.le.s32.totalorder 1, %s9
    %p137 = scmp.lt.s32.totalorder %s9, 3
    %p138 = pnand %p136, %p137
    %p139 = pneg %p138
    // Predicated region
    $region29: #{vdn_forward.11} parent=5 // pred_check
      _
    $region30: #{vdn_forward.11} parent=5 // pred_check_branch
      %141 = sbr.rel (%p138) target = $region32
    $region31: #{vdn_forward.11} parent=5 // pred_region
      %s142 = ssub.s32 %s9, 1
      %p143 = scmp.lt.s32.totalorder %s14, 1
      %s144 = scalar_select %p143, %s14, 1
      %s145 = smul.addr %s144, 4
      %s146 = smul.addr %s145, 4
      %s147 = scalar_lea.vmem %s0, %s146
      %p148 = pneg %p35
      %p149 = pneg %p32
      %p150 = pneg %p56
      %p151 = pneg %p53
      %p152 = pneg %p77
      %p153 = pneg %p74
      %p154 = pneg %p103
      %p155 = pneg %p100
      %p156 = scmp.lt.s32.totalorder %s14, 1
      %s157 = scalar_select %p156, %s14, 1
      %s158 = smul.addr %s157, 8
      %s159 = smul.addr %s158, 4
      %s160 = scalar_lea.vmem %s3, %s159
      %p161 = scmp.lt.s32.totalorder %s14, 1
      %s162 = scalar_select %p161, %s14, 1
      %s163 = smul.addr %s162, 4
      %s164 = smul.addr %s163, 4
      %s165 = scalar_lea.vmem %s0, %s164
      %p166 = scmp.lt.s32.totalorder %s14, 1
      %s167 = scalar_select %p166, %s14, 1
      %s168 = smul.addr %s167, 8
      %s169 = smul.addr %s168, 4
      %s170 = scalar_lea.vmem %s3, %s169
      %v172 = vld [vmem:[%s1] sm:$0xf]
      %v173 = vld [vmem:[%s1 + $0x4] sm:$0xf]
      %v174 = vld [vmem:[%s1 + $0x8] sm:$0xf]
      %v175 = vld [vmem:[%s1 + $0xc] sm:$0xf]
      %v176 = vld [vmem:[%s1 + $0x10] sm:$0xf]
      %v177 = vld [vmem:[%s1 + $0x14] sm:$0xf]
      %v178 = vld [vmem:[%s1 + $0x18] sm:$0xf]
      %v179 = vld [vmem:[%s1 + $0x1c] sm:$0xf]
      %v180 = vld [vmem:[%s165] sm:$0xf]
      %v181 = vld [vmem:[%s165 + $0x4] sm:$0xf]
      %v182 = vld [vmem:[%s165 + $0x8] sm:$0xf]
      %v183 = vld [vmem:[%s165 + $0xc] sm:$0xf]
      %v184 = vld [vmem:[%s2] sm:$0xff]
      %v185 = vld [vmem:[%s2 + $0x8] sm:$0xff]
      %v186 = vld [vmem:[%s2 + $0x10] sm:$0xff]
      %v187 = vld [vmem:[%s2 + $0x18] sm:$0xff]
      %v188 = vld [vmem:[%s2 + $0x20] sm:$0xff]
      %v189 = vld [vmem:[%s2 + $0x28] sm:$0xff]
      %v190 = vld [vmem:[%s2 + $0x30] sm:$0xff]
      %v191 = vld [vmem:[%s2 + $0x38] sm:$0xff]
      %193 = vset.pattern.permute.xlu0 0
      %194 = vperm.xlu0 %193, %v184
      %v195 = vpop.permute.xlu0 %194
      %198 = vset.pattern.permute.xlu0 0
      %199 = vperm.xlu0 %198, %v185
      %v200 = vpop.permute.xlu0 %199
      %203 = vset.pattern.permute.xlu0 0
      %204 = vperm.xlu0 %203, %v186
      %v205 = vpop.permute.xlu0 %204
      %208 = vset.pattern.permute.xlu0 0
      %209 = vperm.xlu0 %208, %v187
      %v210 = vpop.permute.xlu0 %209
      %213 = vset.pattern.permute.xlu0 0
      %214 = vperm.xlu0 %213, %v188
      %v215 = vpop.permute.xlu0 %214
      %218 = vset.pattern.permute.xlu0 0
      %219 = vperm.xlu0 %218, %v189
      %v220 = vpop.permute.xlu0 %219
      %223 = vset.pattern.permute.xlu0 0
      %224 = vperm.xlu0 %223, %v190
      %v225 = vpop.permute.xlu0 %224
      %228 = vset.pattern.permute.xlu0 0
      %229 = vperm.xlu0 %228, %v191
      %v230 = vpop.permute.xlu0 %229
      %v240 = vunpack.c.l.b16 %v172
      %v241 = vunpack.c.l.b16 %v173
      %v242 = vunpack.c.l.b16 %v174
      %v243 = vunpack.c.l.b16 %v175
      %v244 = vunpack.c.l.b16 %v176
      %v245 = vunpack.c.l.b16 %v177
      %v246 = vunpack.c.l.b16 %v178
      %v247 = vunpack.c.l.b16 %v179
      %v248 = vpack.c.b16 %v241, %v240
      %v249 = vpack.c.b16 %v243, %v242
      %v250 = vpack.c.b16 %v245, %v244
      %v251 = vpack.c.b16 %v247, %v246
      %v256 = vunpack.c.l.b16 %v180
      %v257 = vunpack.c.l.b16 %v181
      %v258 = vunpack.c.l.b16 %v182
      %v259 = vunpack.c.l.b16 %v183
      %v260 = vpack.c.b16 %v257, %v256
      %v261 = vpack.c.b16 %v259, %v258
      %vm264 = vcmask 261120
      %v266 = vsel %vm264, %v248, 0
      %v269 = vsel %vm264, %v249, 0
      %v272 = vsel %vm264, %v250, 0
      %v275 = vsel %vm264, %v251, 0
      %277 = vmatprep.subr.bf16.mxu0 0
      %278 = vmatpush1.bf16.msra.mxu0 %v260
      %279 = vmatprep.subr.bf16.mxu0 0
      %280 = vmatpush1.bf16.msra.mxu0 %v261
      %281 = vmatprep.subr.bf16.mxu0 0
      %282 = vmatpush1.bf16.msra.mxu0 0
      %283 = vmatprep.subr.bf16.mxu0 0
      %284 = vmatpush1.bf16.msra.mxu0 0
      %285 = vmatprep.subr.bf16.mxu0 0
      %286 = vmatpush1.bf16.msra.mxu0 0
      %287 = vmatprep.subr.bf16.mxu0 0
      %288 = vmatpush1.bf16.msra.mxu0 0
      %289 = vmatprep.subr.bf16.mxu0 0
      %290 = vmatpush1.bf16.msra.mxu0 0
      %291 = vmatprep.subr.bf16.mxu0 0
      %292 = vmatpush1.bf16.msra.mxu0 0
      %293 = vmatprep.subr.bf16.mxu0 0
      %294 = vmatpush1.bf16.msra.mxu0 0
      %295 = vmatprep.subr.bf16.mxu0 0
      %296 = vmatpush1.bf16.msra.mxu0 0
      %297 = vmatprep.subr.bf16.mxu0 0
      %298 = vmatpush1.bf16.msra.mxu0 0
      %299 = vmatprep.subr.bf16.mxu0 0
      %300 = vmatpush1.bf16.msra.mxu0 0
      %301 = vmatprep.subr.bf16.mxu0 0
      %302 = vmatpush1.bf16.msra.mxu0 0
      %303 = vmatprep.subr.bf16.mxu0 0
      %304 = vmatpush1.bf16.msra.mxu0 0
      %305 = vmatprep.subr.bf16.mxu0 0
      %306 = vmatpush1.bf16.msra.mxu0 0
      %307 = vmatprep.subr.bf16.mxu0 0
      %308 = vmatpush1.bf16.msra.mxu0 0
      %309 = vmatprep.mubr.bf16.mxu0 0
      %310 = vmatmul.mubr.bf16.gmra.mrb[0].mxu0 %v266
      %v311 = vpop.f32.mrb[0].mxu0
      %v312 = vadd.f32 %v195, %v311
      %v313 = vpop.f32.mrb[0].mxu0
      %v314 = vpop.f32.mrb[0].mxu0
      %v315 = vadd.f32 %v200, %v314
      %v316 = vpop.f32.mrb[0].mxu0
      %317 = vmatprep.mubr.bf16.mxu0 0
      %318 = vmatmul.mubr.bf16.gmra.mrb[0].mxu0 %v269
      %v319 = vpop.f32.mrb[0].mxu0
      %v320 = vadd.f32 %v205, %v319
      %v321 = vpop.f32.mrb[0].mxu0
      %v322 = vpop.f32.mrb[0].mxu0
      %v323 = vadd.f32 %v210, %v322
      %v324 = vpop.f32.mrb[0].mxu0
      %325 = vmatprep.mubr.bf16.mxu0 0
      %326 = vmatmul.mubr.bf16.gmra.mrb[0].mxu0 %v272
      %v327 = vpop.f32.mrb[0].mxu0
      %v328 = vadd.f32 %v215, %v327
      %v329 = vpop.f32.mrb[0].mxu0
      %v330 = vpop.f32.mrb[0].mxu0
      %v331 = vadd.f32 %v220, %v330
      %v332 = vpop.f32.mrb[0].mxu0
      %333 = vmatprep.mubr.bf16.mxu0 0
      %334 = vmatmul.mubr.bf16.gmra.mrb[0].mxu0 %v275
      %v335 = vpop.f32.mrb[0].mxu0
      %v336 = vadd.f32 %v225, %v335
      %v337 = vpop.f32.mrb[0].mxu0
      %v338 = vpop.f32.mrb[0].mxu0
      %v339 = vadd.f32 %v230, %v338
      %v340 = vpop.f32.mrb[0].mxu0
      %341 = vdwg.mxu0
      %v342 = vpack.c.bf16 %v315, %v312
      %v343 = vpack.c.bf16 %v323, %v320
      %v344 = vpack.c.bf16 %v331, %v328
      %v345 = vpack.c.bf16 %v339, %v336
      %v350 = vunpack.c.l.b16 %v342
      %v351 = vunpack.c.h.b16 %v342
      %v352 = vunpack.c.l.b16 %v343
      %v353 = vunpack.c.h.b16 %v343
      %v354 = vunpack.c.l.b16 %v344
      %v355 = vunpack.c.h.b16 %v344
      %v356 = vunpack.c.l.b16 %v345
      %v357 = vunpack.c.h.b16 %v345
      %v358 = vpack.c.b16 %v350, %v350
      %v359 = vpack.c.b16 %v351, %v351
      %v360 = vpack.c.b16 %v352, %v352
      %v361 = vpack.c.b16 %v353, %v353
      %v362 = vpack.c.b16 %v354, %v354
      %v363 = vpack.c.b16 %v355, %v355
      %v364 = vpack.c.b16 %v356, %v356
      %v365 = vpack.c.b16 %v357, %v357
      %vm374 = vcmask 125952
      %375 = vst.msk [vmem:[%s170] sm:$0xf] %vm374, %v358
      %376 = vst.msk [vmem:[%s170 + $0x4] sm:$0xf] %vm374, %v359
      %377 = vst.msk [vmem:[%s170 + $0x8] sm:$0xf] %vm374, %v360
      %378 = vst.msk [vmem:[%s170 + $0xc] sm:$0xf] %vm374, %v361
      %379 = vst.msk [vmem:[%s170 + $0x10] sm:$0xf] %vm374, %v362
      %380 = vst.msk [vmem:[%s170 + $0x14] sm:$0xf] %vm374, %v363
      %381 = vst.msk [vmem:[%s170 + $0x18] sm:$0xf] %vm374, %v364
      %382 = vst.msk [vmem:[%s170 + $0x1c] sm:$0xf] %vm374, %v365
      %p383 = scmp.lt.s32.totalorder %s14, 1
      %s384 = scalar_select %p383, %s14, 1
      %s385 = smul.addr %s384, 8
      %s386 = smul.addr %s385, 4
      %s387 = scalar_lea.vmem %s3, %s386
      // Predicated region
      $region33: #{vdn_forward.11} parent=31 // pred_check
        %p388 = pneg %p100
      $region34: #{vdn_forward.11} parent=31 // pred_check_branch
        %390 = sbr.rel (%p388) target = $region36
      $region35: #{vdn_forward.11} parent=31 // pred_region
        _
      $region36: #{vdn_forward.11} parent=31 // pred_fallthru
        _
    $region32: #{vdn_forward.11} parent=5 // pred_fallthru
      _
    %p391 = scmp.le.s32.totalorder 2, %s9
    // Predicated region
    $region37: #{vdn_forward.11} parent=5 // pred_check
      %p392 = pneg %p391
    $region38: #{vdn_forward.11} parent=5 // pred_check_branch
      %394 = sbr.rel (%p392) target = $region40
    $region39: #{vdn_forward.11} parent=5 // pred_region
      %s395 = ssub.s32 %s9, 2
      // Predicated region
      $region41: #{vdn_forward.11} parent=39 // pred_check
        %p396 = pneg %p106
      $region42: #{vdn_forward.11} parent=39 // pred_check_branch
        %398 = sbr.rel (%p396) target = $region44
      $region43: #{vdn_forward.11} parent=39 // pred_region
        %p399 = scmp.lt.s32.totalorder %s15, 1
        %s400 = scalar_select %p399, %s15, 1
        %s401 = smul.addr %s400, 8
        %s402 = smul.addr %s401, 4
        %s403 = scalar_lea.vmem %s3, %s402
      $region44: #{vdn_forward.11} parent=39 // pred_fallthru
        _
    $region40: #{vdn_forward.11} parent=5 // pred_fallthru
      _
  $region6: #{vdn_forward.11} parent=0 // loop_footer
    %s13 = sadd.s32 1, %s9
  $region7: #{vdn_forward.11} parent=0 // loop_footer_branch
    %8 = sbr.rel target = $region3
  $region8: #{vdn_forward.11} parent=0 // loop_exit
    _

// kernel: vdn_forward.10
$region0: #{vdn_forward.10}
  #allocation0 [shape = 'u32[]', space=smem, size = 0x4, offset = 0x4, fixed_abs, tag = 'smem constant byte address 0x4 - core index']
  #allocation1 [shape = 'u32[144,128]{1,0:T(1,128)}', space=vmem, size = 0x12000, scoped, tag = 'internal scratch']
  #allocation2 [shape = 'f32[32,272]{1,0:T(8,128)}', space=vmem, size = 0xc000, scoped, tag = 'scratch operand']
  %s0 = inlined_call_operand.vmem [shape: f32[2,16], index: 0, kind: input, shape index: {}]
  %s1 = inlined_call_operand.vmem [shape: bf16[2,16,16], index: 1, kind: input, shape index: {}]
  %s2 = inlined_call_operand.vmem [shape: bf16[32,144], index: 2, kind: input, shape index: {}]
  %s3 = inlined_call_operand.vmem [shape: bf16[32,288], index: 3, kind: input, shape index: {}]
  %s4 = inlined_call_operand.vmem [shape: f32[32,1], index: 4, kind: input, shape index: {}, may-alias: {4,5}]
  %s5 = inlined_call_operand.vmem [shape: f32[32,1], index: 5, kind: input, shape index: {}, may-alias: {4,5}]
  %s6 = inlined_call_operand.vmem [shape: bf16[2,32,16], index: 6, kind: output, shape index: {}]
  %s7 = sld [smem:[#allocation0]]
  $region57: #{vdn_forward.10} parent=0
    _
  %s9 = ssub.s32 1, %s7
  %s10 = scalar_select 0, %s9, %s7
  loop: start=0, step=1, limit=4
  $region2: #{vdn_forward.10} parent=0 // loop_pre_header
    _
  $region3: #{vdn_forward.10} parent=0 // loop_header
    %s12 = sphi 0, %s16
    %p13 = scmp.ge.s32.totalorder %s12, 4
    %s20 = sphi 0, %s20
    %s22 = sphi 0, %s20
    %s23 = sphi 0, %s22
    %s37 = sphi 0, %s23
    %s43 = sphi 0, %s45
    %s46 = sphi 0, %s43
    %s47 = sphi 0, %s46
    %s63 = sphi 0, %s47
    %s67 = sphi 0, %s67
    %s69 = sphi 0, %s67
    %s70 = sphi 0, %s69
    %s84 = sphi 0, %s70
    %s88 = sphi 0, %s88
    %s90 = sphi 0, %s88
    %s91 = sphi 0, %s90
    %s105 = sphi 0, %s91
    %s109 = sphi 0, %s109
    %s111 = sphi 0, %s109
    %s112 = sphi 0, %s111
    %s126 = sphi 0, %s112
    %s130 = sphi 0, %s130
    %s132 = sphi 0, %s130
    %s133 = sphi 0, %s132
    %s147 = sphi 0, %s133
    %s153 = sphi 0, %s155
    %s156 = sphi 0, %s153
    %s157 = sphi 0, %s156
    %s173 = sphi 0, %s157
  $region4: #{vdn_forward.10} parent=0 // loop_header_branch
    %15 = sbr.rel (%p13) target = $region8
  $region5: #{vdn_forward.10} parent=0 // loop_body
    %s17 = ssub.s32 %s12, 1
    %s18 = ssub.s32 %s12, 2
    %s19 = sadd.s32 %s12, 1
    %s21 = sadd.s32 %s20, 1
    %p24 = scmp.eq.s32.totalorder %s12, 1
    %p25 = scmp.ne.s32.totalorder %s20, %s22
    %p26 = scmp.eq.s32.totalorder %s12, 0
    %p27 = por %p25, %p26
    %p28 = scmp.ne.s32.totalorder %s20, %s22
    %p29 = scmp.eq.s32.totalorder %s17, 1
    %p30 = por %p28, %p29
    %p31 = scmp.ne.s32.totalorder %s22, %s23
    %p32 = scmp.eq.s32.totalorder %s17, 0
    %p33 = por %p31, %p32
    %p34 = scmp.ne.s32.totalorder %s22, %s23
    %p35 = scmp.eq.s32.totalorder %s18, 1
    %p36 = por %p34, %p35
    %p38 = scmp.ne.s32.totalorder %s23, %s37
    %p39 = scmp.eq.s32.totalorder %s18, 0
    %p40 = por %p38, %p39
    %s41 = ssub.s32 %s12, %s19
    %p42 = scmp.eq.s32.totalorder %s41, 0
    %s44 = sadd.s32 %s43, 1
    %s45 = scalar_select %p42, %s43, %s44
    %p48 = pneg %p42
    %p49 = scmp.eq.s32.totalorder %s12, 1
    %p50 = por %p48, %p49
    %p51 = scmp.ne.s32.totalorder %s43, %s46
    %p52 = scmp.eq.s32.totalorder %s12, 0
    %p53 = por %p51, %p52
    %p54 = scmp.ne.s32.totalorder %s43, %s46
    %p55 = scmp.eq.s32.totalorder %s17, 1
    %p56 = por %p54, %p55
    %p57 = scmp.ne.s32.totalorder %s46, %s47
    %p58 = scmp.eq.s32.totalorder %s17, 0
    %p59 = por %p57, %p58
    %p60 = scmp.ne.s32.totalorder %s46, %s47
    %p61 = scmp.eq.s32.totalorder %s18, 1
    %p62 = por %p60, %p61
    %p64 = scmp.ne.s32.totalorder %s47, %s63
    %p65 = scmp.eq.s32.totalorder %s18, 0
    %p66 = por %p64, %p65
    %s68 = sadd.s32 %s67, 1
    %p71 = scmp.eq.s32.totalorder %s12, 1
    %p72 = scmp.ne.s32.totalorder %s67, %s69
    %p73 = scmp.eq.s32.totalorder %s12, 0
    %p74 = por %p72, %p73
    %p75 = scmp.ne.s32.totalorder %s67, %s69
    %p76 = scmp.eq.s32.totalorder %s17, 1
    %p77 = por %p75, %p76
    %p78 = scmp.ne.s32.totalorder %s69, %s70
    %p79 = scmp.eq.s32.totalorder %s17, 0
    %p80 = por %p78, %p79
    %p81 = scmp.ne.s32.totalorder %s69, %s70
    %p82 = scmp.eq.s32.totalorder %s18, 1
    %p83 = por %p81, %p82
    %p85 = scmp.ne.s32.totalorder %s70, %s84
    %p86 = scmp.eq.s32.totalorder %s18, 0
    %p87 = por %p85, %p86
    %s89 = sadd.s32 %s88, 1
    %p92 = scmp.eq.s32.totalorder %s12, 1
    %p93 = scmp.ne.s32.totalorder %s88, %s90
    %p94 = scmp.eq.s32.totalorder %s12, 0
    %p95 = por %p93, %p94
    %p96 = scmp.ne.s32.totalorder %s88, %s90
    %p97 = scmp.eq.s32.totalorder %s17, 1
    %p98 = por %p96, %p97
    %p99 = scmp.ne.s32.totalorder %s90, %s91
    %p100 = scmp.eq.s32.totalorder %s17, 0
    %p101 = por %p99, %p100
    %p102 = scmp.ne.s32.totalorder %s90, %s91
    %p103 = scmp.eq.s32.totalorder %s18, 1
    %p104 = por %p102, %p103
    %p106 = scmp.ne.s32.totalorder %s91, %s105
    %p107 = scmp.eq.s32.totalorder %s18, 0
    %p108 = por %p106, %p107
    %s110 = sadd.s32 %s109, 1
    %p113 = scmp.eq.s32.totalorder %s12, 1
    %p114 = scmp.ne.s32.totalorder %s109, %s111
    %p115 = scmp.eq.s32.totalorder %s12, 0
    %p116 = por %p114, %p115
    %p117 = scmp.ne.s32.totalorder %s109, %s111
    %p118 = scmp.eq.s32.totalorder %s17, 1
    %p119 = por %p117, %p118
    %p120 = scmp.ne.s32.totalorder %s111, %s112
    %p121 = scmp.eq.s32.totalorder %s17, 0
    %p122 = por %p120, %p121
    %p123 = scmp.ne.s32.totalorder %s111, %s112
    %p124 = scmp.eq.s32.totalorder %s18, 1
    %p125 = por %p123, %p124
    %p127 = scmp.ne.s32.totalorder %s112, %s126
    %p128 = scmp.eq.s32.totalorder %s18, 0
    %p129 = por %p127, %p128
    %s131 = sadd.s32 %s130, 1
    %p134 = scmp.eq.s32.totalorder %s12, 1
    %p135 = scmp.ne.s32.totalorder %s130, %s132
    %p136 = scmp.eq.s32.totalorder %s12, 0
    %p137 = por %p135, %p136
    %p138 = scmp.ne.s32.totalorder %s130, %s132
    %p139 = scmp.eq.s32.totalorder %s17, 1
    %p140 = por %p138, %p139
    %p141 = scmp.ne.s32.totalorder %s132, %s133
    %p142 = scmp.eq.s32.totalorder %s17, 0
    %p143 = por %p141, %p142
    %p144 = scmp.ne.s32.totalorder %s132, %s133
    %p145 = scmp.eq.s32.totalorder %s18, 1
    %p146 = por %p144, %p145
    %p148 = scmp.ne.s32.totalorder %s133, %s147
    %p149 = scmp.eq.s32.totalorder %s18, 0
    %p150 = por %p148, %p149
    %s151 = ssub.s32 %s12, %s19
    %p152 = scmp.eq.s32.totalorder %s151, 0
    %s154 = sadd.s32 %s153, 1
    %s155 = scalar_select %p152, %s153, %s154
    %p158 = pneg %p152
    %p159 = scmp.eq.s32.totalorder %s12, 1
    %p160 = por %p158, %p159
    %p161 = scmp.ne.s32.totalorder %s153, %s156
    %p162 = scmp.eq.s32.totalorder %s12, 0
    %p163 = por %p161, %p162
    %p164 = scmp.ne.s32.totalorder %s153, %s156
    %p165 = scmp.eq.s32.totalorder %s17, 1
    %p166 = por %p164, %p165
    %p167 = scmp.ne.s32.totalorder %s156, %s157
    %p168 = scmp.eq.s32.totalorder %s17, 0
    %p169 = por %p167, %p168
    %p170 = scmp.ne.s32.totalorder %s156, %s157
    %p171 = scmp.eq.s32.totalorder %s18, 1
    %p172 = por %p170, %p171
    %p174 = scmp.ne.s32.totalorder %s157, %s173
    %p175 = scmp.eq.s32.totalorder %s18, 0
    %p176 = por %p174, %p175
    %p177 = scmp.le.s32.totalorder 1, %s12
    %p178 = scmp.lt.s32.totalorder %s12, 3
    %p179 = pnand %p177, %p178
    %p180 = pneg %p179
    // Predicated region
    $region9: #{vdn_forward.10} parent=5 // pred_check
      _
    $region10: #{vdn_forward.10} parent=5 // pred_check_branch
      %182 = sbr.rel (%p179) target = $region12
    $region11: #{vdn_forward.10} parent=5 // pred_region
      %s183 = ssub.s32 %s12, 1
      // Predicated region
      $region13: #{vdn_forward.10} parent=11 // pred_check
        %p184 = pneg %p33
      $region14: #{vdn_forward.10} parent=11 // pred_check_branch
        %186 = sbr.rel (%p184) target = $region16
      $region15: #{vdn_forward.10} parent=11 // pred_region
        _
      $region16: #{vdn_forward.10} parent=11 // pred_fallthru
        _
      // Predicated region
      $region17: #{vdn_forward.10} parent=11 // pred_check
        %p187 = pneg %p80
      $region18: #{vdn_forward.10} parent=11 // pred_check_branch
        %189 = sbr.rel (%p187) target = $region20
      $region19: #{vdn_forward.10} parent=11 // pred_region
        _
      $region20: #{vdn_forward.10} parent=11 // pred_fallthru
        _
      // Predicated region
      $region21: #{vdn_forward.10} parent=11 // pred_check
        %p190 = pneg %p101
      $region22: #{vdn_forward.10} parent=11 // pred_check_branch
        %192 = sbr.rel (%p190) target = $region24
      $region23: #{vdn_forward.10} parent=11 // pred_region
        _
      $region24: #{vdn_forward.10} parent=11 // pred_fallthru
        _
      // Predicated region
      $region25: #{vdn_forward.10} parent=11 // pred_check
        %p193 = pneg %p122
      $region26: #{vdn_forward.10} parent=11 // pred_check_branch
        %195 = sbr.rel (%p193) target = $region28
      $region27: #{vdn_forward.10} parent=11 // pred_region
        _
      $region28: #{vdn_forward.10} parent=11 // pred_fallthru
        _
      // Predicated region
      $region29: #{vdn_forward.10} parent=11 // pred_check
        %p196 = pneg %p143
      $region30: #{vdn_forward.10} parent=11 // pred_check_branch
        %198 = sbr.rel (%p196) target = $region32
      $region31: #{vdn_forward.10} parent=11 // pred_region
        _
      $region32: #{vdn_forward.10} parent=11 // pred_fallthru
        _
    $region12: #{vdn_forward.10} parent=5 // pred_fallthru
      _
    %p199 = scmp.lt.s32.totalorder %s12, 2
    // Predicated region
    $region33: #{vdn_forward.10} parent=5 // pred_check
      %p200 = pneg %p199
    $region34: #{vdn_forward.10} parent=5 // pred_check_branch
      %202 = sbr.rel (%p200) target = $region36
    $region35: #{vdn_forward.10} parent=5 // pred_region
      // Predicated region
      $region37: #{vdn_forward.10} parent=35 // pred_check
        %p203 = pneg %p53
      $region38: #{vdn_forward.10} parent=35 // pred_check_branch
        %205 = sbr.rel (%p203) target = $region40
      $region39: #{vdn_forward.10} parent=35 // pred_region
        %p206 = scmp.lt.s32.totalorder %s12, 1
        %s207 = scalar_select %p206, %s12, 1
        %s208 = smul.addr %s207, 2
        %s209 = smul.addr %s208, 4
        %s210 = scalar_lea.vmem %s1, %s209
      $region40: #{vdn_forward.10} parent=35 // pred_fallthru
        _
    $region36: #{vdn_forward.10} parent=5 // pred_fallthru
      _
    %p211 = scmp.le.s32.totalorder 1, %s12
    %p212 = scmp.lt.s32.totalorder %s12, 3
    %p213 = pnand %p211, %p212
    %p214 = pneg %p213
    // Predicated region
    $region41: #{vdn_forward.10} parent=5 // pred_check
      _
    $region42: #{vdn_forward.10} parent=5 // pred_check_branch
      %216 = sbr.rel (%p213) target = $region44
    $region43: #{vdn_forward.10} parent=5 // pred_region
      %s217 = ssub.s32 %s12, 1
      %p218 = pneg %p33
      %p219 = pneg %p30
      %p220 = scmp.lt.s32.totalorder %s17, 1
      %s221 = scalar_select %p220, %s17, 1
      %s222 = smul.addr %s221, 2
      %s223 = smul.addr %s222, 4
      %s224 = scalar_lea.vmem %s1, %s223
      %p225 = pneg %p59
      %p226 = pneg %p56
      %p227 = pneg %p80
      %p228 = pneg %p77
      %p229 = pneg %p101
      %p230 = pneg %p98
      %p231 = pneg %p122
      %p232 = pneg %p119
      %p233 = pneg %p143
      %p234 = pneg %p140
      %p235 = pneg %p169
      %p236 = pneg %p166
      %p237 = scmp.lt.s32.totalorder %s17, 1
      %s238 = scalar_select %p237, %s17, 1
      %s239 = smul.addr %s238, 4
      %s240 = smul.addr %s239, 4
      %s241 = scalar_lea.vmem %s6, %s240
      %p242 = scmp.lt.s32.totalorder %s17, 1
      %s243 = scalar_select %p242, %s17, 1
      %s244 = smul.addr %s243, 2
      %s245 = smul.addr %s244, 4
      %s246 = scalar_lea.vmem %s1, %s245
      %p247 = scmp.lt.s32.totalorder %s17, 1
      %s248 = scalar_select %p247, %s17, 1
      %s249 = smul.addr %s248, 4
      %s250 = smul.addr %s249, 4
      %s251 = scalar_lea.vmem %s6, %s250
      %253 = vst [vmem:[#allocation2] sm:$0xff] 0.0
      %254 = vst [vmem:[#allocation2 + $0x8] sm:$0xff] 0.0
      %vm255 = vcmask 130048
      %256 = vst.msk [vmem:[#allocation2 + $0x10] sm:$0xff] %vm255, 0.0
      %257 = vst [vmem:[#allocation2 + $0x18] sm:$0xff] 0.0
      %258 = vst [vmem:[#allocation2 + $0x20] sm:$0xff] 0.0
      %259 = vst.msk [vmem:[#allocation2 + $0x28] sm:$0xff] %vm255, 0.0
      %260 = vst [vmem:[#allocation2 + $0x30] sm:$0xff] 0.0
      %261 = vst [vmem:[#allocation2 + $0x38] sm:$0xff] 0.0
      %262 = vst.msk [vmem:[#allocation2 + $0x40] sm:$0xff] %vm255, 0.0
      %263 = vst [vmem:[#allocation2 + $0x48] sm:$0xff] 0.0
      %264 = vst [vmem:[#allocation2 + $0x50] sm:$0xff] 0.0
      %265 = vst.msk [vmem:[#allocation2 + $0x58] sm:$0xff] %vm255, 0.0
      %v266 = vld [vmem:[%s0] sm:$0x1]
      %v267 = vld [vmem:[%s0 + $0x1] sm:$0x1]
      %v268 = vld [vmem:[%s246] sm:$0xf]
      %v269 = vld [vmem:[%s246 + $0x4] sm:$0xf]
      %v270 = vunpack.c.l.bf16 %v268
      %v271 = vunpack.c.l.bf16 %v269
      %272 = vst.msk [vmem:[#allocation2 + $0x8] sm:$0xff] %vm255, %v270
      %273 = vst.msk [vmem:[#allocation2 + $0x20] sm:$0xff] %vm255, %v271
      %v274 = vld [vmem:[#allocation2] sm:$0xff]
      %v275 = vld [vmem:[#allocation2 + $0x8] sm:$0xff]
      %v276 = vld [vmem:[#allocation2 + $0x18] sm:$0xff]
      %v277 = vld [vmem:[#allocation2 + $0x20] sm:$0xff]
      %v278 = vlaneseq
      %v279 = vshrl.u32 %v278, 7
      %v280 = vsub.s32 0, %v279
      %v281 = vrot.slane %v266, %v280
      %283 = vrot.lane.b32.xlu0 %v281, 123
      %v284 = vpop.permute.xlu0 %283
      %v286 = vmul.f32 %v274, %v284
      %v287 = vmul.f32 %v275, %v284
      %v288 = vmul.f32 %v276, %v284
      %v289 = vmul.f32 %v277, %v284
      %v290 = vlaneseq
      %v291 = vshrl.u32 %v290, 7
      %v292 = vsub.s32 0, %v291
      %v293 = vrot.slane %v267, %v292
      %295 = vrot.lane.b32.xlu0 %v293, 125
      %v296 = vpop.permute.xlu0 %295
      %v298 = vmul.f32 %v274, %v296
      %v299 = vmul.f32 %v275, %v296
      %v300 = vmul.f32 %v276, %v296
      %v301 = vmul.f32 %v277, %v296
      %302 = vrot.lane.b32.xlu0 %v281, 127
      %v303 = vpop.permute.xlu0 %302
      %v305 = vmul.f32 %v274, %v303
      %v306 = vmul.f32 %v275, %v303
      %v307 = vmul.f32 %v276, %v303
      %v308 = vmul.f32 %v277, %v303
      %309 = vrot.lane.b32.xlu0 %v293, 1
      %v310 = vpop.permute.xlu0 %309
      %v312 = vmul.f32 %v275, %v310
      %v313 = vmul.f32 %v277, %v310
      %314 = vrot.lane.b32.xlu0 %v281, 3
      %v315 = vpop.permute.xlu0 %314
      %v317 = vmul.f32 %v275, %v315
      %v318 = vmul.f32 %v277, %v315
      %319 = vrot.lane.b32.xlu0 %v293, 5
      %v320 = vpop.permute.xlu0 %319
      %v322 = vmul.f32 %v275, %v320
      %v323 = vmul.f32 %v277, %v320
      %328 = vrot.lane.b32.xlu0 %v274, 127
      %v329 = vpop.permute.xlu0 %328
      %330 = vrot.lane.b32.xlu0 %v275, 127
      %v331 = vpop.permute.xlu0 %330
      %332 = vrot.lane.b32.xlu0 %v276, 127
      %v333 = vpop.permute.xlu0 %332
      %334 = vrot.lane.b32.xlu0 %v277, 127
      %v335 = vpop.permute.xlu0 %334
      %vm336 = vcmask 1039360
      %v337 = vsel %vm336, %v329, %v331
      %v338 = vsel %vm336, %v333, %v335
      %347 = vrot.lane.b32.xlu0 %v298, 126
      %v348 = vpop.permute.xlu0 %347
      %349 = vrot.lane.b32.xlu0 %v299, 126
      %v350 = vpop.permute.xlu0 %349
      %351 = vrot.lane.b32.xlu0 %v300, 126
      %v352 = vpop.permute.xlu0 %351
      %353 = vrot.lane.b32.xlu0 %v301, 126
      %v354 = vpop.permute.xlu0 %353
      %vm355 = vcmask 1031168
      %v356 = vsel %vm355, %v348, %v350
      %v357 = vsel %vm355, %v352, %v354
      %366 = vrot.lane.b32.xlu0 %v305, 124
      %v367 = vpop.permute.xlu0 %366
      %368 = vrot.lane.b32.xlu0 %v306, 124
      %v369 = vpop.permute.xlu0 %368
      %370 = vrot.lane.b32.xlu0 %v307, 124
      %v371 = vpop.permute.xlu0 %370
      %372 = vrot.lane.b32.xlu0 %v308, 124
      %v373 = vpop.permute.xlu0 %372
      %vm374 = vcmask 1014784
      %v375 = vsel %vm374, %v367, %v369
      %v376 = vsel %vm374, %v371, %v373
      %381 = vrot.lane.b32.xlu0 %v275, 123
      %v382 = vpop.permute.xlu0 %381
      %383 = vrot.lane.b32.xlu0 %v277, 123
      %v384 = vpop.permute.xlu0 %383
      %389 = vrot.lane.b32.xlu0 %v312, 122
      %v390 = vpop.permute.xlu0 %389
      %391 = vrot.lane.b32.xlu0 %v313, 122
      %v392 = vpop.permute.xlu0 %391
      %397 = vrot.lane.b32.xlu0 %v317, 120
      %v398 = vpop.permute.xlu0 %397
      %399 = vrot.lane.b32.xlu0 %v318, 120
      %v400 = vpop.permute.xlu0 %399
      %403 = vrot.lane.b32.xlu0 %v275, 119
      %v404 = vpop.permute.xlu0 %403
      %405 = vrot.lane.b32.xlu0 %v277, 119
      %v406 = vpop.permute.xlu0 %405
      %411 = vrot.lane.b32.xlu0 %v322, 118
      %v412 = vpop.permute.xlu0 %411
      %413 = vrot.lane.b32.xlu0 %v323, 118
      %v414 = vpop.permute.xlu0 %413
      %v417 = vpack.c.bf16 %v288, %v286
      %v418 = vpack.c.bf16 %v289, %v287
      %v419 = vpack.c.bf16 %v338, %v337
      %v420 = vpack.c.bf16 %v335, %v331
      %v421 = vpack.c.bf16 %v357, %v356
      %v422 = vpack.c.bf16 %v354, %v350
      %v423 = vpack.c.bf16 %v376, %v375
      %v424 = vpack.c.bf16 %v373, %v369
      %v425 = vpack.c.bf16 %v384, %v382
      %v426 = vpack.c.bf16 %v392, %v390
      %v427 = vpack.c.bf16 %v400, %v398
      %v428 = vpack.c.bf16 %v406, %v404
      %v429 = vpack.c.bf16 %v414, %v412
      %v430 = vld [vmem:[%s2] sm:$0xff]
      %v431 = vld [vmem:[%s2 + $0x8] sm:$0xff]
      %v432 = vld [vmem:[%s2 + $0x10] sm:$0xff]
      %v433 = vld [vmem:[%s2 + $0x18] sm:$0xff]
      %v434 = vld [vmem:[%s4] sm:$0xff]
      %v435 = vld [vmem:[%s4 + $0x8] sm:$0xff]
      %v436 = vld [vmem:[%s4 + $0x10] sm:$0xff]
      %v437 = vld [vmem:[%s4 + $0x18] sm:$0xff]
      %439 = vset.pattern.permute.xlu0 0
      %440 = vperm.xlu0 %439, %v434
      %v441 = vpop.permute.xlu0 %440
      %444 = vset.pattern.permute.xlu0 0
      %445 = vperm.xlu0 %444, %v435
      %v446 = vpop.permute.xlu0 %445
      %449 = vset.pattern.permute.xlu0 0
      %450 = vperm.xlu0 %449, %v436
      %v451 = vpop.permute.xlu0 %450
      %454 = vset.pattern.permute.xlu0 0
      %455 = vperm.xlu0 %454, %v437
      %v456 = vpop.permute.xlu0 %455
      %v462 = vunpack.c.l.b16 %v430
      %v463 = vunpack.c.h.b16 %v430
      %v464 = vunpack.c.l.b16 %v431
      %v465 = vunpack.c.h.b16 %v431
      %v466 = vunpack.c.l.b16 %v432
      %v467 = vunpack.c.h.b16 %v432
      %v468 = vunpack.c.l.b16 %v433
      %v469 = vunpack.c.h.b16 %v433
      %v470 = vpack.c.b16 %v464, %v462
      %v471 = vpack.c.b16 %v465, %v463
      %v472 = vpack.c.b16 %v468, %v466
      %v473 = vpack.c.b16 %v469, %v467
      %489 = vrot.lane.b32.xlu0 %v417, 5
      %v490 = vpop.permute.xlu0 %489
      %491 = vrot.lane.b32.xlu0 %v418, 5
      %v492 = vpop.permute.xlu0 %491
      %493 = vrot.lane.b32.xlu0 %v419, 5
      %v494 = vpop.permute.xlu0 %493
      %495 = vrot.lane.b32.xlu0 %v420, 5
      %v496 = vpop.permute.xlu0 %495
      %497 = vrot.lane.b32.xlu0 %v421, 5
      %v498 = vpop.permute.xlu0 %497
      %499 = vrot.lane.b32.xlu0 %v422, 5
      %v500 = vpop.permute.xlu0 %499
      %501 = vrot.lane.b32.xlu0 %v423, 5
      %v502 = vpop.permute.xlu0 %501
      %503 = vrot.lane.b32.xlu0 %v424, 5
      %v504 = vpop.permute.xlu0 %503
      %505 = vrot.lane.b32.xlu0 %v425, 5
      %v506 = vpop.permute.xlu0 %505
      %507 = vrot.lane.b32.xlu0 %v426, 5
      %v508 = vpop.permute.xlu0 %507
      %509 = vrot.lane.b32.xlu0 %v427, 5
      %v510 = vpop.permute.xlu0 %509
      %511 = vrot.lane.b32.xlu0 %v428, 5
      %v512 = vpop.permute.xlu0 %511
      %513 = vrot.lane.b32.xlu0 %v429, 5
      %v514 = vpop.permute.xlu0 %513
      %vm515 = vcmask 39936
      %v516 = vsel %vm515, %v490, %v492
      %v517 = vsel %vm515, %v494, %v496
      %v518 = vsel %vm515, %v498, %v500
      %v519 = vsel %vm515, %v502, %v504
      %v530 = vsel %vm255, %v471, 0
      %v533 = vsel %vm255, %v473, 0
      %535 = vmatprep.subr.bf16.mxu0 0
      %536 = vmatpush1.bf16.msra.mxu0 %v516
      %537 = vmatprep.subr.bf16.mxu0 0
      %538 = vmatpush1.bf16.msra.mxu0 %v517
      %539 = vmatprep.subr.bf16.mxu0 0
      %540 = vmatpush1.bf16.msra.mxu0 %v518
      %541 = vmatprep.subr.bf16.mxu0 0
      %542 = vmatpush1.bf16.msra.mxu0 %v519
      %543 = vmatprep.subr.bf16.mxu0 0
      %544 = vmatpush1.bf16.msra.mxu0 %v506
      %545 = vmatprep.subr.bf16.mxu0 0
      %546 = vmatpush1.bf16.msra.mxu0 %v508
      %547 = vmatprep.subr.bf16.mxu0 0
      %548 = vmatpush1.bf16.msra.mxu0 %v510
      %549 = vmatprep.subr.bf16.mxu0 0
      %550 = vmatpush1.bf16.msra.mxu0 %v512
      %551 = vmatprep.subr.bf16.mxu0 0
      %552 = vmatpush1.bf16.msra.mxu0 %v514
      %553 = vmatprep.subr.bf16.mxu0 0
      %554 = vmatpush1.bf16.msra.mxu0 0
      %555 = vmatprep.subr.bf16.mxu0 0
      %556 = vmatpush1.bf16.msra.mxu0 0
      %557 = vmatprep.subr.bf16.mxu0 0
      %558 = vmatpush1.bf16.msra.mxu0 0
      %559 = vmatprep.subr.bf16.mxu0 0
      %560 = vmatpush1.bf16.msra.mxu0 0
      %561 = vmatprep.subr.bf16.mxu0 0
      %562 = vmatpush1.bf16.msra.mxu0 0
      %563 = vmatprep.subr.bf16.mxu0 0
      %564 = vmatpush1.bf16.msra.mxu0 0
      %565 = vmatprep.subr.bf16.mxu0 0
      %566 = vmatpush1.bf16.msra.mxu0 0
      %567 = vmatprep.mubr.bf16.mxu0 %v530
      %568 = vmatmul.mubr.bf16.gmra.mrb[0].mxu0 %v470
      %v569 = vpop.f32.mrb[0].mxu0
      %v570 = vadd.f32 %v441, %v569
      %v571 = vpop.f32.mrb[0].mxu0
      %v572 = vpop.f32.mrb[0].mxu0
      %v573 = vadd.f32 %v446, %v572
      %v574 = vpop.f32.mrb[0].mxu0
      %575 = vmatprep.mubr.bf16.mxu0 %v533
      %576 = vmatmul.mubr.bf16.gmra.mrb[0].mxu0 %v472
      %v577 = vpop.f32.mrb[0].mxu0
      %v578 = vadd.f32 %v451, %v577
      %v579 = vpop.f32.mrb[0].mxu0
      %v580 = vpop.f32.mrb[0].mxu0
      %v581 = vadd.f32 %v456, %v580
      %v582 = vpop.f32.mrb[0].mxu0
      %583 = vdwg.mxu0
      %v584 = vmul.f32 %v570, 0.2
      %v585 = vmul.f32 %v573, 0.2
      %v586 = vmul.f32 %v578, 0.2
      %v587 = vmul.f32 %v581, 0.2
      %v588 = vmax.f32 %v570, %v584
      %v589 = vmax.f32 %v573, %v585
      %v590 = vmax.f32 %v578, %v586
      %v591 = vmax.f32 %v581, %v587
      %592 = vst.msk [vmem:[#allocation2 + $0x8] sm:$0xff] %vm255, %v588
      %593 = vst.msk [vmem:[#allocation2 + $0x20] sm:$0xff] %vm255, %v589
      %594 = vst.msk [vmem:[#allocation2 + $0x38] sm:$0xff] %vm255, %v590
      %595 = vst.msk [vmem:[#allocation2 + $0x50] sm:$0xff] %vm255, %v591
      %v596 = vld [vmem:[#allocation2] sm:$0xff]
      %v597 = vld [vmem:[#allocation2 + $0x8] sm:$0xff]
      %v598 = vld [vmem:[#allocation2 + $0x18] sm:$0xff]
      %v599 = vld [vmem:[#allocation2 + $0x20] sm:$0xff]
      %v600 = vld [vmem:[#allocation2 + $0x30] sm:$0xff]
      %v601 = vld [vmem:[#allocation2 + $0x38] sm:$0xff]
      %v602 = vld [vmem:[#allocation2 + $0x48] sm:$0xff]
      %v603 = vld [vmem:[#allocation2 + $0x50] sm:$0xff]
      %v604 = vmul.f32 %v596, %v284
      %v605 = vmul.f32 %v597, %v284
      %v606 = vmul.f32 %v598, %v284
      %v607 = vmul.f32 %v599, %v284
      %v608 = vmul.f32 %v600, %v284
      %v609 = vmul.f32 %v601, %v284
      %v610 = vmul.f32 %v602, %v284
      %v611 = vmul.f32 %v603, %v284
      %v612 = vmul.f32 %v596, %v296
      %v613 = vmul.f32 %v597, %v296
      %v614 = vmul.f32 %v598, %v296
      %v615 = vmul.f32 %v599, %v296
      %v616 = vmul.f32 %v600, %v296
      %v617 = vmul.f32 %v601, %v296
      %v618 = vmul.f32 %v602, %v296
      %v619 = vmul.f32 %v603, %v296
      %v620 = vmul.f32 %v596, %v303
      %v621 = vmul.f32 %v597, %v303
      %v622 = vmul.f32 %v598, %v303
      %v623 = vmul.f32 %v599, %v303
      %v624 = vmul.f32 %v600, %v303
      %v625 = vmul.f32 %v601, %v303
      %v626 = vmul.f32 %v602, %v303
      %v627 = vmul.f32 %v603, %v303
      %v628 = vmul.f32 %v597, %v310
      %v629 = vmul.f32 %v599, %v310
      %v630 = vmul.f32 %v601, %v310
      %v631 = vmul.f32 %v603, %v310
      %v632 = vmul.f32 %v597, %v315
      %v633 = vmul.f32 %v599, %v315
      %v634 = vmul.f32 %v601, %v315
      %v635 = vmul.f32 %v603, %v315
      %v636 = vmul.f32 %v597, %v320
      %v637 = vmul.f32 %v599, %v320
      %v638 = vmul.f32 %v601, %v320
      %v639 = vmul.f32 %v603, %v320
      %648 = vrot.lane.b32.xlu0 %v596, 127
      %v649 = vpop.permute.xlu0 %648
      %650 = vrot.lane.b32.xlu0 %v597, 127
      %v651 = vpop.permute.xlu0 %650
      %652 = vrot.lane.b32.xlu0 %v598, 127
      %v653 = vpop.permute.xlu0 %652
      %654 = vrot.lane.b32.xlu0 %v599, 127
      %v655 = vpop.permute.xlu0 %654
      %656 = vrot.lane.b32.xlu0 %v600, 127
      %v657 = vpop.permute.xlu0 %656
      %658 = vrot.lane.b32.xlu0 %v601, 127
      %v659 = vpop.permute.xlu0 %658
      %660 = vrot.lane.b32.xlu0 %v602, 127
      %v661 = vpop.permute.xlu0 %660
      %662 = vrot.lane.b32.xlu0 %v603, 127
      %v663 = vpop.permute.xlu0 %662
      %v664 = vsel %vm336, %v649, %v651
      %v665 = vsel %vm336, %v653, %v655
      %v666 = vsel %vm336, %v657, %v659
      %v667 = vsel %vm336, %v661, %v663
      %684 = vrot.lane.b32.xlu0 %v612, 126
      %v685 = vpop.permute.xlu0 %684
      %686 = vrot.lane.b32.xlu0 %v613, 126
      %v687 = vpop.permute.xlu0 %686
      %688 = vrot.lane.b32.xlu0 %v614, 126
      %v689 = vpop.permute.xlu0 %688
      %690 = vrot.lane.b32.xlu0 %v615, 126
      %v691 = vpop.permute.xlu0 %690
      %692 = vrot.lane.b32.xlu0 %v616, 126
      %v693 = vpop.permute.xlu0 %692
      %694 = vrot.lane.b32.xlu0 %v617, 126
      %v695 = vpop.permute.xlu0 %694
      %696 = vrot.lane.b32.xlu0 %v618, 126
      %v697 = vpop.permute.xlu0 %696
      %698 = vrot.lane.b32.xlu0 %v619, 126
      %v699 = vpop.permute.xlu0 %698
      %v700 = vsel %vm355, %v685, %v687
      %v701 = vsel %vm355, %v689, %v691
      %v702 = vsel %vm355, %v693, %v695
      %v703 = vsel %vm355, %v697, %v699
      %720 = vrot.lane.b32.xlu0 %v620, 124
      %v721 = vpop.permute.xlu0 %720
      %722 = vrot.lane.b32.xlu0 %v621, 124
      %v723 = vpop.permute.xlu0 %722
      %724 = vrot.lane.b32.xlu0 %v622, 124
      %v725 = vpop.permute.xlu0 %724
      %726 = vrot.lane.b32.xlu0 %v623, 124
      %v727 = vpop.permute.xlu0 %726
      %728 = vrot.lane.b32.xlu0 %v624, 124
      %v729 = vpop.permute.xlu0 %728
      %730 = vrot.lane.b32.xlu0 %v625, 124
      %v731 = vpop.permute.xlu0 %730
      %732 = vrot.lane.b32.xlu0 %v626, 124
      %v733 = vpop.permute.xlu0 %732
      %734 = vrot.lane.b32.xlu0 %v627, 124
      %v735 = vpop.permute.xlu0 %734
      %v736 = vsel %vm374, %v721, %v723
      %v737 = vsel %vm374, %v725, %v727
      %v738 = vsel %vm374, %v729, %v731
      %v739 = vsel %vm374, %v733, %v735
      %748 = vrot.lane.b32.xlu0 %v597, 123
      %v749 = vpop.permute.xlu0 %748
      %750 = vrot.lane.b32.xlu0 %v599, 123
      %v751 = vpop.permute.xlu0 %750
      %752 = vrot.lane.b32.xlu0 %v601, 123
      %v753 = vpop.permute.xlu0 %752
      %754 = vrot.lane.b32.xlu0 %v603, 123
      %v755 = vpop.permute.xlu0 %754
      %764 = vrot.lane.b32.xlu0 %v628, 122
      %v765 = vpop.permute.xlu0 %764
      %766 = vrot.lane.b32.xlu0 %v629, 122
      %v767 = vpop.permute.xlu0 %766
      %768 = vrot.lane.b32.xlu0 %v630, 122
      %v769 = vpop.permute.xlu0 %768
      %770 = vrot.lane.b32.xlu0 %v631, 122
      %v771 = vpop.permute.xlu0 %770
      %780 = vrot.lane.b32.xlu0 %v632, 120
      %v781 = vpop.permute.xlu0 %780
      %782 = vrot.lane.b32.xlu0 %v633, 120
      %v783 = vpop.permute.xlu0 %782
      %784 = vrot.lane.b32.xlu0 %v634, 120
      %v785 = vpop.permute.xlu0 %784
      %786 = vrot.lane.b32.xlu0 %v635, 120
      %v787 = vpop.permute.xlu0 %786
      %792 = vrot.lane.b32.xlu0 %v597, 119
      %v793 = vpop.permute.xlu0 %792
      %794 = vrot.lane.b32.xlu0 %v599, 119
      %v795 = vpop.permute.xlu0 %794
      %796 = vrot.lane.b32.xlu0 %v601, 119
      %v797 = vpop.permute.xlu0 %796
      %798 = vrot.lane.b32.xlu0 %v603, 119
      %v799 = vpop.permute.xlu0 %798
      %808 = vrot.lane.b32.xlu0 %v636, 118
      %v809 = vpop.permute.xlu0 %808
      %810 = vrot.lane.b32.xlu0 %v637, 118
      %v811 = vpop.permute.xlu0 %810
      %812 = vrot.lane.b32.xlu0 %v638, 118
      %v813 = vpop.permute.xlu0 %812
      %814 = vrot.lane.b32.xlu0 %v639, 118
      %v815 = vpop.permute.xlu0 %814
      %v820 = vpack.c.bf16 %v606, %v604
      %v821 = vpack.c.bf16 %v607, %v605
      %v822 = vpack.c.bf16 %v610, %v608
      %v823 = vpack.c.bf16 %v611, %v609
      %v824 = vpack.c.bf16 %v665, %v664
      %v825 = vpack.c.bf16 %v655, %v651
      %v826 = vpack.c.bf16 %v667, %v666
      %v827 = vpack.c.bf16 %v663, %v659
      %v828 = vpack.c.bf16 %v701, %v700
      %v829 = vpack.c.bf16 %v691, %v687
      %v830 = vpack.c.bf16 %v703, %v702
      %v831 = vpack.c.bf16 %v699, %v695
      %v832 = vpack.c.bf16 %v737, %v736
      %v833 = vpack.c.bf16 %v727, %v723
      %v834 = vpack.c.bf16 %v739, %v738
      %v835 = vpack.c.bf16 %v735, %v731
      %v836 = vpack.c.bf16 %v751, %v749
      %v837 = vpack.c.bf16 %v755, %v753
      %v838 = vpack.c.bf16 %v767, %v765
      %v839 = vpack.c.bf16 %v771, %v769
      %v840 = vpack.c.bf16 %v783, %v781
      %v841 = vpack.c.bf16 %v787, %v785
      %v842 = vpack.c.bf16 %v795, %v793
      %v843 = vpack.c.bf16 %v799, %v797
      %v844 = vpack.c.bf16 %v811, %v809
      %v845 = vpack.c.bf16 %v815, %v813
      %v846 = vld [vmem:[%s3] sm:$0xff]
      %v847 = vld [vmem:[%s3 + $0x8] sm:$0xf]
      %v848 = vld [vmem:[%s3 + $0xc] sm:$0xff]
      %v849 = vld [vmem:[%s3 + $0x14] sm:$0xf]
      %v850 = vld [vmem:[%s3 + $0x18] sm:$0xff]
      %v851 = vld [vmem:[%s3 + $0x20] sm:$0xf]
      %v852 = vld [vmem:[%s3 + $0x24] sm:$0xff]
      %v853 = vld [vmem:[%s3 + $0x2c] sm:$0xf]
      %v854 = vld [vmem:[%s5] sm:$0xff]
      %v855 = vld [vmem:[%s5 + $0x8] sm:$0xff]
      %v856 = vld [vmem:[%s5 + $0x10] sm:$0xff]
      %v857 = vld [vmem:[%s5 + $0x18] sm:$0xff]
      %859 = vset.pattern.permute.xlu0 0
      %860 = vperm.xlu0 %859, %v854
      %v861 = vpop.permute.xlu0 %860
      %864 = vset.pattern.permute.xlu0 0
      %865 = vperm.xlu0 %864, %v855
      %v866 = vpop.permute.xlu0 %865
      %869 = vset.pattern.permute.xlu0 0
      %870 = vperm.xlu0 %869, %v856
      %v871 = vpop.permute.xlu0 %870
      %874 = vset.pattern.permute.xlu0 0
      %875 = vperm.xlu0 %874, %v857
      %v876 = vpop.permute.xlu0 %875
      %v886 = vunpack.c.l.b16 %v846
      %v887 = vunpack.c.h.b16 %v846
      %v888 = vunpack.c.l.b16 %v847
      %v889 = vunpack.c.l.b16 %v848
      %v890 = vunpack.c.h.b16 %v848
      %v891 = vunpack.c.l.b16 %v849
      %v892 = vunpack.c.l.b16 %v850
      %v893 = vunpack.c.h.b16 %v850
      %v894 = vunpack.c.l.b16 %v851
      %v895 = vunpack.c.l.b16 %v852
      %v896 = vunpack.c.h.b16 %v852
      %v897 = vunpack.c.l.b16 %v853
      %v898 = vpack.c.b16 %v889, %v886
      %v899 = vpack.c.b16 %v890, %v887
      %v900 = vpack.c.b16 %v891, %v888
      %v901 = vpack.c.b16 %v895, %v892
      %v902 = vpack.c.b16 %v896, %v893
      %v903 = vpack.c.b16 %v897, %v894
      %934 = vrot.lane.b32.xlu0 %v820, 5
      %v935 = vpop.permute.xlu0 %934
      %936 = vrot.lane.b32.xlu0 %v821, 5
      %v937 = vpop.permute.xlu0 %936
      %938 = vrot.lane.b32.xlu0 %v822, 5
      %v939 = vpop.permute.xlu0 %938
      %940 = vrot.lane.b32.xlu0 %v823, 5
      %v941 = vpop.permute.xlu0 %940
      %942 = vrot.lane.b32.xlu0 %v824, 5
      %v943 = vpop.permute.xlu0 %942
      %944 = vrot.lane.b32.xlu0 %v825, 5
      %v945 = vpop.permute.xlu0 %944
      %946 = vrot.lane.b32.xlu0 %v826, 5
      %v947 = vpop.permute.xlu0 %946
      %948 = vrot.lane.b32.xlu0 %v827, 5
      %v949 = vpop.permute.xlu0 %948
      %950 = vrot.lane.b32.xlu0 %v828, 5
      %v951 = vpop.permute.xlu0 %950
      %952 = vrot.lane.b32.xlu0 %v829, 5
      %v953 = vpop.permute.xlu0 %952
      %954 = vrot.lane.b32.xlu0 %v830, 5
      %v955 = vpop.permute.xlu0 %954
      %956 = vrot.lane.b32.xlu0 %v831, 5
      %v957 = vpop.permute.xlu0 %956
      %958 = vrot.lane.b32.xlu0 %v832, 5
      %v959 = vpop.permute.xlu0 %958
      %960 = vrot.lane.b32.xlu0 %v833, 5
      %v961 = vpop.permute.xlu0 %960
      %962 = vrot.lane.b32.xlu0 %v834, 5
      %v963 = vpop.permute.xlu0 %962
      %964 = vrot.lane.b32.xlu0 %v835, 5
      %v965 = vpop.permute.xlu0 %964
      %966 = vrot.lane.b32.xlu0 %v836, 5
      %v967 = vpop.permute.xlu0 %966
      %968 = vrot.lane.b32.xlu0 %v837, 5
      %v969 = vpop.permute.xlu0 %968
      %970 = vrot.lane.b32.xlu0 %v838, 5
      %v971 = vpop.permute.xlu0 %970
      %972 = vrot.lane.b32.xlu0 %v839, 5
      %v973 = vpop.permute.xlu0 %972
      %974 = vrot.lane.b32.xlu0 %v840, 5
      %v975 = vpop.permute.xlu0 %974
      %976 = vrot.lane.b32.xlu0 %v841, 5
      %v977 = vpop.permute.xlu0 %976
      %978 = vrot.lane.b32.xlu0 %v842, 5
      %v979 = vpop.permute.xlu0 %978
      %980 = vrot.lane.b32.xlu0 %v843, 5
      %v981 = vpop.permute.xlu0 %980
      %982 = vrot.lane.b32.xlu0 %v844, 5
      %v983 = vpop.permute.xlu0 %982
      %984 = vrot.lane.b32.xlu0 %v845, 5
      %v985 = vpop.permute.xlu0 %984
      %v986 = vsel %vm515, %v935, %v937
      %v987 = vsel %vm515, %v939, %v941
      %v988 = vsel %vm515, %v943, %v945
      %v989 = vsel %vm515, %v947, %v949
      %v990 = vsel %vm515, %v951, %v953
      %v991 = vsel %vm515, %v955, %v957
      %v992 = vsel %vm515, %v959, %v961
      %v993 = vsel %vm515, %v963, %v965
      %vm1012 = vcmask 261120
      %v1014 = vsel %vm1012, %v900, 0
      %v1017 = vsel %vm1012, %v903, 0
      %1019 = vmatprep.subr.bf16.mxu0 0
      %1020 = vmatpush1.bf16.msra.mxu0 %v986
      %1021 = vmatprep.subr.bf16.mxu0 0
      %1022 = vmatpush1.bf16.msra.mxu0 %v987
      %1023 = vmatprep.subr.bf16.mxu0 0
      %1024 = vmatpush1.bf16.msra.mxu0 %v988
      %1025 = vmatprep.subr.bf16.mxu0 0
      %1026 = vmatpush1.bf16.msra.mxu0 %v989
      %1027 = vmatprep.subr.bf16.mxu0 0
      %1028 = vmatpush1.bf16.msra.mxu0 %v990
      %1029 = vmatprep.subr.bf16.mxu0 0
      %1030 = vmatpush1.bf16.msra.mxu0 %v991
      %1031 = vmatprep.subr.bf16.mxu0 0
      %1032 = vmatpush1.bf16.msra.mxu0 %v992
      %1033 = vmatprep.subr.bf16.mxu0 0
      %1034 = vmatpush1.bf16.msra.mxu0 %v993
      %1035 = vmatprep.subr.bf16.mxu0 0
      %1036 = vmatpush1.bf16.msra.mxu0 %v967
      %1037 = vmatprep.subr.bf16.mxu0 0
      %1038 = vmatpush1.bf16.msra.mxu0 %v969
      %1039 = vmatprep.subr.bf16.mxu0 0
      %1040 = vmatpush1.bf16.msra.mxu0 %v971
      %1041 = vmatprep.subr.bf16.mxu0 0
      %1042 = vmatpush1.bf16.msra.mxu0 %v973
      %1043 = vmatprep.subr.bf16.mxu0 0
      %1044 = vmatpush1.bf16.msra.mxu0 %v975
      %1045 = vmatprep.subr.bf16.mxu0 0
      %1046 = vmatpush1.bf16.msra.mxu0 %v977
      %1047 = vmatprep.subr.bf16.mxu0 0
      %1048 = vmatpush1.bf16.msra.mxu0 %v979
      %1049 = vmatprep.subr.bf16.mxu0 0
      %1050 = vmatpush1.bf16.msra.mxu0 %v981
      %1051 = vmatprep.mubr.bf16.mxu0 %v899
      %1052 = vmatmul.mubr.bf16.gmra.mrb[0].mxu0 %v898
      %v1053 = vpop.f32.mrb[0].mxu0
      %v1054 = vadd.f32 %v861, %v1053
      %v1055 = vpop.f32.mrb[0].mxu0
      %v1056 = vpop.f32.mrb[0].mxu0
      %v1057 = vadd.f32 %v866, %v1056
      %v1058 = vpop.f32.mrb[0].mxu0
      %1059 = vmatprep.mubr.bf16.mxu0 %v902
      %1060 = vmatmul.mubr.bf16.gmra.mrb[0].mxu0 %v901
      %v1061 = vpop.f32.mrb[0].mxu0
      %v1062 = vadd.f32 %v871, %v1061
      %v1063 = vpop.f32.mrb[0].mxu0
      %v1064 = vpop.f32.mrb[0].mxu0
      %v1065 = vadd.f32 %v876, %v1064
      %v1066 = vpop.f32.mrb[0].mxu0
      %1067 = vdwg.mxu0
      %1068 = vmatprep.subr.bf16.mxu0 0
      %1069 = vmatpush1.bf16.msra.mxu0 %v983
      %1070 = vmatprep.subr.bf16.mxu0 0
      %1071 = vmatpush1.bf16.msra.mxu0 %v985
      %1072 = vmatprep.subr.bf16.mxu0 0
      %1073 = vmatpush1.bf16.msra.mxu0 0
      %1074 = vmatprep.subr.bf16.mxu0 0
      %1075 = vmatpush1.bf16.msra.mxu0 0
      %1076 = vmatprep.subr.bf16.mxu0 0
      %1077 = vmatpush1.bf16.msra.mxu0 0
      %1078 = vmatprep.subr.bf16.mxu0 0
      %1079 = vmatpush1.bf16.msra.mxu0 0
      %1080 = vmatprep.subr.bf16.mxu0 0
      %1081 = vmatpush1.bf16.msra.mxu0 0
      %1082 = vmatprep.subr.bf16.mxu0 0
      %1083 = vmatpush1.bf16.msra.mxu0 0
      %1084 = vmatprep.subr.bf16.mxu0 0
      %1085 = vmatpush1.bf16.msra.mxu0 0
      %1086 = vmatprep.subr.bf16.mxu0 0
      %1087 = vmatpush1.bf16.msra.mxu0 0
      %1088 = vmatprep.subr.bf16.mxu0 0
      %1089 = vmatpush1.bf16.msra.mxu0 0
      %1090 = vmatprep.subr.bf16.mxu0 0
      %1091 = vmatpush1.bf16.msra.mxu0 0
      %1092 = vmatprep.subr.bf16.mxu0 0
      %1093 = vmatpush1.bf16.msra.mxu0 0
      %1094 = vmatprep.subr.bf16.mxu0 0
      %1095 = vmatpush1.bf16.msra.mxu0 0
      %1096 = vmatprep.subr.bf16.mxu0 0
      %1097 = vmatpush1.bf16.msra.mxu0 0
      %1098 = vmatprep.subr.bf16.mxu0 0
      %1099 = vmatpush1.bf16.msra.mxu0 0
      %1100 = vmatprep.mubr.bf16.mxu0 0
      %1101 = vmatmul.mubr.bf16.gmra.mrb[0].mxu0 %v1014
      %v1102 = vpop.f32.mrb[0].mxu0
      %v1103 = vadd.f32 %v1054, %v1102
      %v1104 = vpop.f32.mrb[0].mxu0
      %v1105 = vpop.f32.mrb[0].mxu0
      %v1106 = vadd.f32 %v1057, %v1105
      %v1107 = vpop.f32.mrb[0].mxu0
      %1108 = vmatprep.mubr.bf16.mxu0 0
      %1109 = vmatmul.mubr.bf16.gmra.mrb[0].mxu0 %v1017
      %v1110 = vpop.f32.mrb[0].mxu0
      %v1111 = vadd.f32 %v1062, %v1110
      %v1112 = vpop.f32.mrb[0].mxu0
      %v1113 = vpop.f32.mrb[0].mxu0
      %v1114 = vadd.f32 %v1065, %v1113
      %v1115 = vpop.f32.mrb[0].mxu0
      %1116 = vdwg.mxu0
      %v1117 = vmul.f32 %v1103, 0.2
      %v1118 = vmul.f32 %v1106, 0.2
      %v1119 = vmul.f32 %v1111, 0.2
      %v1120 = vmul.f32 %v1114, 0.2
      %v1121 = vmax.f32 %v1103, %v1117
      %v1122 = vmax.f32 %v1106, %v1118
      %v1123 = vmax.f32 %v1111, %v1119
      %v1124 = vmax.f32 %v1114, %v1120
      %v1125 = vpack.c.bf16 %v1122, %v1121
      %v1126 = vpack.c.bf16 %v1124, %v1123
      %v1129 = vunpack.c.l.b16 %v1125
      %v1130 = vunpack.c.h.b16 %v1125
      %v1131 = vunpack.c.l.b16 %v1126
      %v1132 = vunpack.c.h.b16 %v1126
      %v1133 = vpack.c.b16 %v1129, %v1129
      %v1134 = vpack.c.b16 %v1130, %v1130
      %v1135 = vpack.c.b16 %v1131, %v1131
      %v1136 = vpack.c.b16 %v1132, %v1132
      %vm1141 = vcmask 125952
      %1142 = vst.msk [vmem:[%s251] sm:$0xf] %vm1141, %v1133
      %1143 = vst.msk [vmem:[%s251 + $0x4] sm:$0xf] %vm1141, %v1134
      %1144 = vst.msk [vmem:[%s251 + $0x8] sm:$0xf] %vm1141, %v1135
      %1145 = vst.msk [vmem:[%s251 + $0xc] sm:$0xf] %vm1141, %v1136
      %p1146 = scmp.lt.s32.totalorder %s17, 1
      %s1147 = scalar_select %p1146, %s17, 1
      %s1148 = smul.addr %s1147, 4
      %s1149 = smul.addr %s1148, 4
      %s1150 = scalar_lea.vmem %s6, %s1149
      // Predicated region
      $region45: #{vdn_forward.10} parent=43 // pred_check
        %p1151 = pneg %p166
      $region46: #{vdn_forward.10} parent=43 // pred_check_branch
        %1153 = sbr.rel (%p1151) target = $region48
      $region47: #{vdn_forward.10} parent=43 // pred_region
        _
      $region48: #{vdn_forward.10} parent=43 // pred_fallthru
        _
    $region44: #{vdn_forward.10} parent=5 // pred_fallthru
      _
    %p1154 = scmp.le.s32.totalorder 2, %s12
    // Predicated region
    $region49: #{vdn_forward.10} parent=5 // pred_check
      %p1155 = pneg %p1154
    $region50: #{vdn_forward.10} parent=5 // pred_check_branch
      %1157 = sbr.rel (%p1155) target = $region52
    $region51: #{vdn_forward.10} parent=5 // pred_region
      %s1158 = ssub.s32 %s12, 2
      // Predicated region
      $region53: #{vdn_forward.10} parent=51 // pred_check
        %p1159 = pneg %p172
      $region54: #{vdn_forward.10} parent=51 // pred_check_branch
        %1161 = sbr.rel (%p1159) target = $region56
      $region55: #{vdn_forward.10} parent=51 // pred_region
        %p1162 = scmp.lt.s32.totalorder %s18, 1
        %s1163 = scalar_select %p1162, %s18, 1
        %s1164 = smul.addr %s1163, 4
        %s1165 = smul.addr %s1164, 4
        %s1166 = scalar_lea.vmem %s6, %s1165
      $region56: #{vdn_forward.10} parent=51 // pred_fallthru
        _
    $region52: #{vdn_forward.10} parent=5 // pred_fallthru
      _
  $region6: #{vdn_forward.10} parent=0 // loop_footer
    %s16 = sadd.s32 1, %s12
  $region7: #{vdn_forward.10} parent=0 // loop_footer_branch
    %11 = sbr.rel target = $region3
  $region8: #{vdn_forward.10} parent=0 // loop_exit
    _

// kernel: vdn_forward.13
$region0: #{vdn_forward.13}
  #allocation0 [shape = 'u32[]', space=smem, size = 0x4, offset = 0x4, fixed_abs, tag = 'smem constant byte address 0x4 - core index']
  #allocation1 [shape = 'u32[144,128]{1,0:T(1,128)}', space=vmem, size = 0x12000, scoped, tag = 'internal scratch']
  %s0 = inlined_call_operand.vmem [shape: bf16[2,16,64], index: 0, kind: input, shape index: {}]
  %s1 = inlined_call_operand.vmem [shape: bf16[32,16], index: 1, kind: input, shape index: {}]
  %s2 = inlined_call_operand.vmem [shape: f32[32,1], index: 2, kind: input, shape index: {}]
  %s3 = inlined_call_operand.vmem [shape: bf16[2,32,64], index: 3, kind: output, shape index: {}]
  %s4 = sld [smem:[#allocation0]]
  $region45: #{vdn_forward.13} parent=0
    _
  %s6 = ssub.s32 1, %s4
  %s7 = scalar_select 0, %s6, %s4
  loop: start=0, step=1, limit=4
  $region2: #{vdn_forward.13} parent=0 // loop_pre_header
    _
  $region3: #{vdn_forward.13} parent=0 // loop_header
    %s9 = sphi 0, %s13
    %p10 = scmp.ge.s32.totalorder %s9, 4
    %s19 = sphi 0, %s21
    %s22 = sphi 0, %s19
    %s23 = sphi 0, %s22
    %s39 = sphi 0, %s23
    %s43 = sphi 0, %s43
    %s45 = sphi 0, %s43
    %s46 = sphi 0, %s45
    %s60 = sphi 0, %s46
    %s64 = sphi 0, %s64
    %s66 = sphi 0, %s64
    %s67 = sphi 0, %s66
    %s81 = sphi 0, %s67
    %s87 = sphi 0, %s89
    %s90 = sphi 0, %s87
    %s91 = sphi 0, %s90
    %s107 = sphi 0, %s91
  $region4: #{vdn_forward.13} parent=0 // loop_header_branch
    %12 = sbr.rel (%p10) target = $region8
  $region5: #{vdn_forward.13} parent=0 // loop_body
    %s14 = ssub.s32 %s9, 1
    %s15 = ssub.s32 %s9, 2
    %s16 = sadd.s32 %s9, 1
    %s17 = ssub.s32 %s9, %s16
    %p18 = scmp.eq.s32.totalorder %s17, 0
    %s20 = sadd.s32 %s19, 1
    %s21 = scalar_select %p18, %s19, %s20
    %p24 = pneg %p18
    %p25 = scmp.eq.s32.totalorder %s9, 1
    %p26 = por %p24, %p25
    %p27 = scmp.ne.s32.totalorder %s19, %s22
    %p28 = scmp.eq.s32.totalorder %s9, 0
    %p29 = por %p27, %p28
    %p30 = scmp.ne.s32.totalorder %s19, %s22
    %p31 = scmp.eq.s32.totalorder %s14, 1
    %p32 = por %p30, %p31
    %p33 = scmp.ne.s32.totalorder %s22, %s23
    %p34 = scmp.eq.s32.totalorder %s14, 0
    %p35 = por %p33, %p34
    %p36 = scmp.ne.s32.totalorder %s22, %s23
    %p37 = scmp.eq.s32.totalorder %s15, 1
    %p38 = por %p36, %p37
    %p40 = scmp.ne.s32.totalorder %s23, %s39
    %p41 = scmp.eq.s32.totalorder %s15, 0
    %p42 = por %p40, %p41
    %s44 = sadd.s32 %s43, 1
    %p47 = scmp.eq.s32.totalorder %s9, 1
    %p48 = scmp.ne.s32.totalorder %s43, %s45
    %p49 = scmp.eq.s32.totalorder %s9, 0
    %p50 = por %p48, %p49
    %p51 = scmp.ne.s32.totalorder %s43, %s45
    %p52 = scmp.eq.s32.totalorder %s14, 1
    %p53 = por %p51, %p52
    %p54 = scmp.ne.s32.totalorder %s45, %s46
    %p55 = scmp.eq.s32.totalorder %s14, 0
    %p56 = por %p54, %p55
    %p57 = scmp.ne.s32.totalorder %s45, %s46
    %p58 = scmp.eq.s32.totalorder %s15, 1
    %p59 = por %p57, %p58
    %p61 = scmp.ne.s32.totalorder %s46, %s60
    %p62 = scmp.eq.s32.totalorder %s15, 0
    %p63 = por %p61, %p62
    %s65 = sadd.s32 %s64, 1
    %p68 = scmp.eq.s32.totalorder %s9, 1
    %p69 = scmp.ne.s32.totalorder %s64, %s66
    %p70 = scmp.eq.s32.totalorder %s9, 0
    %p71 = por %p69, %p70
    %p72 = scmp.ne.s32.totalorder %s64, %s66
    %p73 = scmp.eq.s32.totalorder %s14, 1
    %p74 = por %p72, %p73
    %p75 = scmp.ne.s32.totalorder %s66, %s67
    %p76 = scmp.eq.s32.totalorder %s14, 0
    %p77 = por %p75, %p76
    %p78 = scmp.ne.s32.totalorder %s66, %s67
    %p79 = scmp.eq.s32.totalorder %s15, 1
    %p80 = por %p78, %p79
    %p82 = scmp.ne.s32.totalorder %s67, %s81
    %p83 = scmp.eq.s32.totalorder %s15, 0
    %p84 = por %p82, %p83
    %s85 = ssub.s32 %s9, %s16
    %p86 = scmp.eq.s32.totalorder %s85, 0
    %s88 = sadd.s32 %s87, 1
    %s89 = scalar_select %p86, %s87, %s88
    %p92 = pneg %p86
    %p93 = scmp.eq.s32.totalorder %s9, 1
    %p94 = por %p92, %p93
    %p95 = scmp.ne.s32.totalorder %s87, %s90
    %p96 = scmp.eq.s32.totalorder %s9, 0
    %p97 = por %p95, %p96
    %p98 = scmp.ne.s32.totalorder %s87, %s90
    %p99 = scmp.eq.s32.totalorder %s14, 1
    %p100 = por %p98, %p99
    %p101 = scmp.ne.s32.totalorder %s90, %s91
    %p102 = scmp.eq.s32.totalorder %s14, 0
    %p103 = por %p101, %p102
    %p104 = scmp.ne.s32.totalorder %s90, %s91
    %p105 = scmp.eq.s32.totalorder %s15, 1
    %p106 = por %p104, %p105
    %p108 = scmp.ne.s32.totalorder %s91, %s107
    %p109 = scmp.eq.s32.totalorder %s15, 0
    %p110 = por %p108, %p109
    %p111 = scmp.le.s32.totalorder 1, %s9
    %p112 = scmp.lt.s32.totalorder %s9, 3
    %p113 = pnand %p111, %p112
    %p114 = pneg %p113
    // Predicated region
    $region9: #{vdn_forward.13} parent=5 // pred_check
      _
    $region10: #{vdn_forward.13} parent=5 // pred_check_branch
      %116 = sbr.rel (%p113) target = $region12
    $region11: #{vdn_forward.13} parent=5 // pred_region
      %s117 = ssub.s32 %s9, 1
      // Predicated region
      $region13: #{vdn_forward.13} parent=11 // pred_check
        %p118 = pneg %p56
      $region14: #{vdn_forward.13} parent=11 // pred_check_branch
        %120 = sbr.rel (%p118) target = $region16
      $region15: #{vdn_forward.13} parent=11 // pred_region
        _
      $region16: #{vdn_forward.13} parent=11 // pred_fallthru
        _
      // Predicated region
      $region17: #{vdn_forward.13} parent=11 // pred_check
        %p121 = pneg %p77
      $region18: #{vdn_forward.13} parent=11 // pred_check_branch
        %123 = sbr.rel (%p121) target = $region20
      $region19: #{vdn_forward.13} parent=11 // pred_region
        _
      $region20: #{vdn_forward.13} parent=11 // pred_fallthru
        _
    $region12: #{vdn_forward.13} parent=5 // pred_fallthru
      _
    %p124 = scmp.lt.s32.totalorder %s9, 2
    // Predicated region
    $region21: #{vdn_forward.13} parent=5 // pred_check
      %p125 = pneg %p124
    $region22: #{vdn_forward.13} parent=5 // pred_check_branch
      %127 = sbr.rel (%p125) target = $region24
    $region23: #{vdn_forward.13} parent=5 // pred_region
      // Predicated region
      $region25: #{vdn_forward.13} parent=23 // pred_check
        %p128 = pneg %p29
      $region26: #{vdn_forward.13} parent=23 // pred_check_branch
        %130 = sbr.rel (%p128) target = $region28
      $region27: #{vdn_forward.13} parent=23 // pred_region
        %p131 = scmp.lt.s32.totalorder %s9, 1
        %s132 = scalar_select %p131, %s9, 1
        %s133 = smul.addr %s132, 2
        %s134 = smul.addr %s133, 4
        %s135 = scalar_lea.vmem %s0, %s134
      $region28: #{vdn_forward.13} parent=23 // pred_fallthru
        _
    $region24: #{vdn_forward.13} parent=5 // pred_fallthru
      _
    %p136 = scmp.le.s32.totalorder 1, %s9
    %p137 = scmp.lt.s32.totalorder %s9, 3
    %p138 = pnand %p136, %p137
    %p139 = pneg %p138
    // Predicated region
    $region29: #{vdn_forward.13} parent=5 // pred_check
      _
    $region30: #{vdn_forward.13} parent=5 // pred_check_branch
      %141 = sbr.rel (%p138) target = $region32
    $region31: #{vdn_forward.13} parent=5 // pred_region
      %s142 = ssub.s32 %s9, 1
      %p143 = scmp.lt.s32.totalorder %s14, 1
      %s144 = scalar_select %p143, %s14, 1
      %s145 = smul.addr %s144, 2
      %s146 = smul.addr %s145, 4
      %s147 = scalar_lea.vmem %s0, %s146
      %p148 = pneg %p35
      %p149 = pneg %p32
      %p150 = pneg %p56
      %p151 = pneg %p53
      %p152 = pneg %p77
      %p153 = pneg %p74
      %p154 = pneg %p103
      %p155 = pneg %p100
      %p156 = scmp.lt.s32.totalorder %s14, 1
      %s157 = scalar_select %p156, %s14, 1
      %s158 = smul.addr %s157, 4
      %s159 = smul.addr %s158, 4
      %s160 = scalar_lea.vmem %s3, %s159
      %p161 = scmp.lt.s32.totalorder %s14, 1
      %s162 = scalar_select %p161, %s14, 1
      %s163 = smul.addr %s162, 2
      %s164 = smul.addr %s163, 4
      %s165 = scalar_lea.vmem %s0, %s164
      %p166 = scmp.lt.s32.totalorder %s14, 1
      %s167 = scalar_select %p166, %s14, 1
      %s168 = smul.addr %s167, 4
      %s169 = smul.addr %s168, 4
      %s170 = scalar_lea.vmem %s3, %s169
      %v172 = vld [vmem:[%s1] sm:$0xf]
      %v173 = vld [vmem:[%s1 + $0x4] sm:$0xf]
      %v174 = vld [vmem:[%s1 + $0x8] sm:$0xf]
      %v175 = vld [vmem:[%s1 + $0xc] sm:$0xf]
      %v176 = vld [vmem:[%s165] sm:$0xf]
      %v177 = vld [vmem:[%s165 + $0x4] sm:$0xf]
      %v178 = vld [vmem:[%s2] sm:$0xff]
      %v179 = vld [vmem:[%s2 + $0x8] sm:$0xff]
      %v180 = vld [vmem:[%s2 + $0x10] sm:$0xff]
      %v181 = vld [vmem:[%s2 + $0x18] sm:$0xff]
      %183 = vset.pattern.permute.xlu0 0
      %184 = vperm.xlu0 %183, %v178
      %v185 = vpop.permute.xlu0 %184
      %188 = vset.pattern.permute.xlu0 0
      %189 = vperm.xlu0 %188, %v179
      %v190 = vpop.permute.xlu0 %189
      %193 = vset.pattern.permute.xlu0 0
      %194 = vperm.xlu0 %193, %v180
      %v195 = vpop.permute.xlu0 %194
      %198 = vset.pattern.permute.xlu0 0
      %199 = vperm.xlu0 %198, %v181
      %v200 = vpop.permute.xlu0 %199
      %v206 = vunpack.c.l.b16 %v172
      %v207 = vunpack.c.l.b16 %v173
      %v208 = vunpack.c.l.b16 %v174
      %v209 = vunpack.c.l.b16 %v175
      %v210 = vpack.c.b16 %v207, %v206
      %v211 = vpack.c.b16 %v209, %v208
      %v214 = vunpack.c.l.b16 %v176
      %v215 = vunpack.c.l.b16 %v177
      %v216 = vpack.c.b16 %v215, %v214
      %vm218 = vcmask 130048
      %v220 = vsel %vm218, %v210, 0
      %v223 = vsel %vm218, %v211, 0
      %225 = vmatprep.subr.bf16.mxu0 0
      %226 = vmatpush1.bf16.msra.mxu0 %v216
      %227 = vmatprep.subr.bf16.mxu0 0
      %228 = vmatpush1.bf16.msra.mxu0 0
      %229 = vmatprep.subr.bf16.mxu0 0
      %230 = vmatpush1.bf16.msra.mxu0 0
      %231 = vmatprep.subr.bf16.mxu0 0
      %232 = vmatpush1.bf16.msra.mxu0 0
      %233 = vmatprep.subr.bf16.mxu0 0
      %234 = vmatpush1.bf16.msra.mxu0 0
      %235 = vmatprep.subr.bf16.mxu0 0
      %236 = vmatpush1.bf16.msra.mxu0 0
      %237 = vmatprep.subr.bf16.mxu0 0
      %238 = vmatpush1.bf16.msra.mxu0 0
      %239 = vmatprep.subr.bf16.mxu0 0
      %240 = vmatpush1.bf16.msra.mxu0 0
      %241 = vmatprep.subr.bf16.mxu0 0
      %242 = vmatpush1.bf16.msra.mxu0 0
      %243 = vmatprep.subr.bf16.mxu0 0
      %244 = vmatpush1.bf16.msra.mxu0 0
      %245 = vmatprep.subr.bf16.mxu0 0
      %246 = vmatpush1.bf16.msra.mxu0 0
      %247 = vmatprep.subr.bf16.mxu0 0
      %248 = vmatpush1.bf16.msra.mxu0 0
      %249 = vmatprep.subr.bf16.mxu0 0
      %250 = vmatpush1.bf16.msra.mxu0 0
      %251 = vmatprep.subr.bf16.mxu0 0
      %252 = vmatpush1.bf16.msra.mxu0 0
      %253 = vmatprep.subr.bf16.mxu0 0
      %254 = vmatpush1.bf16.msra.mxu0 0
      %255 = vmatprep.subr.bf16.mxu0 0
      %256 = vmatpush1.bf16.msra.mxu0 0
      %257 = vmatprep.mubr.bf16.mxu0 0
      %258 = vmatmul.mubr.bf16.gmra.mrb[0].mxu0 %v220
      %v259 = vpop.f32.mrb[0].mxu0
      %v260 = vadd.f32 %v185, %v259
      %v261 = vpop.f32.mrb[0].mxu0
      %v262 = vpop.f32.mrb[0].mxu0
      %v263 = vadd.f32 %v190, %v262
      %v264 = vpop.f32.mrb[0].mxu0
      %265 = vmatprep.mubr.bf16.mxu0 0
      %266 = vmatmul.mubr.bf16.gmra.mrb[0].mxu0 %v223
      %v267 = vpop.f32.mrb[0].mxu0
      %v268 = vadd.f32 %v195, %v267
      %v269 = vpop.f32.mrb[0].mxu0
      %v270 = vpop.f32.mrb[0].mxu0
      %v271 = vadd.f32 %v200, %v270
      %v272 = vpop.f32.mrb[0].mxu0
      %273 = vdwg.mxu0
      %v274 = vpack.c.bf16 %v263, %v260
      %v275 = vpack.c.bf16 %v271, %v268
      %v278 = vunpack.c.l.b16 %v274
      %v279 = vunpack.c.h.b16 %v274
      %v280 = vunpack.c.l.b16 %v275
      %v281 = vunpack.c.h.b16 %v275
      %v282 = vpack.c.b16 %v278, %v278
      %v283 = vpack.c.b16 %v279, %v279
      %v284 = vpack.c.b16 %v280, %v280
      %v285 = vpack.c.b16 %v281, %v281
      %vm290 = vcmask 519168
      %291 = vst.msk [vmem:[%s170] sm:$0xf] %vm290, %v282
      %292 = vst.msk [vmem:[%s170 + $0x4] sm:$0xf] %vm290, %v283
      %293 = vst.msk [vmem:[%s170 + $0x8] sm:$0xf] %vm290, %v284
      %294 = vst.msk [vmem:[%s170 + $0xc] sm:$0xf] %vm290, %v285
      %p295 = scmp.lt.s32.totalorder %s14, 1
      %s296 = scalar_select %p295, %s14, 1
      %s297 = smul.addr %s296, 4
      %s298 = smul.addr %s297, 4
      %s299 = scalar_lea.vmem %s3, %s298
      // Predicated region
      $region33: #{vdn_forward.13} parent=31 // pred_check
        %p300 = pneg %p100
      $region34: #{vdn_forward.13} parent=31 // pred_check_branch
        %302 = sbr.rel (%p300) target = $region36
      $region35: #{vdn_forward.13} parent=31 // pred_region
        _
      $region36: #{vdn_forward.13} parent=31 // pred_fallthru
        _
    $region32: #{vdn_forward.13} parent=5 // pred_fallthru
      _
    %p303 = scmp.le.s32.totalorder 2, %s9
    // Predicated region
    $region37: #{vdn_forward.13} parent=5 // pred_check
      %p304 = pneg %p303
    $region38: #{vdn_forward.13} parent=5 // pred_check_branch
      %306 = sbr.rel (%p304) target = $region40
    $region39: #{vdn_forward.13} parent=5 // pred_region
      %s307 = ssub.s32 %s9, 2
      // Predicated region
      $region41: #{vdn_forward.13} parent=39 // pred_check
        %p308 = pneg %p106
      $region42: #{vdn_forward.13} parent=39 // pred_check_branch
        %310 = sbr.rel (%p308) target = $region44
      $region43: #{vdn_forward.13} parent=39 // pred_region
        %p311 = scmp.lt.s32.totalorder %s15, 1
        %s312 = scalar_select %p311, %s15, 1
        %s313 = smul.addr %s312, 4
        %s314 = smul.addr %s313, 4
        %s315 = scalar_lea.vmem %s3, %s314
      $region44: #{vdn_forward.13} parent=39 // pred_fallthru
        _
    $region40: #{vdn_forward.13} parent=5 // pred_fallthru
      _
  $region6: #{vdn_forward.13} parent=0 // loop_footer
    %s13 = sadd.s32 1, %s9
  $region7: #{vdn_forward.13} parent=0 // loop_footer_branch
    %8 = sbr.rel target = $region3
  $region8: #{vdn_forward.13} parent=0 // loop_exit
    _

// kernel: vdn_forward.12
$region0: #{vdn_forward.12}
  #allocation0 [shape = 'u32[]', space=smem, size = 0x4, offset = 0x4, fixed_abs, tag = 'smem constant byte address 0x4 - core index']
  #allocation1 [shape = 'u32[144,128]{1,0:T(1,128)}', space=vmem, size = 0x12000, scoped, tag = 'internal scratch']
  #allocation2 [shape = 'f32[32,320]{1,0:T(8,128)}', space=vmem, size = 0xc000, scoped, tag = 'scratch operand']
  %s0 = inlined_call_operand.vmem [shape: f32[2,64], index: 0, kind: input, shape index: {}]
  %s1 = inlined_call_operand.vmem [shape: bf16[2,16,64], index: 1, kind: input, shape index: {}]
  %s2 = inlined_call_operand.vmem [shape: bf16[2,16,64], index: 2, kind: input, shape index: {}]
  %s3 = inlined_call_operand.vmem [shape: bf16[16,288], index: 3, kind: input, shape index: {}]
  %s4 = inlined_call_operand.vmem [shape: bf16[16,144], index: 4, kind: input, shape index: {}]
  %s5 = inlined_call_operand.vmem [shape: f32[16,1], index: 5, kind: input, shape index: {}, may-alias: {5,6}]
  %s6 = inlined_call_operand.vmem [shape: f32[16,1], index: 6, kind: input, shape index: {}, may-alias: {5,6}]
  %s7 = inlined_call_operand.vmem [shape: bf16[2,16,64], index: 7, kind: output, shape index: {}]
  %s8 = sld [smem:[#allocation0]]
  $region61: #{vdn_forward.12} parent=0
    _
  %s10 = ssub.s32 1, %s8
  %s11 = scalar_select 0, %s10, %s8
  loop: start=0, step=1, limit=4
  $region2: #{vdn_forward.12} parent=0 // loop_pre_header
    _
  $region3: #{vdn_forward.12} parent=0 // loop_header
    %s13 = sphi 0, %s17
    %p14 = scmp.ge.s32.totalorder %s13, 4
    %s21 = sphi 0, %s21
    %s23 = sphi 0, %s21
    %s24 = sphi 0, %s23
    %s38 = sphi 0, %s24
    %s44 = sphi 0, %s46
    %s47 = sphi 0, %s44
    %s48 = sphi 0, %s47
    %s64 = sphi 0, %s48
    %s70 = sphi 0, %s72
    %s73 = sphi 0, %s70
    %s74 = sphi 0, %s73
    %s90 = sphi 0, %s74
    %s94 = sphi 0, %s94
    %s96 = sphi 0, %s94
    %s97 = sphi 0, %s96
    %s111 = sphi 0, %s97
    %s115 = sphi 0, %s115
    %s117 = sphi 0, %s115
    %s118 = sphi 0, %s117
    %s132 = sphi 0, %s118
    %s136 = sphi 0, %s136
    %s138 = sphi 0, %s136
    %s139 = sphi 0, %s138
    %s153 = sphi 0, %s139
    %s157 = sphi 0, %s157
    %s159 = sphi 0, %s157
    %s160 = sphi 0, %s159
    %s174 = sphi 0, %s160
    %s180 = sphi 0, %s182
    %s183 = sphi 0, %s180
    %s184 = sphi 0, %s183
    %s200 = sphi 0, %s184
  $region4: #{vdn_forward.12} parent=0 // loop_header_branch
    %16 = sbr.rel (%p14) target = $region8
  $region5: #{vdn_forward.12} parent=0 // loop_body
    %s18 = ssub.s32 %s13, 1
    %s19 = ssub.s32 %s13, 2
    %s20 = sadd.s32 %s13, 1
    %s22 = sadd.s32 %s21, 1
    %p25 = scmp.eq.s32.totalorder %s13, 1
    %p26 = scmp.ne.s32.totalorder %s21, %s23
    %p27 = scmp.eq.s32.totalorder %s13, 0
    %p28 = por %p26, %p27
    %p29 = scmp.ne.s32.totalorder %s21, %s23
    %p30 = scmp.eq.s32.totalorder %s18, 1
    %p31 = por %p29, %p30
    %p32 = scmp.ne.s32.totalorder %s23, %s24
    %p33 = scmp.eq.s32.totalorder %s18, 0
    %p34 = por %p32, %p33
    %p35 = scmp.ne.s32.totalorder %s23, %s24
    %p36 = scmp.eq.s32.totalorder %s19, 1
    %p37 = por %p35, %p36
    %p39 = scmp.ne.s32.totalorder %s24, %s38
    %p40 = scmp.eq.s32.totalorder %s19, 0
    %p41 = por %p39, %p40
    %s42 = ssub.s32 %s13, %s20
    %p43 = scmp.eq.s32.totalorder %s42, 0
    %s45 = sadd.s32 %s44, 1
    %s46 = scalar_select %p43, %s44, %s45
    %p49 = pneg %p43
    %p50 = scmp.eq.s32.totalorder %s13, 1
    %p51 = por %p49, %p50
    %p52 = scmp.ne.s32.totalorder %s44, %s47
    %p53 = scmp.eq.s32.totalorder %s13, 0
    %p54 = por %p52, %p53
    %p55 = scmp.ne.s32.totalorder %s44, %s47
    %p56 = scmp.eq.s32.totalorder %s18, 1
    %p57 = por %p55, %p56
    %p58 = scmp.ne.s32.totalorder %s47, %s48
    %p59 = scmp.eq.s32.totalorder %s18, 0
    %p60 = por %p58, %p59
    %p61 = scmp.ne.s32.totalorder %s47, %s48
    %p62 = scmp.eq.s32.totalorder %s19, 1
    %p63 = por %p61, %p62
    %p65 = scmp.ne.s32.totalorder %s48, %s64
    %p66 = scmp.eq.s32.totalorder %s19, 0
    %p67 = por %p65, %p66
    %s68 = ssub.s32 %s13, %s20
    %p69 = scmp.eq.s32.totalorder %s68, 0
    %s71 = sadd.s32 %s70, 1
    %s72 = scalar_select %p69, %s70, %s71
    %p75 = pneg %p69
    %p76 = scmp.eq.s32.totalorder %s13, 1
    %p77 = por %p75, %p76
    %p78 = scmp.ne.s32.totalorder %s70, %s73
    %p79 = scmp.eq.s32.totalorder %s13, 0
    %p80 = por %p78, %p79
    %p81 = scmp.ne.s32.totalorder %s70, %s73
    %p82 = scmp.eq.s32.totalorder %s18, 1
    %p83 = por %p81, %p82
    %p84 = scmp.ne.s32.totalorder %s73, %s74
    %p85 = scmp.eq.s32.totalorder %s18, 0
    %p86 = por %p84, %p85
    %p87 = scmp.ne.s32.totalorder %s73, %s74
    %p88 = scmp.eq.s32.totalorder %s19, 1
    %p89 = por %p87, %p88
    %p91 = scmp.ne.s32.totalorder %s74, %s90
    %p92 = scmp.eq.s32.totalorder %s19, 0
    %p93 = por %p91, %p92
    %s95 = sadd.s32 %s94, 1
    %p98 = scmp.eq.s32.totalorder %s13, 1
    %p99 = scmp.ne.s32.totalorder %s94, %s96
    %p100 = scmp.eq.s32.totalorder %s13, 0
    %p101 = por %p99, %p100
    %p102 = scmp.ne.s32.totalorder %s94, %s96
    %p103 = scmp.eq.s32.totalorder %s18, 1
    %p104 = por %p102, %p103
    %p105 = scmp.ne.s32.totalorder %s96, %s97
    %p106 = scmp.eq.s32.totalorder %s18, 0
    %p107 = por %p105, %p106
    %p108 = scmp.ne.s32.totalorder %s96, %s97
    %p109 = scmp.eq.s32.totalorder %s19, 1
    %p110 = por %p108, %p109
    %p112 = scmp.ne.s32.totalorder %s97, %s111
    %p113 = scmp.eq.s32.totalorder %s19, 0
    %p114 = por %p112, %p113
    %s116 = sadd.s32 %s115, 1
    %p119 = scmp.eq.s32.totalorder %s13, 1
    %p120 = scmp.ne.s32.totalorder %s115, %s117
    %p121 = scmp.eq.s32.totalorder %s13, 0
    %p122 = por %p120, %p121
    %p123 = scmp.ne.s32.totalorder %s115, %s117
    %p124 = scmp.eq.s32.totalorder %s18, 1
    %p125 = por %p123, %p124
    %p126 = scmp.ne.s32.totalorder %s117, %s118
    %p127 = scmp.eq.s32.totalorder %s18, 0
    %p128 = por %p126, %p127
    %p129 = scmp.ne.s32.totalorder %s117, %s118
    %p130 = scmp.eq.s32.totalorder %s19, 1
    %p131 = por %p129, %p130
    %p133 = scmp.ne.s32.totalorder %s118, %s132
    %p134 = scmp.eq.s32.totalorder %s19, 0
    %p135 = por %p133, %p134
    %s137 = sadd.s32 %s136, 1
    %p140 = scmp.eq.s32.totalorder %s13, 1
    %p141 = scmp.ne.s32.totalorder %s136, %s138
    %p142 = scmp.eq.s32.totalorder %s13, 0
    %p143 = por %p141, %p142
    %p144 = scmp.ne.s32.totalorder %s136, %s138
    %p145 = scmp.eq.s32.totalorder %s18, 1
    %p146 = por %p144, %p145
    %p147 = scmp.ne.s32.totalorder %s138, %s139
    %p148 = scmp.eq.s32.totalorder %s18, 0
    %p149 = por %p147, %p148
    %p150 = scmp.ne.s32.totalorder %s138, %s139
    %p151 = scmp.eq.s32.totalorder %s19, 1
    %p152 = por %p150, %p151
    %p154 = scmp.ne.s32.totalorder %s139, %s153
    %p155 = scmp.eq.s32.totalorder %s19, 0
    %p156 = por %p154, %p155
    %s158 = sadd.s32 %s157, 1
    %p161 = scmp.eq.s32.totalorder %s13, 1
    %p162 = scmp.ne.s32.totalorder %s157, %s159
    %p163 = scmp.eq.s32.totalorder %s13, 0
    %p164 = por %p162, %p163
    %p165 = scmp.ne.s32.totalorder %s157, %s159
    %p166 = scmp.eq.s32.totalorder %s18, 1
    %p167 = por %p165, %p166
    %p168 = scmp.ne.s32.totalorder %s159, %s160
    %p169 = scmp.eq.s32.totalorder %s18, 0
    %p170 = por %p168, %p169
    %p171 = scmp.ne.s32.totalorder %s159, %s160
    %p172 = scmp.eq.s32.totalorder %s19, 1
    %p173 = por %p171, %p172
    %p175 = scmp.ne.s32.totalorder %s160, %s174
    %p176 = scmp.eq.s32.totalorder %s19, 0
    %p177 = por %p175, %p176
    %s178 = ssub.s32 %s13, %s20
    %p179 = scmp.eq.s32.totalorder %s178, 0
    %s181 = sadd.s32 %s180, 1
    %s182 = scalar_select %p179, %s180, %s181
    %p185 = pneg %p179
    %p186 = scmp.eq.s32.totalorder %s13, 1
    %p187 = por %p185, %p186
    %p188 = scmp.ne.s32.totalorder %s180, %s183
    %p189 = scmp.eq.s32.totalorder %s13, 0
    %p190 = por %p188, %p189
    %p191 = scmp.ne.s32.totalorder %s180, %s183
    %p192 = scmp.eq.s32.totalorder %s18, 1
    %p193 = por %p191, %p192
    %p194 = scmp.ne.s32.totalorder %s183, %s184
    %p195 = scmp.eq.s32.totalorder %s18, 0
    %p196 = por %p194, %p195
    %p197 = scmp.ne.s32.totalorder %s183, %s184
    %p198 = scmp.eq.s32.totalorder %s19, 1
    %p199 = por %p197, %p198
    %p201 = scmp.ne.s32.totalorder %s184, %s200
    %p202 = scmp.eq.s32.totalorder %s19, 0
    %p203 = por %p201, %p202
    %p204 = scmp.le.s32.totalorder 1, %s13
    %p205 = scmp.lt.s32.totalorder %s13, 3
    %p206 = pnand %p204, %p205
    %p207 = pneg %p206
    // Predicated region
    $region9: #{vdn_forward.12} parent=5 // pred_check
      _
    $region10: #{vdn_forward.12} parent=5 // pred_check_branch
      %209 = sbr.rel (%p206) target = $region12
    $region11: #{vdn_forward.12} parent=5 // pred_region
      %s210 = ssub.s32 %s13, 1
      // Predicated region
      $region13: #{vdn_forward.12} parent=11 // pred_check
        %p211 = pneg %p34
      $region14: #{vdn_forward.12} parent=11 // pred_check_branch
        %213 = sbr.rel (%p211) target = $region16
      $region15: #{vdn_forward.12} parent=11 // pred_region
        _
      $region16: #{vdn_forward.12} parent=11 // pred_fallthru
        _
      // Predicated region
      $region17: #{vdn_forward.12} parent=11 // pred_check
        %p214 = pneg %p107
      $region18: #{vdn_forward.12} parent=11 // pred_check_branch
        %216 = sbr.rel (%p214) target = $region20
      $region19: #{vdn_forward.12} parent=11 // pred_region
        _
      $region20: #{vdn_forward.12} parent=11 // pred_fallthru
        _
      // Predicated region
      $region21: #{vdn_forward.12} parent=11 // pred_check
        %p217 = pneg %p128
      $region22: #{vdn_forward.12} parent=11 // pred_check_branch
        %219 = sbr.rel (%p217) target = $region24
      $region23: #{vdn_forward.12} parent=11 // pred_region
        _
      $region24: #{vdn_forward.12} parent=11 // pred_fallthru
        _
      // Predicated region
      $region25: #{vdn_forward.12} parent=11 // pred_check
        %p220 = pneg %p149
      $region26: #{vdn_forward.12} parent=11 // pred_check_branch
        %222 = sbr.rel (%p220) target = $region28
      $region27: #{vdn_forward.12} parent=11 // pred_region
        _
      $region28: #{vdn_forward.12} parent=11 // pred_fallthru
        _
      // Predicated region
      $region29: #{vdn_forward.12} parent=11 // pred_check
        %p223 = pneg %p170
      $region30: #{vdn_forward.12} parent=11 // pred_check_branch
        %225 = sbr.rel (%p223) target = $region32
      $region31: #{vdn_forward.12} parent=11 // pred_region
        _
      $region32: #{vdn_forward.12} parent=11 // pred_fallthru
        _
    $region12: #{vdn_forward.12} parent=5 // pred_fallthru
      _
    %p226 = scmp.lt.s32.totalorder %s13, 2
    // Predicated region
    $region33: #{vdn_forward.12} parent=5 // pred_check
      %p227 = pneg %p226
    $region34: #{vdn_forward.12} parent=5 // pred_check_branch
      %229 = sbr.rel (%p227) target = $region36
    $region35: #{vdn_forward.12} parent=5 // pred_region
      // Predicated region
      $region37: #{vdn_forward.12} parent=35 // pred_check
        %p230 = pneg %p54
      $region38: #{vdn_forward.12} parent=35 // pred_check_branch
        %232 = sbr.rel (%p230) target = $region40
      $region39: #{vdn_forward.12} parent=35 // pred_region
        %p233 = scmp.lt.s32.totalorder %s13, 1
        %s234 = scalar_select %p233, %s13, 1
        %s235 = smul.addr %s234, 2
        %s236 = smul.addr %s235, 4
        %s237 = scalar_lea.vmem %s1, %s236
      $region40: #{vdn_forward.12} parent=35 // pred_fallthru
        _
      // Predicated region
      $region41: #{vdn_forward.12} parent=35 // pred_check
        %p238 = pneg %p80
      $region42: #{vdn_forward.12} parent=35 // pred_check_branch
        %240 = sbr.rel (%p238) target = $region44
      $region43: #{vdn_forward.12} parent=35 // pred_region
        %p241 = scmp.lt.s32.totalorder %s13, 1
        %s242 = scalar_select %p241, %s13, 1
        %s243 = smul.addr %s242, 2
        %s244 = smul.addr %s243, 4
        %s245 = scalar_lea.vmem %s2, %s244
      $region44: #{vdn_forward.12} parent=35 // pred_fallthru
        _
    $region36: #{vdn_forward.12} parent=5 // pred_fallthru
      _
    %p246 = scmp.le.s32.totalorder 1, %s13
    %p247 = scmp.lt.s32.totalorder %s13, 3
    %p248 = pnand %p246, %p247
    %p249 = pneg %p248
    // Predicated region
    $region45: #{vdn_forward.12} parent=5 // pred_check
      _
    $region46: #{vdn_forward.12} parent=5 // pred_check_branch
      %251 = sbr.rel (%p248) target = $region48
    $region47: #{vdn_forward.12} parent=5 // pred_region
      %s252 = ssub.s32 %s13, 1
      %p253 = pneg %p34
      %p254 = pneg %p31
      %p255 = scmp.lt.s32.totalorder %s18, 1
      %s256 = scalar_select %p255, %s18, 1
      %s257 = smul.addr %s256, 2
      %s258 = smul.addr %s257, 4
      %s259 = scalar_lea.vmem %s1, %s258
      %p260 = pneg %p60
      %p261 = pneg %p57
      %p262 = scmp.lt.s32.totalorder %s18, 1
      %s263 = scalar_select %p262, %s18, 1
      %s264 = smul.addr %s263, 2
      %s265 = smul.addr %s264, 4
      %s266 = scalar_lea.vmem %s2, %s265
      %p267 = pneg %p86
      %p268 = pneg %p83
      %p269 = pneg %p107
      %p270 = pneg %p104
      %p271 = pneg %p128
      %p272 = pneg %p125
      %p273 = pneg %p149
      %p274 = pneg %p146
      %p275 = pneg %p170
      %p276 = pneg %p167
      %p277 = pneg %p196
      %p278 = pneg %p193
      %p279 = scmp.lt.s32.totalorder %s18, 1
      %s280 = scalar_select %p279, %s18, 1
      %s281 = smul.addr %s280, 2
      %s282 = smul.addr %s281, 4
      %s283 = scalar_lea.vmem %s7, %s282
      %p284 = scmp.lt.s32.totalorder %s18, 1
      %s285 = scalar_select %p284, %s18, 1
      %s286 = smul.addr %s285, 2
      %s287 = smul.addr %s286, 4
      %s288 = scalar_lea.vmem %s1, %s287
      %p289 = scmp.lt.s32.totalorder %s18, 1
      %s290 = scalar_select %p289, %s18, 1
      %s291 = smul.addr %s290, 2
      %s292 = smul.addr %s291, 4
      %s293 = scalar_lea.vmem %s2, %s292
      %p294 = scmp.lt.s32.totalorder %s18, 1
      %s295 = scalar_select %p294, %s18, 1
      %s296 = smul.addr %s295, 2
      %s297 = smul.addr %s296, 4
      %s298 = scalar_lea.vmem %s7, %s297
      %300 = vst [vmem:[#allocation2] sm:$0xff] 0.0
      %301 = vst [vmem:[#allocation2 + $0x8] sm:$0xff] 0.0
      %vm302 = vcmask 523264
      %303 = vst.msk [vmem:[#allocation2 + $0x10] sm:$0xff] %vm302, 0.0
      %304 = vst [vmem:[#allocation2 + $0x18] sm:$0xff] 0.0
      %305 = vst [vmem:[#allocation2 + $0x20] sm:$0xff] 0.0
      %306 = vst.msk [vmem:[#allocation2 + $0x28] sm:$0xff] %vm302, 0.0
      %307 = vst [vmem:[#allocation2 + $0x30] sm:$0xff] 0.0
      %308 = vst [vmem:[#allocation2 + $0x38] sm:$0xff] 0.0
      %309 = vst.msk [vmem:[#allocation2 + $0x40] sm:$0xff] %vm302, 0.0
      %310 = vst [vmem:[#allocation2 + $0x48] sm:$0xff] 0.0
      %311 = vst [vmem:[#allocation2 + $0x50] sm:$0xff] 0.0
      %312 = vst.msk [vmem:[#allocation2 + $0x58] sm:$0xff] %vm302, 0.0
      %v313 = vld [vmem:[%s0] sm:$0x1]
      %v314 = vld [vmem:[%s0 + $0x1] sm:$0x1]
      %v315 = vld [vmem:[%s288] sm:$0xf]
      %v316 = vld [vmem:[%s288 + $0x4] sm:$0xf]
      %v317 = vunpack.c.l.bf16 %v315
      %v318 = vunpack.c.l.bf16 %v316
      %319 = vst.msk [vmem:[#allocation2 + $0x8] sm:$0xff] %vm302, %v317
      %320 = vst.msk [vmem:[#allocation2 + $0x20] sm:$0xff] %vm302, %v318
      %v321 = vld [vmem:[%s293] sm:$0xf]
      %v322 = vld [vmem:[%s293 + $0x4] sm:$0xf]
      %v323 = vunpack.c.l.bf16 %v321
      %v324 = vunpack.c.l.bf16 %v322
      %325 = vst.msk [vmem:[#allocation2 + $0x38] sm:$0xff] %vm302, %v323
      %326 = vst.msk [vmem:[#allocation2 + $0x50] sm:$0xff] %vm302, %v324
      %v327 = vld [vmem:[#allocation2] sm:$0xff]
      %v328 = vld [vmem:[#allocation2 + $0x8] sm:$0xff]
      %v329 = vld [vmem:[#allocation2 + $0x18] sm:$0xff]
      %v330 = vld [vmem:[#allocation2 + $0x20] sm:$0xff]
      %v331 = vld [vmem:[#allocation2 + $0x30] sm:$0xff]
      %v332 = vld [vmem:[#allocation2 + $0x38] sm:$0xff]
      %v333 = vld [vmem:[#allocation2 + $0x48] sm:$0xff]
      %v334 = vld [vmem:[#allocation2 + $0x50] sm:$0xff]
      %v335 = vlaneseq
      %v336 = vshrl.u32 %v335, 7
      %v337 = vsub.s32 0, %v336
      %v338 = vrot.slane %v313, %v337
      %340 = vrot.lane.b32.xlu0 %v338, 119
      %v341 = vpop.permute.xlu0 %340
      %v343 = vmul.f32 %v327, %v341
      %v344 = vmul.f32 %v328, %v341
      %v345 = vmul.f32 %v329, %v341
      %v346 = vmul.f32 %v330, %v341
      %v347 = vmul.f32 %v331, %v341
      %v348 = vmul.f32 %v332, %v341
      %v349 = vmul.f32 %v333, %v341
      %v350 = vmul.f32 %v334, %v341
      %v351 = vlaneseq
      %v352 = vshrl.u32 %v351, 7
      %v353 = vsub.s32 0, %v352
      %v354 = vrot.slane %v314, %v353
      %356 = vrot.lane.b32.xlu0 %v354, 121
      %v357 = vpop.permute.xlu0 %356
      %v359 = vmul.f32 %v327, %v357
      %v360 = vmul.f32 %v328, %v357
      %v361 = vmul.f32 %v329, %v357
      %v362 = vmul.f32 %v330, %v357
      %v363 = vmul.f32 %v331, %v357
      %v364 = vmul.f32 %v332, %v357
      %v365 = vmul.f32 %v333, %v357
      %v366 = vmul.f32 %v334, %v357
      %367 = vrot.lane.b32.xlu0 %v338, 127
      %v368 = vpop.permute.xlu0 %367
      %v370 = vmul.f32 %v327, %v368
      %v371 = vmul.f32 %v328, %v368
      %v372 = vmul.f32 %v329, %v368
      %v373 = vmul.f32 %v330, %v368
      %v374 = vmul.f32 %v331, %v368
      %v375 = vmul.f32 %v332, %v368
      %v376 = vmul.f32 %v333, %v368
      %v377 = vmul.f32 %v334, %v368
      %378 = vrot.lane.b32.xlu0 %v354, 1
      %v379 = vpop.permute.xlu0 %378
      %v381 = vmul.f32 %v328, %v379
      %v382 = vmul.f32 %v330, %v379
      %v383 = vmul.f32 %v332, %v379
      %v384 = vmul.f32 %v334, %v379
      %385 = vrot.lane.b32.xlu0 %v338, 7
      %v386 = vpop.permute.xlu0 %385
      %v388 = vmul.f32 %v328, %v386
      %v389 = vmul.f32 %v330, %v386
      %v390 = vmul.f32 %v332, %v386
      %v391 = vmul.f32 %v334, %v386
      %392 = vrot.lane.b32.xlu0 %v354, 9
      %v393 = vpop.permute.xlu0 %392
      %v395 = vmul.f32 %v328, %v393
      %v396 = vmul.f32 %v330, %v393
      %v397 = vmul.f32 %v332, %v393
      %v398 = vmul.f32 %v334, %v393
      %407 = vrot.lane.b32.xlu0 %v327, 127
      %v408 = vpop.permute.xlu0 %407
      %409 = vrot.lane.b32.xlu0 %v328, 127
      %v410 = vpop.permute.xlu0 %409
      %411 = vrot.lane.b32.xlu0 %v329, 127
      %v412 = vpop.permute.xlu0 %411
      %413 = vrot.lane.b32.xlu0 %v330, 127
      %v414 = vpop.permute.xlu0 %413
      %415 = vrot.lane.b32.xlu0 %v331, 127
      %v416 = vpop.permute.xlu0 %415
      %417 = vrot.lane.b32.xlu0 %v332, 127
      %v418 = vpop.permute.xlu0 %417
      %419 = vrot.lane.b32.xlu0 %v333, 127
      %v420 = vpop.permute.xlu0 %419
      %421 = vrot.lane.b32.xlu0 %v334, 127
      %v422 = vpop.permute.xlu0 %421
      %vm423 = vcmask 1039360
      %v424 = vsel %vm423, %v408, %v410
      %v425 = vsel %vm423, %v412, %v414
      %v426 = vsel %vm423, %v416, %v418
      %v427 = vsel %vm423, %v420, %v422
      %444 = vrot.lane.b32.xlu0 %v359, 126
      %v445 = vpop.permute.xlu0 %444
      %446 = vrot.lane.b32.xlu0 %v360, 126
      %v447 = vpop.permute.xlu0 %446
      %448 = vrot.lane.b32.xlu0 %v361, 126
      %v449 = vpop.permute.xlu0 %448
      %450 = vrot.lane.b32.xlu0 %v362, 126
      %v451 = vpop.permute.xlu0 %450
      %452 = vrot.lane.b32.xlu0 %v363, 126
      %v453 = vpop.permute.xlu0 %452
      %454 = vrot.lane.b32.xlu0 %v364, 126
      %v455 = vpop.permute.xlu0 %454
      %456 = vrot.lane.b32.xlu0 %v365, 126
      %v457 = vpop.permute.xlu0 %456
      %458 = vrot.lane.b32.xlu0 %v366, 126
      %v459 = vpop.permute.xlu0 %458
      %vm460 = vcmask 1031168
      %v461 = vsel %vm460, %v445, %v447
      %v462 = vsel %vm460, %v449, %v451
      %v463 = vsel %vm460, %v453, %v455
      %v464 = vsel %vm460, %v457, %v459
      %481 = vrot.lane.b32.xlu0 %v370, 120
      %v482 = vpop.permute.xlu0 %481
      %483 = vrot.lane.b32.xlu0 %v371, 120
      %v484 = vpop.permute.xlu0 %483
      %485 = vrot.lane.b32.xlu0 %v372, 120
      %v486 = vpop.permute.xlu0 %485
      %487 = vrot.lane.b32.xlu0 %v373, 120
      %v488 = vpop.permute.xlu0 %487
      %489 = vrot.lane.b32.xlu0 %v374, 120
      %v490 = vpop.permute.xlu0 %489
      %491 = vrot.lane.b32.xlu0 %v375, 120
      %v492 = vpop.permute.xlu0 %491
      %493 = vrot.lane.b32.xlu0 %v376, 120
      %v494 = vpop.permute.xlu0 %493
      %495 = vrot.lane.b32.xlu0 %v377, 120
      %v496 = vpop.permute.xlu0 %495
      %vm497 = vcmask 982016
      %v498 = vsel %vm497, %v482, %v484
      %v499 = vsel %vm497, %v486, %v488
      %v500 = vsel %vm497, %v490, %v492
      %v501 = vsel %vm497, %v494, %v496
      %510 = vrot.lane.b32.xlu0 %v328, 119
      %v511 = vpop.permute.xlu0 %510
      %512 = vrot.lane.b32.xlu0 %v330, 119
      %v513 = vpop.permute.xlu0 %512
      %514 = vrot.lane.b32.xlu0 %v332, 119
      %v515 = vpop.permute.xlu0 %514
      %516 = vrot.lane.b32.xlu0 %v334, 119
      %v517 = vpop.permute.xlu0 %516
      %526 = vrot.lane.b32.xlu0 %v381, 118
      %v527 = vpop.permute.xlu0 %526
      %528 = vrot.lane.b32.xlu0 %v382, 118
      %v529 = vpop.permute.xlu0 %528
      %530 = vrot.lane.b32.xlu0 %v383, 118
      %v531 = vpop.permute.xlu0 %530
      %532 = vrot.lane.b32.xlu0 %v384, 118
      %v533 = vpop.permute.xlu0 %532
      %542 = vrot.lane.b32.xlu0 %v388, 112
      %v543 = vpop.permute.xlu0 %542
      %544 = vrot.lane.b32.xlu0 %v389, 112
      %v545 = vpop.permute.xlu0 %544
      %546 = vrot.lane.b32.xlu0 %v390, 112
      %v547 = vpop.permute.xlu0 %546
      %548 = vrot.lane.b32.xlu0 %v391, 112
      %v549 = vpop.permute.xlu0 %548
      %554 = vrot.lane.b32.xlu0 %v328, 111
      %v555 = vpop.permute.xlu0 %554
      %556 = vrot.lane.b32.xlu0 %v330, 111
      %v557 = vpop.permute.xlu0 %556
      %558 = vrot.lane.b32.xlu0 %v332, 111
      %v559 = vpop.permute.xlu0 %558
      %560 = vrot.lane.b32.xlu0 %v334, 111
      %v561 = vpop.permute.xlu0 %560
      %570 = vrot.lane.b32.xlu0 %v395, 110
      %v571 = vpop.permute.xlu0 %570
      %572 = vrot.lane.b32.xlu0 %v396, 110
      %v573 = vpop.permute.xlu0 %572
      %574 = vrot.lane.b32.xlu0 %v397, 110
      %v575 = vpop.permute.xlu0 %574
      %576 = vrot.lane.b32.xlu0 %v398, 110
      %v577 = vpop.permute.xlu0 %576
      %v582 = vpack.c.bf16 %v345, %v343
      %v583 = vpack.c.bf16 %v346, %v344
      %v584 = vpack.c.bf16 %v349, %v347
      %v585 = vpack.c.bf16 %v350, %v348
      %v586 = vpack.c.bf16 %v425, %v424
      %v587 = vpack.c.bf16 %v414, %v410
      %v588 = vpack.c.bf16 %v427, %v426
      %v589 = vpack.c.bf16 %v422, %v418
      %v590 = vpack.c.bf16 %v462, %v461
      %v591 = vpack.c.bf16 %v451, %v447
      %v592 = vpack.c.bf16 %v464, %v463
      %v593 = vpack.c.bf16 %v459, %v455
      %v594 = vpack.c.bf16 %v499, %v498
      %v595 = vpack.c.bf16 %v488, %v484
      %v596 = vpack.c.bf16 %v501, %v500
      %v597 = vpack.c.bf16 %v496, %v492
      %v598 = vpack.c.bf16 %v513, %v511
      %v599 = vpack.c.bf16 %v517, %v515
      %v600 = vpack.c.bf16 %v529, %v527
      %v601 = vpack.c.bf16 %v533, %v531
      %v602 = vpack.c.bf16 %v545, %v543
      %v603 = vpack.c.bf16 %v549, %v547
      %v604 = vpack.c.bf16 %v557, %v555
      %v605 = vpack.c.bf16 %v561, %v559
      %v606 = vpack.c.bf16 %v573, %v571
      %v607 = vpack.c.bf16 %v577, %v575
      %v608 = vld [vmem:[%s3] sm:$0xff]
      %v609 = vld [vmem:[%s3 + $0x8] sm:$0xf]
      %v610 = vld [vmem:[%s3 + $0xc] sm:$0xff]
      %v611 = vld [vmem:[%s3 + $0x14] sm:$0xf]
      %v612 = vld [vmem:[%s5] sm:$0xff]
      %v613 = vld [vmem:[%s5 + $0x8] sm:$0xff]
      %615 = vset.pattern.permute.xlu0 0
      %616 = vperm.xlu0 %615, %v612
      %v617 = vpop.permute.xlu0 %616
      %620 = vset.pattern.permute.xlu0 0
      %621 = vperm.xlu0 %620, %v613
      %v622 = vpop.permute.xlu0 %621
      %v628 = vunpack.c.l.b16 %v608
      %v629 = vunpack.c.h.b16 %v608
      %v630 = vunpack.c.l.b16 %v609
      %v631 = vunpack.c.l.b16 %v610
      %v632 = vunpack.c.h.b16 %v610
      %v633 = vunpack.c.l.b16 %v611
      %v634 = vpack.c.b16 %v631, %v628
      %v635 = vpack.c.b16 %v632, %v629
      %v636 = vpack.c.b16 %v633, %v630
      %665 = vrot.lane.b32.xlu0 %v582, 9
      %v666 = vpop.permute.xlu0 %665
      %667 = vrot.lane.b32.xlu0 %v583, 9
      %v668 = vpop.permute.xlu0 %667
      %669 = vrot.lane.b32.xlu0 %v584, 9
      %v670 = vpop.permute.xlu0 %669
      %671 = vrot.lane.b32.xlu0 %v585, 9
      %v672 = vpop.permute.xlu0 %671
      %673 = vrot.lane.b32.xlu0 %v586, 9
      %v674 = vpop.permute.xlu0 %673
      %675 = vrot.lane.b32.xlu0 %v587, 9
      %v676 = vpop.permute.xlu0 %675
      %677 = vrot.lane.b32.xlu0 %v588, 9
      %v678 = vpop.permute.xlu0 %677
      %679 = vrot.lane.b32.xlu0 %v589, 9
      %v680 = vpop.permute.xlu0 %679
      %681 = vrot.lane.b32.xlu0 %v590, 9
      %v682 = vpop.permute.xlu0 %681
      %683 = vrot.lane.b32.xlu0 %v591, 9
      %v684 = vpop.permute.xlu0 %683
      %685 = vrot.lane.b32.xlu0 %v592, 9
      %v686 = vpop.permute.xlu0 %685
      %687 = vrot.lane.b32.xlu0 %v593, 9
      %v688 = vpop.permute.xlu0 %687
      %689 = vrot.lane.b32.xlu0 %v594, 9
      %v690 = vpop.permute.xlu0 %689
      %691 = vrot.lane.b32.xlu0 %v595, 9
      %v692 = vpop.permute.xlu0 %691
      %693 = vrot.lane.b32.xlu0 %v596, 9
      %v694 = vpop.permute.xlu0 %693
      %695 = vrot.lane.b32.xlu0 %v597, 9
      %v696 = vpop.permute.xlu0 %695
      %697 = vrot.lane.b32.xlu0 %v598, 9
      %v698 = vpop.permute.xlu0 %697
      %699 = vrot.lane.b32.xlu0 %v599, 9
      %v700 = vpop.permute.xlu0 %699
      %701 = vrot.lane.b32.xlu0 %v600, 9
      %v702 = vpop.permute.xlu0 %701
      %703 = vrot.lane.b32.xlu0 %v601, 9
      %v704 = vpop.permute.xlu0 %703
      %705 = vrot.lane.b32.xlu0 %v602, 9
      %v706 = vpop.permute.xlu0 %705
      %707 = vrot.lane.b32.xlu0 %v603, 9
      %v708 = vpop.permute.xlu0 %707
      %709 = vrot.lane.b32.xlu0 %v604, 9
      %v710 = vpop.permute.xlu0 %709
      %711 = vrot.lane.b32.xlu0 %v605, 9
      %v712 = vpop.permute.xlu0 %711
      %713 = vrot.lane.b32.xlu0 %v606, 9
      %v714 = vpop.permute.xlu0 %713
      %715 = vrot.lane.b32.xlu0 %v607, 9
      %v716 = vpop.permute.xlu0 %715
      %vm717 = vcmask 72704
      %v718 = vsel %vm717, %v666, %v668
      %v719 = vsel %vm717, %v670, %v672
      %v720 = vsel %vm717, %v674, %v676
      %v721 = vsel %vm717, %v678, %v680
      %v722 = vsel %vm717, %v682, %v684
      %v723 = vsel %vm717, %v686, %v688
      %v724 = vsel %vm717, %v690, %v692
      %v725 = vsel %vm717, %v694, %v696
      %vm744 = vcmask 261120
      %v746 = vsel %vm744, %v636, 0
      %748 = vmatprep.subr.bf16.mxu0 0
      %749 = vmatpush1.bf16.msra.mxu0 %v718
      %750 = vmatprep.subr.bf16.mxu0 0
      %751 = vmatpush1.bf16.msra.mxu0 %v719
      %752 = vmatprep.subr.bf16.mxu0 0
      %753 = vmatpush1.bf16.msra.mxu0 %v720
      %754 = vmatprep.subr.bf16.mxu0 0
      %755 = vmatpush1.bf16.msra.mxu0 %v721
      %756 = vmatprep.subr.bf16.mxu0 0
      %757 = vmatpush1.bf16.msra.mxu0 %v722
      %758 = vmatprep.subr.bf16.mxu0 0
      %759 = vmatpush1.bf16.msra.mxu0 %v723
      %760 = vmatprep.subr.bf16.mxu0 0
      %761 = vmatpush1.bf16.msra.mxu0 %v724
      %762 = vmatprep.subr.bf16.mxu0 0
      %763 = vmatpush1.bf16.msra.mxu0 %v725
      %764 = vmatprep.subr.bf16.mxu0 0
      %765 = vmatpush1.bf16.msra.mxu0 %v698
      %766 = vmatprep.subr.bf16.mxu0 0
      %767 = vmatpush1.bf16.msra.mxu0 %v700
      %768 = vmatprep.subr.bf16.mxu0 0
      %769 = vmatpush1.bf16.msra.mxu0 %v702
      %770 = vmatprep.subr.bf16.mxu0 0
      %771 = vmatpush1.bf16.msra.mxu0 %v704
      %772 = vmatprep.subr.bf16.mxu0 0
      %773 = vmatpush1.bf16.msra.mxu0 %v706
      %774 = vmatprep.subr.bf16.mxu0 0
      %775 = vmatpush1.bf16.msra.mxu0 %v708
      %776 = vmatprep.subr.bf16.mxu0 0
      %777 = vmatpush1.bf16.msra.mxu0 %v710
      %778 = vmatprep.subr.bf16.mxu0 0
      %779 = vmatpush1.bf16.msra.mxu0 %v712
      %780 = vmatprep.mubr.bf16.mxu0 %v635
      %781 = vmatmul.mubr.bf16.gmra.mrb[0].mxu0 %v634
      %v782 = vpop.f32.mrb[0].mxu0
      %v783 = vadd.f32 %v617, %v782
      %v784 = vpop.f32.mrb[0].mxu0
      %v785 = vpop.f32.mrb[0].mxu0
      %v786 = vadd.f32 %v622, %v785
      %v787 = vpop.f32.mrb[0].mxu0
      %788 = vdwg.mxu0
      %789 = vmatprep.subr.bf16.mxu0 0
      %790 = vmatpush1.bf16.msra.mxu0 %v714
      %791 = vmatprep.subr.bf16.mxu0 0
      %792 = vmatpush1.bf16.msra.mxu0 %v716
      %793 = vmatprep.subr.bf16.mxu0 0
      %794 = vmatpush1.bf16.msra.mxu0 0
      %795 = vmatprep.subr.bf16.mxu0 0
      %796 = vmatpush1.bf16.msra.mxu0 0
      %797 = vmatprep.subr.bf16.mxu0 0
      %798 = vmatpush1.bf16.msra.mxu0 0
      %799 = vmatprep.subr.bf16.mxu0 0
      %800 = vmatpush1.bf16.msra.mxu0 0
      %801 = vmatprep.subr.bf16.mxu0 0
      %802 = vmatpush1.bf16.msra.mxu0 0
      %803 = vmatprep.subr.bf16.mxu0 0
      %804 = vmatpush1.bf16.msra.mxu0 0
      %805 = vmatprep.subr.bf16.mxu0 0
      %806 = vmatpush1.bf16.msra.mxu0 0
      %807 = vmatprep.subr.bf16.mxu0 0
      %808 = vmatpush1.bf16.msra.mxu0 0
      %809 = vmatprep.subr.bf16.mxu0 0
      %810 = vmatpush1.bf16.msra.mxu0 0
      %811 = vmatprep.subr.bf16.mxu0 0
      %812 = vmatpush1.bf16.msra.mxu0 0
      %813 = vmatprep.subr.bf16.mxu0 0
      %814 = vmatpush1.bf16.msra.mxu0 0
      %815 = vmatprep.subr.bf16.mxu0 0
      %816 = vmatpush1.bf16.msra.mxu0 0
      %817 = vmatprep.subr.bf16.mxu0 0
      %818 = vmatpush1.bf16.msra.mxu0 0
      %819 = vmatprep.subr.bf16.mxu0 0
      %820 = vmatpush1.bf16.msra.mxu0 0
      %821 = vmatprep.mubr.bf16.mxu0 0
      %822 = vmatmul.mubr.bf16.gmra.mrb[0].mxu0 %v746
      %v823 = vpop.f32.mrb[0].mxu0
      %v824 = vadd.f32 %v783, %v823
      %v825 = vpop.f32.mrb[0].mxu0
      %v826 = vpop.f32.mrb[0].mxu0
      %v827 = vadd.f32 %v786, %v826
      %v828 = vpop.f32.mrb[0].mxu0
      %829 = vdwg.mxu0
      %v830 = vmul.f32 %v824, 0.2
      %v831 = vmul.f32 %v827, 0.2
      %v832 = vmax.f32 %v824, %v830
      %v833 = vmax.f32 %v827, %v831
      %834 = vst.msk [vmem:[#allocation2 + $0x8] sm:$0xff] %vm302, %v832
      %835 = vst.msk [vmem:[#allocation2 + $0x20] sm:$0xff] %vm302, %v833
      %v836 = vld [vmem:[#allocation2] sm:$0xff]
      %v837 = vld [vmem:[#allocation2 + $0x8] sm:$0xff]
      %v838 = vld [vmem:[#allocation2 + $0x18] sm:$0xff]
      %v839 = vld [vmem:[#allocation2 + $0x20] sm:$0xff]
      %v840 = vmul.f32 %v836, %v341
      %v841 = vmul.f32 %v837, %v341
      %v842 = vmul.f32 %v838, %v341
      %v843 = vmul.f32 %v839, %v341
      %v844 = vmul.f32 %v836, %v357
      %v845 = vmul.f32 %v837, %v357
      %v846 = vmul.f32 %v838, %v357
      %v847 = vmul.f32 %v839, %v357
      %v848 = vmul.f32 %v836, %v368
      %v849 = vmul.f32 %v837, %v368
      %v850 = vmul.f32 %v838, %v368
      %v851 = vmul.f32 %v839, %v368
      %v852 = vmul.f32 %v837, %v379
      %v853 = vmul.f32 %v839, %v379
      %v854 = vmul.f32 %v837, %v386
      %v855 = vmul.f32 %v839, %v386
      %v856 = vmul.f32 %v837, %v393
      %v857 = vmul.f32 %v839, %v393
      %862 = vrot.lane.b32.xlu0 %v836, 127
      %v863 = vpop.permute.xlu0 %862
      %864 = vrot.lane.b32.xlu0 %v837, 127
      %v865 = vpop.permute.xlu0 %864
      %866 = vrot.lane.b32.xlu0 %v838, 127
      %v867 = vpop.permute.xlu0 %866
      %868 = vrot.lane.b32.xlu0 %v839, 127
      %v869 = vpop.permute.xlu0 %868
      %v870 = vsel %vm423, %v863, %v865
      %v871 = vsel %vm423, %v867, %v869
      %880 = vrot.lane.b32.xlu0 %v844, 126
      %v881 = vpop.permute.xlu0 %880
      %882 = vrot.lane.b32.xlu0 %v845, 126
      %v883 = vpop.permute.xlu0 %882
      %884 = vrot.lane.b32.xlu0 %v846, 126
      %v885 = vpop.permute.xlu0 %884
      %886 = vrot.lane.b32.xlu0 %v847, 126
      %v887 = vpop.permute.xlu0 %886
      %v888 = vsel %vm460, %v881, %v883
      %v889 = vsel %vm460, %v885, %v887
      %898 = vrot.lane.b32.xlu0 %v848, 120
      %v899 = vpop.permute.xlu0 %898
      %900 = vrot.lane.b32.xlu0 %v849, 120
      %v901 = vpop.permute.xlu0 %900
      %902 = vrot.lane.b32.xlu0 %v850, 120
      %v903 = vpop.permute.xlu0 %902
      %904 = vrot.lane.b32.xlu0 %v851, 120
      %v905 = vpop.permute.xlu0 %904
      %v906 = vsel %vm497, %v899, %v901
      %v907 = vsel %vm497, %v903, %v905
      %912 = vrot.lane.b32.xlu0 %v837, 119
      %v913 = vpop.permute.xlu0 %912
      %914 = vrot.lane.b32.xlu0 %v839, 119
      %v915 = vpop.permute.xlu0 %914
      %920 = vrot.lane.b32.xlu0 %v852, 118
      %v921 = vpop.permute.xlu0 %920
      %922 = vrot.lane.b32.xlu0 %v853, 118
      %v923 = vpop.permute.xlu0 %922
      %928 = vrot.lane.b32.xlu0 %v854, 112
      %v929 = vpop.permute.xlu0 %928
      %930 = vrot.lane.b32.xlu0 %v855, 112
      %v931 = vpop.permute.xlu0 %930
      %934 = vrot.lane.b32.xlu0 %v837, 111
      %v935 = vpop.permute.xlu0 %934
      %936 = vrot.lane.b32.xlu0 %v839, 111
      %v937 = vpop.permute.xlu0 %936
      %942 = vrot.lane.b32.xlu0 %v856, 110
      %v943 = vpop.permute.xlu0 %942
      %944 = vrot.lane.b32.xlu0 %v857, 110
      %v945 = vpop.permute.xlu0 %944
      %v948 = vpack.c.bf16 %v842, %v840
      %v949 = vpack.c.bf16 %v843, %v841
      %v950 = vpack.c.bf16 %v871, %v870
      %v951 = vpack.c.bf16 %v869, %v865
      %v952 = vpack.c.bf16 %v889, %v888
      %v953 = vpack.c.bf16 %v887, %v883
      %v954 = vpack.c.bf16 %v907, %v906
      %v955 = vpack.c.bf16 %v905, %v901
      %v956 = vpack.c.bf16 %v915, %v913
      %v957 = vpack.c.bf16 %v923, %v921
      %v958 = vpack.c.bf16 %v931, %v929
      %v959 = vpack.c.bf16 %v937, %v935
      %v960 = vpack.c.bf16 %v945, %v943
      %v961 = vld [vmem:[%s4] sm:$0xff]
      %v962 = vld [vmem:[%s4 + $0x8] sm:$0xff]
      %v963 = vld [vmem:[%s6] sm:$0xff]
      %v964 = vld [vmem:[%s6 + $0x8] sm:$0xff]
      %966 = vset.pattern.permute.xlu0 0
      %967 = vperm.xlu0 %966, %v963
      %v968 = vpop.permute.xlu0 %967
      %971 = vset.pattern.permute.xlu0 0
      %972 = vperm.xlu0 %971, %v964
      %v973 = vpop.permute.xlu0 %972
      %v977 = vunpack.c.l.b16 %v961
      %v978 = vunpack.c.h.b16 %v961
      %v979 = vunpack.c.l.b16 %v962
      %v980 = vunpack.c.h.b16 %v962
      %v981 = vpack.c.b16 %v979, %v977
      %v982 = vpack.c.b16 %v980, %v978
      %997 = vrot.lane.b32.xlu0 %v948, 9
      %v998 = vpop.permute.xlu0 %997
      %999 = vrot.lane.b32.xlu0 %v949, 9
      %v1000 = vpop.permute.xlu0 %999
      %1001 = vrot.lane.b32.xlu0 %v950, 9
      %v1002 = vpop.permute.xlu0 %1001
      %1003 = vrot.lane.b32.xlu0 %v951, 9
      %v1004 = vpop.permute.xlu0 %1003
      %1005 = vrot.lane.b32.xlu0 %v952, 9
      %v1006 = vpop.permute.xlu0 %1005
      %1007 = vrot.lane.b32.xlu0 %v953, 9
      %v1008 = vpop.permute.xlu0 %1007
      %1009 = vrot.lane.b32.xlu0 %v954, 9
      %v1010 = vpop.permute.xlu0 %1009
      %1011 = vrot.lane.b32.xlu0 %v955, 9
      %v1012 = vpop.permute.xlu0 %1011
      %1013 = vrot.lane.b32.xlu0 %v956, 9
      %v1014 = vpop.permute.xlu0 %1013
      %1015 = vrot.lane.b32.xlu0 %v957, 9
      %v1016 = vpop.permute.xlu0 %1015
      %1017 = vrot.lane.b32.xlu0 %v958, 9
      %v1018 = vpop.permute.xlu0 %1017
      %1019 = vrot.lane.b32.xlu0 %v959, 9
      %v1020 = vpop.permute.xlu0 %1019
      %1021 = vrot.lane.b32.xlu0 %v960, 9
      %v1022 = vpop.permute.xlu0 %1021
      %v1023 = vsel %vm717, %v998, %v1000
      %v1024 = vsel %vm717, %v1002, %v1004
      %v1025 = vsel %vm717, %v1006, %v1008
      %v1026 = vsel %vm717, %v1010, %v1012
      %vm1036 = vcmask 130048
      %v1038 = vsel %vm1036, %v982, 0
      %1040 = vmatprep.subr.bf16.mxu0 0
      %1041 = vmatpush1.bf16.msra.mxu0 %v1023
      %1042 = vmatprep.subr.bf16.mxu0 0
      %1043 = vmatpush1.bf16.msra.mxu0 %v1024
      %1044 = vmatprep.subr.bf16.mxu0 0
      %1045 = vmatpush1.bf16.msra.mxu0 %v1025
      %1046 = vmatprep.subr.bf16.mxu0 0
      %1047 = vmatpush1.bf16.msra.mxu0 %v1026
      %1048 = vmatprep.subr.bf16.mxu0 0
      %1049 = vmatpush1.bf16.msra.mxu0 %v1014
      %1050 = vmatprep.subr.bf16.mxu0 0
      %1051 = vmatpush1.bf16.msra.mxu0 %v1016
      %1052 = vmatprep.subr.bf16.mxu0 0
      %1053 = vmatpush1.bf16.msra.mxu0 %v1018
      %1054 = vmatprep.subr.bf16.mxu0 0
      %1055 = vmatpush1.bf16.msra.mxu0 %v1020
      %1056 = vmatprep.subr.bf16.mxu0 0
      %1057 = vmatpush1.bf16.msra.mxu0 %v1022
      %1058 = vmatprep.subr.bf16.mxu0 0
      %1059 = vmatpush1.bf16.msra.mxu0 0
      %1060 = vmatprep.subr.bf16.mxu0 0
      %1061 = vmatpush1.bf16.msra.mxu0 0
      %1062 = vmatprep.subr.bf16.mxu0 0
      %1063 = vmatpush1.bf16.msra.mxu0 0
      %1064 = vmatprep.subr.bf16.mxu0 0
      %1065 = vmatpush1.bf16.msra.mxu0 0
      %1066 = vmatprep.subr.bf16.mxu0 0
      %1067 = vmatpush1.bf16.msra.mxu0 0
      %1068 = vmatprep.subr.bf16.mxu0 0
      %1069 = vmatpush1.bf16.msra.mxu0 0
      %1070 = vmatprep.subr.bf16.mxu0 0
      %1071 = vmatpush1.bf16.msra.mxu0 0
      %1072 = vmatprep.mubr.bf16.mxu0 %v1038
      %1073 = vmatmul.mubr.bf16.gmra.mrb[0].mxu0 %v981
      %v1074 = vpop.f32.mrb[0].mxu0
      %v1075 = vadd.f32 %v968, %v1074
      %v1076 = vpop.f32.mrb[0].mxu0
      %v1077 = vpop.f32.mrb[0].mxu0
      %v1078 = vadd.f32 %v973, %v1077
      %v1079 = vpop.f32.mrb[0].mxu0
      %1080 = vdwg.mxu0
      %v1081 = vmul.f32 %v1075, 0.2
      %v1082 = vmul.f32 %v1078, 0.2
      %v1083 = vmax.f32 %v1075, %v1081
      %v1084 = vmax.f32 %v1078, %v1082
      %v1085 = vpack.c.bf16 %v1084, %v1083
      %v1087 = vunpack.c.l.b16 %v1085
      %v1088 = vunpack.c.h.b16 %v1085
      %v1089 = vpack.c.b16 %v1087, %v1087
      %v1090 = vpack.c.b16 %v1088, %v1088
      %vm1093 = vcmask 519168
      %1094 = vst.msk [vmem:[%s298] sm:$0xf] %vm1093, %v1089
      %1095 = vst.msk [vmem:[%s298 + $0x4] sm:$0xf] %vm1093, %v1090
      %p1096 = scmp.lt.s32.totalorder %s18, 1
      %s1097 = scalar_select %p1096, %s18, 1
      %s1098 = smul.addr %s1097, 2
      %s1099 = smul.addr %s1098, 4
      %s1100 = scalar_lea.vmem %s7, %s1099
      // Predicated region
      $region49: #{vdn_forward.12} parent=47 // pred_check
        %p1101 = pneg %p193
      $region50: #{vdn_forward.12} parent=47 // pred_check_branch
        %1103 = sbr.rel (%p1101) target = $region52
      $region51: #{vdn_forward.12} parent=47 // pred_region
        _
      $region52: #{vdn_forward.12} parent=47 // pred_fallthru
        _
    $region48: #{vdn_forward.12} parent=5 // pred_fallthru
      _
    %p1104 = scmp.le.s32.totalorder 2, %s13
    // Predicated region
    $region53: #{vdn_forward.12} parent=5 // pred_check
      %p1105 = pneg %p1104
    $region54: #{vdn_forward.12} parent=5 // pred_check_branch
      %1107 = sbr.rel (%p1105) target = $region56
    $region55: #{vdn_forward.12} parent=5 // pred_region
      %s1108 = ssub.s32 %s13, 2
      // Predicated region
      $region57: #{vdn_forward.12} parent=55 // pred_check
        %p1109 = pneg %p199
      $region58: #{vdn_forward.12} parent=55 // pred_check_branch
        %1111 = sbr.rel (%p1109) target = $region60
      $region59: #{vdn_forward.12} parent=55 // pred_region
        %p1112 = scmp.lt.s32.totalorder %s19, 1
        %s1113 = scalar_select %p1112, %s19, 1
        %s1114 = smul.addr %s1113, 2
        %s1115 = smul.addr %s1114, 4
        %s1116 = scalar_lea.vmem %s7, %s1115
      $region60: #{vdn_forward.12} parent=55 // pred_fallthru
        _
    $region56: #{vdn_forward.12} parent=5 // pred_fallthru
      _
  $region6: #{vdn_forward.12} parent=0 // loop_footer
    %s17 = sadd.s32 1, %s13
  $region7: #{vdn_forward.12} parent=0 // loop_footer_branch
    %12 = sbr.rel target = $region3
  $region8: #{vdn_forward.12} parent=0 // loop_exit
    _

// kernel: vdn_forward.14
$region0: #{vdn_forward.14}
  #allocation0 [shape = 'u32[]', space=smem, size = 0x4, offset = 0x4, fixed_abs, tag = 'smem constant byte address 0x4 - core index']
  #allocation1 [shape = 'u32[144,128]{1,0:T(1,128)}', space=vmem, size = 0x12000, scoped, tag = 'internal scratch']
  #allocation2 [shape = 'f32[16,512]{1,0:T(8,128)}', space=vmem, size = 0x8000, scoped, tag = 'scratch operand']
  %s0 = inlined_call_operand.vmem [shape: f32[2,256], index: 0, kind: input, shape index: {}]
  %s1 = inlined_call_operand.vmem [shape: bf16[2,8,256], index: 1, kind: input, shape index: {}]
  %s2 = inlined_call_operand.vmem [shape: bf16[2,8,256], index: 2, kind: input, shape index: {}]
  %s3 = inlined_call_operand.vmem [shape: bf16[8,144], index: 3, kind: input, shape index: {}]
  %s4 = inlined_call_operand.vmem [shape: bf16[8,72], index: 4, kind: input, shape index: {}]
  %s5 = inlined_call_operand.vmem [shape: bf16[8,72], index: 5, kind: input, shape index: {}]
  %s6 = inlined_call_operand.vmem [shape: f32[8,1], index: 6, kind: input, shape index: {}, may-alias: {6,7,8}]
  %s7 = inlined_call_operand.vmem [shape: f32[8,1], index: 7, kind: input, shape index: {}, may-alias: {6,7,8}]
  %s8 = inlined_call_operand.vmem [shape: f32[8,1], index: 8, kind: input, shape index: {}, may-alias: {6,7,8}]
  %s9 = inlined_call_operand.vmem [shape: f32[2,8,256], index: 9, kind: output, shape index: {}]
  %s10 = sld [smem:[#allocation0]]
  $region69: #{vdn_forward.14} parent=0
    _
  %s12 = ssub.s32 1, %s10
  %s13 = scalar_select 0, %s12, %s10
  loop: start=0, step=1, limit=4
  $region2: #{vdn_forward.14} parent=0 // loop_pre_header
    _
  $region3: #{vdn_forward.14} parent=0 // loop_header
    %s15 = sphi 0, %s19
    %p16 = scmp.ge.s32.totalorder %s15, 4
    %s23 = sphi 0, %s23
    %s25 = sphi 0, %s23
    %s26 = sphi 0, %s25
    %s40 = sphi 0, %s26
    %s46 = sphi 0, %s48
    %s49 = sphi 0, %s46
    %s50 = sphi 0, %s49
    %s66 = sphi 0, %s50
    %s72 = sphi 0, %s74
    %s75 = sphi 0, %s72
    %s76 = sphi 0, %s75
    %s92 = sphi 0, %s76
    %s96 = sphi 0, %s96
    %s98 = sphi 0, %s96
    %s99 = sphi 0, %s98
    %s113 = sphi 0, %s99
    %s117 = sphi 0, %s117
    %s119 = sphi 0, %s117
    %s120 = sphi 0, %s119
    %s134 = sphi 0, %s120
    %s138 = sphi 0, %s138
    %s140 = sphi 0, %s138
    %s141 = sphi 0, %s140
    %s155 = sphi 0, %s141
    %s159 = sphi 0, %s159
    %s161 = sphi 0, %s159
    %s162 = sphi 0, %s161
    %s176 = sphi 0, %s162
    %s180 = sphi 0, %s180
    %s182 = sphi 0, %s180
    %s183 = sphi 0, %s182
    %s197 = sphi 0, %s183
    %s201 = sphi 0, %s201
    %s203 = sphi 0, %s201
    %s204 = sphi 0, %s203
    %s218 = sphi 0, %s204
    %s224 = sphi 0, %s226
    %s227 = sphi 0, %s224
    %s228 = sphi 0, %s227
    %s244 = sphi 0, %s228
  $region4: #{vdn_forward.14} parent=0 // loop_header_branch
    %18 = sbr.rel (%p16) target = $region8
  $region5: #{vdn_forward.14} parent=0 // loop_body
    %s20 = ssub.s32 %s15, 1
    %s21 = ssub.s32 %s15, 2
    %s22 = sadd.s32 %s15, 1
    %s24 = sadd.s32 %s23, 1
    %p27 = scmp.eq.s32.totalorder %s15, 1
    %p28 = scmp.ne.s32.totalorder %s23, %s25
    %p29 = scmp.eq.s32.totalorder %s15, 0
    %p30 = por %p28, %p29
    %p31 = scmp.ne.s32.totalorder %s23, %s25
    %p32 = scmp.eq.s32.totalorder %s20, 1
    %p33 = por %p31, %p32
    %p34 = scmp.ne.s32.totalorder %s25, %s26
    %p35 = scmp.eq.s32.totalorder %s20, 0
    %p36 = por %p34, %p35
    %p37 = scmp.ne.s32.totalorder %s25, %s26
    %p38 = scmp.eq.s32.totalorder %s21, 1
    %p39 = por %p37, %p38
    %p41 = scmp.ne.s32.totalorder %s26, %s40
    %p42 = scmp.eq.s32.totalorder %s21, 0
    %p43 = por %p41, %p42
    %s44 = ssub.s32 %s15, %s22
    %p45 = scmp.eq.s32.totalorder %s44, 0
    %s47 = sadd.s32 %s46, 1
    %s48 = scalar_select %p45, %s46, %s47
    %p51 = pneg %p45
    %p52 = scmp.eq.s32.totalorder %s15, 1
    %p53 = por %p51, %p52
    %p54 = scmp.ne.s32.totalorder %s46, %s49
    %p55 = scmp.eq.s32.totalorder %s15, 0
    %p56 = por %p54, %p55
    %p57 = scmp.ne.s32.totalorder %s46, %s49
    %p58 = scmp.eq.s32.totalorder %s20, 1
    %p59 = por %p57, %p58
    %p60 = scmp.ne.s32.totalorder %s49, %s50
    %p61 = scmp.eq.s32.totalorder %s20, 0
    %p62 = por %p60, %p61
    %p63 = scmp.ne.s32.totalorder %s49, %s50
    %p64 = scmp.eq.s32.totalorder %s21, 1
    %p65 = por %p63, %p64
    %p67 = scmp.ne.s32.totalorder %s50, %s66
    %p68 = scmp.eq.s32.totalorder %s21, 0
    %p69 = por %p67, %p68
    %s70 = ssub.s32 %s15, %s22
    %p71 = scmp.eq.s32.totalorder %s70, 0
    %s73 = sadd.s32 %s72, 1
    %s74 = scalar_select %p71, %s72, %s73
    %p77 = pneg %p71
    %p78 = scmp.eq.s32.totalorder %s15, 1
    %p79 = por %p77, %p78
    %p80 = scmp.ne.s32.totalorder %s72, %s75
    %p81 = scmp.eq.s32.totalorder %s15, 0
    %p82 = por %p80, %p81
    %p83 = scmp.ne.s32.totalorder %s72, %s75
    %p84 = scmp.eq.s32.totalorder %s20, 1
    %p85 = por %p83, %p84
    %p86 = scmp.ne.s32.totalorder %s75, %s76
    %p87 = scmp.eq.s32.totalorder %s20, 0
    %p88 = por %p86, %p87
    %p89 = scmp.ne.s32.totalorder %s75, %s76
    %p90 = scmp.eq.s32.totalorder %s21, 1
    %p91 = por %p89, %p90
    %p93 = scmp.ne.s32.totalorder %s76, %s92
    %p94 = scmp.eq.s32.totalorder %s21, 0
    %p95 = por %p93, %p94
    %s97 = sadd.s32 %s96, 1
    %p100 = scmp.eq.s32.totalorder %s15, 1
    %p101 = scmp.ne.s32.totalorder %s96, %s98
    %p102 = scmp.eq.s32.totalorder %s15, 0
    %p103 = por %p101, %p102
    %p104 = scmp.ne.s32.totalorder %s96, %s98
    %p105 = scmp.eq.s32.totalorder %s20, 1
    %p106 = por %p104, %p105
    %p107 = scmp.ne.s32.totalorder %s98, %s99
    %p108 = scmp.eq.s32.totalorder %s20, 0
    %p109 = por %p107, %p108
    %p110 = scmp.ne.s32.totalorder %s98, %s99
    %p111 = scmp.eq.s32.totalorder %s21, 1
    %p112 = por %p110, %p111
    %p114 = scmp.ne.s32.totalorder %s99, %s113
    %p115 = scmp.eq.s32.totalorder %s21, 0
    %p116 = por %p114, %p115
    %s118 = sadd.s32 %s117, 1
    %p121 = scmp.eq.s32.totalorder %s15, 1
    %p122 = scmp.ne.s32.totalorder %s117, %s119
    %p123 = scmp.eq.s32.totalorder %s15, 0
    %p124 = por %p122, %p123
    %p125 = scmp.ne.s32.totalorder %s117, %s119
    %p126 = scmp.eq.s32.totalorder %s20, 1
    %p127 = por %p125, %p126
    %p128 = scmp.ne.s32.totalorder %s119, %s120
    %p129 = scmp.eq.s32.totalorder %s20, 0
    %p130 = por %p128, %p129
    %p131 = scmp.ne.s32.totalorder %s119, %s120
    %p132 = scmp.eq.s32.totalorder %s21, 1
    %p133 = por %p131, %p132
    %p135 = scmp.ne.s32.totalorder %s120, %s134
    %p136 = scmp.eq.s32.totalorder %s21, 0
    %p137 = por %p135, %p136
    %s139 = sadd.s32 %s138, 1
    %p142 = scmp.eq.s32.totalorder %s15, 1
    %p143 = scmp.ne.s32.totalorder %s138, %s140
    %p144 = scmp.eq.s32.totalorder %s15, 0
    %p145 = por %p143, %p144
    %p146 = scmp.ne.s32.totalorder %s138, %s140
    %p147 = scmp.eq.s32.totalorder %s20, 1
    %p148 = por %p146, %p147
    %p149 = scmp.ne.s32.totalorder %s140, %s141
    %p150 = scmp.eq.s32.totalorder %s20, 0
    %p151 = por %p149, %p150
    %p152 = scmp.ne.s32.totalorder %s140, %s141
    %p153 = scmp.eq.s32.totalorder %s21, 1
    %p154 = por %p152, %p153
    %p156 = scmp.ne.s32.totalorder %s141, %s155
    %p157 = scmp.eq.s32.totalorder %s21, 0
    %p158 = por %p156, %p157
    %s160 = sadd.s32 %s159, 1
    %p163 = scmp.eq.s32.totalorder %s15, 1
    %p164 = scmp.ne.s32.totalorder %s159, %s161
    %p165 = scmp.eq.s32.totalorder %s15, 0
    %p166 = por %p164, %p165
    %p167 = scmp.ne.s32.totalorder %s159, %s161
    %p168 = scmp.eq.s32.totalorder %s20, 1
    %p169 = por %p167, %p168
    %p170 = scmp.ne.s32.totalorder %s161, %s162
    %p171 = scmp.eq.s32.totalorder %s20, 0
    %p172 = por %p170, %p171
    %p173 = scmp.ne.s32.totalorder %s161, %s162
    %p174 = scmp.eq.s32.totalorder %s21, 1
    %p175 = por %p173, %p174
    %p177 = scmp.ne.s32.totalorder %s162, %s176
    %p178 = scmp.eq.s32.totalorder %s21, 0
    %p179 = por %p177, %p178
    %s181 = sadd.s32 %s180, 1
    %p184 = scmp.eq.s32.totalorder %s15, 1
    %p185 = scmp.ne.s32.totalorder %s180, %s182
    %p186 = scmp.eq.s32.totalorder %s15, 0
    %p187 = por %p185, %p186
    %p188 = scmp.ne.s32.totalorder %s180, %s182
    %p189 = scmp.eq.s32.totalorder %s20, 1
    %p190 = por %p188, %p189
    %p191 = scmp.ne.s32.totalorder %s182, %s183
    %p192 = scmp.eq.s32.totalorder %s20, 0
    %p193 = por %p191, %p192
    %p194 = scmp.ne.s32.totalorder %s182, %s183
    %p195 = scmp.eq.s32.totalorder %s21, 1
    %p196 = por %p194, %p195
    %p198 = scmp.ne.s32.totalorder %s183, %s197
    %p199 = scmp.eq.s32.totalorder %s21, 0
    %p200 = por %p198, %p199
    %s202 = sadd.s32 %s201, 1
    %p205 = scmp.eq.s32.totalorder %s15, 1
    %p206 = scmp.ne.s32.totalorder %s201, %s203
    %p207 = scmp.eq.s32.totalorder %s15, 0
    %p208 = por %p206, %p207
    %p209 = scmp.ne.s32.totalorder %s201, %s203
    %p210 = scmp.eq.s32.totalorder %s20, 1
    %p211 = por %p209, %p210
    %p212 = scmp.ne.s32.totalorder %s203, %s204
    %p213 = scmp.eq.s32.totalorder %s20, 0
    %p214 = por %p212, %p213
    %p215 = scmp.ne.s32.totalorder %s203, %s204
    %p216 = scmp.eq.s32.totalorder %s21, 1
    %p217 = por %p215, %p216
    %p219 = scmp.ne.s32.totalorder %s204, %s218
    %p220 = scmp.eq.s32.totalorder %s21, 0
    %p221 = por %p219, %p220
    %s222 = ssub.s32 %s15, %s22
    %p223 = scmp.eq.s32.totalorder %s222, 0
    %s225 = sadd.s32 %s224, 1
    %s226 = scalar_select %p223, %s224, %s225
    %p229 = pneg %p223
    %p230 = scmp.eq.s32.totalorder %s15, 1
    %p231 = por %p229, %p230
    %p232 = scmp.ne.s32.totalorder %s224, %s227
    %p233 = scmp.eq.s32.totalorder %s15, 0
    %p234 = por %p232, %p233
    %p235 = scmp.ne.s32.totalorder %s224, %s227
    %p236 = scmp.eq.s32.totalorder %s20, 1
    %p237 = por %p235, %p236
    %p238 = scmp.ne.s32.totalorder %s227, %s228
    %p239 = scmp.eq.s32.totalorder %s20, 0
    %p240 = por %p238, %p239
    %p241 = scmp.ne.s32.totalorder %s227, %s228
    %p242 = scmp.eq.s32.totalorder %s21, 1
    %p243 = por %p241, %p242
    %p245 = scmp.ne.s32.totalorder %s228, %s244
    %p246 = scmp.eq.s32.totalorder %s21, 0
    %p247 = por %p245, %p246
    %p248 = scmp.le.s32.totalorder 1, %s15
    %p249 = scmp.lt.s32.totalorder %s15, 3
    %p250 = pnand %p248, %p249
    %p251 = pneg %p250
    // Predicated region
    $region9: #{vdn_forward.14} parent=5 // pred_check
      _
    $region10: #{vdn_forward.14} parent=5 // pred_check_branch
      %253 = sbr.rel (%p250) target = $region12
    $region11: #{vdn_forward.14} parent=5 // pred_region
      %s254 = ssub.s32 %s15, 1
      // Predicated region
      $region13: #{vdn_forward.14} parent=11 // pred_check
        %p255 = pneg %p36
      $region14: #{vdn_forward.14} parent=11 // pred_check_branch
        %257 = sbr.rel (%p255) target = $region16
      $region15: #{vdn_forward.14} parent=11 // pred_region
        _
      $region16: #{vdn_forward.14} parent=11 // pred_fallthru
        _
      // Predicated region
      $region17: #{vdn_forward.14} parent=11 // pred_check
        %p258 = pneg %p109
      $region18: #{vdn_forward.14} parent=11 // pred_check_branch
        %260 = sbr.rel (%p258) target = $region20
      $region19: #{vdn_forward.14} parent=11 // pred_region
        _
      $region20: #{vdn_forward.14} parent=11 // pred_fallthru
        _
      // Predicated region
      $region21: #{vdn_forward.14} parent=11 // pred_check
        %p261 = pneg %p130
      $region22: #{vdn_forward.14} parent=11 // pred_check_branch
        %263 = sbr.rel (%p261) target = $region24
      $region23: #{vdn_forward.14} parent=11 // pred_region
        _
      $region24: #{vdn_forward.14} parent=11 // pred_fallthru
        _
      // Predicated region
      $region25: #{vdn_forward.14} parent=11 // pred_check
        %p264 = pneg %p151
      $region26: #{vdn_forward.14} parent=11 // pred_check_branch
        %266 = sbr.rel (%p264) target = $region28
      $region27: #{vdn_forward.14} parent=11 // pred_region
        _
      $region28: #{vdn_forward.14} parent=11 // pred_fallthru
        _
      // Predicated region
      $region29: #{vdn_forward.14} parent=11 // pred_check
        %p267 = pneg %p172
      $region30: #{vdn_forward.14} parent=11 // pred_check_branch
        %269 = sbr.rel (%p267) target = $region32
      $region31: #{vdn_forward.14} parent=11 // pred_region
        _
      $region32: #{vdn_forward.14} parent=11 // pred_fallthru
        _
      // Predicated region
      $region33: #{vdn_forward.14} parent=11 // pred_check
        %p270 = pneg %p193
      $region34: #{vdn_forward.14} parent=11 // pred_check_branch
        %272 = sbr.rel (%p270) target = $region36
      $region35: #{vdn_forward.14} parent=11 // pred_region
        _
      $region36: #{vdn_forward.14} parent=11 // pred_fallthru
        _
      // Predicated region
      $region37: #{vdn_forward.14} parent=11 // pred_check
        %p273 = pneg %p214
      $region38: #{vdn_forward.14} parent=11 // pred_check_branch
        %275 = sbr.rel (%p273) target = $region40
      $region39: #{vdn_forward.14} parent=11 // pred_region
        _
      $region40: #{vdn_forward.14} parent=11 // pred_fallthru
        _
    $region12: #{vdn_forward.14} parent=5 // pred_fallthru
      _
    %p276 = scmp.lt.s32.totalorder %s15, 2
    // Predicated region
    $region41: #{vdn_forward.14} parent=5 // pred_check
      %p277 = pneg %p276
    $region42: #{vdn_forward.14} parent=5 // pred_check_branch
      %279 = sbr.rel (%p277) target = $region44
    $region43: #{vdn_forward.14} parent=5 // pred_region
      // Predicated region
      $region45: #{vdn_forward.14} parent=43 // pred_check
        %p280 = pneg %p56
      $region46: #{vdn_forward.14} parent=43 // pred_check_branch
        %282 = sbr.rel (%p280) target = $region48
      $region47: #{vdn_forward.14} parent=43 // pred_region
        %p283 = scmp.lt.s32.totalorder %s15, 1
        %s284 = scalar_select %p283, %s15, 1
        %s285 = smul.addr %s284, 2
        %s286 = smul.addr %s285, 4
        %s287 = scalar_lea.vmem %s1, %s286
      $region48: #{vdn_forward.14} parent=43 // pred_fallthru
        _
      // Predicated region
      $region49: #{vdn_forward.14} parent=43 // pred_check
        %p288 = pneg %p82
      $region50: #{vdn_forward.14} parent=43 // pred_check_branch
        %290 = sbr.rel (%p288) target = $region52
      $region51: #{vdn_forward.14} parent=43 // pred_region
        %p291 = scmp.lt.s32.totalorder %s15, 1
        %s292 = scalar_select %p291, %s15, 1
        %s293 = smul.addr %s292, 2
        %s294 = smul.addr %s293, 4
        %s295 = scalar_lea.vmem %s2, %s294
      $region52: #{vdn_forward.14} parent=43 // pred_fallthru
        _
    $region44: #{vdn_forward.14} parent=5 // pred_fallthru
      _
    %p296 = scmp.le.s32.totalorder 1, %s15
    %p297 = scmp.lt.s32.totalorder %s15, 3
    %p298 = pnand %p296, %p297
    %p299 = pneg %p298
    // Predicated region
    $region53: #{vdn_forward.14} parent=5 // pred_check
      _
    $region54: #{vdn_forward.14} parent=5 // pred_check_branch
      %301 = sbr.rel (%p298) target = $region56
    $region55: #{vdn_forward.14} parent=5 // pred_region
      %s302 = ssub.s32 %s15, 1
      %p303 = pneg %p36
      %p304 = pneg %p33
      %p305 = scmp.lt.s32.totalorder %s20, 1
      %s306 = scalar_select %p305, %s20, 1
      %s307 = smul.addr %s306, 2
      %s308 = smul.addr %s307, 4
      %s309 = scalar_lea.vmem %s1, %s308
      %p310 = pneg %p62
      %p311 = pneg %p59
      %p312 = scmp.lt.s32.totalorder %s20, 1
      %s313 = scalar_select %p312, %s20, 1
      %s314 = smul.addr %s313, 2
      %s315 = smul.addr %s314, 4
      %s316 = scalar_lea.vmem %s2, %s315
      %p317 = pneg %p88
      %p318 = pneg %p85
      %p319 = pneg %p109
      %p320 = pneg %p106
      %p321 = pneg %p130
      %p322 = pneg %p127
      %p323 = pneg %p151
      %p324 = pneg %p148
      %p325 = pneg %p172
      %p326 = pneg %p169
      %p327 = pneg %p193
      %p328 = pneg %p190
      %p329 = pneg %p214
      %p330 = pneg %p211
      %p331 = pneg %p240
      %p332 = pneg %p237
      %p333 = scmp.lt.s32.totalorder %s20, 1
      %s334 = scalar_select %p333, %s20, 1
      %s335 = smul.addr %s334, 2
      %s336 = smul.addr %s335, 8
      %s337 = scalar_lea.vmem %s9, %s336
      %p338 = scmp.lt.s32.totalorder %s20, 1
      %s339 = scalar_select %p338, %s20, 1
      %s340 = smul.addr %s339, 2
      %s341 = smul.addr %s340, 4
      %s342 = scalar_lea.vmem %s1, %s341
      %p343 = scmp.lt.s32.totalorder %s20, 1
      %s344 = scalar_select %p343, %s20, 1
      %s345 = smul.addr %s344, 2
      %s346 = smul.addr %s345, 4
      %s347 = scalar_lea.vmem %s2, %s346
      %p348 = scmp.lt.s32.totalorder %s20, 1
      %s349 = scalar_select %p348, %s20, 1
      %s350 = smul.addr %s349, 2
      %s351 = smul.addr %s350, 8
      %s352 = scalar_lea.vmem %s9, %s351
      %354 = vst [vmem:[#allocation2] sm:$0xff] 0.0
      %355 = vst [vmem:[#allocation2 + $0x8] sm:$0xff] 0.0
      %356 = vst [vmem:[#allocation2 + $0x10] sm:$0xff] 0.0
      %357 = vst [vmem:[#allocation2 + $0x18] sm:$0xff] 0.0
      %358 = vst [vmem:[#allocation2 + $0x20] sm:$0xff] 0.0
      %359 = vst [vmem:[#allocation2 + $0x28] sm:$0xff] 0.0
      %360 = vst [vmem:[#allocation2 + $0x30] sm:$0xff] 0.0
      %361 = vst [vmem:[#allocation2 + $0x38] sm:$0xff] 0.0
      %v362 = vld [vmem:[%s0] ss:$2 sm:$0x3]
      %s363 = scalar_lea.vmem %s0, 1
      %v364 = vld [vmem:[%s363] ss:$2 sm:$0x3]
      %v365 = vld [vmem:[%s342] sm:$0xff]
      %v366 = vunpack.c.l.bf16 %v365
      %v367 = vunpack.c.h.bf16 %v365
      %368 = vst [vmem:[#allocation2 + $0x8] sm:$0xff] %v366
      %369 = vst [vmem:[#allocation2 + $0x10] sm:$0xff] %v367
      %v370 = vld [vmem:[%s347] sm:$0xff]
      %v371 = vunpack.c.l.bf16 %v370
      %v372 = vunpack.c.h.bf16 %v370
      %373 = vst [vmem:[#allocation2 + $0x28] sm:$0xff] %v371
      %374 = vst [vmem:[#allocation2 + $0x30] sm:$0xff] %v372
      %v375 = vld [vmem:[#allocation2] sm:$0xff]
      %v376 = vld [vmem:[#allocation2 + $0x8] sm:$0xff]
      %v377 = vld [vmem:[#allocation2 + $0x10] sm:$0xff]
      %v378 = vld [vmem:[#allocation2 + $0x18] sm:$0xff]
      %v379 = vld [vmem:[#allocation2 + $0x20] sm:$0xff]
      %v380 = vld [vmem:[#allocation2 + $0x28] sm:$0xff]
      %v381 = vld [vmem:[#allocation2 + $0x30] sm:$0xff]
      %v382 = vld [vmem:[#allocation2 + $0x38] sm:$0xff]
      %v384 = vlaneseq
      %v385 = vshrl.u32 %v384, 7
      %v386 = vsub.s32 0, %v385
      %v387 = vrot.slane %v362, %v386
      %v388 = vlaneseq
      %v389 = vshrl.u32 %v388, 7
      %v390 = vsub.s32 1, %v389
      %v391 = vrot.slane %v362, %v390
      %392 = vrot.lane.b32.xlu0 %v387, 111
      %v393 = vpop.permute.xlu0 %392
      %394 = vrot.lane.b32.xlu0 %v391, 111
      %v395 = vpop.permute.xlu0 %394
      %vm396 = vcmask 908288
      %v397 = vsel %vm396, %v393, %v395
      %v401 = vmul.f32 %v375, %v393
      %v402 = vmul.f32 %v376, %v397
      %v403 = vmul.f32 %v377, %v395
      %v404 = vmul.f32 %v379, %v393
      %v405 = vmul.f32 %v380, %v397
      %v406 = vmul.f32 %v381, %v395
      %v408 = vlaneseq
      %v409 = vshrl.u32 %v408, 7
      %v410 = vsub.s32 0, %v409
      %v411 = vrot.slane %v364, %v410
      %v412 = vlaneseq
      %v413 = vshrl.u32 %v412, 7
      %v414 = vsub.s32 1, %v413
      %v415 = vrot.slane %v364, %v414
      %416 = vrot.lane.b32.xlu0 %v411, 113
      %v417 = vpop.permute.xlu0 %416
      %418 = vrot.lane.b32.xlu0 %v415, 113
      %v419 = vpop.permute.xlu0 %418
      %vm420 = vcmask 924672
      %v421 = vsel %vm420, %v417, %v419
      %v425 = vmul.f32 %v375, %v417
      %v426 = vmul.f32 %v376, %v421
      %v427 = vmul.f32 %v377, %v419
      %v428 = vmul.f32 %v379, %v417
      %v429 = vmul.f32 %v380, %v421
      %v430 = vmul.f32 %v381, %v419
      %431 = vrot.lane.b32.xlu0 %v387, 127
      %v432 = vpop.permute.xlu0 %431
      %433 = vrot.lane.b32.xlu0 %v391, 127
      %v434 = vpop.permute.xlu0 %433
      %vm435 = vcmask 1039360
      %v436 = vsel %vm435, %v432, %v434
      %v440 = vmul.f32 %v375, %v432
      %v441 = vmul.f32 %v376, %v436
      %v442 = vmul.f32 %v377, %v434
      %v443 = vmul.f32 %v379, %v432
      %v444 = vmul.f32 %v380, %v436
      %v445 = vmul.f32 %v381, %v434
      %446 = vrot.lane.b32.xlu0 %v411, 1
      %v447 = vpop.permute.xlu0 %446
      %448 = vrot.lane.b32.xlu0 %v415, 1
      %v449 = vpop.permute.xlu0 %448
      %vm450 = vcmask 7168
      %v451 = vsel %vm450, %v447, %v449
      %v455 = vmul.f32 %v376, %v447
      %v456 = vmul.f32 %v377, %v451
      %v457 = vmul.f32 %v378, %v449
      %v458 = vmul.f32 %v380, %v447
      %v459 = vmul.f32 %v381, %v451
      %v460 = vmul.f32 %v382, %v449
      %461 = vrot.lane.b32.xlu0 %v387, 15
      %v462 = vpop.permute.xlu0 %461
      %463 = vrot.lane.b32.xlu0 %v391, 15
      %v464 = vpop.permute.xlu0 %463
      %vm465 = vcmask 121856
      %v466 = vsel %vm465, %v462, %v464
      %v470 = vmul.f32 %v376, %v462
      %v471 = vmul.f32 %v377, %v466
      %v472 = vmul.f32 %v378, %v464
      %v473 = vmul.f32 %v380, %v462
      %v474 = vmul.f32 %v381, %v466
      %v475 = vmul.f32 %v382, %v464
      %476 = vrot.lane.b32.xlu0 %v411, 17
      %v477 = vpop.permute.xlu0 %476
      %478 = vrot.lane.b32.xlu0 %v415, 17
      %v479 = vpop.permute.xlu0 %478
      %vm480 = vcmask 138240
      %v481 = vsel %vm480, %v477, %v479
      %v485 = vmul.f32 %v376, %v477
      %v486 = vmul.f32 %v377, %v481
      %v487 = vmul.f32 %v378, %v479
      %v488 = vmul.f32 %v380, %v477
      %v489 = vmul.f32 %v381, %v481
      %v490 = vmul.f32 %v382, %v479
      %497 = vrot.lane.b32.xlu0 %v375, 127
      %v498 = vpop.permute.xlu0 %497
      %499 = vrot.lane.b32.xlu0 %v376, 127
      %v500 = vpop.permute.xlu0 %499
      %501 = vrot.lane.b32.xlu0 %v377, 127
      %v502 = vpop.permute.xlu0 %501
      %503 = vrot.lane.b32.xlu0 %v379, 127
      %v504 = vpop.permute.xlu0 %503
      %505 = vrot.lane.b32.xlu0 %v380, 127
      %v506 = vpop.permute.xlu0 %505
      %507 = vrot.lane.b32.xlu0 %v381, 127
      %v508 = vpop.permute.xlu0 %507
      %v509 = vsel %vm435, %v498, %v500
      %v510 = vsel %vm435, %v500, %v502
      %v511 = vsel %vm435, %v504, %v506
      %v512 = vsel %vm435, %v506, %v508
      %525 = vrot.lane.b32.xlu0 %v425, 126
      %v526 = vpop.permute.xlu0 %525
      %527 = vrot.lane.b32.xlu0 %v426, 126
      %v528 = vpop.permute.xlu0 %527
      %529 = vrot.lane.b32.xlu0 %v427, 126
      %v530 = vpop.permute.xlu0 %529
      %531 = vrot.lane.b32.xlu0 %v428, 126
      %v532 = vpop.permute.xlu0 %531
      %533 = vrot.lane.b32.xlu0 %v429, 126
      %v534 = vpop.permute.xlu0 %533
      %535 = vrot.lane.b32.xlu0 %v430, 126
      %v536 = vpop.permute.xlu0 %535
      %vm537 = vcmask 1031168
      %v538 = vsel %vm537, %v526, %v528
      %v539 = vsel %vm537, %v528, %v530
      %v540 = vsel %vm537, %v532, %v534
      %v541 = vsel %vm537, %v534, %v536
      %554 = vrot.lane.b32.xlu0 %v440, 112
      %v555 = vpop.permute.xlu0 %554
      %556 = vrot.lane.b32.xlu0 %v441, 112
      %v557 = vpop.permute.xlu0 %556
      %558 = vrot.lane.b32.xlu0 %v442, 112
      %v559 = vpop.permute.xlu0 %558
      %560 = vrot.lane.b32.xlu0 %v443, 112
      %v561 = vpop.permute.xlu0 %560
      %562 = vrot.lane.b32.xlu0 %v444, 112
      %v563 = vpop.permute.xlu0 %562
      %564 = vrot.lane.b32.xlu0 %v445, 112
      %v565 = vpop.permute.xlu0 %564
      %vm566 = vcmask 916480
      %v567 = vsel %vm566, %v555, %v557
      %v568 = vsel %vm566, %v557, %v559
      %v569 = vsel %vm566, %v561, %v563
      %v570 = vsel %vm566, %v563, %v565
      %577 = vrot.lane.b32.xlu0 %v376, 111
      %v578 = vpop.permute.xlu0 %577
      %579 = vrot.lane.b32.xlu0 %v377, 111
      %v580 = vpop.permute.xlu0 %579
      %581 = vrot.lane.b32.xlu0 %v380, 111
      %v582 = vpop.permute.xlu0 %581
      %583 = vrot.lane.b32.xlu0 %v381, 111
      %v584 = vpop.permute.xlu0 %583
      %v585 = vsel %vm396, %v578, %v580
      %v586 = vsel %vm396, %v582, %v584
      %599 = vrot.lane.b32.xlu0 %v455, 110
      %v600 = vpop.permute.xlu0 %599
      %601 = vrot.lane.b32.xlu0 %v456, 110
      %v602 = vpop.permute.xlu0 %601
      %603 = vrot.lane.b32.xlu0 %v457, 110
      %v604 = vpop.permute.xlu0 %603
      %605 = vrot.lane.b32.xlu0 %v458, 110
      %v606 = vpop.permute.xlu0 %605
      %607 = vrot.lane.b32.xlu0 %v459, 110
      %v608 = vpop.permute.xlu0 %607
      %609 = vrot.lane.b32.xlu0 %v460, 110
      %v610 = vpop.permute.xlu0 %609
      %vm611 = vcmask 900096
      %v612 = vsel %vm611, %v600, %v602
      %v613 = vsel %vm611, %v602, %v604
      %v614 = vsel %vm611, %v606, %v608
      %v615 = vsel %vm611, %v608, %v610
      %628 = vrot.lane.b32.xlu0 %v470, 96
      %v629 = vpop.permute.xlu0 %628
      %630 = vrot.lane.b32.xlu0 %v471, 96
      %v631 = vpop.permute.xlu0 %630
      %632 = vrot.lane.b32.xlu0 %v472, 96
      %v633 = vpop.permute.xlu0 %632
      %634 = vrot.lane.b32.xlu0 %v473, 96
      %v635 = vpop.permute.xlu0 %634
      %636 = vrot.lane.b32.xlu0 %v474, 96
      %v637 = vpop.permute.xlu0 %636
      %638 = vrot.lane.b32.xlu0 %v475, 96
      %v639 = vpop.permute.xlu0 %638
      %vm640 = vcmask 785408
      %v641 = vsel %vm640, %v629, %v631
      %v642 = vsel %vm640, %v631, %v633
      %v643 = vsel %vm640, %v635, %v637
      %v644 = vsel %vm640, %v637, %v639
      %653 = vrot.lane.b32.xlu0 %v376, 95
      %v654 = vpop.permute.xlu0 %653
      %655 = vrot.lane.b32.xlu0 %v377, 95
      %v656 = vpop.permute.xlu0 %655
      %657 = vrot.lane.b32.xlu0 %v378, 95
      %v658 = vpop.permute.xlu0 %657
      %659 = vrot.lane.b32.xlu0 %v380, 95
      %v660 = vpop.permute.xlu0 %659
      %661 = vrot.lane.b32.xlu0 %v381, 95
      %v662 = vpop.permute.xlu0 %661
      %663 = vrot.lane.b32.xlu0 %v382, 95
      %v664 = vpop.permute.xlu0 %663
      %vm665 = vcmask 777216
      %v666 = vsel %vm665, %v654, %v656
      %v667 = vsel %vm665, %v656, %v658
      %v668 = vsel %vm665, %v660, %v662
      %v669 = vsel %vm665, %v662, %v664
      %682 = vrot.lane.b32.xlu0 %v485, 94
      %v683 = vpop.permute.xlu0 %682
      %684 = vrot.lane.b32.xlu0 %v486, 94
      %v685 = vpop.permute.xlu0 %684
      %686 = vrot.lane.b32.xlu0 %v487, 94
      %v687 = vpop.permute.xlu0 %686
      %688 = vrot.lane.b32.xlu0 %v488, 94
      %v689 = vpop.permute.xlu0 %688
      %690 = vrot.lane.b32.xlu0 %v489, 94
      %v691 = vpop.permute.xlu0 %690
      %692 = vrot.lane.b32.xlu0 %v490, 94
      %v693 = vpop.permute.xlu0 %692
      %vm694 = vcmask 769024
      %v695 = vsel %vm694, %v683, %v685
      %v696 = vsel %vm694, %v685, %v687
      %v697 = vsel %vm694, %v689, %v691
      %v698 = vsel %vm694, %v691, %v693
      %v705 = vpack.c.bf16 %v404, %v401
      %v706 = vpack.c.bf16 %v405, %v402
      %v707 = vpack.c.bf16 %v406, %v403
      %v708 = vpack.c.bf16 %v511, %v509
      %v709 = vpack.c.bf16 %v512, %v510
      %v710 = vpack.c.bf16 %v508, %v502
      %v711 = vpack.c.bf16 %v540, %v538
      %v712 = vpack.c.bf16 %v541, %v539
      %v713 = vpack.c.bf16 %v536, %v530
      %v714 = vpack.c.bf16 %v569, %v567
      %v715 = vpack.c.bf16 %v570, %v568
      %v716 = vpack.c.bf16 %v565, %v559
      %v717 = vpack.c.bf16 %v582, %v578
      %v718 = vpack.c.bf16 %v586, %v585
      %v719 = vpack.c.bf16 %v584, %v580
      %v720 = vpack.c.bf16 %v606, %v600
      %v721 = vpack.c.bf16 %v614, %v612
      %v722 = vpack.c.bf16 %v615, %v613
      %v723 = vpack.c.bf16 %v635, %v629
      %v724 = vpack.c.bf16 %v643, %v641
      %v725 = vpack.c.bf16 %v644, %v642
      %v726 = vpack.c.bf16 %v660, %v654
      %v727 = vpack.c.bf16 %v668, %v666
      %v728 = vpack.c.bf16 %v669, %v667
      %v729 = vpack.c.bf16 %v689, %v683
      %v730 = vpack.c.bf16 %v697, %v695
      %v731 = vpack.c.bf16 %v698, %v696
      %v732 = vld [vmem:[%s3] sm:$0xff]
      %v733 = vld [vmem:[%s6] sm:$0xff]
      %735 = vset.pattern.permute.xlu0 0
      %736 = vperm.xlu0 %735, %v733
      %v737 = vpop.permute.xlu0 %736
      %v740 = vunpack.c.l.b16 %v732
      %v741 = vunpack.c.h.b16 %v732
      %v742 = vpack.c.b16 %v740, %v740
      %v743 = vpack.c.b16 %v741, %v741
      %772 = vrot.lane.b32.xlu0 %v705, 17
      %v773 = vpop.permute.xlu0 %772
      %774 = vrot.lane.b32.xlu0 %v706, 17
      %v775 = vpop.permute.xlu0 %774
      %776 = vrot.lane.b32.xlu0 %v707, 17
      %v777 = vpop.permute.xlu0 %776
      %778 = vrot.lane.b32.xlu0 %v708, 17
      %v779 = vpop.permute.xlu0 %778
      %780 = vrot.lane.b32.xlu0 %v709, 17
      %v781 = vpop.permute.xlu0 %780
      %782 = vrot.lane.b32.xlu0 %v710, 17
      %v783 = vpop.permute.xlu0 %782
      %784 = vrot.lane.b32.xlu0 %v711, 17
      %v785 = vpop.permute.xlu0 %784
      %786 = vrot.lane.b32.xlu0 %v712, 17
      %v787 = vpop.permute.xlu0 %786
      %788 = vrot.lane.b32.xlu0 %v713, 17
      %v789 = vpop.permute.xlu0 %788
      %790 = vrot.lane.b32.xlu0 %v714, 17
      %v791 = vpop.permute.xlu0 %790
      %792 = vrot.lane.b32.xlu0 %v715, 17
      %v793 = vpop.permute.xlu0 %792
      %794 = vrot.lane.b32.xlu0 %v716, 17
      %v795 = vpop.permute.xlu0 %794
      %796 = vrot.lane.b32.xlu0 %v717, 17
      %v797 = vpop.permute.xlu0 %796
      %798 = vrot.lane.b32.xlu0 %v718, 17
      %v799 = vpop.permute.xlu0 %798
      %800 = vrot.lane.b32.xlu0 %v719, 17
      %v801 = vpop.permute.xlu0 %800
      %802 = vrot.lane.b32.xlu0 %v720, 17
      %v803 = vpop.permute.xlu0 %802
      %804 = vrot.lane.b32.xlu0 %v721, 17
      %v805 = vpop.permute.xlu0 %804
      %806 = vrot.lane.b32.xlu0 %v722, 17
      %v807 = vpop.permute.xlu0 %806
      %808 = vrot.lane.b32.xlu0 %v723, 17
      %v809 = vpop.permute.xlu0 %808
      %810 = vrot.lane.b32.xlu0 %v724, 17
      %v811 = vpop.permute.xlu0 %810
      %812 = vrot.lane.b32.xlu0 %v725, 17
      %v813 = vpop.permute.xlu0 %812
      %814 = vrot.lane.b32.xlu0 %v726, 17
      %v815 = vpop.permute.xlu0 %814
      %816 = vrot.lane.b32.xlu0 %v727, 17
      %v817 = vpop.permute.xlu0 %816
      %818 = vrot.lane.b32.xlu0 %v728, 17
      %v819 = vpop.permute.xlu0 %818
      %820 = vrot.lane.b32.xlu0 %v729, 17
      %v821 = vpop.permute.xlu0 %820
      %822 = vrot.lane.b32.xlu0 %v730, 17
      %v823 = vpop.permute.xlu0 %822
      %824 = vrot.lane.b32.xlu0 %v731, 17
      %v825 = vpop.permute.xlu0 %824
      %vm826 = vcmask 138240
      %v827 = vsel %vm826, %v773, %v775
      %v828 = vsel %vm826, %v775, %v777
      %v829 = vsel %vm826, %v779, %v781
      %v830 = vsel %vm826, %v781, %v783
      %v831 = vsel %vm826, %v785, %v787
      %v832 = vsel %vm826, %v787, %v789
      %v833 = vsel %vm826, %v791, %v793
      %v834 = vsel %vm826, %v793, %v795
      %v835 = vsel %vm826, %v797, %v799
      %v836 = vsel %vm826, %v799, %v801
      %v837 = vsel %vm826, %v803, %v805
      %v838 = vsel %vm826, %v805, %v807
      %v839 = vsel %vm826, %v809, %v811
      %v840 = vsel %vm826, %v811, %v813
      %v841 = vsel %vm826, %v815, %v817
      %v842 = vsel %vm826, %v817, %v819
      %v843 = vsel %vm826, %v821, %v823
      %v844 = vsel %vm826, %v823, %v825
      %vm863 = vcmask 130048
      %v865 = vsel %vm863, %v743, 0
      %867 = vmatprep.subr.bf16.mxu0 %v828
      %868 = vmatpush1.bf16.msra.mxu0 %v827
      %869 = vmatprep.subr.bf16.mxu0 %v830
      %870 = vmatpush1.bf16.msra.mxu0 %v829
      %871 = vmatprep.subr.bf16.mxu0 %v832
      %872 = vmatpush1.bf16.msra.mxu0 %v831
      %873 = vmatprep.subr.bf16.mxu0 %v834
      %874 = vmatpush1.bf16.msra.mxu0 %v833
      %875 = vmatprep.subr.bf16.mxu0 %v836
      %876 = vmatpush1.bf16.msra.mxu0 %v835
      %877 = vmatprep.subr.bf16.mxu0 %v838
      %878 = vmatpush1.bf16.msra.mxu0 %v837
      %879 = vmatprep.subr.bf16.mxu0 %v840
      %880 = vmatpush1.bf16.msra.mxu0 %v839
      %881 = vmatprep.subr.bf16.mxu0 %v842
      %882 = vmatpush1.bf16.msra.mxu0 %v841
      %883 = vmatprep.subr.bf16.mxu0 %v844
      %884 = vmatpush1.bf16.msra.mxu0 %v843
      %885 = vmatprep.subr.bf16.mxu0 0
      %886 = vmatpush1.bf16.msra.mxu0 0
      %887 = vmatprep.subr.bf16.mxu0 0
      %888 = vmatpush1.bf16.msra.mxu0 0
      %889 = vmatprep.subr.bf16.mxu0 0
      %890 = vmatpush1.bf16.msra.mxu0 0
      %891 = vmatprep.subr.bf16.mxu0 0
      %892 = vmatpush1.bf16.msra.mxu0 0
      %893 = vmatprep.subr.bf16.mxu0 0
      %894 = vmatpush1.bf16.msra.mxu0 0
      %895 = vmatprep.subr.bf16.mxu0 0
      %896 = vmatpush1.bf16.msra.mxu0 0
      %897 = vmatprep.subr.bf16.mxu0 0
      %898 = vmatpush1.bf16.msra.mxu0 0
      %899 = vmatprep.mubr.bf16.mxu0 %v865
      %900 = vmatmul.mubr.bf16.gmra.mrb[0].mxu0 %v742
      %v901 = vpop.f32.mrb[0].mxu0
      %v902 = vadd.f32 %v737, %v901
      %v903 = vpop.f32.mrb[0].mxu0
      %v904 = vadd.f32 %v737, %v903
      %v905 = vpop.f32.mrb[0].mxu0
      %v906 = vpop.f32.mrb[0].mxu0
      %907 = vdwg.mxu0
      %v908 = vmul.f32 %v902, 0.2
      %v909 = vmul.f32 %v904, 0.2
      %v910 = vmax.f32 %v902, %v908
      %v911 = vmax.f32 %v904, %v909
      %912 = vst [vmem:[#allocation2 + $0x8] sm:$0xff] %v910
      %913 = vst [vmem:[#allocation2 + $0x10] sm:$0xff] %v911
      %v914 = vld [vmem:[#allocation2] sm:$0xff]
      %v915 = vld [vmem:[#allocation2 + $0x8] sm:$0xff]
      %v916 = vld [vmem:[#allocation2 + $0x10] sm:$0xff]
      %v917 = vld [vmem:[#allocation2 + $0x18] sm:$0xff]
      %v918 = vmul.f32 %v914, %v393
      %v919 = vmul.f32 %v915, %v397
      %v920 = vmul.f32 %v916, %v395
      %v921 = vmul.f32 %v914, %v417
      %v922 = vmul.f32 %v915, %v421
      %v923 = vmul.f32 %v916, %v419
      %v924 = vmul.f32 %v914, %v432
      %v925 = vmul.f32 %v915, %v436
      %v926 = vmul.f32 %v916, %v434
      %v927 = vmul.f32 %v915, %v447
      %v928 = vmul.f32 %v916, %v451
      %v929 = vmul.f32 %v917, %v449
      %v930 = vmul.f32 %v915, %v462
      %v931 = vmul.f32 %v916, %v466
      %v932 = vmul.f32 %v917, %v464
      %v933 = vmul.f32 %v915, %v477
      %v934 = vmul.f32 %v916, %v481
      %v935 = vmul.f32 %v917, %v479
      %939 = vrot.lane.b32.xlu0 %v914, 127
      %v940 = vpop.permute.xlu0 %939
      %941 = vrot.lane.b32.xlu0 %v915, 127
      %v942 = vpop.permute.xlu0 %941
      %943 = vrot.lane.b32.xlu0 %v916, 127
      %v944 = vpop.permute.xlu0 %943
      %v945 = vsel %vm435, %v940, %v942
      %v946 = vsel %vm435, %v942, %v944
      %953 = vrot.lane.b32.xlu0 %v921, 126
      %v954 = vpop.permute.xlu0 %953
      %955 = vrot.lane.b32.xlu0 %v922, 126
      %v956 = vpop.permute.xlu0 %955
      %957 = vrot.lane.b32.xlu0 %v923, 126
      %v958 = vpop.permute.xlu0 %957
      %v959 = vsel %vm537, %v954, %v956
      %v960 = vsel %vm537, %v956, %v958
      %967 = vrot.lane.b32.xlu0 %v924, 112
      %v968 = vpop.permute.xlu0 %967
      %969 = vrot.lane.b32.xlu0 %v925, 112
      %v970 = vpop.permute.xlu0 %969
      %971 = vrot.lane.b32.xlu0 %v926, 112
      %v972 = vpop.permute.xlu0 %971
      %v973 = vsel %vm566, %v968, %v970
      %v974 = vsel %vm566, %v970, %v972
      %978 = vrot.lane.b32.xlu0 %v915, 111
      %v979 = vpop.permute.xlu0 %978
      %980 = vrot.lane.b32.xlu0 %v916, 111
      %v981 = vpop.permute.xlu0 %980
      %v982 = vsel %vm396, %v979, %v981
      %989 = vrot.lane.b32.xlu0 %v927, 110
      %v990 = vpop.permute.xlu0 %989
      %991 = vrot.lane.b32.xlu0 %v928, 110
      %v992 = vpop.permute.xlu0 %991
      %993 = vrot.lane.b32.xlu0 %v929, 110
      %v994 = vpop.permute.xlu0 %993
      %v995 = vsel %vm611, %v990, %v992
      %v996 = vsel %vm611, %v992, %v994
      %1003 = vrot.lane.b32.xlu0 %v930, 96
      %v1004 = vpop.permute.xlu0 %1003
      %1005 = vrot.lane.b32.xlu0 %v931, 96
      %v1006 = vpop.permute.xlu0 %1005
      %1007 = vrot.lane.b32.xlu0 %v932, 96
      %v1008 = vpop.permute.xlu0 %1007
      %v1009 = vsel %vm640, %v1004, %v1006
      %v1010 = vsel %vm640, %v1006, %v1008
      %1015 = vrot.lane.b32.xlu0 %v915, 95
      %v1016 = vpop.permute.xlu0 %1015
      %1017 = vrot.lane.b32.xlu0 %v916, 95
      %v1018 = vpop.permute.xlu0 %1017
      %1019 = vrot.lane.b32.xlu0 %v917, 95
      %v1020 = vpop.permute.xlu0 %1019
      %v1021 = vsel %vm665, %v1016, %v1018
      %v1022 = vsel %vm665, %v1018, %v1020
      %1029 = vrot.lane.b32.xlu0 %v933, 94
      %v1030 = vpop.permute.xlu0 %1029
      %1031 = vrot.lane.b32.xlu0 %v934, 94
      %v1032 = vpop.permute.xlu0 %1031
      %1033 = vrot.lane.b32.xlu0 %v935, 94
      %v1034 = vpop.permute.xlu0 %1033
      %v1035 = vsel %vm694, %v1030, %v1032
      %v1036 = vsel %vm694, %v1032, %v1034
      %v1040 = vpack.c.bf16 %v945, %v918
      %v1041 = vpack.c.bf16 %v946, %v919
      %v1042 = vpack.c.bf16 %v944, %v920
      %v1043 = vpack.c.bf16 %v973, %v959
      %v1044 = vpack.c.bf16 %v974, %v960
      %v1045 = vpack.c.bf16 %v972, %v958
      %v1046 = vpack.c.bf16 %v990, %v979
      %v1047 = vpack.c.bf16 %v995, %v982
      %v1048 = vpack.c.bf16 %v996, %v981
      %v1049 = vpack.c.bf16 %v1016, %v1004
      %v1050 = vpack.c.bf16 %v1021, %v1009
      %v1051 = vpack.c.bf16 %v1022, %v1010
      %v1052 = vpack.c.bf16 %v1030, %v1030
      %v1053 = vpack.c.bf16 %v1035, %v1035
      %v1054 = vpack.c.bf16 %v1036, %v1036
      %v1055 = vld [vmem:[%s4] sm:$0xf]
      %v1056 = vld [vmem:[%s7] sm:$0xff]
      %1058 = vset.pattern.permute.xlu0 0
      %1059 = vperm.xlu0 %1058, %v1056
      %v1060 = vpop.permute.xlu0 %1059
      %1077 = vrot.lane.b32.xlu0 %v1040, 17
      %v1078 = vpop.permute.xlu0 %1077
      %1079 = vrot.lane.b32.xlu0 %v1041, 17
      %v1080 = vpop.permute.xlu0 %1079
      %1081 = vrot.lane.b32.xlu0 %v1042, 17
      %v1082 = vpop.permute.xlu0 %1081
      %1083 = vrot.lane.b32.xlu0 %v1043, 17
      %v1084 = vpop.permute.xlu0 %1083
      %1085 = vrot.lane.b32.xlu0 %v1044, 17
      %v1086 = vpop.permute.xlu0 %1085
      %1087 = vrot.lane.b32.xlu0 %v1045, 17
      %v1088 = vpop.permute.xlu0 %1087
      %1089 = vrot.lane.b32.xlu0 %v1046, 17
      %v1090 = vpop.permute.xlu0 %1089
      %1091 = vrot.lane.b32.xlu0 %v1047, 17
      %v1092 = vpop.permute.xlu0 %1091
      %1093 = vrot.lane.b32.xlu0 %v1048, 17
      %v1094 = vpop.permute.xlu0 %1093
      %1095 = vrot.lane.b32.xlu0 %v1049, 17
      %v1096 = vpop.permute.xlu0 %1095
      %1097 = vrot.lane.b32.xlu0 %v1050, 17
      %v1098 = vpop.permute.xlu0 %1097
      %1099 = vrot.lane.b32.xlu0 %v1051, 17
      %v1100 = vpop.permute.xlu0 %1099
      %1101 = vrot.lane.b32.xlu0 %v1052, 17
      %v1102 = vpop.permute.xlu0 %1101
      %1103 = vrot.lane.b32.xlu0 %v1053, 17
      %v1104 = vpop.permute.xlu0 %1103
      %1105 = vrot.lane.b32.xlu0 %v1054, 17
      %v1106 = vpop.permute.xlu0 %1105
      %v1107 = vsel %vm826, %v1078, %v1080
      %v1108 = vsel %vm826, %v1080, %v1082
      %v1109 = vsel %vm826, %v1084, %v1086
      %v1110 = vsel %vm826, %v1086, %v1088
      %v1111 = vsel %vm826, %v1090, %v1092
      %v1112 = vsel %vm826, %v1092, %v1094
      %v1113 = vsel %vm826, %v1096, %v1098
      %v1114 = vsel %vm826, %v1098, %v1100
      %v1115 = vsel %vm826, %v1102, %v1104
      %v1116 = vsel %vm826, %v1104, %v1106
      %vm1125 = vcmask 588800
      %v1127 = vsel %vm1125, %v1055, 0
      %vm1129 = vcmask 1043456
      %v1131 = vsel %vm1129, %v1115, 0
      %v1134 = vsel %vm1129, %v1116, 0
      %1136 = vmatprep.subr.bf16.mxu0 %v1108
      %1137 = vmatpush1.bf16.msra.mxu0 %v1107
      %1138 = vmatprep.subr.bf16.mxu0 %v1110
      %1139 = vmatpush1.bf16.msra.mxu0 %v1109
      %1140 = vmatprep.subr.bf16.mxu0 %v1112
      %1141 = vmatpush1.bf16.msra.mxu0 %v1111
      %1142 = vmatprep.subr.bf16.mxu0 %v1114
      %1143 = vmatpush1.bf16.msra.mxu0 %v1113
      %1144 = vmatprep.subr.bf16.mxu0 %v1134
      %1145 = vmatpush1.bf16.msra.mxu0 %v1131
      %1146 = vmatprep.subr.bf16.mxu0 0
      %1147 = vmatpush1.bf16.msra.mxu0 0
      %1148 = vmatprep.subr.bf16.mxu0 0
      %1149 = vmatpush1.bf16.msra.mxu0 0
      %1150 = vmatprep.subr.bf16.mxu0 0
      %1151 = vmatpush1.bf16.msra.mxu0 0
      %1152 = vmatprep.subr.bf16.mxu0 0
      %1153 = vmatpush1.bf16.msra.mxu0 0
      %1154 = vmatprep.subr.bf16.mxu0 0
      %1155 = vmatpush1.bf16.msra.mxu0 0
      %1156 = vmatprep.subr.bf16.mxu0 0
      %1157 = vmatpush1.bf16.msra.mxu0 0
      %1158 = vmatprep.subr.bf16.mxu0 0
      %1159 = vmatpush1.bf16.msra.mxu0 0
      %1160 = vmatprep.subr.bf16.mxu0 0
      %1161 = vmatpush1.bf16.msra.mxu0 0
      %1162 = vmatprep.subr.bf16.mxu0 0
      %1163 = vmatpush1.bf16.msra.mxu0 0
      %1164 = vmatprep.subr.bf16.mxu0 0
      %1165 = vmatpush1.bf16.msra.mxu0 0
      %1166 = vmatprep.subr.bf16.mxu0 0
      %1167 = vmatpush1.bf16.msra.mxu0 0
      %1168 = vmatprep.mubr.bf16.mxu0 0
      %1169 = vmatmul.mubr.bf16.gmra.mrb[0].mxu0 %v1127
      %v1170 = vpop.f32.mrb[0].mxu0
      %v1171 = vadd.f32 %v1060, %v1170
      %v1172 = vpop.f32.mrb[0].mxu0
      %v1173 = vadd.f32 %v1060, %v1172
      %v1174 = vpop.f32.mrb[0].mxu0
      %v1175 = vpop.f32.mrb[0].mxu0
      %1176 = vdwg.mxu0
      %v1177 = vmul.f32 %v1171, 0.2
      %v1178 = vmul.f32 %v1173, 0.2
      %v1179 = vmax.f32 %v1171, %v1177
      %v1180 = vmax.f32 %v1173, %v1178
      %1181 = vst [vmem:[#allocation2 + $0x8] sm:$0xff] %v1179
      %1182 = vst [vmem:[#allocation2 + $0x10] sm:$0xff] %v1180
      %v1183 = vld [vmem:[#allocation2] sm:$0xff]
      %v1184 = vld [vmem:[#allocation2 + $0x8] sm:$0xff]
      %v1185 = vld [vmem:[#allocation2 + $0x10] sm:$0xff]
      %v1186 = vld [vmem:[#allocation2 + $0x18] sm:$0xff]
      %v1187 = vmul.f32 %v1183, %v393
      %v1188 = vmul.f32 %v1184, %v397
      %v1189 = vmul.f32 %v1185, %v395
      %v1190 = vmul.f32 %v1183, %v417
      %v1191 = vmul.f32 %v1184, %v421
      %v1192 = vmul.f32 %v1185, %v419
      %v1193 = vmul.f32 %v1183, %v432
      %v1194 = vmul.f32 %v1184, %v436
      %v1195 = vmul.f32 %v1185, %v434
      %v1196 = vmul.f32 %v1184, %v447
      %v1197 = vmul.f32 %v1185, %v451
      %v1198 = vmul.f32 %v1186, %v449
      %v1199 = vmul.f32 %v1184, %v462
      %v1200 = vmul.f32 %v1185, %v466
      %v1201 = vmul.f32 %v1186, %v464
      %v1202 = vmul.f32 %v1184, %v477
      %v1203 = vmul.f32 %v1185, %v481
      %v1204 = vmul.f32 %v1186, %v479
      %1208 = vrot.lane.b32.xlu0 %v1183, 127
      %v1209 = vpop.permute.xlu0 %1208
      %1210 = vrot.lane.b32.xlu0 %v1184, 127
      %v1211 = vpop.permute.xlu0 %1210
      %1212 = vrot.lane.b32.xlu0 %v1185, 127
      %v1213 = vpop.permute.xlu0 %1212
      %v1214 = vsel %vm435, %v1209, %v1211
      %v1215 = vsel %vm435, %v1211, %v1213
      %1222 = vrot.lane.b32.xlu0 %v1190, 126
      %v1223 = vpop.permute.xlu0 %1222
      %1224 = vrot.lane.b32.xlu0 %v1191, 126
      %v1225 = vpop.permute.xlu0 %1224
      %1226 = vrot.lane.b32.xlu0 %v1192, 126
      %v1227 = vpop.permute.xlu0 %1226
      %v1228 = vsel %vm537, %v1223, %v1225
      %v1229 = vsel %vm537, %v1225, %v1227
      %1236 = vrot.lane.b32.xlu0 %v1193, 112
      %v1237 = vpop.permute.xlu0 %1236
      %1238 = vrot.lane.b32.xlu0 %v1194, 112
      %v1239 = vpop.permute.xlu0 %1238
      %1240 = vrot.lane.b32.xlu0 %v1195, 112
      %v1241 = vpop.permute.xlu0 %1240
      %v1242 = vsel %vm566, %v1237, %v1239
      %v1243 = vsel %vm566, %v1239, %v1241
      %1247 = vrot.lane.b32.xlu0 %v1184, 111
      %v1248 = vpop.permute.xlu0 %1247
      %1249 = vrot.lane.b32.xlu0 %v1185, 111
      %v1250 = vpop.permute.xlu0 %1249
      %v1251 = vsel %vm396, %v1248, %v1250
      %1258 = vrot.lane.b32.xlu0 %v1196, 110
      %v1259 = vpop.permute.xlu0 %1258
      %1260 = vrot.lane.b32.xlu0 %v1197, 110
      %v1261 = vpop.permute.xlu0 %1260
      %1262 = vrot.lane.b32.xlu0 %v1198, 110
      %v1263 = vpop.permute.xlu0 %1262
      %v1264 = vsel %vm611, %v1259, %v1261
      %v1265 = vsel %vm611, %v1261, %v1263
      %1272 = vrot.lane.b32.xlu0 %v1199, 96
      %v1273 = vpop.permute.xlu0 %1272
      %1274 = vrot.lane.b32.xlu0 %v1200, 96
      %v1275 = vpop.permute.xlu0 %1274
      %1276 = vrot.lane.b32.xlu0 %v1201, 96
      %v1277 = vpop.permute.xlu0 %1276
      %v1278 = vsel %vm640, %v1273, %v1275
      %v1279 = vsel %vm640, %v1275, %v1277
      %1284 = vrot.lane.b32.xlu0 %v1184, 95
      %v1285 = vpop.permute.xlu0 %1284
      %1286 = vrot.lane.b32.xlu0 %v1185, 95
      %v1287 = vpop.permute.xlu0 %1286
      %1288 = vrot.lane.b32.xlu0 %v1186, 95
      %v1289 = vpop.permute.xlu0 %1288
      %v1290 = vsel %vm665, %v1285, %v1287
      %v1291 = vsel %vm665, %v1287, %v1289
      %1298 = vrot.lane.b32.xlu0 %v1202, 94
      %v1299 = vpop.permute.xlu0 %1298
      %1300 = vrot.lane.b32.xlu0 %v1203, 94
      %v1301 = vpop.permute.xlu0 %1300
      %1302 = vrot.lane.b32.xlu0 %v1204, 94
      %v1303 = vpop.permute.xlu0 %1302
      %v1304 = vsel %vm694, %v1299, %v1301
      %v1305 = vsel %vm694, %v1301, %v1303
      %v1309 = vpack.c.bf16 %v1214, %v1187
      %v1310 = vpack.c.bf16 %v1215, %v1188
      %v1311 = vpack.c.bf16 %v1213, %v1189
      %v1312 = vpack.c.bf16 %v1242, %v1228
      %v1313 = vpack.c.bf16 %v1243, %v1229
      %v1314 = vpack.c.bf16 %v1241, %v1227
      %v1315 = vpack.c.bf16 %v1259, %v1248
      %v1316 = vpack.c.bf16 %v1264, %v1251
      %v1317 = vpack.c.bf16 %v1265, %v1250
      %v1318 = vpack.c.bf16 %v1285, %v1273
      %v1319 = vpack.c.bf16 %v1290, %v1278
      %v1320 = vpack.c.bf16 %v1291, %v1279
      %v1321 = vpack.c.bf16 %v1299, %v1299
      %v1322 = vpack.c.bf16 %v1304, %v1304
      %v1323 = vpack.c.bf16 %v1305, %v1305
      %v1324 = vld [vmem:[%s5] sm:$0xf]
      %v1325 = vld [vmem:[%s8] sm:$0xff]
      %1327 = vset.pattern.permute.xlu0 0
      %1328 = vperm.xlu0 %1327, %v1325
      %v1329 = vpop.permute.xlu0 %1328
      %1346 = vrot.lane.b32.xlu0 %v1309, 17
      %v1347 = vpop.permute.xlu0 %1346
      %1348 = vrot.lane.b32.xlu0 %v1310, 17
      %v1349 = vpop.permute.xlu0 %1348
      %1350 = vrot.lane.b32.xlu0 %v1311, 17
      %v1351 = vpop.permute.xlu0 %1350
      %1352 = vrot.lane.b32.xlu0 %v1312, 17
      %v1353 = vpop.permute.xlu0 %1352
      %1354 = vrot.lane.b32.xlu0 %v1313, 17
      %v1355 = vpop.permute.xlu0 %1354
      %1356 = vrot.lane.b32.xlu0 %v1314, 17
      %v1357 = vpop.permute.xlu0 %1356
      %1358 = vrot.lane.b32.xlu0 %v1315, 17
      %v1359 = vpop.permute.xlu0 %1358
      %1360 = vrot.lane.b32.xlu0 %v1316, 17
      %v1361 = vpop.permute.xlu0 %1360
      %1362 = vrot.lane.b32.xlu0 %v1317, 17
      %v1363 = vpop.permute.xlu0 %1362
      %1364 = vrot.lane.b32.xlu0 %v1318, 17
      %v1365 = vpop.permute.xlu0 %1364
      %1366 = vrot.lane.b32.xlu0 %v1319, 17
      %v1367 = vpop.permute.xlu0 %1366
      %1368 = vrot.lane.b32.xlu0 %v1320, 17
      %v1369 = vpop.permute.xlu0 %1368
      %1370 = vrot.lane.b32.xlu0 %v1321, 17
      %v1371 = vpop.permute.xlu0 %1370
      %1372 = vrot.lane.b32.xlu0 %v1322, 17
      %v1373 = vpop.permute.xlu0 %1372
      %1374 = vrot.lane.b32.xlu0 %v1323, 17
      %v1375 = vpop.permute.xlu0 %1374
      %v1376 = vsel %vm826, %v1347, %v1349
      %v1377 = vsel %vm826, %v1349, %v1351
      %v1378 = vsel %vm826, %v1353, %v1355
      %v1379 = vsel %vm826, %v1355, %v1357
      %v1380 = vsel %vm826, %v1359, %v1361
      %v1381 = vsel %vm826, %v1361, %v1363
      %v1382 = vsel %vm826, %v1365, %v1367
      %v1383 = vsel %vm826, %v1367, %v1369
      %v1384 = vsel %vm826, %v1371, %v1373
      %v1385 = vsel %vm826, %v1373, %v1375
      %v1395 = vsel %vm1125, %v1324, 0
      %v1398 = vsel %vm1129, %v1384, 0
      %v1401 = vsel %vm1129, %v1385, 0
      %1403 = vmatprep.subr.bf16.mxu0 %v1377
      %1404 = vmatpush1.bf16.msra.mxu0 %v1376
      %1405 = vmatprep.subr.bf16.mxu0 %v1379
      %1406 = vmatpush1.bf16.msra.mxu0 %v1378
      %1407 = vmatprep.subr.bf16.mxu0 %v1381
      %1408 = vmatpush1.bf16.msra.mxu0 %v1380
      %1409 = vmatprep.subr.bf16.mxu0 %v1383
      %1410 = vmatpush1.bf16.msra.mxu0 %v1382
      %1411 = vmatprep.subr.bf16.mxu0 %v1401
      %1412 = vmatpush1.bf16.msra.mxu0 %v1398
      %1413 = vmatprep.subr.bf16.mxu0 0
      %1414 = vmatpush1.bf16.msra.mxu0 0
      %1415 = vmatprep.subr.bf16.mxu0 0
      %1416 = vmatpush1.bf16.msra.mxu0 0
      %1417 = vmatprep.subr.bf16.mxu0 0
      %1418 = vmatpush1.bf16.msra.mxu0 0
      %1419 = vmatprep.subr.bf16.mxu0 0
      %1420 = vmatpush1.bf16.msra.mxu0 0
      %1421 = vmatprep.subr.bf16.mxu0 0
      %1422 = vmatpush1.bf16.msra.mxu0 0
      %1423 = vmatprep.subr.bf16.mxu0 0
      %1424 = vmatpush1.bf16.msra.mxu0 0
      %1425 = vmatprep.subr.bf16.mxu0 0
      %1426 = vmatpush1.bf16.msra.mxu0 0
      %1427 = vmatprep.subr.bf16.mxu0 0
      %1428 = vmatpush1.bf16.msra.mxu0 0
      %1429 = vmatprep.subr.bf16.mxu0 0
      %1430 = vmatpush1.bf16.msra.mxu0 0
      %1431 = vmatprep.subr.bf16.mxu0 0
      %1432 = vmatpush1.bf16.msra.mxu0 0
      %1433 = vmatprep.subr.bf16.mxu0 0
      %1434 = vmatpush1.bf16.msra.mxu0 0
      %1435 = vmatprep.mubr.bf16.mxu0 0
      %1436 = vmatmul.mubr.bf16.gmra.mrb[0].mxu0 %v1395
      %v1437 = vpop.f32.mrb[0].mxu0
      %v1438 = vadd.f32 %v1329, %v1437
      %v1439 = vpop.f32.mrb[0].mxu0
      %v1440 = vadd.f32 %v1329, %v1439
      %v1441 = vpop.f32.mrb[0].mxu0
      %v1442 = vpop.f32.mrb[0].mxu0
      %1443 = vdwg.mxu0
      %1444 = vst [vmem:[%s352] sm:$0xff] %v1438
      %1445 = vst [vmem:[%s352 + $0x8] sm:$0xff] %v1440
      %p1446 = scmp.lt.s32.totalorder %s20, 1
      %s1447 = scalar_select %p1446, %s20, 1
      %s1448 = smul.addr %s1447, 2
      %s1449 = smul.addr %s1448, 8
      %s1450 = scalar_lea.vmem %s9, %s1449
      // Predicated region
      $region57: #{vdn_forward.14} parent=55 // pred_check
        %p1451 = pneg %p237
      $region58: #{vdn_forward.14} parent=55 // pred_check_branch
        %1453 = sbr.rel (%p1451) target = $region60
      $region59: #{vdn_forward.14} parent=55 // pred_region
        _
      $region60: #{vdn_forward.14} parent=55 // pred_fallthru
        _
    $region56: #{vdn_forward.14} parent=5 // pred_fallthru
      _
    %p1454 = scmp.le.s32.totalorder 2, %s15
    // Predicated region
    $region61: #{vdn_forward.14} parent=5 // pred_check
      %p1455 = pneg %p1454
    $region62: #{vdn_forward.14} parent=5 // pred_check_branch
      %1457 = sbr.rel (%p1455) target = $region64
    $region63: #{vdn_forward.14} parent=5 // pred_region
      %s1458 = ssub.s32 %s15, 2
      // Predicated region
      $region65: #{vdn_forward.14} parent=63 // pred_check
        %p1459 = pneg %p243
      $region66: #{vdn_forward.14} parent=63 // pred_check_branch
        %1461 = sbr.rel (%p1459) target = $region68
      $region67: #{vdn_forward.14} parent=63 // pred_region
        %p1462 = scmp.lt.s32.totalorder %s21, 1
        %s1463 = scalar_select %p1462, %s21, 1
        %s1464 = smul.addr %s1463, 2
        %s1465 = smul.addr %s1464, 8
        %s1466 = scalar_lea.vmem %s9, %s1465
      $region68: #{vdn_forward.14} parent=63 // pred_fallthru
        _
    $region64: #{vdn_forward.14} parent=5 // pred_fallthru
      _
  $region6: #{vdn_forward.14} parent=0 // loop_footer
    %s19 = sadd.s32 1, %s15
  $region7: #{vdn_forward.14} parent=0 // loop_footer_branch
    %14 = sbr.rel target = $region3
  $region8: #{vdn_forward.14} parent=0 // loop_exit
    _

// kernel: vdn_forward.15
$region0: #{vdn_forward.15}
  #allocation0 [shape = 'u32[]', space=smem, size = 0x4, offset = 0x4, fixed_abs, tag = 'smem constant byte address 0x4 - core index']
  #allocation1 [shape = 'u32[144,128]{1,0:T(1,128)}', space=vmem, size = 0x12000, scoped, tag = 'internal scratch']
  #allocation2 [shape = 'f32[16,512]{1,0:T(8,128)}', space=vmem, size = 0x8000, scoped, tag = 'scratch operand']
  %s0 = inlined_call_operand.vmem [shape: f32[2,256], index: 0, kind: input, shape index: {}]
  %s1 = inlined_call_operand.vmem [shape: bf16[2,8,256], index: 1, kind: input, shape index: {}]
  %s2 = inlined_call_operand.vmem [shape: bf16[16,72], index: 2, kind: input, shape index: {}]
  %s3 = inlined_call_operand.vmem [shape: bf16[16,144], index: 3, kind: input, shape index: {}]
  %s4 = inlined_call_operand.vmem [shape: bf16[16,144], index: 4, kind: input, shape index: {}]
  %s5 = inlined_call_operand.vmem [shape: bf16[16,144], index: 5, kind: input, shape index: {}]
  %s6 = inlined_call_operand.vmem [shape: bf16[8,144], index: 6, kind: input, shape index: {}]
  %s7 = inlined_call_operand.vmem [shape: f32[16,1], index: 7, kind: input, shape index: {}, may-alias: {7,8,9,10}]
  %s8 = inlined_call_operand.vmem [shape: f32[16,1], index: 8, kind: input, shape index: {}, may-alias: {7,8,9,10}]
  %s9 = inlined_call_operand.vmem [shape: f32[16,1], index: 9, kind: input, shape index: {}, may-alias: {7,8,9,10}]
  %s10 = inlined_call_operand.vmem [shape: f32[16,1], index: 10, kind: input, shape index: {}, may-alias: {7,8,9,10}]
  %s11 = inlined_call_operand.vmem [shape: f32[8,1], index: 11, kind: input, shape index: {}]
  %s12 = inlined_call_operand.vmem [shape: f32[2,8,256], index: 12, kind: output, shape index: {}]
  %s13 = sld [smem:[#allocation0]]
  $region81: #{vdn_forward.15} parent=0
    _
  %s15 = ssub.s32 1, %s13
  %s16 = scalar_select 0, %s15, %s13
  loop: start=0, step=1, limit=4
  $region2: #{vdn_forward.15} parent=0 // loop_pre_header
    _
  $region3: #{vdn_forward.15} parent=0 // loop_header
    %s18 = sphi 0, %s22
    %p19 = scmp.ge.s32.totalorder %s18, 4
    %s26 = sphi 0, %s26
    %s28 = sphi 0, %s26
    %s29 = sphi 0, %s28
    %s43 = sphi 0, %s29
    %s49 = sphi 0, %s51
    %s52 = sphi 0, %s49
    %s53 = sphi 0, %s52
    %s69 = sphi 0, %s53
    %s73 = sphi 0, %s73
    %s75 = sphi 0, %s73
    %s76 = sphi 0, %s75
    %s90 = sphi 0, %s76
    %s94 = sphi 0, %s94
    %s96 = sphi 0, %s94
    %s97 = sphi 0, %s96
    %s111 = sphi 0, %s97
    %s115 = sphi 0, %s115
    %s117 = sphi 0, %s115
    %s118 = sphi 0, %s117
    %s132 = sphi 0, %s118
    %s136 = sphi 0, %s136
    %s138 = sphi 0, %s136
    %s139 = sphi 0, %s138
    %s153 = sphi 0, %s139
    %s157 = sphi 0, %s157
    %s159 = sphi 0, %s157
    %s160 = sphi 0, %s159
    %s174 = sphi 0, %s160
    %s178 = sphi 0, %s178
    %s180 = sphi 0, %s178
    %s181 = sphi 0, %s180
    %s195 = sphi 0, %s181
    %s199 = sphi 0, %s199
    %s201 = sphi 0, %s199
    %s202 = sphi 0, %s201
    %s216 = sphi 0, %s202
    %s220 = sphi 0, %s220
    %s222 = sphi 0, %s220
    %s223 = sphi 0, %s222
    %s237 = sphi 0, %s223
    %s241 = sphi 0, %s241
    %s243 = sphi 0, %s241
    %s244 = sphi 0, %s243
    %s258 = sphi 0, %s244
    %s262 = sphi 0, %s262
    %s264 = sphi 0, %s262
    %s265 = sphi 0, %s264
    %s279 = sphi 0, %s265
    %s285 = sphi 0, %s287
    %s288 = sphi 0, %s285
    %s289 = sphi 0, %s288
    %s305 = sphi 0, %s289
  $region4: #{vdn_forward.15} parent=0 // loop_header_branch
    %21 = sbr.rel (%p19) target = $region8
  $region5: #{vdn_forward.15} parent=0 // loop_body
    %s23 = ssub.s32 %s18, 1
    %s24 = ssub.s32 %s18, 2
    %s25 = sadd.s32 %s18, 1
    %s27 = sadd.s32 %s26, 1
    %p30 = scmp.eq.s32.totalorder %s18, 1
    %p31 = scmp.ne.s32.totalorder %s26, %s28
    %p32 = scmp.eq.s32.totalorder %s18, 0
    %p33 = por %p31, %p32
    %p34 = scmp.ne.s32.totalorder %s26, %s28
    %p35 = scmp.eq.s32.totalorder %s23, 1
    %p36 = por %p34, %p35
    %p37 = scmp.ne.s32.totalorder %s28, %s29
    %p38 = scmp.eq.s32.totalorder %s23, 0
    %p39 = por %p37, %p38
    %p40 = scmp.ne.s32.totalorder %s28, %s29
    %p41 = scmp.eq.s32.totalorder %s24, 1
    %p42 = por %p40, %p41
    %p44 = scmp.ne.s32.totalorder %s29, %s43
    %p45 = scmp.eq.s32.totalorder %s24, 0
    %p46 = por %p44, %p45
    %s47 = ssub.s32 %s18, %s25
    %p48 = scmp.eq.s32.totalorder %s47, 0
    %s50 = sadd.s32 %s49, 1
    %s51 = scalar_select %p48, %s49, %s50
    %p54 = pneg %p48
    %p55 = scmp.eq.s32.totalorder %s18, 1
    %p56 = por %p54, %p55
    %p57 = scmp.ne.s32.totalorder %s49, %s52
    %p58 = scmp.eq.s32.totalorder %s18, 0
    %p59 = por %p57, %p58
    %p60 = scmp.ne.s32.totalorder %s49, %s52
    %p61 = scmp.eq.s32.totalorder %s23, 1
    %p62 = por %p60, %p61
    %p63 = scmp.ne.s32.totalorder %s52, %s53
    %p64 = scmp.eq.s32.totalorder %s23, 0
    %p65 = por %p63, %p64
    %p66 = scmp.ne.s32.totalorder %s52, %s53
    %p67 = scmp.eq.s32.totalorder %s24, 1
    %p68 = por %p66, %p67
    %p70 = scmp.ne.s32.totalorder %s53, %s69
    %p71 = scmp.eq.s32.totalorder %s24, 0
    %p72 = por %p70, %p71
    %s74 = sadd.s32 %s73, 1
    %p77 = scmp.eq.s32.totalorder %s18, 1
    %p78 = scmp.ne.s32.totalorder %s73, %s75
    %p79 = scmp.eq.s32.totalorder %s18, 0
    %p80 = por %p78, %p79
    %p81 = scmp.ne.s32.totalorder %s73, %s75
    %p82 = scmp.eq.s32.totalorder %s23, 1
    %p83 = por %p81, %p82
    %p84 = scmp.ne.s32.totalorder %s75, %s76
    %p85 = scmp.eq.s32.totalorder %s23, 0
    %p86 = por %p84, %p85
    %p87 = scmp.ne.s32.totalorder %s75, %s76
    %p88 = scmp.eq.s32.totalorder %s24, 1
    %p89 = por %p87, %p88
    %p91 = scmp.ne.s32.totalorder %s76, %s90
    %p92 = scmp.eq.s32.totalorder %s24, 0
    %p93 = por %p91, %p92
    %s95 = sadd.s32 %s94, 1
    %p98 = scmp.eq.s32.totalorder %s18, 1
    %p99 = scmp.ne.s32.totalorder %s94, %s96
    %p100 = scmp.eq.s32.totalorder %s18, 0
    %p101 = por %p99, %p100
    %p102 = scmp.ne.s32.totalorder %s94, %s96
    %p103 = scmp.eq.s32.totalorder %s23, 1
    %p104 = por %p102, %p103
    %p105 = scmp.ne.s32.totalorder %s96, %s97
    %p106 = scmp.eq.s32.totalorder %s23, 0
    %p107 = por %p105, %p106
    %p108 = scmp.ne.s32.totalorder %s96, %s97
    %p109 = scmp.eq.s32.totalorder %s24, 1
    %p110 = por %p108, %p109
    %p112 = scmp.ne.s32.totalorder %s97, %s111
    %p113 = scmp.eq.s32.totalorder %s24, 0
    %p114 = por %p112, %p113
    %s116 = sadd.s32 %s115, 1
    %p119 = scmp.eq.s32.totalorder %s18, 1
    %p120 = scmp.ne.s32.totalorder %s115, %s117
    %p121 = scmp.eq.s32.totalorder %s18, 0
    %p122 = por %p120, %p121
    %p123 = scmp.ne.s32.totalorder %s115, %s117
    %p124 = scmp.eq.s32.totalorder %s23, 1
    %p125 = por %p123, %p124
    %p126 = scmp.ne.s32.totalorder %s117, %s118
    %p127 = scmp.eq.s32.totalorder %s23, 0
    %p128 = por %p126, %p127
    %p129 = scmp.ne.s32.totalorder %s117, %s118
    %p130 = scmp.eq.s32.totalorder %s24, 1
    %p131 = por %p129, %p130
    %p133 = scmp.ne.s32.totalorder %s118, %s132
    %p134 = scmp.eq.s32.totalorder %s24, 0
    %p135 = por %p133, %p134
    %s137 = sadd.s32 %s136, 1
    %p140 = scmp.eq.s32.totalorder %s18, 1
    %p141 = scmp.ne.s32.totalorder %s136, %s138
    %p142 = scmp.eq.s32.totalorder %s18, 0
    %p143 = por %p141, %p142
    %p144 = scmp.ne.s32.totalorder %s136, %s138
    %p145 = scmp.eq.s32.totalorder %s23, 1
    %p146 = por %p144, %p145
    %p147 = scmp.ne.s32.totalorder %s138, %s139
    %p148 = scmp.eq.s32.totalorder %s23, 0
    %p149 = por %p147, %p148
    %p150 = scmp.ne.s32.totalorder %s138, %s139
    %p151 = scmp.eq.s32.totalorder %s24, 1
    %p152 = por %p150, %p151
    %p154 = scmp.ne.s32.totalorder %s139, %s153
    %p155 = scmp.eq.s32.totalorder %s24, 0
    %p156 = por %p154, %p155
    %s158 = sadd.s32 %s157, 1
    %p161 = scmp.eq.s32.totalorder %s18, 1
    %p162 = scmp.ne.s32.totalorder %s157, %s159
    %p163 = scmp.eq.s32.totalorder %s18, 0
    %p164 = por %p162, %p163
    %p165 = scmp.ne.s32.totalorder %s157, %s159
    %p166 = scmp.eq.s32.totalorder %s23, 1
    %p167 = por %p165, %p166
    %p168 = scmp.ne.s32.totalorder %s159, %s160
    %p169 = scmp.eq.s32.totalorder %s23, 0
    %p170 = por %p168, %p169
    %p171 = scmp.ne.s32.totalorder %s159, %s160
    %p172 = scmp.eq.s32.totalorder %s24, 1
    %p173 = por %p171, %p172
    %p175 = scmp.ne.s32.totalorder %s160, %s174
    %p176 = scmp.eq.s32.totalorder %s24, 0
    %p177 = por %p175, %p176
    %s179 = sadd.s32 %s178, 1
    %p182 = scmp.eq.s32.totalorder %s18, 1
    %p183 = scmp.ne.s32.totalorder %s178, %s180
    %p184 = scmp.eq.s32.totalorder %s18, 0
    %p185 = por %p183, %p184
    %p186 = scmp.ne.s32.totalorder %s178, %s180
    %p187 = scmp.eq.s32.totalorder %s23, 1
    %p188 = por %p186, %p187
    %p189 = scmp.ne.s32.totalorder %s180, %s181
    %p190 = scmp.eq.s32.totalorder %s23, 0
    %p191 = por %p189, %p190
    %p192 = scmp.ne.s32.totalorder %s180, %s181
    %p193 = scmp.eq.s32.totalorder %s24, 1
    %p194 = por %p192, %p193
    %p196 = scmp.ne.s32.totalorder %s181, %s195
    %p197 = scmp.eq.s32.totalorder %s24, 0
    %p198 = por %p196, %p197
    %s200 = sadd.s32 %s199, 1
    %p203 = scmp.eq.s32.totalorder %s18, 1
    %p204 = scmp.ne.s32.totalorder %s199, %s201
    %p205 = scmp.eq.s32.totalorder %s18, 0
    %p206 = por %p204, %p205
    %p207 = scmp.ne.s32.totalorder %s199, %s201
    %p208 = scmp.eq.s32.totalorder %s23, 1
    %p209 = por %p207, %p208
    %p210 = scmp.ne.s32.totalorder %s201, %s202
    %p211 = scmp.eq.s32.totalorder %s23, 0
    %p212 = por %p210, %p211
    %p213 = scmp.ne.s32.totalorder %s201, %s202
    %p214 = scmp.eq.s32.totalorder %s24, 1
    %p215 = por %p213, %p214
    %p217 = scmp.ne.s32.totalorder %s202, %s216
    %p218 = scmp.eq.s32.totalorder %s24, 0
    %p219 = por %p217, %p218
    %s221 = sadd.s32 %s220, 1
    %p224 = scmp.eq.s32.totalorder %s18, 1
    %p225 = scmp.ne.s32.totalorder %s220, %s222
    %p226 = scmp.eq.s32.totalorder %s18, 0
    %p227 = por %p225, %p226
    %p228 = scmp.ne.s32.totalorder %s220, %s222
    %p229 = scmp.eq.s32.totalorder %s23, 1
    %p230 = por %p228, %p229
    %p231 = scmp.ne.s32.totalorder %s222, %s223
    %p232 = scmp.eq.s32.totalorder %s23, 0
    %p233 = por %p231, %p232
    %p234 = scmp.ne.s32.totalorder %s222, %s223
    %p235 = scmp.eq.s32.totalorder %s24, 1
    %p236 = por %p234, %p235
    %p238 = scmp.ne.s32.totalorder %s223, %s237
    %p239 = scmp.eq.s32.totalorder %s24, 0
    %p240 = por %p238, %p239
    %s242 = sadd.s32 %s241, 1
    %p245 = scmp.eq.s32.totalorder %s18, 1
    %p246 = scmp.ne.s32.totalorder %s241, %s243
    %p247 = scmp.eq.s32.totalorder %s18, 0
    %p248 = por %p246, %p247
    %p249 = scmp.ne.s32.totalorder %s241, %s243
    %p250 = scmp.eq.s32.totalorder %s23, 1
    %p251 = por %p249, %p250
    %p252 = scmp.ne.s32.totalorder %s243, %s244
    %p253 = scmp.eq.s32.totalorder %s23, 0
    %p254 = por %p252, %p253
    %p255 = scmp.ne.s32.totalorder %s243, %s244
    %p256 = scmp.eq.s32.totalorder %s24, 1
    %p257 = por %p255, %p256
    %p259 = scmp.ne.s32.totalorder %s244, %s258
    %p260 = scmp.eq.s32.totalorder %s24, 0
    %p261 = por %p259, %p260
    %s263 = sadd.s32 %s262, 1
    %p266 = scmp.eq.s32.totalorder %s18, 1
    %p267 = scmp.ne.s32.totalorder %s262, %s264
    %p268 = scmp.eq.s32.totalorder %s18, 0
    %p269 = por %p267, %p268
    %p270 = scmp.ne.s32.totalorder %s262, %s264
    %p271 = scmp.eq.s32.totalorder %s23, 1
    %p272 = por %p270, %p271
    %p273 = scmp.ne.s32.totalorder %s264, %s265
    %p274 = scmp.eq.s32.totalorder %s23, 0
    %p275 = por %p273, %p274
    %p276 = scmp.ne.s32.totalorder %s264, %s265
    %p277 = scmp.eq.s32.totalorder %s24, 1
    %p278 = por %p276, %p277
    %p280 = scmp.ne.s32.totalorder %s265, %s279
    %p281 = scmp.eq.s32.totalorder %s24, 0
    %p282 = por %p280, %p281
    %s283 = ssub.s32 %s18, %s25
    %p284 = scmp.eq.s32.totalorder %s283, 0
    %s286 = sadd.s32 %s285, 1
    %s287 = scalar_select %p284, %s285, %s286
    %p290 = pneg %p284
    %p291 = scmp.eq.s32.totalorder %s18, 1
    %p292 = por %p290, %p291
    %p293 = scmp.ne.s32.totalorder %s285, %s288
    %p294 = scmp.eq.s32.totalorder %s18, 0
    %p295 = por %p293, %p294
    %p296 = scmp.ne.s32.totalorder %s285, %s288
    %p297 = scmp.eq.s32.totalorder %s23, 1
    %p298 = por %p296, %p297
    %p299 = scmp.ne.s32.totalorder %s288, %s289
    %p300 = scmp.eq.s32.totalorder %s23, 0
    %p301 = por %p299, %p300
    %p302 = scmp.ne.s32.totalorder %s288, %s289
    %p303 = scmp.eq.s32.totalorder %s24, 1
    %p304 = por %p302, %p303
    %p306 = scmp.ne.s32.totalorder %s289, %s305
    %p307 = scmp.eq.s32.totalorder %s24, 0
    %p308 = por %p306, %p307
    %p309 = scmp.le.s32.totalorder 1, %s18
    %p310 = scmp.lt.s32.totalorder %s18, 3
    %p311 = pnand %p309, %p310
    %p312 = pneg %p311
    // Predicated region
    $region9: #{vdn_forward.15} parent=5 // pred_check
      _
    $region10: #{vdn_forward.15} parent=5 // pred_check_branch
      %314 = sbr.rel (%p311) target = $region12
    $region11: #{vdn_forward.15} parent=5 // pred_region
      %s315 = ssub.s32 %s18, 1
      // Predicated region
      $region13: #{vdn_forward.15} parent=11 // pred_check
        %p316 = pneg %p39
      $region14: #{vdn_forward.15} parent=11 // pred_check_branch
        %318 = sbr.rel (%p316) target = $region16
      $region15: #{vdn_forward.15} parent=11 // pred_region
        _
      $region16: #{vdn_forward.15} parent=11 // pred_fallthru
        _
      // Predicated region
      $region17: #{vdn_forward.15} parent=11 // pred_check
        %p319 = pneg %p86
      $region18: #{vdn_forward.15} parent=11 // pred_check_branch
        %321 = sbr.rel (%p319) target = $region20
      $region19: #{vdn_forward.15} parent=11 // pred_region
        _
      $region20: #{vdn_forward.15} parent=11 // pred_fallthru
        _
      // Predicated region
      $region21: #{vdn_forward.15} parent=11 // pred_check
        %p322 = pneg %p107
      $region22: #{vdn_forward.15} parent=11 // pred_check_branch
        %324 = sbr.rel (%p322) target = $region24
      $region23: #{vdn_forward.15} parent=11 // pred_region
        _
      $region24: #{vdn_forward.15} parent=11 // pred_fallthru
        _
      // Predicated region
      $region25: #{vdn_forward.15} parent=11 // pred_check
        %p325 = pneg %p128
      $region26: #{vdn_forward.15} parent=11 // pred_check_branch
        %327 = sbr.rel (%p325) target = $region28
      $region27: #{vdn_forward.15} parent=11 // pred_region
        _
      $region28: #{vdn_forward.15} parent=11 // pred_fallthru
        _
      // Predicated region
      $region29: #{vdn_forward.15} parent=11 // pred_check
        %p328 = pneg %p149
      $region30: #{vdn_forward.15} parent=11 // pred_check_branch
        %330 = sbr.rel (%p328) target = $region32
      $region31: #{vdn_forward.15} parent=11 // pred_region
        _
      $region32: #{vdn_forward.15} parent=11 // pred_fallthru
        _
      // Predicated region
      $region33: #{vdn_forward.15} parent=11 // pred_check
        %p331 = pneg %p170
      $region34: #{vdn_forward.15} parent=11 // pred_check_branch
        %333 = sbr.rel (%p331) target = $region36
      $region35: #{vdn_forward.15} parent=11 // pred_region
        _
      $region36: #{vdn_forward.15} parent=11 // pred_fallthru
        _
      // Predicated region
      $region37: #{vdn_forward.15} parent=11 // pred_check
        %p334 = pneg %p191
      $region38: #{vdn_forward.15} parent=11 // pred_check_branch
        %336 = sbr.rel (%p334) target = $region40
      $region39: #{vdn_forward.15} parent=11 // pred_region
        _
      $region40: #{vdn_forward.15} parent=11 // pred_fallthru
        _
      // Predicated region
      $region41: #{vdn_forward.15} parent=11 // pred_check
        %p337 = pneg %p212
      $region42: #{vdn_forward.15} parent=11 // pred_check_branch
        %339 = sbr.rel (%p337) target = $region44
      $region43: #{vdn_forward.15} parent=11 // pred_region
        _
      $region44: #{vdn_forward.15} parent=11 // pred_fallthru
        _
      // Predicated region
      $region45: #{vdn_forward.15} parent=11 // pred_check
        %p340 = pneg %p233
      $region46: #{vdn_forward.15} parent=11 // pred_check_branch
        %342 = sbr.rel (%p340) target = $region48
      $region47: #{vdn_forward.15} parent=11 // pred_region
        _
      $region48: #{vdn_forward.15} parent=11 // pred_fallthru
        _
      // Predicated region
      $region49: #{vdn_forward.15} parent=11 // pred_check
        %p343 = pneg %p254
      $region50: #{vdn_forward.15} parent=11 // pred_check_branch
        %345 = sbr.rel (%p343) target = $region52
      $region51: #{vdn_forward.15} parent=11 // pred_region
        _
      $region52: #{vdn_forward.15} parent=11 // pred_fallthru
        _
      // Predicated region
      $region53: #{vdn_forward.15} parent=11 // pred_check
        %p346 = pneg %p275
      $region54: #{vdn_forward.15} parent=11 // pred_check_branch
        %348 = sbr.rel (%p346) target = $region56
      $region55: #{vdn_forward.15} parent=11 // pred_region
        _
      $region56: #{vdn_forward.15} parent=11 // pred_fallthru
        _
    $region12: #{vdn_forward.15} parent=5 // pred_fallthru
      _
    %p349 = scmp.lt.s32.totalorder %s18, 2
    // Predicated region
    $region57: #{vdn_forward.15} parent=5 // pred_check
      %p350 = pneg %p349
    $region58: #{vdn_forward.15} parent=5 // pred_check_branch
      %352 = sbr.rel (%p350) target = $region60
    $region59: #{vdn_forward.15} parent=5 // pred_region
      // Predicated region
      $region61: #{vdn_forward.15} parent=59 // pred_check
        %p353 = pneg %p59
      $region62: #{vdn_forward.15} parent=59 // pred_check_branch
        %355 = sbr.rel (%p353) target = $region64
      $region63: #{vdn_forward.15} parent=59 // pred_region
        %p356 = scmp.lt.s32.totalorder %s18, 1
        %s357 = scalar_select %p356, %s18, 1
        %s358 = smul.addr %s357, 2
        %s359 = smul.addr %s358, 4
        %s360 = scalar_lea.vmem %s1, %s359
      $region64: #{vdn_forward.15} parent=59 // pred_fallthru
        _
    $region60: #{vdn_forward.15} parent=5 // pred_fallthru
      _
    %p361 = scmp.le.s32.totalorder 1, %s18
    %p362 = scmp.lt.s32.totalorder %s18, 3
    %p363 = pnand %p361, %p362
    %p364 = pneg %p363
    // Predicated region
    $region65: #{vdn_forward.15} parent=5 // pred_check
      _
    $region66: #{vdn_forward.15} parent=5 // pred_check_branch
      %366 = sbr.rel (%p363) target = $region68
    $region67: #{vdn_forward.15} parent=5 // pred_region
      %s367 = ssub.s32 %s18, 1
      %p368 = pneg %p39
      %p369 = pneg %p36
      %p370 = scmp.lt.s32.totalorder %s23, 1
      %s371 = scalar_select %p370, %s23, 1
      %s372 = smul.addr %s371, 2
      %s373 = smul.addr %s372, 4
      %s374 = scalar_lea.vmem %s1, %s373
      %p375 = pneg %p65
      %p376 = pneg %p62
      %p377 = pneg %p86
      %p378 = pneg %p83
      %p379 = pneg %p107
      %p380 = pneg %p104
      %p381 = pneg %p128
      %p382 = pneg %p125
      %p383 = pneg %p149
      %p384 = pneg %p146
      %p385 = pneg %p170
      %p386 = pneg %p167
      %p387 = pneg %p191
      %p388 = pneg %p188
      %p389 = pneg %p212
      %p390 = pneg %p209
      %p391 = pneg %p233
      %p392 = pneg %p230
      %p393 = pneg %p254
      %p394 = pneg %p251
      %p395 = pneg %p275
      %p396 = pneg %p272
      %p397 = pneg %p301
      %p398 = pneg %p298
      %p399 = scmp.lt.s32.totalorder %s23, 1
      %s400 = scalar_select %p399, %s23, 1
      %s401 = smul.addr %s400, 2
      %s402 = smul.addr %s401, 8
      %s403 = scalar_lea.vmem %s12, %s402
      %p404 = scmp.lt.s32.totalorder %s23, 1
      %s405 = scalar_select %p404, %s23, 1
      %s406 = smul.addr %s405, 2
      %s407 = smul.addr %s406, 4
      %s408 = scalar_lea.vmem %s1, %s407
      %p409 = scmp.lt.s32.totalorder %s23, 1
      %s410 = scalar_select %p409, %s23, 1
      %s411 = smul.addr %s410, 2
      %s412 = smul.addr %s411, 8
      %s413 = scalar_lea.vmem %s12, %s412
      %415 = vst [vmem:[#allocation2] sm:$0xff] 0.0
      %416 = vst [vmem:[#allocation2 + $0x8] sm:$0xff] 0.0
      %417 = vst [vmem:[#allocation2 + $0x10] sm:$0xff] 0.0
      %418 = vst [vmem:[#allocation2 + $0x18] sm:$0xff] 0.0
      %419 = vst [vmem:[#allocation2 + $0x20] sm:$0xff] 0.0
      %420 = vst [vmem:[#allocation2 + $0x28] sm:$0xff] 0.0
      %421 = vst [vmem:[#allocation2 + $0x30] sm:$0xff] 0.0
      %422 = vst [vmem:[#allocation2 + $0x38] sm:$0xff] 0.0
      %v423 = vld [vmem:[%s0] ss:$2 sm:$0x3]
      %s424 = scalar_lea.vmem %s0, 1
      %v425 = vld [vmem:[%s424] ss:$2 sm:$0x3]
      %v426 = vld [vmem:[%s408] sm:$0xff]
      %v427 = vunpack.c.l.bf16 %v426
      %v428 = vunpack.c.h.bf16 %v426
      %429 = vst [vmem:[#allocation2 + $0x8] sm:$0xff] %v427
      %430 = vst [vmem:[#allocation2 + $0x10] sm:$0xff] %v428
      %v431 = vld [vmem:[#allocation2] sm:$0xff]
      %v432 = vld [vmem:[#allocation2 + $0x8] sm:$0xff]
      %v433 = vld [vmem:[#allocation2 + $0x10] sm:$0xff]
      %v434 = vld [vmem:[#allocation2 + $0x18] sm:$0xff]
      %v436 = vlaneseq
      %v437 = vshrl.u32 %v436, 7
      %v438 = vsub.s32 0, %v437
      %v439 = vrot.slane %v423, %v438
      %v440 = vlaneseq
      %v441 = vshrl.u32 %v440, 7
      %v442 = vsub.s32 1, %v441
      %v443 = vrot.slane %v423, %v442
      %444 = vrot.lane.b32.xlu0 %v439, 111
      %v445 = vpop.permute.xlu0 %444
      %446 = vrot.lane.b32.xlu0 %v443, 111
      %v447 = vpop.permute.xlu0 %446
      %vm448 = vcmask 908288
      %v449 = vsel %vm448, %v445, %v447
      %v453 = vmul.f32 %v431, %v445
      %v454 = vmul.f32 %v432, %v449
      %v455 = vmul.f32 %v433, %v447
      %v457 = vlaneseq
      %v458 = vshrl.u32 %v457, 7
      %v459 = vsub.s32 0, %v458
      %v460 = vrot.slane %v425, %v459
      %v461 = vlaneseq
      %v462 = vshrl.u32 %v461, 7
      %v463 = vsub.s32 1, %v462
      %v464 = vrot.slane %v425, %v463
      %465 = vrot.lane.b32.xlu0 %v460, 113
      %v466 = vpop.permute.xlu0 %465
      %467 = vrot.lane.b32.xlu0 %v464, 113
      %v468 = vpop.permute.xlu0 %467
      %vm469 = vcmask 924672
      %v470 = vsel %vm469, %v466, %v468
      %v474 = vmul.f32 %v431, %v466
      %v475 = vmul.f32 %v432, %v470
      %v476 = vmul.f32 %v433, %v468
      %477 = vrot.lane.b32.xlu0 %v439, 127
      %v478 = vpop.permute.xlu0 %477
      %479 = vrot.lane.b32.xlu0 %v443, 127
      %v480 = vpop.permute.xlu0 %479
      %vm481 = vcmask 1039360
      %v482 = vsel %vm481, %v478, %v480
      %v486 = vmul.f32 %v431, %v478
      %v487 = vmul.f32 %v432, %v482
      %v488 = vmul.f32 %v433, %v480
      %489 = vrot.lane.b32.xlu0 %v460, 1
      %v490 = vpop.permute.xlu0 %489
      %491 = vrot.lane.b32.xlu0 %v464, 1
      %v492 = vpop.permute.xlu0 %491
      %vm493 = vcmask 7168
      %v494 = vsel %vm493, %v490, %v492
      %v498 = vmul.f32 %v432, %v490
      %v499 = vmul.f32 %v433, %v494
      %v500 = vmul.f32 %v434, %v492
      %501 = vrot.lane.b32.xlu0 %v439, 15
      %v502 = vpop.permute.xlu0 %501
      %503 = vrot.lane.b32.xlu0 %v443, 15
      %v504 = vpop.permute.xlu0 %503
      %vm505 = vcmask 121856
      %v506 = vsel %vm505, %v502, %v504
      %v510 = vmul.f32 %v432, %v502
      %v511 = vmul.f32 %v433, %v506
      %v512 = vmul.f32 %v434, %v504
      %513 = vrot.lane.b32.xlu0 %v460, 17
      %v514 = vpop.permute.xlu0 %513
      %515 = vrot.lane.b32.xlu0 %v464, 17
      %v516 = vpop.permute.xlu0 %515
      %vm517 = vcmask 138240
      %v518 = vsel %vm517, %v514, %v516
      %v522 = vmul.f32 %v432, %v514
      %v523 = vmul.f32 %v433, %v518
      %v524 = vmul.f32 %v434, %v516
      %528 = vrot.lane.b32.xlu0 %v431, 127
      %v529 = vpop.permute.xlu0 %528
      %530 = vrot.lane.b32.xlu0 %v432, 127
      %v531 = vpop.permute.xlu0 %530
      %532 = vrot.lane.b32.xlu0 %v433, 127
      %v533 = vpop.permute.xlu0 %532
      %v534 = vsel %vm481, %v529, %v531
      %v535 = vsel %vm481, %v531, %v533
      %542 = vrot.lane.b32.xlu0 %v474, 126
      %v543 = vpop.permute.xlu0 %542
      %544 = vrot.lane.b32.xlu0 %v475, 126
      %v545 = vpop.permute.xlu0 %544
      %546 = vrot.lane.b32.xlu0 %v476, 126
      %v547 = vpop.permute.xlu0 %546
      %vm548 = vcmask 1031168
      %v549 = vsel %vm548, %v543, %v545
      %v550 = vsel %vm548, %v545, %v547
      %557 = vrot.lane.b32.xlu0 %v486, 112
      %v558 = vpop.permute.xlu0 %557
      %559 = vrot.lane.b32.xlu0 %v487, 112
      %v560 = vpop.permute.xlu0 %559
      %561 = vrot.lane.b32.xlu0 %v488, 112
      %v562 = vpop.permute.xlu0 %561
      %vm563 = vcmask 916480
      %v564 = vsel %vm563, %v558, %v560
      %v565 = vsel %vm563, %v560, %v562
      %569 = vrot.lane.b32.xlu0 %v432, 111
      %v570 = vpop.permute.xlu0 %569
      %571 = vrot.lane.b32.xlu0 %v433, 111
      %v572 = vpop.permute.xlu0 %571
      %v573 = vsel %vm448, %v570, %v572
      %580 = vrot.lane.b32.xlu0 %v498, 110
      %v581 = vpop.permute.xlu0 %580
      %582 = vrot.lane.b32.xlu0 %v499, 110
      %v583 = vpop.permute.xlu0 %582
      %584 = vrot.lane.b32.xlu0 %v500, 110
      %v585 = vpop.permute.xlu0 %584
      %vm586 = vcmask 900096
      %v587 = vsel %vm586, %v581, %v583
      %v588 = vsel %vm586, %v583, %v585
      %595 = vrot.lane.b32.xlu0 %v510, 96
      %v596 = vpop.permute.xlu0 %595
      %597 = vrot.lane.b32.xlu0 %v511, 96
      %v598 = vpop.permute.xlu0 %597
      %599 = vrot.lane.b32.xlu0 %v512, 96
      %v600 = vpop.permute.xlu0 %599
      %vm601 = vcmask 785408
      %v602 = vsel %vm601, %v596, %v598
      %v603 = vsel %vm601, %v598, %v600
      %608 = vrot.lane.b32.xlu0 %v432, 95
      %v609 = vpop.permute.xlu0 %608
      %610 = vrot.lane.b32.xlu0 %v433, 95
      %v611 = vpop.permute.xlu0 %610
      %612 = vrot.lane.b32.xlu0 %v434, 95
      %v613 = vpop.permute.xlu0 %612
      %vm614 = vcmask 777216
      %v615 = vsel %vm614, %v609, %v611
      %v616 = vsel %vm614, %v611, %v613
      %623 = vrot.lane.b32.xlu0 %v522, 94
      %v624 = vpop.permute.xlu0 %623
      %625 = vrot.lane.b32.xlu0 %v523, 94
      %v626 = vpop.permute.xlu0 %625
      %627 = vrot.lane.b32.xlu0 %v524, 94
      %v628 = vpop.permute.xlu0 %627
      %vm629 = vcmask 769024
      %v630 = vsel %vm629, %v624, %v626
      %v631 = vsel %vm629, %v626, %v628
      %v635 = vpack.c.bf16 %v534, %v453
      %v636 = vpack.c.bf16 %v535, %v454
      %v637 = vpack.c.bf16 %v533, %v455
      %v638 = vpack.c.bf16 %v564, %v549
      %v639 = vpack.c.bf16 %v565, %v550
      %v640 = vpack.c.bf16 %v562, %v547
      %v641 = vpack.c.bf16 %v581, %v570
      %v642 = vpack.c.bf16 %v587, %v573
      %v643 = vpack.c.bf16 %v588, %v572
      %v644 = vpack.c.bf16 %v609, %v596
      %v645 = vpack.c.bf16 %v615, %v602
      %v646 = vpack.c.bf16 %v616, %v603
      %v647 = vpack.c.bf16 %v624, %v624
      %v648 = vpack.c.bf16 %v630, %v630
      %v649 = vpack.c.bf16 %v631, %v631
      %v650 = vld [vmem:[%s2] sm:$0xf]
      %v651 = vld [vmem:[%s2 + $0x4] sm:$0xf]
      %v652 = vld [vmem:[%s7] sm:$0xff]
      %v653 = vld [vmem:[%s7 + $0x8] sm:$0xff]
      %655 = vset.pattern.permute.xlu0 0
      %656 = vperm.xlu0 %655, %v652
      %v657 = vpop.permute.xlu0 %656
      %660 = vset.pattern.permute.xlu0 0
      %661 = vperm.xlu0 %660, %v653
      %v662 = vpop.permute.xlu0 %661
      %v666 = vunpack.c.l.b16 %v650
      %v667 = vunpack.c.l.b16 %v651
      %v668 = vpack.c.b16 %v667, %v666
      %684 = vrot.lane.b32.xlu0 %v635, 17
      %v685 = vpop.permute.xlu0 %684
      %686 = vrot.lane.b32.xlu0 %v636, 17
      %v687 = vpop.permute.xlu0 %686
      %688 = vrot.lane.b32.xlu0 %v637, 17
      %v689 = vpop.permute.xlu0 %688
      %690 = vrot.lane.b32.xlu0 %v638, 17
      %v691 = vpop.permute.xlu0 %690
      %692 = vrot.lane.b32.xlu0 %v639, 17
      %v693 = vpop.permute.xlu0 %692
      %694 = vrot.lane.b32.xlu0 %v640, 17
      %v695 = vpop.permute.xlu0 %694
      %696 = vrot.lane.b32.xlu0 %v641, 17
      %v697 = vpop.permute.xlu0 %696
      %698 = vrot.lane.b32.xlu0 %v642, 17
      %v699 = vpop.permute.xlu0 %698
      %700 = vrot.lane.b32.xlu0 %v643, 17
      %v701 = vpop.permute.xlu0 %700
      %702 = vrot.lane.b32.xlu0 %v644, 17
      %v703 = vpop.permute.xlu0 %702
      %704 = vrot.lane.b32.xlu0 %v645, 17
      %v705 = vpop.permute.xlu0 %704
      %706 = vrot.lane.b32.xlu0 %v646, 17
      %v707 = vpop.permute.xlu0 %706
      %708 = vrot.lane.b32.xlu0 %v647, 17
      %v709 = vpop.permute.xlu0 %708
      %710 = vrot.lane.b32.xlu0 %v648, 17
      %v711 = vpop.permute.xlu0 %710
      %712 = vrot.lane.b32.xlu0 %v649, 17
      %v713 = vpop.permute.xlu0 %712
      %vm714 = vcmask 138240
      %v715 = vsel %vm714, %v685, %v687
      %v716 = vsel %vm714, %v687, %v689
      %v717 = vsel %vm714, %v691, %v693
      %v718 = vsel %vm714, %v693, %v695
      %v719 = vsel %vm714, %v697, %v699
      %v720 = vsel %vm714, %v699, %v701
      %v721 = vsel %vm714, %v703, %v705
      %v722 = vsel %vm714, %v705, %v707
      %v723 = vsel %vm714, %v709, %v711
      %v724 = vsel %vm714, %v711, %v713
      %vm733 = vcmask 588800
      %v735 = vsel %vm733, %v668, 0
      %vm737 = vcmask 1043456
      %v739 = vsel %vm737, %v723, 0
      %v742 = vsel %vm737, %v724, 0
      %744 = vmatprep.subr.bf16.mxu0 %v716
      %745 = vmatpush1.bf16.msra.mxu0 %v715
      %746 = vmatprep.subr.bf16.mxu0 %v718
      %747 = vmatpush1.bf16.msra.mxu0 %v717
      %748 = vmatprep.subr.bf16.mxu0 %v720
      %749 = vmatpush1.bf16.msra.mxu0 %v719
      %750 = vmatprep.subr.bf16.mxu0 %v722
      %751 = vmatpush1.bf16.msra.mxu0 %v721
      %752 = vmatprep.subr.bf16.mxu0 %v742
      %753 = vmatpush1.bf16.msra.mxu0 %v739
      %754 = vmatprep.subr.bf16.mxu0 0
      %755 = vmatpush1.bf16.msra.mxu0 0
      %756 = vmatprep.subr.bf16.mxu0 0
      %757 = vmatpush1.bf16.msra.mxu0 0
      %758 = vmatprep.subr.bf16.mxu0 0
      %759 = vmatpush1.bf16.msra.mxu0 0
      %760 = vmatprep.subr.bf16.mxu0 0
      %761 = vmatpush1.bf16.msra.mxu0 0
      %762 = vmatprep.subr.bf16.mxu0 0
      %763 = vmatpush1.bf16.msra.mxu0 0
      %764 = vmatprep.subr.bf16.mxu0 0
      %765 = vmatpush1.bf16.msra.mxu0 0
      %766 = vmatprep.subr.bf16.mxu0 0
      %767 = vmatpush1.bf16.msra.mxu0 0
      %768 = vmatprep.subr.bf16.mxu0 0
      %769 = vmatpush1.bf16.msra.mxu0 0
      %770 = vmatprep.subr.bf16.mxu0 0
      %771 = vmatpush1.bf16.msra.mxu0 0
      %772 = vmatprep.subr.bf16.mxu0 0
      %773 = vmatpush1.bf16.msra.mxu0 0
      %774 = vmatprep.subr.bf16.mxu0 0
      %775 = vmatpush1.bf16.msra.mxu0 0
      %776 = vmatprep.mubr.bf16.mxu0 0
      %777 = vmatmul.mubr.bf16.gmra.mrb[0].mxu0 %v735
      %v778 = vpop.f32.mrb[0].mxu0
      %v779 = vadd.f32 %v657, %v778
      %v780 = vpop.f32.mrb[0].mxu0
      %v781 = vadd.f32 %v657, %v780
      %v782 = vpop.f32.mrb[0].mxu0
      %v783 = vadd.f32 %v662, %v782
      %v784 = vpop.f32.mrb[0].mxu0
      %v785 = vadd.f32 %v662, %v784
      %786 = vdwg.mxu0
      %v787 = vmax.f32 %v779, 0.0
      %v788 = vmax.f32 %v781, 0.0
      %v789 = vmax.f32 %v783, 0.0
      %v790 = vmax.f32 %v785, 0.0
      %791 = vst [vmem:[#allocation2 + $0x8] sm:$0xff] %v787
      %792 = vst [vmem:[#allocation2 + $0x10] sm:$0xff] %v788
      %793 = vst [vmem:[#allocation2 + $0x28] sm:$0xff] %v789
      %794 = vst [vmem:[#allocation2 + $0x30] sm:$0xff] %v790
      %v795 = vld [vmem:[#allocation2] sm:$0xff]
      %v796 = vld [vmem:[#allocation2 + $0x8] sm:$0xff]
      %v797 = vld [vmem:[#allocation2 + $0x10] sm:$0xff]
      %v798 = vld [vmem:[#allocation2 + $0x18] sm:$0xff]
      %v799 = vld [vmem:[#allocation2 + $0x20] sm:$0xff]
      %v800 = vld [vmem:[#allocation2 + $0x28] sm:$0xff]
      %v801 = vld [vmem:[#allocation2 + $0x30] sm:$0xff]
      %v802 = vld [vmem:[#allocation2 + $0x38] sm:$0xff]
      %v803 = vmul.f32 %v795, %v445
      %v804 = vmul.f32 %v796, %v449
      %v805 = vmul.f32 %v797, %v447
      %v806 = vmul.f32 %v799, %v445
      %v807 = vmul.f32 %v800, %v449
      %v808 = vmul.f32 %v801, %v447
      %v809 = vmul.f32 %v795, %v466
      %v810 = vmul.f32 %v796, %v470
      %v811 = vmul.f32 %v797, %v468
      %v812 = vmul.f32 %v799, %v466
      %v813 = vmul.f32 %v800, %v470
      %v814 = vmul.f32 %v801, %v468
      %v815 = vmul.f32 %v795, %v478
      %v816 = vmul.f32 %v796, %v482
      %v817 = vmul.f32 %v797, %v480
      %v818 = vmul.f32 %v799, %v478
      %v819 = vmul.f32 %v800, %v482
      %v820 = vmul.f32 %v801, %v480
      %v821 = vmul.f32 %v796, %v490
      %v822 = vmul.f32 %v797, %v494
      %v823 = vmul.f32 %v798, %v492
      %v824 = vmul.f32 %v800, %v490
      %v825 = vmul.f32 %v801, %v494
      %v826 = vmul.f32 %v802, %v492
      %v827 = vmul.f32 %v796, %v502
      %v828 = vmul.f32 %v797, %v506
      %v829 = vmul.f32 %v798, %v504
      %v830 = vmul.f32 %v800, %v502
      %v831 = vmul.f32 %v801, %v506
      %v832 = vmul.f32 %v802, %v504
      %v833 = vmul.f32 %v796, %v514
      %v834 = vmul.f32 %v797, %v518
      %v835 = vmul.f32 %v798, %v516
      %v836 = vmul.f32 %v800, %v514
      %v837 = vmul.f32 %v801, %v518
      %v838 = vmul.f32 %v802, %v516
      %845 = vrot.lane.b32.xlu0 %v795, 127
      %v846 = vpop.permute.xlu0 %845
      %847 = vrot.lane.b32.xlu0 %v796, 127
      %v848 = vpop.permute.xlu0 %847
      %849 = vrot.lane.b32.xlu0 %v797, 127
      %v850 = vpop.permute.xlu0 %849
      %851 = vrot.lane.b32.xlu0 %v799, 127
      %v852 = vpop.permute.xlu0 %851
      %853 = vrot.lane.b32.xlu0 %v800, 127
      %v854 = vpop.permute.xlu0 %853
      %855 = vrot.lane.b32.xlu0 %v801, 127
      %v856 = vpop.permute.xlu0 %855
      %v857 = vsel %vm481, %v846, %v848
      %v858 = vsel %vm481, %v848, %v850
      %v859 = vsel %vm481, %v852, %v854
      %v860 = vsel %vm481, %v854, %v856
      %873 = vrot.lane.b32.xlu0 %v809, 126
      %v874 = vpop.permute.xlu0 %873
      %875 = vrot.lane.b32.xlu0 %v810, 126
      %v876 = vpop.permute.xlu0 %875
      %877 = vrot.lane.b32.xlu0 %v811, 126
      %v878 = vpop.permute.xlu0 %877
      %879 = vrot.lane.b32.xlu0 %v812, 126
      %v880 = vpop.permute.xlu0 %879
      %881 = vrot.lane.b32.xlu0 %v813, 126
      %v882 = vpop.permute.xlu0 %881
      %883 = vrot.lane.b32.xlu0 %v814, 126
      %v884 = vpop.permute.xlu0 %883
      %v885 = vsel %vm548, %v874, %v876
      %v886 = vsel %vm548, %v876, %v878
      %v887 = vsel %vm548, %v880, %v882
      %v888 = vsel %vm548, %v882, %v884
      %901 = vrot.lane.b32.xlu0 %v815, 112
      %v902 = vpop.permute.xlu0 %901
      %903 = vrot.lane.b32.xlu0 %v816, 112
      %v904 = vpop.permute.xlu0 %903
      %905 = vrot.lane.b32.xlu0 %v817, 112
      %v906 = vpop.permute.xlu0 %905
      %907 = vrot.lane.b32.xlu0 %v818, 112
      %v908 = vpop.permute.xlu0 %907
      %909 = vrot.lane.b32.xlu0 %v819, 112
      %v910 = vpop.permute.xlu0 %909
      %911 = vrot.lane.b32.xlu0 %v820, 112
      %v912 = vpop.permute.xlu0 %911
      %v913 = vsel %vm563, %v902, %v904
      %v914 = vsel %vm563, %v904, %v906
      %v915 = vsel %vm563, %v908, %v910
      %v916 = vsel %vm563, %v910, %v912
      %923 = vrot.lane.b32.xlu0 %v796, 111
      %v924 = vpop.permute.xlu0 %923
      %925 = vrot.lane.b32.xlu0 %v797, 111
      %v926 = vpop.permute.xlu0 %925
      %927 = vrot.lane.b32.xlu0 %v800, 111
      %v928 = vpop.permute.xlu0 %927
      %929 = vrot.lane.b32.xlu0 %v801, 111
      %v930 = vpop.permute.xlu0 %929
      %v931 = vsel %vm448, %v924, %v926
      %v932 = vsel %vm448, %v928, %v930
      %945 = vrot.lane.b32.xlu0 %v821, 110
      %v946 = vpop.permute.xlu0 %945
      %947 = vrot.lane.b32.xlu0 %v822, 110
      %v948 = vpop.permute.xlu0 %947
      %949 = vrot.lane.b32.xlu0 %v823, 110
      %v950 = vpop.permute.xlu0 %949
      %951 = vrot.lane.b32.xlu0 %v824, 110
      %v952 = vpop.permute.xlu0 %951
      %953 = vrot.lane.b32.xlu0 %v825, 110
      %v954 = vpop.permute.xlu0 %953
      %955 = vrot.lane.b32.xlu0 %v826, 110
      %v956 = vpop.permute.xlu0 %955
      %v957 = vsel %vm586, %v946, %v948
      %v958 = vsel %vm586, %v948, %v950
      %v959 = vsel %vm586, %v952, %v954
      %v960 = vsel %vm586, %v954, %v956
      %973 = vrot.lane.b32.xlu0 %v827, 96
      %v974 = vpop.permute.xlu0 %973
      %975 = vrot.lane.b32.xlu0 %v828, 96
      %v976 = vpop.permute.xlu0 %975
      %977 = vrot.lane.b32.xlu0 %v829, 96
      %v978 = vpop.permute.xlu0 %977
      %979 = vrot.lane.b32.xlu0 %v830, 96
      %v980 = vpop.permute.xlu0 %979
      %981 = vrot.lane.b32.xlu0 %v831, 96
      %v982 = vpop.permute.xlu0 %981
      %983 = vrot.lane.b32.xlu0 %v832, 96
      %v984 = vpop.permute.xlu0 %983
      %v985 = vsel %vm601, %v974, %v976
      %v986 = vsel %vm601, %v976, %v978
      %v987 = vsel %vm601, %v980, %v982
      %v988 = vsel %vm601, %v982, %v984
      %997 = vrot.lane.b32.xlu0 %v796, 95
      %v998 = vpop.permute.xlu0 %997
      %999 = vrot.lane.b32.xlu0 %v797, 95
      %v1000 = vpop.permute.xlu0 %999
      %1001 = vrot.lane.b32.xlu0 %v798, 95
      %v1002 = vpop.permute.xlu0 %1001
      %1003 = vrot.lane.b32.xlu0 %v800, 95
      %v1004 = vpop.permute.xlu0 %1003
      %1005 = vrot.lane.b32.xlu0 %v801, 95
      %v1006 = vpop.permute.xlu0 %1005
      %1007 = vrot.lane.b32.xlu0 %v802, 95
      %v1008 = vpop.permute.xlu0 %1007
      %v1009 = vsel %vm614, %v998, %v1000
      %v1010 = vsel %vm614, %v1000, %v1002
      %v1011 = vsel %vm614, %v1004, %v1006
      %v1012 = vsel %vm614, %v1006, %v1008
      %1025 = vrot.lane.b32.xlu0 %v833, 94
      %v1026 = vpop.permute.xlu0 %1025
      %1027 = vrot.lane.b32.xlu0 %v834, 94
      %v1028 = vpop.permute.xlu0 %1027
      %1029 = vrot.lane.b32.xlu0 %v835, 94
      %v1030 = vpop.permute.xlu0 %1029
      %1031 = vrot.lane.b32.xlu0 %v836, 94
      %v1032 = vpop.permute.xlu0 %1031
      %1033 = vrot.lane.b32.xlu0 %v837, 94
      %v1034 = vpop.permute.xlu0 %1033
      %1035 = vrot.lane.b32.xlu0 %v838, 94
      %v1036 = vpop.permute.xlu0 %1035
      %v1037 = vsel %vm629, %v1026, %v1028
      %v1038 = vsel %vm629, %v1028, %v1030
      %v1039 = vsel %vm629, %v1032, %v1034
      %v1040 = vsel %vm629, %v1034, %v1036
      %v1047 = vpack.c.bf16 %v806, %v803
      %v1048 = vpack.c.bf16 %v807, %v804
      %v1049 = vpack.c.bf16 %v808, %v805
      %v1050 = vpack.c.bf16 %v859, %v857
      %v1051 = vpack.c.bf16 %v860, %v858
      %v1052 = vpack.c.bf16 %v856, %v850
      %v1053 = vpack.c.bf16 %v887, %v885
      %v1054 = vpack.c.bf16 %v888, %v886
      %v1055 = vpack.c.bf16 %v884, %v878
      %v1056 = vpack.c.bf16 %v915, %v913
      %v1057 = vpack.c.bf16 %v916, %v914
      %v1058 = vpack.c.bf16 %v912, %v906
      %v1059 = vpack.c.bf16 %v928, %v924
      %v1060 = vpack.c.bf16 %v932, %v931
      %v1061 = vpack.c.bf16 %v930, %v926
      %v1062 = vpack.c.bf16 %v952, %v946
      %v1063 = vpack.c.bf16 %v959, %v957
      %v1064 = vpack.c.bf16 %v960, %v958
      %v1065 = vpack.c.bf16 %v980, %v974
      %v1066 = vpack.c.bf16 %v987, %v985
      %v1067 = vpack.c.bf16 %v988, %v986
      %v1068 = vpack.c.bf16 %v1004, %v998
      %v1069 = vpack.c.bf16 %v1011, %v1009
      %v1070 = vpack.c.bf16 %v1012, %v1010
      %v1071 = vpack.c.bf16 %v1032, %v1026
      %v1072 = vpack.c.bf16 %v1039, %v1037
      %v1073 = vpack.c.bf16 %v1040, %v1038
      %v1074 = vld [vmem:[%s3] sm:$0xff]
      %v1075 = vld [vmem:[%s3 + $0x8] sm:$0xff]
      %v1076 = vld [vmem:[%s8] sm:$0xff]
      %v1077 = vld [vmem:[%s8 + $0x8] sm:$0xff]
      %1079 = vset.pattern.permute.xlu0 0
      %1080 = vperm.xlu0 %1079, %v1076
      %v1081 = vpop.permute.xlu0 %1080
      %1084 = vset.pattern.permute.xlu0 0
      %1085 = vperm.xlu0 %1084, %v1077
      %v1086 = vpop.permute.xlu0 %1085
      %v1090 = vunpack.c.l.b16 %v1074
      %v1091 = vunpack.c.h.b16 %v1074
      %v1092 = vunpack.c.l.b16 %v1075
      %v1093 = vunpack.c.h.b16 %v1075
      %v1094 = vpack.c.b16 %v1092, %v1090
      %v1095 = vpack.c.b16 %v1093, %v1091
      %1124 = vrot.lane.b32.xlu0 %v1047, 17
      %v1125 = vpop.permute.xlu0 %1124
      %1126 = vrot.lane.b32.xlu0 %v1048, 17
      %v1127 = vpop.permute.xlu0 %1126
      %1128 = vrot.lane.b32.xlu0 %v1049, 17
      %v1129 = vpop.permute.xlu0 %1128
      %1130 = vrot.lane.b32.xlu0 %v1050, 17
      %v1131 = vpop.permute.xlu0 %1130
      %1132 = vrot.lane.b32.xlu0 %v1051, 17
      %v1133 = vpop.permute.xlu0 %1132
      %1134 = vrot.lane.b32.xlu0 %v1052, 17
      %v1135 = vpop.permute.xlu0 %1134
      %1136 = vrot.lane.b32.xlu0 %v1053, 17
      %v1137 = vpop.permute.xlu0 %1136
      %1138 = vrot.lane.b32.xlu0 %v1054, 17
      %v1139 = vpop.permute.xlu0 %1138
      %1140 = vrot.lane.b32.xlu0 %v1055, 17
      %v1141 = vpop.permute.xlu0 %1140
      %1142 = vrot.lane.b32.xlu0 %v1056, 17
      %v1143 = vpop.permute.xlu0 %1142
      %1144 = vrot.lane.b32.xlu0 %v1057, 17
      %v1145 = vpop.permute.xlu0 %1144
      %1146 = vrot.lane.b32.xlu0 %v1058, 17
      %v1147 = vpop.permute.xlu0 %1146
      %1148 = vrot.lane.b32.xlu0 %v1059, 17
      %v1149 = vpop.permute.xlu0 %1148
      %1150 = vrot.lane.b32.xlu0 %v1060, 17
      %v1151 = vpop.permute.xlu0 %1150
      %1152 = vrot.lane.b32.xlu0 %v1061, 17
      %v1153 = vpop.permute.xlu0 %1152
      %1154 = vrot.lane.b32.xlu0 %v1062, 17
      %v1155 = vpop.permute.xlu0 %1154
      %1156 = vrot.lane.b32.xlu0 %v1063, 17
      %v1157 = vpop.permute.xlu0 %1156
      %1158 = vrot.lane.b32.xlu0 %v1064, 17
      %v1159 = vpop.permute.xlu0 %1158
      %1160 = vrot.lane.b32.xlu0 %v1065, 17
      %v1161 = vpop.permute.xlu0 %1160
      %1162 = vrot.lane.b32.xlu0 %v1066, 17
      %v1163 = vpop.permute.xlu0 %1162
      %1164 = vrot.lane.b32.xlu0 %v1067, 17
      %v1165 = vpop.permute.xlu0 %1164
      %1166 = vrot.lane.b32.xlu0 %v1068, 17
      %v1167 = vpop.permute.xlu0 %1166
      %1168 = vrot.lane.b32.xlu0 %v1069, 17
      %v1169 = vpop.permute.xlu0 %1168
      %1170 = vrot.lane.b32.xlu0 %v1070, 17
      %v1171 = vpop.permute.xlu0 %1170
      %1172 = vrot.lane.b32.xlu0 %v1071, 17
      %v1173 = vpop.permute.xlu0 %1172
      %1174 = vrot.lane.b32.xlu0 %v1072, 17
      %v1175 = vpop.permute.xlu0 %1174
      %1176 = vrot.lane.b32.xlu0 %v1073, 17
      %v1177 = vpop.permute.xlu0 %1176
      %v1178 = vsel %vm714, %v1125, %v1127
      %v1179 = vsel %vm714, %v1127, %v1129
      %v1180 = vsel %vm714, %v1131, %v1133
      %v1181 = vsel %vm714, %v1133, %v1135
      %v1182 = vsel %vm714, %v1137, %v1139
      %v1183 = vsel %vm714, %v1139, %v1141
      %v1184 = vsel %vm714, %v1143, %v1145
      %v1185 = vsel %vm714, %v1145, %v1147
      %v1186 = vsel %vm714, %v1149, %v1151
      %v1187 = vsel %vm714, %v1151, %v1153
      %v1188 = vsel %vm714, %v1155, %v1157
      %v1189 = vsel %vm714, %v1157, %v1159
      %v1190 = vsel %vm714, %v1161, %v1163
      %v1191 = vsel %vm714, %v1163, %v1165
      %v1192 = vsel %vm714, %v1167, %v1169
      %v1193 = vsel %vm714, %v1169, %v1171
      %v1194 = vsel %vm714, %v1173, %v1175
      %v1195 = vsel %vm714, %v1175, %v1177
      %vm1214 = vcmask 130048
      %v1216 = vsel %vm1214, %v1095, 0
      %1218 = vmatprep.subr.bf16.mxu0 %v1179
      %1219 = vmatpush1.bf16.msra.mxu0 %v1178
      %1220 = vmatprep.subr.bf16.mxu0 %v1181
      %1221 = vmatpush1.bf16.msra.mxu0 %v1180
      %1222 = vmatprep.subr.bf16.mxu0 %v1183
      %1223 = vmatpush1.bf16.msra.mxu0 %v1182
      %1224 = vmatprep.subr.bf16.mxu0 %v1185
      %1225 = vmatpush1.bf16.msra.mxu0 %v1184
      %1226 = vmatprep.subr.bf16.mxu0 %v1187
      %1227 = vmatpush1.bf16.msra.mxu0 %v1186
      %1228 = vmatprep.subr.bf16.mxu0 %v1189
      %1229 = vmatpush1.bf16.msra.mxu0 %v1188
      %1230 = vmatprep.subr.bf16.mxu0 %v1191
      %1231 = vmatpush1.bf16.msra.mxu0 %v1190
      %1232 = vmatprep.subr.bf16.mxu0 %v1193
      %1233 = vmatpush1.bf16.msra.mxu0 %v1192
      %1234 = vmatprep.subr.bf16.mxu0 %v1195
      %1235 = vmatpush1.bf16.msra.mxu0 %v1194
      %1236 = vmatprep.subr.bf16.mxu0 0
      %1237 = vmatpush1.bf16.msra.mxu0 0
      %1238 = vmatprep.subr.bf16.mxu0 0
      %1239 = vmatpush1.bf16.msra.mxu0 0
      %1240 = vmatprep.subr.bf16.mxu0 0
      %1241 = vmatpush1.bf16.msra.mxu0 0
      %1242 = vmatprep.subr.bf16.mxu0 0
      %1243 = vmatpush1.bf16.msra.mxu0 0
      %1244 = vmatprep.subr.bf16.mxu0 0
      %1245 = vmatpush1.bf16.msra.mxu0 0
      %1246 = vmatprep.subr.bf16.mxu0 0
      %1247 = vmatpush1.bf16.msra.mxu0 0
      %1248 = vmatprep.subr.bf16.mxu0 0
      %1249 = vmatpush1.bf16.msra.mxu0 0
      %1250 = vmatprep.mubr.bf16.mxu0 %v1216
      %1251 = vmatmul.mubr.bf16.gmra.mrb[0].mxu0 %v1094
      %v1252 = vpop.f32.mrb[0].mxu0
      %v1253 = vadd.f32 %v1081, %v1252
      %v1254 = vpop.f32.mrb[0].mxu0
      %v1255 = vadd.f32 %v1081, %v1254
      %v1256 = vpop.f32.mrb[0].mxu0
      %v1257 = vadd.f32 %v1086, %v1256
      %v1258 = vpop.f32.mrb[0].mxu0
      %v1259 = vadd.f32 %v1086, %v1258
      %1260 = vdwg.mxu0
      %v1261 = vmax.f32 %v1253, 0.0
      %v1262 = vmax.f32 %v1255, 0.0
      %v1263 = vmax.f32 %v1257, 0.0
      %v1264 = vmax.f32 %v1259, 0.0
      %1265 = vst [vmem:[#allocation2 + $0x8] sm:$0xff] %v1261
      %1266 = vst [vmem:[#allocation2 + $0x10] sm:$0xff] %v1262
      %1267 = vst [vmem:[#allocation2 + $0x28] sm:$0xff] %v1263
      %1268 = vst [vmem:[#allocation2 + $0x30] sm:$0xff] %v1264
      %v1269 = vld [vmem:[#allocation2] sm:$0xff]
      %v1270 = vld [vmem:[#allocation2 + $0x8] sm:$0xff]
      %v1271 = vld [vmem:[#allocation2 + $0x10] sm:$0xff]
      %v1272 = vld [vmem:[#allocation2 + $0x18] sm:$0xff]
      %v1273 = vld [vmem:[#allocation2 + $0x20] sm:$0xff]
      %v1274 = vld [vmem:[#allocation2 + $0x28] sm:$0xff]
      %v1275 = vld [vmem:[#allocation2 + $0x30] sm:$0xff]
      %v1276 = vld [vmem:[#allocation2 + $0x38] sm:$0xff]
      %v1277 = vmul.f32 %v1269, %v445
      %v1278 = vmul.f32 %v1270, %v449
      %v1279 = vmul.f32 %v1271, %v447
      %v1280 = vmul.f32 %v1273, %v445
      %v1281 = vmul.f32 %v1274, %v449
      %v1282 = vmul.f32 %v1275, %v447
      %v1283 = vmul.f32 %v1269, %v466
      %v1284 = vmul.f32 %v1270, %v470
      %v1285 = vmul.f32 %v1271, %v468
      %v1286 = vmul.f32 %v1273, %v466
      %v1287 = vmul.f32 %v1274, %v470
      %v1288 = vmul.f32 %v1275, %v468
      %v1289 = vmul.f32 %v1269, %v478
      %v1290 = vmul.f32 %v1270, %v482
      %v1291 = vmul.f32 %v1271, %v480
      %v1292 = vmul.f32 %v1273, %v478
      %v1293 = vmul.f32 %v1274, %v482
      %v1294 = vmul.f32 %v1275, %v480
      %v1295 = vmul.f32 %v1270, %v490
      %v1296 = vmul.f32 %v1271, %v494
      %v1297 = vmul.f32 %v1272, %v492
      %v1298 = vmul.f32 %v1274, %v490
      %v1299 = vmul.f32 %v1275, %v494
      %v1300 = vmul.f32 %v1276, %v492
      %v1301 = vmul.f32 %v1270, %v502
      %v1302 = vmul.f32 %v1271, %v506
      %v1303 = vmul.f32 %v1272, %v504
      %v1304 = vmul.f32 %v1274, %v502
      %v1305 = vmul.f32 %v1275, %v506
      %v1306 = vmul.f32 %v1276, %v504
      %v1307 = vmul.f32 %v1270, %v514
      %v1308 = vmul.f32 %v1271, %v518
      %v1309 = vmul.f32 %v1272, %v516
      %v1310 = vmul.f32 %v1274, %v514
      %v1311 = vmul.f32 %v1275, %v518
      %v1312 = vmul.f32 %v1276, %v516
      %1319 = vrot.lane.b32.xlu0 %v1269, 127
      %v1320 = vpop.permute.xlu0 %1319
      %1321 = vrot.lane.b32.xlu0 %v1270, 127
      %v1322 = vpop.permute.xlu0 %1321
      %1323 = vrot.lane.b32.xlu0 %v1271, 127
      %v1324 = vpop.permute.xlu0 %1323
      %1325 = vrot.lane.b32.xlu0 %v1273, 127
      %v1326 = vpop.permute.xlu0 %1325
      %1327 = vrot.lane.b32.xlu0 %v1274, 127
      %v1328 = vpop.permute.xlu0 %1327
      %1329 = vrot.lane.b32.xlu0 %v1275, 127
      %v1330 = vpop.permute.xlu0 %1329
      %v1331 = vsel %vm481, %v1320, %v1322
      %v1332 = vsel %vm481, %v1322, %v1324
      %v1333 = vsel %vm481, %v1326, %v1328
      %v1334 = vsel %vm481, %v1328, %v1330
      %1347 = vrot.lane.b32.xlu0 %v1283, 126
      %v1348 = vpop.permute.xlu0 %1347
      %1349 = vrot.lane.b32.xlu0 %v1284, 126
      %v1350 = vpop.permute.xlu0 %1349
      %1351 = vrot.lane.b32.xlu0 %v1285, 126
      %v1352 = vpop.permute.xlu0 %1351
      %1353 = vrot.lane.b32.xlu0 %v1286, 126
      %v1354 = vpop.permute.xlu0 %1353
      %1355 = vrot.lane.b32.xlu0 %v1287, 126
      %v1356 = vpop.permute.xlu0 %1355
      %1357 = vrot.lane.b32.xlu0 %v1288, 126
      %v1358 = vpop.permute.xlu0 %1357
      %v1359 = vsel %vm548, %v1348, %v1350
      %v1360 = vsel %vm548, %v1350, %v1352
      %v1361 = vsel %vm548, %v1354, %v1356
      %v1362 = vsel %vm548, %v1356, %v1358
      %1375 = vrot.lane.b32.xlu0 %v1289, 112
      %v1376 = vpop.permute.xlu0 %1375
      %1377 = vrot.lane.b32.xlu0 %v1290, 112
      %v1378 = vpop.permute.xlu0 %1377
      %1379 = vrot.lane.b32.xlu0 %v1291, 112
      %v1380 = vpop.permute.xlu0 %1379
      %1381 = vrot.lane.b32.xlu0 %v1292, 112
      %v1382 = vpop.permute.xlu0 %1381
      %1383 = vrot.lane.b32.xlu0 %v1293, 112
      %v1384 = vpop.permute.xlu0 %1383
      %1385 = vrot.lane.b32.xlu0 %v1294, 112
      %v1386 = vpop.permute.xlu0 %1385
      %v1387 = vsel %vm563, %v1376, %v1378
      %v1388 = vsel %vm563, %v1378, %v1380
      %v1389 = vsel %vm563, %v1382, %v1384
      %v1390 = vsel %vm563, %v1384, %v1386
      %1397 = vrot.lane.b32.xlu0 %v1270, 111
      %v1398 = vpop.permute.xlu0 %1397
      %1399 = vrot.lane.b32.xlu0 %v1271, 111
      %v1400 = vpop.permute.xlu0 %1399
      %1401 = vrot.lane.b32.xlu0 %v1274, 111
      %v1402 = vpop.permute.xlu0 %1401
      %1403 = vrot.lane.b32.xlu0 %v1275, 111
      %v1404 = vpop.permute.xlu0 %1403
      %v1405 = vsel %vm448, %v1398, %v1400
      %v1406 = vsel %vm448, %v1402, %v1404
      %1419 = vrot.lane.b32.xlu0 %v1295, 110
      %v1420 = vpop.permute.xlu0 %1419
      %1421 = vrot.lane.b32.xlu0 %v1296, 110
      %v1422 = vpop.permute.xlu0 %1421
      %1423 = vrot.lane.b32.xlu0 %v1297, 110
      %v1424 = vpop.permute.xlu0 %1423
      %1425 = vrot.lane.b32.xlu0 %v1298, 110
      %v1426 = vpop.permute.xlu0 %1425
      %1427 = vrot.lane.b32.xlu0 %v1299, 110
      %v1428 = vpop.permute.xlu0 %1427
      %1429 = vrot.lane.b32.xlu0 %v1300, 110
      %v1430 = vpop.permute.xlu0 %1429
      %v1431 = vsel %vm586, %v1420, %v1422
      %v1432 = vsel %vm586, %v1422, %v1424
      %v1433 = vsel %vm586, %v1426, %v1428
      %v1434 = vsel %vm586, %v1428, %v1430
      %1447 = vrot.lane.b32.xlu0 %v1301, 96
      %v1448 = vpop.permute.xlu0 %1447
      %1449 = vrot.lane.b32.xlu0 %v1302, 96
      %v1450 = vpop.permute.xlu0 %1449
      %1451 = vrot.lane.b32.xlu0 %v1303, 96
      %v1452 = vpop.permute.xlu0 %1451
      %1453 = vrot.lane.b32.xlu0 %v1304, 96
      %v1454 = vpop.permute.xlu0 %1453
      %1455 = vrot.lane.b32.xlu0 %v1305, 96
      %v1456 = vpop.permute.xlu0 %1455
      %1457 = vrot.lane.b32.xlu0 %v1306, 96
      %v1458 = vpop.permute.xlu0 %1457
      %v1459 = vsel %vm601, %v1448, %v1450
      %v1460 = vsel %vm601, %v1450, %v1452
      %v1461 = vsel %vm601, %v1454, %v1456
      %v1462 = vsel %vm601, %v1456, %v1458
      %1471 = vrot.lane.b32.xlu0 %v1270, 95
      %v1472 = vpop.permute.xlu0 %1471
      %1473 = vrot.lane.b32.xlu0 %v1271, 95
      %v1474 = vpop.permute.xlu0 %1473
      %1475 = vrot.lane.b32.xlu0 %v1272, 95
      %v1476 = vpop.permute.xlu0 %1475
      %1477 = vrot.lane.b32.xlu0 %v1274, 95
      %v1478 = vpop.permute.xlu0 %1477
      %1479 = vrot.lane.b32.xlu0 %v1275, 95
      %v1480 = vpop.permute.xlu0 %1479
      %1481 = vrot.lane.b32.xlu0 %v1276, 95
      %v1482 = vpop.permute.xlu0 %1481
      %v1483 = vsel %vm614, %v1472, %v1474
      %v1484 = vsel %vm614, %v1474, %v1476
      %v1485 = vsel %vm614, %v1478, %v1480
      %v1486 = vsel %vm614, %v1480, %v1482
      %1499 = vrot.lane.b32.xlu0 %v1307, 94
      %v1500 = vpop.permute.xlu0 %1499
      %1501 = vrot.lane.b32.xlu0 %v1308, 94
      %v1502 = vpop.permute.xlu0 %1501
      %1503 = vrot.lane.b32.xlu0 %v1309, 94
      %v1504 = vpop.permute.xlu0 %1503
      %1505 = vrot.lane.b32.xlu0 %v1310, 94
      %v1506 = vpop.permute.xlu0 %1505
      %1507 = vrot.lane.b32.xlu0 %v1311, 94
      %v1508 = vpop.permute.xlu0 %1507
      %1509 = vrot.lane.b32.xlu0 %v1312, 94
      %v1510 = vpop.permute.xlu0 %1509
      %v1511 = vsel %vm629, %v1500, %v1502
      %v1512 = vsel %vm629, %v1502, %v1504
      %v1513 = vsel %vm629, %v1506, %v1508
      %v1514 = vsel %vm629, %v1508, %v1510
      %v1521 = vpack.c.bf16 %v1280, %v1277
      %v1522 = vpack.c.bf16 %v1281, %v1278
      %v1523 = vpack.c.bf16 %v1282, %v1279
      %v1524 = vpack.c.bf16 %v1333, %v1331
      %v1525 = vpack.c.bf16 %v1334, %v1332
      %v1526 = vpack.c.bf16 %v1330, %v1324
      %v1527 = vpack.c.bf16 %v1361, %v1359
      %v1528 = vpack.c.bf16 %v1362, %v1360
      %v1529 = vpack.c.bf16 %v1358, %v1352
      %v1530 = vpack.c.bf16 %v1389, %v1387
      %v1531 = vpack.c.bf16 %v1390, %v1388
      %v1532 = vpack.c.bf16 %v1386, %v1380
      %v1533 = vpack.c.bf16 %v1402, %v1398
      %v1534 = vpack.c.bf16 %v1406, %v1405
      %v1535 = vpack.c.bf16 %v1404, %v1400
      %v1536 = vpack.c.bf16 %v1426, %v1420
      %v1537 = vpack.c.bf16 %v1433, %v1431
      %v1538 = vpack.c.bf16 %v1434, %v1432
      %v1539 = vpack.c.bf16 %v1454, %v1448
      %v1540 = vpack.c.bf16 %v1461, %v1459
      %v1541 = vpack.c.bf16 %v1462, %v1460
      %v1542 = vpack.c.bf16 %v1478, %v1472
      %v1543 = vpack.c.bf16 %v1485, %v1483
      %v1544 = vpack.c.bf16 %v1486, %v1484
      %v1545 = vpack.c.bf16 %v1506, %v1500
      %v1546 = vpack.c.bf16 %v1513, %v1511
      %v1547 = vpack.c.bf16 %v1514, %v1512
      %v1548 = vld [vmem:[%s4] sm:$0xff]
      %v1549 = vld [vmem:[%s4 + $0x8] sm:$0xff]
      %v1550 = vld [vmem:[%s9] sm:$0xff]
      %v1551 = vld [vmem:[%s9 + $0x8] sm:$0xff]
      %1553 = vset.pattern.permute.xlu0 0
      %1554 = vperm.xlu0 %1553, %v1550
      %v1555 = vpop.permute.xlu0 %1554
      %1558 = vset.pattern.permute.xlu0 0
      %1559 = vperm.xlu0 %1558, %v1551
      %v1560 = vpop.permute.xlu0 %1559
      %v1564 = vunpack.c.l.b16 %v1548
      %v1565 = vunpack.c.h.b16 %v1548
      %v1566 = vunpack.c.l.b16 %v1549
      %v1567 = vunpack.c.h.b16 %v1549
      %v1568 = vpack.c.b16 %v1566, %v1564
      %v1569 = vpack.c.b16 %v1567, %v1565
      %1598 = vrot.lane.b32.xlu0 %v1521, 17
      %v1599 = vpop.permute.xlu0 %1598
      %1600 = vrot.lane.b32.xlu0 %v1522, 17
      %v1601 = vpop.permute.xlu0 %1600
      %1602 = vrot.lane.b32.xlu0 %v1523, 17
      %v1603 = vpop.permute.xlu0 %1602
      %1604 = vrot.lane.b32.xlu0 %v1524, 17
      %v1605 = vpop.permute.xlu0 %1604
      %1606 = vrot.lane.b32.xlu0 %v1525, 17
      %v1607 = vpop.permute.xlu0 %1606
      %1608 = vrot.lane.b32.xlu0 %v1526, 17
      %v1609 = vpop.permute.xlu0 %1608
      %1610 = vrot.lane.b32.xlu0 %v1527, 17
      %v1611 = vpop.permute.xlu0 %1610
      %1612 = vrot.lane.b32.xlu0 %v1528, 17
      %v1613 = vpop.permute.xlu0 %1612
      %1614 = vrot.lane.b32.xlu0 %v1529, 17
      %v1615 = vpop.permute.xlu0 %1614
      %1616 = vrot.lane.b32.xlu0 %v1530, 17
      %v1617 = vpop.permute.xlu0 %1616
      %1618 = vrot.lane.b32.xlu0 %v1531, 17
      %v1619 = vpop.permute.xlu0 %1618
      %1620 = vrot.lane.b32.xlu0 %v1532, 17
      %v1621 = vpop.permute.xlu0 %1620
      %1622 = vrot.lane.b32.xlu0 %v1533, 17
      %v1623 = vpop.permute.xlu0 %1622
      %1624 = vrot.lane.b32.xlu0 %v1534, 17
      %v1625 = vpop.permute.xlu0 %1624
      %1626 = vrot.lane.b32.xlu0 %v1535, 17
      %v1627 = vpop.permute.xlu0 %1626
      %1628 = vrot.lane.b32.xlu0 %v1536, 17
      %v1629 = vpop.permute.xlu0 %1628
      %1630 = vrot.lane.b32.xlu0 %v1537, 17
      %v1631 = vpop.permute.xlu0 %1630
      %1632 = vrot.lane.b32.xlu0 %v1538, 17
      %v1633 = vpop.permute.xlu0 %1632
      %1634 = vrot.lane.b32.xlu0 %v1539, 17
      %v1635 = vpop.permute.xlu0 %1634
      %1636 = vrot.lane.b32.xlu0 %v1540, 17
      %v1637 = vpop.permute.xlu0 %1636
      %1638 = vrot.lane.b32.xlu0 %v1541, 17
      %v1639 = vpop.permute.xlu0 %1638
      %1640 = vrot.lane.b32.xlu0 %v1542, 17
      %v1641 = vpop.permute.xlu0 %1640
      %1642 = vrot.lane.b32.xlu0 %v1543, 17
      %v1643 = vpop.permute.xlu0 %1642
      %1644 = vrot.lane.b32.xlu0 %v1544, 17
      %v1645 = vpop.permute.xlu0 %1644
      %1646 = vrot.lane.b32.xlu0 %v1545, 17
      %v1647 = vpop.permute.xlu0 %1646
      %1648 = vrot.lane.b32.xlu0 %v1546, 17
      %v1649 = vpop.permute.xlu0 %1648
      %1650 = vrot.lane.b32.xlu0 %v1547, 17
      %v1651 = vpop.permute.xlu0 %1650
      %v1652 = vsel %vm714, %v1599, %v1601
      %v1653 = vsel %vm714, %v1601, %v1603
      %v1654 = vsel %vm714, %v1605, %v1607
      %v1655 = vsel %vm714, %v1607, %v1609
      %v1656 = vsel %vm714, %v1611, %v1613
      %v1657 = vsel %vm714, %v1613, %v1615
      %v1658 = vsel %vm714, %v1617, %v1619
      %v1659 = vsel %vm714, %v1619, %v1621
      %v1660 = vsel %vm714, %v1623, %v1625
      %v1661 = vsel %vm714, %v1625, %v1627
      %v1662 = vsel %vm714, %v1629, %v1631
      %v1663 = vsel %vm714, %v1631, %v1633
      %v1664 = vsel %vm714, %v1635, %v1637
      %v1665 = vsel %vm714, %v1637, %v1639
      %v1666 = vsel %vm714, %v1641, %v1643
      %v1667 = vsel %vm714, %v1643, %v1645
      %v1668 = vsel %vm714, %v1647, %v1649
      %v1669 = vsel %vm714, %v1649, %v1651
      %v1689 = vsel %vm1214, %v1569, 0
      %1691 = vmatprep.subr.bf16.mxu0 %v1653
      %1692 = vmatpush1.bf16.msra.mxu0 %v1652
      %1693 = vmatprep.subr.bf16.mxu0 %v1655
      %1694 = vmatpush1.bf16.msra.mxu0 %v1654
      %1695 = vmatprep.subr.bf16.mxu0 %v1657
      %1696 = vmatpush1.bf16.msra.mxu0 %v1656
      %1697 = vmatprep.subr.bf16.mxu0 %v1659
      %1698 = vmatpush1.bf16.msra.mxu0 %v1658
      %1699 = vmatprep.subr.bf16.mxu0 %v1661
      %1700 = vmatpush1.bf16.msra.mxu0 %v1660
      %1701 = vmatprep.subr.bf16.mxu0 %v1663
      %1702 = vmatpush1.bf16.msra.mxu0 %v1662
      %1703 = vmatprep.subr.bf16.mxu0 %v1665
      %1704 = vmatpush1.bf16.msra.mxu0 %v1664
      %1705 = vmatprep.subr.bf16.mxu0 %v1667
      %1706 = vmatpush1.bf16.msra.mxu0 %v1666
      %1707 = vmatprep.subr.bf16.mxu0 %v1669
      %1708 = vmatpush1.bf16.msra.mxu0 %v1668
      %1709 = vmatprep.subr.bf16.mxu0 0
      %1710 = vmatpush1.bf16.msra.mxu0 0
      %1711 = vmatprep.subr.bf16.mxu0 0
      %1712 = vmatpush1.bf16.msra.mxu0 0
      %1713 = vmatprep.subr.bf16.mxu0 0
      %1714 = vmatpush1.bf16.msra.mxu0 0
      %1715 = vmatprep.subr.bf16.mxu0 0
      %1716 = vmatpush1.bf16.msra.mxu0 0
      %1717 = vmatprep.subr.bf16.mxu0 0
      %1718 = vmatpush1.bf16.msra.mxu0 0
      %1719 = vmatprep.subr.bf16.mxu0 0
      %1720 = vmatpush1.bf16.msra.mxu0 0
      %1721 = vmatprep.subr.bf16.mxu0 0
      %1722 = vmatpush1.bf16.msra.mxu0 0
      %1723 = vmatprep.mubr.bf16.mxu0 %v1689
      %1724 = vmatmul.mubr.bf16.gmra.mrb[0].mxu0 %v1568
      %v1725 = vpop.f32.mrb[0].mxu0
      %v1726 = vadd.f32 %v1555, %v1725
      %v1727 = vpop.f32.mrb[0].mxu0
      %v1728 = vadd.f32 %v1555, %v1727
      %v1729 = vpop.f32.mrb[0].mxu0
      %v1730 = vadd.f32 %v1560, %v1729
      %v1731 = vpop.f32.mrb[0].mxu0
      %v1732 = vadd.f32 %v1560, %v1731
      %1733 = vdwg.mxu0
      %v1734 = vmax.f32 %v1726, 0.0
      %v1735 = vmax.f32 %v1728, 0.0
      %v1736 = vmax.f32 %v1730, 0.0
      %v1737 = vmax.f32 %v1732, 0.0
      %1738 = vst [vmem:[#allocation2 + $0x8] sm:$0xff] %v1734
      %1739 = vst [vmem:[#allocation2 + $0x10] sm:$0xff] %v1735
      %1740 = vst [vmem:[#allocation2 + $0x28] sm:$0xff] %v1736
      %1741 = vst [vmem:[#allocation2 + $0x30] sm:$0xff] %v1737
      %v1742 = vld [vmem:[#allocation2] sm:$0xff]
      %v1743 = vld [vmem:[#allocation2 + $0x8] sm:$0xff]
      %v1744 = vld [vmem:[#allocation2 + $0x10] sm:$0xff]
      %v1745 = vld [vmem:[#allocation2 + $0x18] sm:$0xff]
      %v1746 = vld [vmem:[#allocation2 + $0x20] sm:$0xff]
      %v1747 = vld [vmem:[#allocation2 + $0x28] sm:$0xff]
      %v1748 = vld [vmem:[#allocation2 + $0x30] sm:$0xff]
      %v1749 = vld [vmem:[#allocation2 + $0x38] sm:$0xff]
      %v1750 = vmul.f32 %v1742, %v445
      %v1751 = vmul.f32 %v1743, %v449
      %v1752 = vmul.f32 %v1744, %v447
      %v1753 = vmul.f32 %v1746, %v445
      %v1754 = vmul.f32 %v1747, %v449
      %v1755 = vmul.f32 %v1748, %v447
      %v1756 = vmul.f32 %v1742, %v466
      %v1757 = vmul.f32 %v1743, %v470
      %v1758 = vmul.f32 %v1744, %v468
      %v1759 = vmul.f32 %v1746, %v466
      %v1760 = vmul.f32 %v1747, %v470
      %v1761 = vmul.f32 %v1748, %v468
      %v1762 = vmul.f32 %v1742, %v478
      %v1763 = vmul.f32 %v1743, %v482
      %v1764 = vmul.f32 %v1744, %v480
      %v1765 = vmul.f32 %v1746, %v478
      %v1766 = vmul.f32 %v1747, %v482
      %v1767 = vmul.f32 %v1748, %v480
      %v1768 = vmul.f32 %v1743, %v490
      %v1769 = vmul.f32 %v1744, %v494
      %v1770 = vmul.f32 %v1745, %v492
      %v1771 = vmul.f32 %v1747, %v490
      %v1772 = vmul.f32 %v1748, %v494
      %v1773 = vmul.f32 %v1749, %v492
      %v1774 = vmul.f32 %v1743, %v502
      %v1775 = vmul.f32 %v1744, %v506
      %v1776 = vmul.f32 %v1745, %v504
      %v1777 = vmul.f32 %v1747, %v502
      %v1778 = vmul.f32 %v1748, %v506
      %v1779 = vmul.f32 %v1749, %v504
      %v1780 = vmul.f32 %v1743, %v514
      %v1781 = vmul.f32 %v1744, %v518
      %v1782 = vmul.f32 %v1745, %v516
      %v1783 = vmul.f32 %v1747, %v514
      %v1784 = vmul.f32 %v1748, %v518
      %v1785 = vmul.f32 %v1749, %v516
      %1792 = vrot.lane.b32.xlu0 %v1742, 127
      %v1793 = vpop.permute.xlu0 %1792
      %1794 = vrot.lane.b32.xlu0 %v1743, 127
      %v1795 = vpop.permute.xlu0 %1794
      %1796 = vrot.lane.b32.xlu0 %v1744, 127
      %v1797 = vpop.permute.xlu0 %1796
      %1798 = vrot.lane.b32.xlu0 %v1746, 127
      %v1799 = vpop.permute.xlu0 %1798
      %1800 = vrot.lane.b32.xlu0 %v1747, 127
      %v1801 = vpop.permute.xlu0 %1800
      %1802 = vrot.lane.b32.xlu0 %v1748, 127
      %v1803 = vpop.permute.xlu0 %1802
      %v1804 = vsel %vm481, %v1793, %v1795
      %v1805 = vsel %vm481, %v1795, %v1797
      %v1806 = vsel %vm481, %v1799, %v1801
      %v1807 = vsel %vm481, %v1801, %v1803
      %1820 = vrot.lane.b32.xlu0 %v1756, 126
      %v1821 = vpop.permute.xlu0 %1820
      %1822 = vrot.lane.b32.xlu0 %v1757, 126
      %v1823 = vpop.permute.xlu0 %1822
      %1824 = vrot.lane.b32.xlu0 %v1758, 126
      %v1825 = vpop.permute.xlu0 %1824
      %1826 = vrot.lane.b32.xlu0 %v1759, 126
      %v1827 = vpop.permute.xlu0 %1826
      %1828 = vrot.lane.b32.xlu0 %v1760, 126
      %v1829 = vpop.permute.xlu0 %1828
      %1830 = vrot.lane.b32.xlu0 %v1761, 126
      %v1831 = vpop.permute.xlu0 %1830
      %v1832 = vsel %vm548, %v1821, %v1823
      %v1833 = vsel %vm548, %v1823, %v1825
      %v1834 = vsel %vm548, %v1827, %v1829
      %v1835 = vsel %vm548, %v1829, %v1831
      %1848 = vrot.lane.b32.xlu0 %v1762, 112
      %v1849 = vpop.permute.xlu0 %1848
      %1850 = vrot.lane.b32.xlu0 %v1763, 112
      %v1851 = vpop.permute.xlu0 %1850
      %1852 = vrot.lane.b32.xlu0 %v1764, 112
      %v1853 = vpop.permute.xlu0 %1852
      %1854 = vrot.lane.b32.xlu0 %v1765, 112
      %v1855 = vpop.permute.xlu0 %1854
      %1856 = vrot.lane.b32.xlu0 %v1766, 112
      %v1857 = vpop.permute.xlu0 %1856
      %1858 = vrot.lane.b32.xlu0 %v1767, 112
      %v1859 = vpop.permute.xlu0 %1858
      %v1860 = vsel %vm563, %v1849, %v1851
      %v1861 = vsel %vm563, %v1851, %v1853
      %v1862 = vsel %vm563, %v1855, %v1857
      %v1863 = vsel %vm563, %v1857, %v1859
      %1870 = vrot.lane.b32.xlu0 %v1743, 111
      %v1871 = vpop.permute.xlu0 %1870
      %1872 = vrot.lane.b32.xlu0 %v1744, 111
      %v1873 = vpop.permute.xlu0 %1872
      %1874 = vrot.lane.b32.xlu0 %v1747, 111
      %v1875 = vpop.permute.xlu0 %1874
      %1876 = vrot.lane.b32.xlu0 %v1748, 111
      %v1877 = vpop.permute.xlu0 %1876
      %v1878 = vsel %vm448, %v1871, %v1873
      %v1879 = vsel %vm448, %v1875, %v1877
      %1892 = vrot.lane.b32.xlu0 %v1768, 110
      %v1893 = vpop.permute.xlu0 %1892
      %1894 = vrot.lane.b32.xlu0 %v1769, 110
      %v1895 = vpop.permute.xlu0 %1894
      %1896 = vrot.lane.b32.xlu0 %v1770, 110
      %v1897 = vpop.permute.xlu0 %1896
      %1898 = vrot.lane.b32.xlu0 %v1771, 110
      %v1899 = vpop.permute.xlu0 %1898
      %1900 = vrot.lane.b32.xlu0 %v1772, 110
      %v1901 = vpop.permute.xlu0 %1900
      %1902 = vrot.lane.b32.xlu0 %v1773, 110
      %v1903 = vpop.permute.xlu0 %1902
      %v1904 = vsel %vm586, %v1893, %v1895
      %v1905 = vsel %vm586, %v1895, %v1897
      %v1906 = vsel %vm586, %v1899, %v1901
      %v1907 = vsel %vm586, %v1901, %v1903
      %1920 = vrot.lane.b32.xlu0 %v1774, 96
      %v1921 = vpop.permute.xlu0 %1920
      %1922 = vrot.lane.b32.xlu0 %v1775, 96
      %v1923 = vpop.permute.xlu0 %1922
      %1924 = vrot.lane.b32.xlu0 %v1776, 96
      %v1925 = vpop.permute.xlu0 %1924
      %1926 = vrot.lane.b32.xlu0 %v1777, 96
      %v1927 = vpop.permute.xlu0 %1926
      %1928 = vrot.lane.b32.xlu0 %v1778, 96
      %v1929 = vpop.permute.xlu0 %1928
      %1930 = vrot.lane.b32.xlu0 %v1779, 96
      %v1931 = vpop.permute.xlu0 %1930
      %v1932 = vsel %vm601, %v1921, %v1923
      %v1933 = vsel %vm601, %v1923, %v1925
      %v1934 = vsel %vm601, %v1927, %v1929
      %v1935 = vsel %vm601, %v1929, %v1931
      %1944 = vrot.lane.b32.xlu0 %v1743, 95
      %v1945 = vpop.permute.xlu0 %1944
      %1946 = vrot.lane.b32.xlu0 %v1744, 95
      %v1947 = vpop.permute.xlu0 %1946
      %1948 = vrot.lane.b32.xlu0 %v1745, 95
      %v1949 = vpop.permute.xlu0 %1948
      %1950 = vrot.lane.b32.xlu0 %v1747, 95
      %v1951 = vpop.permute.xlu0 %1950
      %1952 = vrot.lane.b32.xlu0 %v1748, 95
      %v1953 = vpop.permute.xlu0 %1952
      %1954 = vrot.lane.b32.xlu0 %v1749, 95
      %v1955 = vpop.permute.xlu0 %1954
      %v1956 = vsel %vm614, %v1945, %v1947
      %v1957 = vsel %vm614, %v1947, %v1949
      %v1958 = vsel %vm614, %v1951, %v1953
      %v1959 = vsel %vm614, %v1953, %v1955
      %1972 = vrot.lane.b32.xlu0 %v1780, 94
      %v1973 = vpop.permute.xlu0 %1972
      %1974 = vrot.lane.b32.xlu0 %v1781, 94
      %v1975 = vpop.permute.xlu0 %1974
      %1976 = vrot.lane.b32.xlu0 %v1782, 94
      %v1977 = vpop.permute.xlu0 %1976
      %1978 = vrot.lane.b32.xlu0 %v1783, 94
      %v1979 = vpop.permute.xlu0 %1978
      %1980 = vrot.lane.b32.xlu0 %v1784, 94
      %v1981 = vpop.permute.xlu0 %1980
      %1982 = vrot.lane.b32.xlu0 %v1785, 94
      %v1983 = vpop.permute.xlu0 %1982
      %v1984 = vsel %vm629, %v1973, %v1975
      %v1985 = vsel %vm629, %v1975, %v1977
      %v1986 = vsel %vm629, %v1979, %v1981
      %v1987 = vsel %vm629, %v1981, %v1983
      %v1994 = vpack.c.bf16 %v1753, %v1750
      %v1995 = vpack.c.bf16 %v1754, %v1751
      %v1996 = vpack.c.bf16 %v1755, %v1752
      %v1997 = vpack.c.bf16 %v1806, %v1804
      %v1998 = vpack.c.bf16 %v1807, %v1805
      %v1999 = vpack.c.bf16 %v1803, %v1797
      %v2000 = vpack.c.bf16 %v1834, %v1832
      %v2001 = vpack.c.bf16 %v1835, %v1833
      %v2002 = vpack.c.bf16 %v1831, %v1825
      %v2003 = vpack.c.bf16 %v1862, %v1860
      %v2004 = vpack.c.bf16 %v1863, %v1861
      %v2005 = vpack.c.bf16 %v1859, %v1853
      %v2006 = vpack.c.bf16 %v1875, %v1871
      %v2007 = vpack.c.bf16 %v1879, %v1878
      %v2008 = vpack.c.bf16 %v1877, %v1873
      %v2009 = vpack.c.bf16 %v1899, %v1893
      %v2010 = vpack.c.bf16 %v1906, %v1904
      %v2011 = vpack.c.bf16 %v1907, %v1905
      %v2012 = vpack.c.bf16 %v1927, %v1921
      %v2013 = vpack.c.bf16 %v1934, %v1932
      %v2014 = vpack.c.bf16 %v1935, %v1933
      %v2015 = vpack.c.bf16 %v1951, %v1945
      %v2016 = vpack.c.bf16 %v1958, %v1956
      %v2017 = vpack.c.bf16 %v1959, %v1957
      %v2018 = vpack.c.bf16 %v1979, %v1973
      %v2019 = vpack.c.bf16 %v1986, %v1984
      %v2020 = vpack.c.bf16 %v1987, %v1985
      %v2021 = vld [vmem:[%s5] sm:$0xff]
      %v2022 = vld [vmem:[%s5 + $0x8] sm:$0xff]
      %v2023 = vld [vmem:[%s10] sm:$0xff]
      %v2024 = vld [vmem:[%s10 + $0x8] sm:$0xff]
      %2026 = vset.pattern.permute.xlu0 0
      %2027 = vperm.xlu0 %2026, %v2023
      %v2028 = vpop.permute.xlu0 %2027
      %2031 = vset.pattern.permute.xlu0 0
      %2032 = vperm.xlu0 %2031, %v2024
      %v2033 = vpop.permute.xlu0 %2032
      %v2037 = vunpack.c.l.b16 %v2021
      %v2038 = vunpack.c.h.b16 %v2021
      %v2039 = vunpack.c.l.b16 %v2022
      %v2040 = vunpack.c.h.b16 %v2022
      %v2041 = vpack.c.b16 %v2039, %v2037
      %v2042 = vpack.c.b16 %v2040, %v2038
      %2071 = vrot.lane.b32.xlu0 %v1994, 17
      %v2072 = vpop.permute.xlu0 %2071
      %2073 = vrot.lane.b32.xlu0 %v1995, 17
      %v2074 = vpop.permute.xlu0 %2073
      %2075 = vrot.lane.b32.xlu0 %v1996, 17
      %v2076 = vpop.permute.xlu0 %2075
      %2077 = vrot.lane.b32.xlu0 %v1997, 17
      %v2078 = vpop.permute.xlu0 %2077
      %2079 = vrot.lane.b32.xlu0 %v1998, 17
      %v2080 = vpop.permute.xlu0 %2079
      %2081 = vrot.lane.b32.xlu0 %v1999, 17
      %v2082 = vpop.permute.xlu0 %2081
      %2083 = vrot.lane.b32.xlu0 %v2000, 17
      %v2084 = vpop.permute.xlu0 %2083
      %2085 = vrot.lane.b32.xlu0 %v2001, 17
      %v2086 = vpop.permute.xlu0 %2085
      %2087 = vrot.lane.b32.xlu0 %v2002, 17
      %v2088 = vpop.permute.xlu0 %2087
      %2089 = vrot.lane.b32.xlu0 %v2003, 17
      %v2090 = vpop.permute.xlu0 %2089
      %2091 = vrot.lane.b32.xlu0 %v2004, 17
      %v2092 = vpop.permute.xlu0 %2091
      %2093 = vrot.lane.b32.xlu0 %v2005, 17
      %v2094 = vpop.permute.xlu0 %2093
      %2095 = vrot.lane.b32.xlu0 %v2006, 17
      %v2096 = vpop.permute.xlu0 %2095
      %2097 = vrot.lane.b32.xlu0 %v2007, 17
      %v2098 = vpop.permute.xlu0 %2097
      %2099 = vrot.lane.b32.xlu0 %v2008, 17
      %v2100 = vpop.permute.xlu0 %2099
      %2101 = vrot.lane.b32.xlu0 %v2009, 17
      %v2102 = vpop.permute.xlu0 %2101
      %2103 = vrot.lane.b32.xlu0 %v2010, 17
      %v2104 = vpop.permute.xlu0 %2103
      %2105 = vrot.lane.b32.xlu0 %v2011, 17
      %v2106 = vpop.permute.xlu0 %2105
      %2107 = vrot.lane.b32.xlu0 %v2012, 17
      %v2108 = vpop.permute.xlu0 %2107
      %2109 = vrot.lane.b32.xlu0 %v2013, 17
      %v2110 = vpop.permute.xlu0 %2109
      %2111 = vrot.lane.b32.xlu0 %v2014, 17
      %v2112 = vpop.permute.xlu0 %2111
      %2113 = vrot.lane.b32.xlu0 %v2015, 17
      %v2114 = vpop.permute.xlu0 %2113
      %2115 = vrot.lane.b32.xlu0 %v2016, 17
      %v2116 = vpop.permute.xlu0 %2115
      %2117 = vrot.lane.b32.xlu0 %v2017, 17
      %v2118 = vpop.permute.xlu0 %2117
      %2119 = vrot.lane.b32.xlu0 %v2018, 17
      %v2120 = vpop.permute.xlu0 %2119
      %2121 = vrot.lane.b32.xlu0 %v2019, 17
      %v2122 = vpop.permute.xlu0 %2121
      %2123 = vrot.lane.b32.xlu0 %v2020, 17
      %v2124 = vpop.permute.xlu0 %2123
      %v2125 = vsel %vm714, %v2072, %v2074
      %v2126 = vsel %vm714, %v2074, %v2076
      %v2127 = vsel %vm714, %v2078, %v2080
      %v2128 = vsel %vm714, %v2080, %v2082
      %v2129 = vsel %vm714, %v2084, %v2086
      %v2130 = vsel %vm714, %v2086, %v2088
      %v2131 = vsel %vm714, %v2090, %v2092
      %v2132 = vsel %vm714, %v2092, %v2094
      %v2133 = vsel %vm714, %v2096, %v2098
      %v2134 = vsel %vm714, %v2098, %v2100
      %v2135 = vsel %vm714, %v2102, %v2104
      %v2136 = vsel %vm714, %v2104, %v2106
      %v2137 = vsel %vm714, %v2108, %v2110
      %v2138 = vsel %vm714, %v2110, %v2112
      %v2139 = vsel %vm714, %v2114, %v2116
      %v2140 = vsel %vm714, %v2116, %v2118
      %v2141 = vsel %vm714, %v2120, %v2122
      %v2142 = vsel %vm714, %v2122, %v2124
      %v2162 = vsel %vm1214, %v2042, 0
      %2164 = vmatprep.subr.bf16.mxu0 %v2126
      %2165 = vmatpush1.bf16.msra.mxu0 %v2125
      %2166 = vmatprep.subr.bf16.mxu0 %v2128
      %2167 = vmatpush1.bf16.msra.mxu0 %v2127
      %2168 = vmatprep.subr.bf16.mxu0 %v2130
      %2169 = vmatpush1.bf16.msra.mxu0 %v2129
      %2170 = vmatprep.subr.bf16.mxu0 %v2132
      %2171 = vmatpush1.bf16.msra.mxu0 %v2131
      %2172 = vmatprep.subr.bf16.mxu0 %v2134
      %2173 = vmatpush1.bf16.msra.mxu0 %v2133
      %2174 = vmatprep.subr.bf16.mxu0 %v2136
      %2175 = vmatpush1.bf16.msra.mxu0 %v2135
      %2176 = vmatprep.subr.bf16.mxu0 %v2138
      %2177 = vmatpush1.bf16.msra.mxu0 %v2137
      %2178 = vmatprep.subr.bf16.mxu0 %v2140
      %2179 = vmatpush1.bf16.msra.mxu0 %v2139
      %2180 = vmatprep.subr.bf16.mxu0 %v2142
      %2181 = vmatpush1.bf16.msra.mxu0 %v2141
      %2182 = vmatprep.subr.bf16.mxu0 0
      %2183 = vmatpush1.bf16.msra.mxu0 0
      %2184 = vmatprep.subr.bf16.mxu0 0
      %2185 = vmatpush1.bf16.msra.mxu0 0
      %2186 = vmatprep.subr.bf16.mxu0 0
      %2187 = vmatpush1.bf16.msra.mxu0 0
      %2188 = vmatprep.subr.bf16.mxu0 0
      %2189 = vmatpush1.bf16.msra.mxu0 0
      %2190 = vmatprep.subr.bf16.mxu0 0
      %2191 = vmatpush1.bf16.msra.mxu0 0
      %2192 = vmatprep.subr.bf16.mxu0 0
      %2193 = vmatpush1.bf16.msra.mxu0 0
      %2194 = vmatprep.subr.bf16.mxu0 0
      %2195 = vmatpush1.bf16.msra.mxu0 0
      %2196 = vmatprep.mubr.bf16.mxu0 %v2162
      %2197 = vmatmul.mubr.bf16.gmra.mrb[0].mxu0 %v2041
      %v2198 = vpop.f32.mrb[0].mxu0
      %v2199 = vadd.f32 %v2028, %v2198
      %v2200 = vpop.f32.mrb[0].mxu0
      %v2201 = vadd.f32 %v2028, %v2200
      %v2202 = vpop.f32.mrb[0].mxu0
      %v2203 = vadd.f32 %v2033, %v2202
      %v2204 = vpop.f32.mrb[0].mxu0
      %v2205 = vadd.f32 %v2033, %v2204
      %2206 = vdwg.mxu0
      %v2207 = vmax.f32 %v2199, 0.0
      %v2208 = vmax.f32 %v2201, 0.0
      %v2209 = vmax.f32 %v2203, 0.0
      %v2210 = vmax.f32 %v2205, 0.0
      %2211 = vst [vmem:[#allocation2 + $0x8] sm:$0xff] %v2207
      %2212 = vst [vmem:[#allocation2 + $0x10] sm:$0xff] %v2208
      %2213 = vst [vmem:[#allocation2 + $0x28] sm:$0xff] %v2209
      %2214 = vst [vmem:[#allocation2 + $0x30] sm:$0xff] %v2210
      %v2215 = vld [vmem:[#allocation2] sm:$0xff]
      %v2216 = vld [vmem:[#allocation2 + $0x8] sm:$0xff]
      %v2217 = vld [vmem:[#allocation2 + $0x10] sm:$0xff]
      %v2218 = vld [vmem:[#allocation2 + $0x18] sm:$0xff]
      %v2219 = vld [vmem:[#allocation2 + $0x20] sm:$0xff]
      %v2220 = vld [vmem:[#allocation2 + $0x28] sm:$0xff]
      %v2221 = vld [vmem:[#allocation2 + $0x30] sm:$0xff]
      %v2222 = vld [vmem:[#allocation2 + $0x38] sm:$0xff]
      %v2223 = vmul.f32 %v2215, %v445
      %v2224 = vmul.f32 %v2216, %v449
      %v2225 = vmul.f32 %v2217, %v447
      %v2226 = vmul.f32 %v2219, %v445
      %v2227 = vmul.f32 %v2220, %v449
      %v2228 = vmul.f32 %v2221, %v447
      %v2229 = vmul.f32 %v2215, %v466
      %v2230 = vmul.f32 %v2216, %v470
      %v2231 = vmul.f32 %v2217, %v468
      %v2232 = vmul.f32 %v2219, %v466
      %v2233 = vmul.f32 %v2220, %v470
      %v2234 = vmul.f32 %v2221, %v468
      %v2235 = vmul.f32 %v2215, %v478
      %v2236 = vmul.f32 %v2216, %v482
      %v2237 = vmul.f32 %v2217, %v480
      %v2238 = vmul.f32 %v2219, %v478
      %v2239 = vmul.f32 %v2220, %v482
      %v2240 = vmul.f32 %v2221, %v480
      %v2241 = vmul.f32 %v2216, %v490
      %v2242 = vmul.f32 %v2217, %v494
      %v2243 = vmul.f32 %v2218, %v492
      %v2244 = vmul.f32 %v2220, %v490
      %v2245 = vmul.f32 %v2221, %v494
      %v2246 = vmul.f32 %v2222, %v492
      %v2247 = vmul.f32 %v2216, %v502
      %v2248 = vmul.f32 %v2217, %v506
      %v2249 = vmul.f32 %v2218, %v504
      %v2250 = vmul.f32 %v2220, %v502
      %v2251 = vmul.f32 %v2221, %v506
      %v2252 = vmul.f32 %v2222, %v504
      %v2253 = vmul.f32 %v2216, %v514
      %v2254 = vmul.f32 %v2217, %v518
      %v2255 = vmul.f32 %v2218, %v516
      %v2256 = vmul.f32 %v2220, %v514
      %v2257 = vmul.f32 %v2221, %v518
      %v2258 = vmul.f32 %v2222, %v516
      %2265 = vrot.lane.b32.xlu0 %v2215, 127
      %v2266 = vpop.permute.xlu0 %2265
      %2267 = vrot.lane.b32.xlu0 %v2216, 127
      %v2268 = vpop.permute.xlu0 %2267
      %2269 = vrot.lane.b32.xlu0 %v2217, 127
      %v2270 = vpop.permute.xlu0 %2269
      %2271 = vrot.lane.b32.xlu0 %v2219, 127
      %v2272 = vpop.permute.xlu0 %2271
      %2273 = vrot.lane.b32.xlu0 %v2220, 127
      %v2274 = vpop.permute.xlu0 %2273
      %2275 = vrot.lane.b32.xlu0 %v2221, 127
      %v2276 = vpop.permute.xlu0 %2275
      %v2277 = vsel %vm481, %v2266, %v2268
      %v2278 = vsel %vm481, %v2268, %v2270
      %v2279 = vsel %vm481, %v2272, %v2274
      %v2280 = vsel %vm481, %v2274, %v2276
      %2293 = vrot.lane.b32.xlu0 %v2229, 126
      %v2294 = vpop.permute.xlu0 %2293
      %2295 = vrot.lane.b32.xlu0 %v2230, 126
      %v2296 = vpop.permute.xlu0 %2295
      %2297 = vrot.lane.b32.xlu0 %v2231, 126
      %v2298 = vpop.permute.xlu0 %2297
      %2299 = vrot.lane.b32.xlu0 %v2232, 126
      %v2300 = vpop.permute.xlu0 %2299
      %2301 = vrot.lane.b32.xlu0 %v2233, 126
      %v2302 = vpop.permute.xlu0 %2301
      %2303 = vrot.lane.b32.xlu0 %v2234, 126
      %v2304 = vpop.permute.xlu0 %2303
      %v2305 = vsel %vm548, %v2294, %v2296
      %v2306 = vsel %vm548, %v2296, %v2298
      %v2307 = vsel %vm548, %v2300, %v2302
      %v2308 = vsel %vm548, %v2302, %v2304
      %2321 = vrot.lane.b32.xlu0 %v2235, 112
      %v2322 = vpop.permute.xlu0 %2321
      %2323 = vrot.lane.b32.xlu0 %v2236, 112
      %v2324 = vpop.permute.xlu0 %2323
      %2325 = vrot.lane.b32.xlu0 %v2237, 112
      %v2326 = vpop.permute.xlu0 %2325
      %2327 = vrot.lane.b32.xlu0 %v2238, 112
      %v2328 = vpop.permute.xlu0 %2327
      %2329 = vrot.lane.b32.xlu0 %v2239, 112
      %v2330 = vpop.permute.xlu0 %2329
      %2331 = vrot.lane.b32.xlu0 %v2240, 112
      %v2332 = vpop.permute.xlu0 %2331
      %v2333 = vsel %vm563, %v2322, %v2324
      %v2334 = vsel %vm563, %v2324, %v2326
      %v2335 = vsel %vm563, %v2328, %v2330
      %v2336 = vsel %vm563, %v2330, %v2332
      %2343 = vrot.lane.b32.xlu0 %v2216, 111
      %v2344 = vpop.permute.xlu0 %2343
      %2345 = vrot.lane.b32.xlu0 %v2217, 111
      %v2346 = vpop.permute.xlu0 %2345
      %2347 = vrot.lane.b32.xlu0 %v2220, 111
      %v2348 = vpop.permute.xlu0 %2347
      %2349 = vrot.lane.b32.xlu0 %v2221, 111
      %v2350 = vpop.permute.xlu0 %2349
      %v2351 = vsel %vm448, %v2344, %v2346
      %v2352 = vsel %vm448, %v2348, %v2350
      %2365 = vrot.lane.b32.xlu0 %v2241, 110
      %v2366 = vpop.permute.xlu0 %2365
      %2367 = vrot.lane.b32.xlu0 %v2242, 110
      %v2368 = vpop.permute.xlu0 %2367
      %2369 = vrot.lane.b32.xlu0 %v2243, 110
      %v2370 = vpop.permute.xlu0 %2369
      %2371 = vrot.lane.b32.xlu0 %v2244, 110
      %v2372 = vpop.permute.xlu0 %2371
      %2373 = vrot.lane.b32.xlu0 %v2245, 110
      %v2374 = vpop.permute.xlu0 %2373
      %2375 = vrot.lane.b32.xlu0 %v2246, 110
      %v2376 = vpop.permute.xlu0 %2375
      %v2377 = vsel %vm586, %v2366, %v2368
      %v2378 = vsel %vm586, %v2368, %v2370
      %v2379 = vsel %vm586, %v2372, %v2374
      %v2380 = vsel %vm586, %v2374, %v2376
      %2393 = vrot.lane.b32.xlu0 %v2247, 96
      %v2394 = vpop.permute.xlu0 %2393
      %2395 = vrot.lane.b32.xlu0 %v2248, 96
      %v2396 = vpop.permute.xlu0 %2395
      %2397 = vrot.lane.b32.xlu0 %v2249, 96
      %v2398 = vpop.permute.xlu0 %2397
      %2399 = vrot.lane.b32.xlu0 %v2250, 96
      %v2400 = vpop.permute.xlu0 %2399
      %2401 = vrot.lane.b32.xlu0 %v2251, 96
      %v2402 = vpop.permute.xlu0 %2401
      %2403 = vrot.lane.b32.xlu0 %v2252, 96
      %v2404 = vpop.permute.xlu0 %2403
      %v2405 = vsel %vm601, %v2394, %v2396
      %v2406 = vsel %vm601, %v2396, %v2398
      %v2407 = vsel %vm601, %v2400, %v2402
      %v2408 = vsel %vm601, %v2402, %v2404
      %2417 = vrot.lane.b32.xlu0 %v2216, 95
      %v2418 = vpop.permute.xlu0 %2417
      %2419 = vrot.lane.b32.xlu0 %v2217, 95
      %v2420 = vpop.permute.xlu0 %2419
      %2421 = vrot.lane.b32.xlu0 %v2218, 95
      %v2422 = vpop.permute.xlu0 %2421
      %2423 = vrot.lane.b32.xlu0 %v2220, 95
      %v2424 = vpop.permute.xlu0 %2423
      %2425 = vrot.lane.b32.xlu0 %v2221, 95
      %v2426 = vpop.permute.xlu0 %2425
      %2427 = vrot.lane.b32.xlu0 %v2222, 95
      %v2428 = vpop.permute.xlu0 %2427
      %v2429 = vsel %vm614, %v2418, %v2420
      %v2430 = vsel %vm614, %v2420, %v2422
      %v2431 = vsel %vm614, %v2424, %v2426
      %v2432 = vsel %vm614, %v2426, %v2428
      %2445 = vrot.lane.b32.xlu0 %v2253, 94
      %v2446 = vpop.permute.xlu0 %2445
      %2447 = vrot.lane.b32.xlu0 %v2254, 94
      %v2448 = vpop.permute.xlu0 %2447
      %2449 = vrot.lane.b32.xlu0 %v2255, 94
      %v2450 = vpop.permute.xlu0 %2449
      %2451 = vrot.lane.b32.xlu0 %v2256, 94
      %v2452 = vpop.permute.xlu0 %2451
      %2453 = vrot.lane.b32.xlu0 %v2257, 94
      %v2454 = vpop.permute.xlu0 %2453
      %2455 = vrot.lane.b32.xlu0 %v2258, 94
      %v2456 = vpop.permute.xlu0 %2455
      %v2457 = vsel %vm629, %v2446, %v2448
      %v2458 = vsel %vm629, %v2448, %v2450
      %v2459 = vsel %vm629, %v2452, %v2454
      %v2460 = vsel %vm629, %v2454, %v2456
      %v2467 = vpack.c.bf16 %v2226, %v2223
      %v2468 = vpack.c.bf16 %v2227, %v2224
      %v2469 = vpack.c.bf16 %v2228, %v2225
      %v2470 = vpack.c.bf16 %v2279, %v2277
      %v2471 = vpack.c.bf16 %v2280, %v2278
      %v2472 = vpack.c.bf16 %v2276, %v2270
      %v2473 = vpack.c.bf16 %v2307, %v2305
      %v2474 = vpack.c.bf16 %v2308, %v2306
      %v2475 = vpack.c.bf16 %v2304, %v2298
      %v2476 = vpack.c.bf16 %v2335, %v2333
      %v2477 = vpack.c.bf16 %v2336, %v2334
      %v2478 = vpack.c.bf16 %v2332, %v2326
      %v2479 = vpack.c.bf16 %v2348, %v2344
      %v2480 = vpack.c.bf16 %v2352, %v2351
      %v2481 = vpack.c.bf16 %v2350, %v2346
      %v2482 = vpack.c.bf16 %v2372, %v2366
      %v2483 = vpack.c.bf16 %v2379, %v2377
      %v2484 = vpack.c.bf16 %v2380, %v2378
      %v2485 = vpack.c.bf16 %v2400, %v2394
      %v2486 = vpack.c.bf16 %v2407, %v2405
      %v2487 = vpack.c.bf16 %v2408, %v2406
      %v2488 = vpack.c.bf16 %v2424, %v2418
      %v2489 = vpack.c.bf16 %v2431, %v2429
      %v2490 = vpack.c.bf16 %v2432, %v2430
      %v2491 = vpack.c.bf16 %v2452, %v2446
      %v2492 = vpack.c.bf16 %v2459, %v2457
      %v2493 = vpack.c.bf16 %v2460, %v2458
      %v2494 = vld [vmem:[%s6] sm:$0xff]
      %v2495 = vld [vmem:[%s11] sm:$0xff]
      %2497 = vset.pattern.permute.xlu0 0
      %2498 = vperm.xlu0 %2497, %v2495
      %v2499 = vpop.permute.xlu0 %2498
      %v2502 = vunpack.c.l.b16 %v2494
      %v2503 = vunpack.c.h.b16 %v2494
      %v2504 = vpack.c.b16 %v2502, %v2502
      %v2505 = vpack.c.b16 %v2503, %v2503
      %2534 = vrot.lane.b32.xlu0 %v2467, 17
      %v2535 = vpop.permute.xlu0 %2534
      %2536 = vrot.lane.b32.xlu0 %v2468, 17
      %v2537 = vpop.permute.xlu0 %2536
      %2538 = vrot.lane.b32.xlu0 %v2469, 17
      %v2539 = vpop.permute.xlu0 %2538
      %2540 = vrot.lane.b32.xlu0 %v2470, 17
      %v2541 = vpop.permute.xlu0 %2540
      %2542 = vrot.lane.b32.xlu0 %v2471, 17
      %v2543 = vpop.permute.xlu0 %2542
      %2544 = vrot.lane.b32.xlu0 %v2472, 17
      %v2545 = vpop.permute.xlu0 %2544
      %2546 = vrot.lane.b32.xlu0 %v2473, 17
      %v2547 = vpop.permute.xlu0 %2546
      %2548 = vrot.lane.b32.xlu0 %v2474, 17
      %v2549 = vpop.permute.xlu0 %2548
      %2550 = vrot.lane.b32.xlu0 %v2475, 17
      %v2551 = vpop.permute.xlu0 %2550
      %2552 = vrot.lane.b32.xlu0 %v2476, 17
      %v2553 = vpop.permute.xlu0 %2552
      %2554 = vrot.lane.b32.xlu0 %v2477, 17
      %v2555 = vpop.permute.xlu0 %2554
      %2556 = vrot.lane.b32.xlu0 %v2478, 17
      %v2557 = vpop.permute.xlu0 %2556
      %2558 = vrot.lane.b32.xlu0 %v2479, 17
      %v2559 = vpop.permute.xlu0 %2558
      %2560 = vrot.lane.b32.xlu0 %v2480, 17
      %v2561 = vpop.permute.xlu0 %2560
      %2562 = vrot.lane.b32.xlu0 %v2481, 17
      %v2563 = vpop.permute.xlu0 %2562
      %2564 = vrot.lane.b32.xlu0 %v2482, 17
      %v2565 = vpop.permute.xlu0 %2564
      %2566 = vrot.lane.b32.xlu0 %v2483, 17
      %v2567 = vpop.permute.xlu0 %2566
      %2568 = vrot.lane.b32.xlu0 %v2484, 17
      %v2569 = vpop.permute.xlu0 %2568
      %2570 = vrot.lane.b32.xlu0 %v2485, 17
      %v2571 = vpop.permute.xlu0 %2570
      %2572 = vrot.lane.b32.xlu0 %v2486, 17
      %v2573 = vpop.permute.xlu0 %2572
      %2574 = vrot.lane.b32.xlu0 %v2487, 17
      %v2575 = vpop.permute.xlu0 %2574
      %2576 = vrot.lane.b32.xlu0 %v2488, 17
      %v2577 = vpop.permute.xlu0 %2576
      %2578 = vrot.lane.b32.xlu0 %v2489, 17
      %v2579 = vpop.permute.xlu0 %2578
      %2580 = vrot.lane.b32.xlu0 %v2490, 17
      %v2581 = vpop.permute.xlu0 %2580
      %2582 = vrot.lane.b32.xlu0 %v2491, 17
      %v2583 = vpop.permute.xlu0 %2582
      %2584 = vrot.lane.b32.xlu0 %v2492, 17
      %v2585 = vpop.permute.xlu0 %2584
      %2586 = vrot.lane.b32.xlu0 %v2493, 17
      %v2587 = vpop.permute.xlu0 %2586
      %v2588 = vsel %vm714, %v2535, %v2537
      %v2589 = vsel %vm714, %v2537, %v2539
      %v2590 = vsel %vm714, %v2541, %v2543
      %v2591 = vsel %vm714, %v2543, %v2545
      %v2592 = vsel %vm714, %v2547, %v2549
      %v2593 = vsel %vm714, %v2549, %v2551
      %v2594 = vsel %vm714, %v2553, %v2555
      %v2595 = vsel %vm714, %v2555, %v2557
      %v2596 = vsel %vm714, %v2559, %v2561
      %v2597 = vsel %vm714, %v2561, %v2563
      %v2598 = vsel %vm714, %v2565, %v2567
      %v2599 = vsel %vm714, %v2567, %v2569
      %v2600 = vsel %vm714, %v2571, %v2573
      %v2601 = vsel %vm714, %v2573, %v2575
      %v2602 = vsel %vm714, %v2577, %v2579
      %v2603 = vsel %vm714, %v2579, %v2581
      %v2604 = vsel %vm714, %v2583, %v2585
      %v2605 = vsel %vm714, %v2585, %v2587
      %v2625 = vsel %vm1214, %v2505, 0
      %2627 = vmatprep.subr.bf16.mxu0 %v2589
      %2628 = vmatpush1.bf16.msra.mxu0 %v2588
      %2629 = vmatprep.subr.bf16.mxu0 %v2591
      %2630 = vmatpush1.bf16.msra.mxu0 %v2590
      %2631 = vmatprep.subr.bf16.mxu0 %v2593
      %2632 = vmatpush1.bf16.msra.mxu0 %v2592
      %2633 = vmatprep.subr.bf16.mxu0 %v2595
      %2634 = vmatpush1.bf16.msra.mxu0 %v2594
      %2635 = vmatprep.subr.bf16.mxu0 %v2597
      %2636 = vmatpush1.bf16.msra.mxu0 %v2596
      %2637 = vmatprep.subr.bf16.mxu0 %v2599
      %2638 = vmatpush1.bf16.msra.mxu0 %v2598
      %2639 = vmatprep.subr.bf16.mxu0 %v2601
      %2640 = vmatpush1.bf16.msra.mxu0 %v2600
      %2641 = vmatprep.subr.bf16.mxu0 %v2603
      %2642 = vmatpush1.bf16.msra.mxu0 %v2602
      %2643 = vmatprep.subr.bf16.mxu0 %v2605
      %2644 = vmatpush1.bf16.msra.mxu0 %v2604
      %2645 = vmatprep.subr.bf16.mxu0 0
      %2646 = vmatpush1.bf16.msra.mxu0 0
      %2647 = vmatprep.subr.bf16.mxu0 0
      %2648 = vmatpush1.bf16.msra.mxu0 0
      %2649 = vmatprep.subr.bf16.mxu0 0
      %2650 = vmatpush1.bf16.msra.mxu0 0
      %2651 = vmatprep.subr.bf16.mxu0 0
      %2652 = vmatpush1.bf16.msra.mxu0 0
      %2653 = vmatprep.subr.bf16.mxu0 0
      %2654 = vmatpush1.bf16.msra.mxu0 0
      %2655 = vmatprep.subr.bf16.mxu0 0
      %2656 = vmatpush1.bf16.msra.mxu0 0
      %2657 = vmatprep.subr.bf16.mxu0 0
      %2658 = vmatpush1.bf16.msra.mxu0 0
      %2659 = vmatprep.mubr.bf16.mxu0 %v2625
      %2660 = vmatmul.mubr.bf16.gmra.mrb[0].mxu0 %v2504
      %v2661 = vpop.f32.mrb[0].mxu0
      %v2662 = vadd.f32 %v2499, %v2661
      %v2663 = vpop.f32.mrb[0].mxu0
      %v2664 = vadd.f32 %v2499, %v2663
      %v2665 = vpop.f32.mrb[0].mxu0
      %v2666 = vpop.f32.mrb[0].mxu0
      %2667 = vdwg.mxu0
      %2668 = vst [vmem:[%s413] sm:$0xff] %v2662
      %2669 = vst [vmem:[%s413 + $0x8] sm:$0xff] %v2664
      %p2670 = scmp.lt.s32.totalorder %s23, 1
      %s2671 = scalar_select %p2670, %s23, 1
      %s2672 = smul.addr %s2671, 2
      %s2673 = smul.addr %s2672, 8
      %s2674 = scalar_lea.vmem %s12, %s2673
      // Predicated region
      $region69: #{vdn_forward.15} parent=67 // pred_check
        %p2675 = pneg %p298
      $region70: #{vdn_forward.15} parent=67 // pred_check_branch
        %2677 = sbr.rel (%p2675) target = $region72
      $region71: #{vdn_forward.15} parent=67 // pred_region
        _
      $region72: #{vdn_forward.15} parent=67 // pred_fallthru
        _
    $region68: #{vdn_forward.15} parent=5 // pred_fallthru
      _
    %p2678 = scmp.le.s32.totalorder 2, %s18
    // Predicated region
    $region73: #{vdn_forward.15} parent=5 // pred_check
      %p2679 = pneg %p2678
    $region74: #{vdn_forward.15} parent=5 // pred_check_branch
      %2681 = sbr.rel (%p2679) target = $region76
    $region75: #{vdn_forward.15} parent=5 // pred_region
      %s2682 = ssub.s32 %s18, 2
      // Predicated region
      $region77: #{vdn_forward.15} parent=75 // pred_check
        %p2683 = pneg %p304
      $region78: #{vdn_forward.15} parent=75 // pred_check_branch
        %2685 = sbr.rel (%p2683) target = $region80
      $region79: #{vdn_forward.15} parent=75 // pred_region
        %p2686 = scmp.lt.s32.totalorder %s24, 1
        %s2687 = scalar_select %p2686, %s24, 1
        %s2688 = smul.addr %s2687, 2
        %s2689 = smul.addr %s2688, 8
        %s2690 = scalar_lea.vmem %s12, %s2689
      $region80: #{vdn_forward.15} parent=75 // pred_fallthru
        _
    $region76: #{vdn_forward.15} parent=5 // pred_fallthru
      _
  $region6: #{vdn_forward.15} parent=0 // loop_footer
    %s22 = sadd.s32 1, %s18
  $region7: #{vdn_forward.15} parent=0 // loop_footer_branch
    %17 = sbr.rel target = $region3
  $region8: #{vdn_forward.15} parent=0 // loop_exit
    _

</llo_original>
